<compile_context>
chip_gen: v7x
topology: tpu7x:2x2x1
jax: 0.10.0
libtpu: 0.0.40
codegen_flags: <defaults>
</compile_context>

<pallas_src>
import functools

import jax
import jax.numpy as jnp
from jax import lax
from jax.experimental import pallas as pl
from jax.experimental.pallas import tpu as pltpu


NUM_ELECTRODES = 32   # C
HID_CHANNELS = 64     # H
NUM_CLASSES = 9
NUM_LAYERS = 3


def _lstm_eeg_kernel(T, Bp,
                     x_ref,                          # [T*Bp, C]   f32
                     w_ih0_ref, w_hh0_ref, b0_ref,   # [C,4H] [H,4H] bf16, [1,4H] f32
                     w_ih1_ref, w_hh1_ref, b1_ref,   # [H,4H] [H,4H] bf16, [1,4H] f32
                     w_ih2_ref, w_hh2_ref, b2_ref,   # [H,4H] [H,4H] bf16, [1,4H] f32
                     w_out_ref, b_out_ref,           # [H,NC] bf16, [1,NC] f32
                     o_ref,                          # [Bp, NC] f32
                     gates_ref,                      # scratch [T*Bp, 4H] f32
                     seq_ref):                       # scratch [T*Bp, H]  f32
    H = w_hh0_ref.shape[0]

    def precompute_input_proj(inp_f32, w_ih_ref, b_ref):
        # One big [T*Bp, in] x [in, 4H] MXU matmul, hoisted off the serial
        # recurrence; bias is folded in here so the cell never re-adds it.
        gates_ref[...] = (
            jnp.dot(inp_f32.astype(jnp.bfloat16), w_ih_ref[...],
                    preferred_element_type=jnp.float32)
            + b_ref[...])

    def run_layer(w_hh_ref, write_seq):
        w_hh = w_hh_ref[...]   # [H, 4H] bf16, loaded once per layer

        def body(t, carry):
            h, c = carry                                   # f32 [Bp, H]
            row = pl.multiple_of(t * Bp, Bp)               # 8-aligned sublane start
            g_lin = gates_ref[pl.ds(row, Bp), :]           # [Bp, 4H] precomputed
            gates = g_lin + jnp.dot(h.astype(jnp.bfloat16), w_hh,
                                    preferred_element_type=jnp.float32)
            # Gate layout (i, f, o, g): one contiguous sigmoid slab + one tanh.
            sig = jax.nn.sigmoid(gates[:, :3 * H])
            i_g = sig[:, 0 * H:1 * H]
            f_g = sig[:, 1 * H:2 * H]
            o_g = sig[:, 2 * H:3 * H]
            g_g = jnp.tanh(gates[:, 3 * H:])
            c_new = f_g * c + i_g * g_g
            h_new = o_g * jnp.tanh(c_new)
            if write_seq:
                seq_ref[pl.ds(row, Bp), :] = h_new
            return h_new, c_new

        h0 = jnp.zeros((Bp, H), jnp.float32)
        c0 = jnp.zeros((Bp, H), jnp.float32)
        # Short fixed trip count: fully unroll for scheduler visibility.
        return lax.fori_loop(0, T, body, (h0, c0), unroll=True)

    # Layer 0: raw input -> seq scratch.
    precompute_input_proj(x_ref[...], w_ih0_ref, b0_ref)
    run_layer(w_hh0_ref, write_seq=True)
    # Layer 1: reads seq (already folded into gates_ref), overwrites seq.
    precompute_input_proj(seq_ref[...], w_ih1_ref, b1_ref)
    run_layer(w_hh1_ref, write_seq=True)
    # Layer 2: only the final hidden state is needed.
    precompute_input_proj(seq_ref[...], w_ih2_ref, b2_ref)
    h_last, _ = run_layer(w_hh2_ref, write_seq=False)

    # TODO(synk): F.dropout(r_out, 0.3) in the reference uses training=True
    # (stochastic); implemented here as identity (eval semantics) to keep the
    # kernel deterministic.

    o_ref[...] = (jnp.dot(h_last.astype(jnp.bfloat16), w_out_ref[...],
                          preferred_element_type=jnp.float32)
                  + b_out_ref[...])


def lstm_eeg_forward(x_bct, params):
    """x_bct: [B, C, T] float32 (PyTorch input layout). Returns [B, NUM_CLASSES]."""
    B, C, T = x_bct.shape
    H = HID_CHANNELS
    Bp = ((B + 7) // 8) * 8                     # pad batch to a sublane multiple

    # Single layout pass: [B, C, T] -> [T, B, C], pad batch, flatten to [T*Bp, C].
    x_tbc = jnp.transpose(x_bct, (2, 0, 1))
    x_tbc = jnp.pad(x_tbc, ((0, 0), (0, Bp - B), (0, 0)))
    x_flat = x_tbc.reshape(T * Bp, C)

    def reorder(w):
        # PyTorch gate columns (i, f, g, o) -> kernel layout (i, f, o, g).
        return jnp.concatenate(
            [w[:, :2 * H], w[:, 3 * H:4 * H], w[:, 2 * H:3 * H]], axis=-1)

    def prep_w(w):
        return reorder(w).astype(jnp.bfloat16)  # bf16 matmul operands

    def prep_b(b):
        return reorder(b)                        # biases stay f32

    vmem = functools.partial(pl.BlockSpec, memory_space=pltpu.MemorySpace.VMEM)
    n_inputs = 12
    in_specs = [vmem() for _ in range(n_inputs)]

    out = pl.pallas_call(
        functools.partial(_lstm_eeg_kernel, T, Bp),
        out_shape=jax.ShapeDtypeStruct((Bp, NUM_CLASSES), jnp.float32),
        in_specs=in_specs,
        out_specs=vmem(),
        scratch_shapes=[
            pltpu.VMEM((T * Bp, 4 * H), jnp.float32),   # precomputed input gates
            pltpu.VMEM((T * Bp, H), jnp.float32),       # inter-layer sequence
        ],
    )(
        x_flat,
        prep_w(params["w_ih0"]), prep_w(params["w_hh0"]), prep_b(params["b0"]),
        prep_w(params["w_ih1"]), prep_w(params["w_hh1"]), prep_b(params["b1"]),
        prep_w(params["w_ih2"]), prep_w(params["w_hh2"]), prep_b(params["b2"]),
        params["w_out"].astype(jnp.bfloat16), params["b_out"],
    )
    return out[:B]


def init_params(key):
    """Deterministic PyTorch-style init: U(-1/sqrt(H), 1/sqrt(H)).

    Weights are stored pre-transposed ([in, 4H], PyTorch gate order i,f,g,o) and
    the two LSTM biases are pre-summed ([1, 4H]); output linear is [H, NC]+[1, NC].
    """
    H, C, NC = HID_CHANNELS, NUM_ELECTRODES, NUM_CLASSES
    bound = 1.0 / jnp.sqrt(jnp.float32(H))

    def u(key, shape):
        return jax.random.uniform(key, shape, jnp.float32, -bound, bound)

    keys = jax.random.split(key, 4 * NUM_LAYERS + 2)
    params = {}
    in_sizes = [C, H, H]
    for l in range(NUM_LAYERS):
        k_ih, k_hh, k_bih, k_bhh = keys[4 * l:4 * l + 4]
        params[f"w_ih{l}"] = u(k_ih, (in_sizes[l], 4 * H))     # (= W_ih^T)
        params[f"w_hh{l}"] = u(k_hh, (H, 4 * H))               # (= W_hh^T)
        params[f"b{l}"] = (u(k_bih, (1, 4 * H)) + u(k_bhh, (1, 4 * H)))
    params["w_out"] = u(keys[-2], (H, NC))                     # (= W_out^T)
    params["b_out"] = u(keys[-1], (1, NC))
    return params


def reference_forward(x_bct, params):
    """Pure-JAX f32 reference matching the PyTorch forward (dropout as identity)."""
    B, C, T = x_bct.shape
    H = HID_CHANNELS
    x = jnp.transpose(x_bct, (0, 2, 1))  # [B, T, C]

    def layer(inp, w_ih_t, w_hh_t, b):
        def step(carry, x_t):
            h, c = carry
            gates = x_t @ w_ih_t + h @ w_hh_t + b[0]
            i = jax.nn.sigmoid(gates[:, 0 * H:1 * H])
            f = jax.nn.sigmoid(gates[:, 1 * H:2 * H])
            g = jnp.tanh(gates[:, 2 * H:3 * H])
            o = jax.nn.sigmoid(gates[:, 3 * H:4 * H])
            c = f * c + i * g
            h = o * jnp.tanh(c)
            return (h, c), h

        h0 = jnp.zeros((B, H), jnp.float32)
        c0 = jnp.zeros((B, H), jnp.float32)
        (_, _), hs = lax.scan(step, (h0, c0), jnp.swapaxes(inp, 0, 1))
        return jnp.swapaxes(hs, 0, 1)  # [B, T, H]

    h = layer(x, params["w_ih0"], params["w_hh0"], params["b0"])
    h = layer(h, params["w_ih1"], params["w_hh1"], params["b1"])
    h = layer(h, params["w_ih2"], params["w_hh2"], params["b2"])
    return h[:, -1, :] @ params["w_out"] + params["b_out"][0]


if __name__ == "__main__":
    key = jax.random.PRNGKey(0)
    k_param, k_x = jax.random.split(key)

    B, T = 2, 16  # small shapes: batch=2, seq=16, C=32 electrodes, H=64
    params = init_params(k_param)
    x = jax.random.normal(k_x, (B, NUM_ELECTRODES, T), jnp.float32)

    out = lstm_eeg_forward(x, params)
    out = jax.block_until_ready(out)

    ref = reference_forward(x, params)
    assert out.shape == (B, NUM_CLASSES)
    # bf16 matmul operands vs f32 reference -> loosened tolerance.
    assert jnp.allclose(out, ref, rtol=2e-2, atol=2e-2), (out, ref)

    print("KERNEL_OK")
</pallas_src>

<mosaic_0001>
module attributes {stable_mosaic.version = 11 : i64} {
  func.func @_lstm_eeg_kernel(%arg0: memref<128x32xf32, #tpu.memory_space<vmem>>, %arg1: memref<32x256xbf16, #tpu.memory_space<vmem>>, %arg2: memref<64x256xbf16, #tpu.memory_space<vmem>>, %arg3: memref<1x256xf32, #tpu.memory_space<vmem>>, %arg4: memref<64x256xbf16, #tpu.memory_space<vmem>>, %arg5: memref<64x256xbf16, #tpu.memory_space<vmem>>, %arg6: memref<1x256xf32, #tpu.memory_space<vmem>>, %arg7: memref<64x256xbf16, #tpu.memory_space<vmem>>, %arg8: memref<64x256xbf16, #tpu.memory_space<vmem>>, %arg9: memref<1x256xf32, #tpu.memory_space<vmem>>, %arg10: memref<64x9xbf16, #tpu.memory_space<vmem>>, %arg11: memref<1x9xf32, #tpu.memory_space<vmem>>, %arg12: memref<8x9xf32, #tpu.memory_space<vmem>>, %arg13: memref<128x256xf32, #tpu.memory_space<vmem>>, %arg14: memref<128x64xf32, #tpu.memory_space<vmem>>) attributes {dimension_semantics = [], scalar_prefetch = 0 : i64, scratch_operands = 2 : i64, tpu.core_type = #tpu.core_type<tc>} {
    %c0 = arith.constant 0 : index
    %c0_0 = arith.constant 0 : index
    %0 = vector.load %arg0[%c0, %c0_0] : memref<128x32xf32, #tpu.memory_space<vmem>>, vector<128x32xf32>
    %1 = arith.truncf %0 : vector<128x32xf32> to vector<128x32xbf16>
    %c0_1 = arith.constant 0 : index
    %c0_2 = arith.constant 0 : index
    %2 = vector.load %arg1[%c0_1, %c0_2] : memref<32x256xbf16, #tpu.memory_space<vmem>>, vector<32x256xbf16>
    %cst = arith.constant dense<0.000000e+00> : vector<128x256xf32>
    %3 = tpu.matmul %1, %2, %cst {dimension_numbers = #tpu.dot_dimension_numbers<[1], [0], [0], [1], [0, 0, 1, 1], [], []>} : vector<128x32xbf16>, vector<32x256xbf16>, vector<128x256xf32> -> vector<128x256xf32>
    %c0_3 = arith.constant 0 : index
    %c0_4 = arith.constant 0 : index
    %4 = vector.load %arg3[%c0_3, %c0_4] : memref<1x256xf32, #tpu.memory_space<vmem>>, vector<1x256xf32>
    %5 = vector.broadcast %4 : vector<1x256xf32> to vector<128x256xf32>
    %6 = arith.addf %3, %5 : vector<128x256xf32>
    %c0_5 = arith.constant 0 : index
    %c0_6 = arith.constant 0 : index
    %7 = vector.load %arg13[%c0_5, %c0_6] : memref<128x256xf32, #tpu.memory_space<vmem>>, vector<128x256xf32>
    tpu.vector_store %arg13[%c0_5, %c0_6], %6 {strides = array<i32>} : memref<128x256xf32, #tpu.memory_space<vmem>>, vector<128x256xf32>,
    %c0_7 = arith.constant 0 : index
    %c0_8 = arith.constant 0 : index
    %8 = vector.load %arg2[%c0_7, %c0_8] : memref<64x256xbf16, #tpu.memory_space<vmem>>, vector<64x256xbf16>
    %cst_9 = arith.constant 0.000000e+00 : f32
    %9 = vector.broadcast %cst_9 : f32 to vector<8x64xf32>
    %cst_10 = arith.constant 0.000000e+00 : f32
    %10 = vector.broadcast %cst_10 : f32 to vector<8x64xf32>
    %c0_i32 = arith.constant 0 : i32
    %c8_i32 = arith.constant 8 : i32
    %11 = arith.muli %c0_i32, %c8_i32 : i32
    %12 = tpu.assume_multiple %11, 8 : i32
    %13 = arith.index_cast %12 : i32 to index
    %c0_11 = arith.constant 0 : index
    %14 = vector.load %arg13[%13, %c0_11] : memref<128x256xf32, #tpu.memory_space<vmem>>, vector<8x256xf32>
    %15 = arith.truncf %9 : vector<8x64xf32> to vector<8x64xbf16>
    %cst_12 = arith.constant dense<0.000000e+00> : vector<8x256xf32>
    %16 = tpu.matmul %15, %8, %cst_12 {dimension_numbers = #tpu.dot_dimension_numbers<[1], [0], [0], [1], [0, 0, 1, 1], [], []>} : vector<8x64xbf16>, vector<64x256xbf16>, vector<8x256xf32> -> vector<8x256xf32>
    %17 = arith.addf %14, %16 : vector<8x256xf32>
    %18 = vector.extract_strided_slice %17 {offsets = [0, 0], sizes = [8, 192], strides = [1, 1]} : vector<8x256xf32> to vector<8x192xf32>
    %19 = arith.negf %18 : vector<8x192xf32>
    %20 = math.exp %19 : vector<8x192xf32>
    %cst_13 = arith.constant 1.000000e+00 : f32
    %21 = vector.broadcast %cst_13 : f32 to vector<8x192xf32>
    %22 = arith.addf %21, %20 : vector<8x192xf32>
    %23 = arith.divf %21, %22 : vector<8x192xf32>
    %24 = vector.extract_strided_slice %23 {offsets = [0, 0], sizes = [8, 64], strides = [1, 1]} : vector<8x192xf32> to vector<8x64xf32>
    %25 = vector.extract_strided_slice %23 {offsets = [0, 64], sizes = [8, 64], strides = [1, 1]} : vector<8x192xf32> to vector<8x64xf32>
    %26 = vector.extract_strided_slice %23 {offsets = [0, 128], sizes = [8, 64], strides = [1, 1]} : vector<8x192xf32> to vector<8x64xf32>
    %27 = vector.extract_strided_slice %17 {offsets = [0, 192], sizes = [8, 64], strides = [1, 1]} : vector<8x256xf32> to vector<8x64xf32>
    %28 = math.tanh %27 : vector<8x64xf32>
    %29 = arith.mulf %25, %10 : vector<8x64xf32>
    %30 = arith.mulf %24, %28 : vector<8x64xf32>
    %31 = arith.addf %29, %30 : vector<8x64xf32>
    %32 = math.tanh %31 : vector<8x64xf32>
    %33 = arith.mulf %26, %32 : vector<8x64xf32>
    %34 = arith.index_cast %12 : i32 to index
    %c0_14 = arith.constant 0 : index
    %35 = vector.load %arg14[%34, %c0_14] : memref<128x64xf32, #tpu.memory_space<vmem>>, vector<8x64xf32>
    tpu.vector_store %arg14[%34, %c0_14], %33 {strides = array<i32>} : memref<128x64xf32, #tpu.memory_space<vmem>>, vector<8x64xf32>,
    %c1_i32 = arith.constant 1 : i32
    %c8_i32_15 = arith.constant 8 : i32
    %36 = arith.muli %c1_i32, %c8_i32_15 : i32
    %37 = tpu.assume_multiple %36, 8 : i32
    %38 = arith.index_cast %37 : i32 to index
    %c0_16 = arith.constant 0 : index
    %39 = vector.load %arg13[%38, %c0_16] : memref<128x256xf32, #tpu.memory_space<vmem>>, vector<8x256xf32>
    %40 = arith.truncf %33 : vector<8x64xf32> to vector<8x64xbf16>
    %cst_17 = arith.constant dense<0.000000e+00> : vector<8x256xf32>
    %41 = tpu.matmul %40, %8, %cst_17 {dimension_numbers = #tpu.dot_dimension_numbers<[1], [0], [0], [1], [0, 0, 1, 1], [], []>} : vector<8x64xbf16>, vector<64x256xbf16>, vector<8x256xf32> -> vector<8x256xf32>
    %42 = arith.addf %39, %41 : vector<8x256xf32>
    %43 = vector.extract_strided_slice %42 {offsets = [0, 0], sizes = [8, 192], strides = [1, 1]} : vector<8x256xf32> to vector<8x192xf32>
    %44 = arith.negf %43 : vector<8x192xf32>
    %45 = math.exp %44 : vector<8x192xf32>
    %cst_18 = arith.constant 1.000000e+00 : f32
    %46 = vector.broadcast %cst_18 : f32 to vector<8x192xf32>
    %47 = arith.addf %46, %45 : vector<8x192xf32>
    %48 = arith.divf %46, %47 : vector<8x192xf32>
    %49 = vector.extract_strided_slice %48 {offsets = [0, 0], sizes = [8, 64], strides = [1, 1]} : vector<8x192xf32> to vector<8x64xf32>
    %50 = vector.extract_strided_slice %48 {offsets = [0, 64], sizes = [8, 64], strides = [1, 1]} : vector<8x192xf32> to vector<8x64xf32>
    %51 = vector.extract_strided_slice %48 {offsets = [0, 128], sizes = [8, 64], strides = [1, 1]} : vector<8x192xf32> to vector<8x64xf32>
    %52 = vector.extract_strided_slice %42 {offsets = [0, 192], sizes = [8, 64], strides = [1, 1]} : vector<8x256xf32> to vector<8x64xf32>
    %53 = math.tanh %52 : vector<8x64xf32>
    %54 = arith.mulf %50, %31 : vector<8x64xf32>
    %55 = arith.mulf %49, %53 : vector<8x64xf32>
    %56 = arith.addf %54, %55 : vector<8x64xf32>
    %57 = math.tanh %56 : vector<8x64xf32>
    %58 = arith.mulf %51, %57 : vector<8x64xf32>
    %59 = arith.index_cast %37 : i32 to index
    %c0_19 = arith.constant 0 : index
    %60 = vector.load %arg14[%59, %c0_19] : memref<128x64xf32, #tpu.memory_space<vmem>>, vector<8x64xf32>
    tpu.vector_store %arg14[%59, %c0_19], %58 {strides = array<i32>} : memref<128x64xf32, #tpu.memory_space<vmem>>, vector<8x64xf32>,
    %c2_i32 = arith.constant 2 : i32
    %c8_i32_20 = arith.constant 8 : i32
    %61 = arith.muli %c2_i32, %c8_i32_20 : i32
    %62 = tpu.assume_multiple %61, 8 : i32
    %63 = arith.index_cast %62 : i32 to index
    %c0_21 = arith.constant 0 : index
    %64 = vector.load %arg13[%63, %c0_21] : memref<128x256xf32, #tpu.memory_space<vmem>>, vector<8x256xf32>
    %65 = arith.truncf %58 : vector<8x64xf32> to vector<8x64xbf16>
    %cst_22 = arith.constant dense<0.000000e+00> : vector<8x256xf32>
    %66 = tpu.matmul %65, %8, %cst_22 {dimension_numbers = #tpu.dot_dimension_numbers<[1], [0], [0], [1], [0, 0, 1, 1], [], []>} : vector<8x64xbf16>, vector<64x256xbf16>, vector<8x256xf32> -> vector<8x256xf32>
    %67 = arith.addf %64, %66 : vector<8x256xf32>
    %68 = vector.extract_strided_slice %67 {offsets = [0, 0], sizes = [8, 192], strides = [1, 1]} : vector<8x256xf32> to vector<8x192xf32>
    %69 = arith.negf %68 : vector<8x192xf32>
    %70 = math.exp %69 : vector<8x192xf32>
    %cst_23 = arith.constant 1.000000e+00 : f32
    %71 = vector.broadcast %cst_23 : f32 to vector<8x192xf32>
    %72 = arith.addf %71, %70 : vector<8x192xf32>
    %73 = arith.divf %71, %72 : vector<8x192xf32>
    %74 = vector.extract_strided_slice %73 {offsets = [0, 0], sizes = [8, 64], strides = [1, 1]} : vector<8x192xf32> to vector<8x64xf32>
    %75 = vector.extract_strided_slice %73 {offsets = [0, 64], sizes = [8, 64], strides = [1, 1]} : vector<8x192xf32> to vector<8x64xf32>
    %76 = vector.extract_strided_slice %73 {offsets = [0, 128], sizes = [8, 64], strides = [1, 1]} : vector<8x192xf32> to vector<8x64xf32>
    %77 = vector.extract_strided_slice %67 {offsets = [0, 192], sizes = [8, 64], strides = [1, 1]} : vector<8x256xf32> to vector<8x64xf32>
    %78 = math.tanh %77 : vector<8x64xf32>
    %79 = arith.mulf %75, %56 : vector<8x64xf32>
    %80 = arith.mulf %74, %78 : vector<8x64xf32>
    %81 = arith.addf %79, %80 : vector<8x64xf32>
    %82 = math.tanh %81 : vector<8x64xf32>
    %83 = arith.mulf %76, %82 : vector<8x64xf32>
    %84 = arith.index_cast %62 : i32 to index
    %c0_24 = arith.constant 0 : index
    %85 = vector.load %arg14[%84, %c0_24] : memref<128x64xf32, #tpu.memory_space<vmem>>, vector<8x64xf32>
    tpu.vector_store %arg14[%84, %c0_24], %83 {strides = array<i32>} : memref<128x64xf32, #tpu.memory_space<vmem>>, vector<8x64xf32>,
    %c3_i32 = arith.constant 3 : i32
    %c8_i32_25 = arith.constant 8 : i32
    %86 = arith.muli %c3_i32, %c8_i32_25 : i32
    %87 = tpu.assume_multiple %86, 8 : i32
    %88 = arith.index_cast %87 : i32 to index
    %c0_26 = arith.constant 0 : index
    %89 = vector.load %arg13[%88, %c0_26] : memref<128x256xf32, #tpu.memory_space<vmem>>, vector<8x256xf32>
    %90 = arith.truncf %83 : vector<8x64xf32> to vector<8x64xbf16>
    %cst_27 = arith.constant dense<0.000000e+00> : vector<8x256xf32>
    %91 = tpu.matmul %90, %8, %cst_27 {dimension_numbers = #tpu.dot_dimension_numbers<[1], [0], [0], [1], [0, 0, 1, 1], [], []>} : vector<8x64xbf16>, vector<64x256xbf16>, vector<8x256xf32> -> vector<8x256xf32>
    %92 = arith.addf %89, %91 : vector<8x256xf32>
    %93 = vector.extract_strided_slice %92 {offsets = [0, 0], sizes = [8, 192], strides = [1, 1]} : vector<8x256xf32> to vector<8x192xf32>
    %94 = arith.negf %93 : vector<8x192xf32>
    %95 = math.exp %94 : vector<8x192xf32>
    %cst_28 = arith.constant 1.000000e+00 : f32
    %96 = vector.broadcast %cst_28 : f32 to vector<8x192xf32>
    %97 = arith.addf %96, %95 : vector<8x192xf32>
    %98 = arith.divf %96, %97 : vector<8x192xf32>
    %99 = vector.extract_strided_slice %98 {offsets = [0, 0], sizes = [8, 64], strides = [1, 1]} : vector<8x192xf32> to vector<8x64xf32>
    %100 = vector.extract_strided_slice %98 {offsets = [0, 64], sizes = [8, 64], strides = [1, 1]} : vector<8x192xf32> to vector<8x64xf32>
    %101 = vector.extract_strided_slice %98 {offsets = [0, 128], sizes = [8, 64], strides = [1, 1]} : vector<8x192xf32> to vector<8x64xf32>
    %102 = vector.extract_strided_slice %92 {offsets = [0, 192], sizes = [8, 64], strides = [1, 1]} : vector<8x256xf32> to vector<8x64xf32>
    %103 = math.tanh %102 : vector<8x64xf32>
    %104 = arith.mulf %100, %81 : vector<8x64xf32>
    %105 = arith.mulf %99, %103 : vector<8x64xf32>
    %106 = arith.addf %104, %105 : vector<8x64xf32>
    %107 = math.tanh %106 : vector<8x64xf32>
    %108 = arith.mulf %101, %107 : vector<8x64xf32>
    %109 = arith.index_cast %87 : i32 to index
    %c0_29 = arith.constant 0 : index
    %110 = vector.load %arg14[%109, %c0_29] : memref<128x64xf32, #tpu.memory_space<vmem>>, vector<8x64xf32>
    tpu.vector_store %arg14[%109, %c0_29], %108 {strides = array<i32>} : memref<128x64xf32, #tpu.memory_space<vmem>>, vector<8x64xf32>,
    %c4_i32 = arith.constant 4 : i32
    %c8_i32_30 = arith.constant 8 : i32
    %111 = arith.muli %c4_i32, %c8_i32_30 : i32
    %112 = tpu.assume_multiple %111, 8 : i32
    %113 = arith.index_cast %112 : i32 to index
    %c0_31 = arith.constant 0 : index
    %114 = vector.load %arg13[%113, %c0_31] : memref<128x256xf32, #tpu.memory_space<vmem>>, vector<8x256xf32>
    %115 = arith.truncf %108 : vector<8x64xf32> to vector<8x64xbf16>
    %cst_32 = arith.constant dense<0.000000e+00> : vector<8x256xf32>
    %116 = tpu.matmul %115, %8, %cst_32 {dimension_numbers = #tpu.dot_dimension_numbers<[1], [0], [0], [1], [0, 0, 1, 1], [], []>} : vector<8x64xbf16>, vector<64x256xbf16>, vector<8x256xf32> -> vector<8x256xf32>
    %117 = arith.addf %114, %116 : vector<8x256xf32>
    %118 = vector.extract_strided_slice %117 {offsets = [0, 0], sizes = [8, 192], strides = [1, 1]} : vector<8x256xf32> to vector<8x192xf32>
    %119 = arith.negf %118 : vector<8x192xf32>
    %120 = math.exp %119 : vector<8x192xf32>
    %cst_33 = arith.constant 1.000000e+00 : f32
    %121 = vector.broadcast %cst_33 : f32 to vector<8x192xf32>
    %122 = arith.addf %121, %120 : vector<8x192xf32>
    %123 = arith.divf %121, %122 : vector<8x192xf32>
    %124 = vector.extract_strided_slice %123 {offsets = [0, 0], sizes = [8, 64], strides = [1, 1]} : vector<8x192xf32> to vector<8x64xf32>
    %125 = vector.extract_strided_slice %123 {offsets = [0, 64], sizes = [8, 64], strides = [1, 1]} : vector<8x192xf32> to vector<8x64xf32>
    %126 = vector.extract_strided_slice %123 {offsets = [0, 128], sizes = [8, 64], strides = [1, 1]} : vector<8x192xf32> to vector<8x64xf32>
    %127 = vector.extract_strided_slice %117 {offsets = [0, 192], sizes = [8, 64], strides = [1, 1]} : vector<8x256xf32> to vector<8x64xf32>
    %128 = math.tanh %127 : vector<8x64xf32>
    %129 = arith.mulf %125, %106 : vector<8x64xf32>
    %130 = arith.mulf %124, %128 : vector<8x64xf32>
    %131 = arith.addf %129, %130 : vector<8x64xf32>
    %132 = math.tanh %131 : vector<8x64xf32>
    %133 = arith.mulf %126, %132 : vector<8x64xf32>
    %134 = arith.index_cast %112 : i32 to index
    %c0_34 = arith.constant 0 : index
    %135 = vector.load %arg14[%134, %c0_34] : memref<128x64xf32, #tpu.memory_space<vmem>>, vector<8x64xf32>
    tpu.vector_store %arg14[%134, %c0_34], %133 {strides = array<i32>} : memref<128x64xf32, #tpu.memory_space<vmem>>, vector<8x64xf32>,
    %c5_i32 = arith.constant 5 : i32
    %c8_i32_35 = arith.constant 8 : i32
    %136 = arith.muli %c5_i32, %c8_i32_35 : i32
    %137 = tpu.assume_multiple %136, 8 : i32
    %138 = arith.index_cast %137 : i32 to index
    %c0_36 = arith.constant 0 : index
    %139 = vector.load %arg13[%138, %c0_36] : memref<128x256xf32, #tpu.memory_space<vmem>>, vector<8x256xf32>
    %140 = arith.truncf %133 : vector<8x64xf32> to vector<8x64xbf16>
    %cst_37 = arith.constant dense<0.000000e+00> : vector<8x256xf32>
    %141 = tpu.matmul %140, %8, %cst_37 {dimension_numbers = #tpu.dot_dimension_numbers<[1], [0], [0], [1], [0, 0, 1, 1], [], []>} : vector<8x64xbf16>, vector<64x256xbf16>, vector<8x256xf32> -> vector<8x256xf32>
    %142 = arith.addf %139, %141 : vector<8x256xf32>
    %143 = vector.extract_strided_slice %142 {offsets = [0, 0], sizes = [8, 192], strides = [1, 1]} : vector<8x256xf32> to vector<8x192xf32>
    %144 = arith.negf %143 : vector<8x192xf32>
    %145 = math.exp %144 : vector<8x192xf32>
    %cst_38 = arith.constant 1.000000e+00 : f32
    %146 = vector.broadcast %cst_38 : f32 to vector<8x192xf32>
    %147 = arith.addf %146, %145 : vector<8x192xf32>
    %148 = arith.divf %146, %147 : vector<8x192xf32>
    %149 = vector.extract_strided_slice %148 {offsets = [0, 0], sizes = [8, 64], strides = [1, 1]} : vector<8x192xf32> to vector<8x64xf32>
    %150 = vector.extract_strided_slice %148 {offsets = [0, 64], sizes = [8, 64], strides = [1, 1]} : vector<8x192xf32> to vector<8x64xf32>
    %151 = vector.extract_strided_slice %148 {offsets = [0, 128], sizes = [8, 64], strides = [1, 1]} : vector<8x192xf32> to vector<8x64xf32>
    %152 = vector.extract_strided_slice %142 {offsets = [0, 192], sizes = [8, 64], strides = [1, 1]} : vector<8x256xf32> to vector<8x64xf32>
    %153 = math.tanh %152 : vector<8x64xf32>
    %154 = arith.mulf %150, %131 : vector<8x64xf32>
    %155 = arith.mulf %149, %153 : vector<8x64xf32>
    %156 = arith.addf %154, %155 : vector<8x64xf32>
    %157 = math.tanh %156 : vector<8x64xf32>
    %158 = arith.mulf %151, %157 : vector<8x64xf32>
    %159 = arith.index_cast %137 : i32 to index
    %c0_39 = arith.constant 0 : index
    %160 = vector.load %arg14[%159, %c0_39] : memref<128x64xf32, #tpu.memory_space<vmem>>, vector<8x64xf32>
    tpu.vector_store %arg14[%159, %c0_39], %158 {strides = array<i32>} : memref<128x64xf32, #tpu.memory_space<vmem>>, vector<8x64xf32>,
    %c6_i32 = arith.constant 6 : i32
    %c8_i32_40 = arith.constant 8 : i32
    %161 = arith.muli %c6_i32, %c8_i32_40 : i32
    %162 = tpu.assume_multiple %161, 8 : i32
    %163 = arith.index_cast %162 : i32 to index
    %c0_41 = arith.constant 0 : index
    %164 = vector.load %arg13[%163, %c0_41] : memref<128x256xf32, #tpu.memory_space<vmem>>, vector<8x256xf32>
    %165 = arith.truncf %158 : vector<8x64xf32> to vector<8x64xbf16>
    %cst_42 = arith.constant dense<0.000000e+00> : vector<8x256xf32>
    %166 = tpu.matmul %165, %8, %cst_42 {dimension_numbers = #tpu.dot_dimension_numbers<[1], [0], [0], [1], [0, 0, 1, 1], [], []>} : vector<8x64xbf16>, vector<64x256xbf16>, vector<8x256xf32> -> vector<8x256xf32>
    %167 = arith.addf %164, %166 : vector<8x256xf32>
    %168 = vector.extract_strided_slice %167 {offsets = [0, 0], sizes = [8, 192], strides = [1, 1]} : vector<8x256xf32> to vector<8x192xf32>
    %169 = arith.negf %168 : vector<8x192xf32>
    %170 = math.exp %169 : vector<8x192xf32>
    %cst_43 = arith.constant 1.000000e+00 : f32
    %171 = vector.broadcast %cst_43 : f32 to vector<8x192xf32>
    %172 = arith.addf %171, %170 : vector<8x192xf32>
    %173 = arith.divf %171, %172 : vector<8x192xf32>
    %174 = vector.extract_strided_slice %173 {offsets = [0, 0], sizes = [8, 64], strides = [1, 1]} : vector<8x192xf32> to vector<8x64xf32>
    %175 = vector.extract_strided_slice %173 {offsets = [0, 64], sizes = [8, 64], strides = [1, 1]} : vector<8x192xf32> to vector<8x64xf32>
    %176 = vector.extract_strided_slice %173 {offsets = [0, 128], sizes = [8, 64], strides = [1, 1]} : vector<8x192xf32> to vector<8x64xf32>
    %177 = vector.extract_strided_slice %167 {offsets = [0, 192], sizes = [8, 64], strides = [1, 1]} : vector<8x256xf32> to vector<8x64xf32>
    %178 = math.tanh %177 : vector<8x64xf32>
    %179 = arith.mulf %175, %156 : vector<8x64xf32>
    %180 = arith.mulf %174, %178 : vector<8x64xf32>
    %181 = arith.addf %179, %180 : vector<8x64xf32>
    %182 = math.tanh %181 : vector<8x64xf32>
    %183 = arith.mulf %176, %182 : vector<8x64xf32>
    %184 = arith.index_cast %162 : i32 to index
    %c0_44 = arith.constant 0 : index
    %185 = vector.load %arg14[%184, %c0_44] : memref<128x64xf32, #tpu.memory_space<vmem>>, vector<8x64xf32>
    tpu.vector_store %arg14[%184, %c0_44], %183 {strides = array<i32>} : memref<128x64xf32, #tpu.memory_space<vmem>>, vector<8x64xf32>,
    %c7_i32 = arith.constant 7 : i32
    %c8_i32_45 = arith.constant 8 : i32
    %186 = arith.muli %c7_i32, %c8_i32_45 : i32
    %187 = tpu.assume_multiple %186, 8 : i32
    %188 = arith.index_cast %187 : i32 to index
    %c0_46 = arith.constant 0 : index
    %189 = vector.load %arg13[%188, %c0_46] : memref<128x256xf32, #tpu.memory_space<vmem>>, vector<8x256xf32>
    %190 = arith.truncf %183 : vector<8x64xf32> to vector<8x64xbf16>
    %cst_47 = arith.constant dense<0.000000e+00> : vector<8x256xf32>
    %191 = tpu.matmul %190, %8, %cst_47 {dimension_numbers = #tpu.dot_dimension_numbers<[1], [0], [0], [1], [0, 0, 1, 1], [], []>} : vector<8x64xbf16>, vector<64x256xbf16>, vector<8x256xf32> -> vector<8x256xf32>
    %192 = arith.addf %189, %191 : vector<8x256xf32>
    %193 = vector.extract_strided_slice %192 {offsets = [0, 0], sizes = [8, 192], strides = [1, 1]} : vector<8x256xf32> to vector<8x192xf32>
    %194 = arith.negf %193 : vector<8x192xf32>
    %195 = math.exp %194 : vector<8x192xf32>
    %cst_48 = arith.constant 1.000000e+00 : f32
    %196 = vector.broadcast %cst_48 : f32 to vector<8x192xf32>
    %197 = arith.addf %196, %195 : vector<8x192xf32>
    %198 = arith.divf %196, %197 : vector<8x192xf32>
    %199 = vector.extract_strided_slice %198 {offsets = [0, 0], sizes = [8, 64], strides = [1, 1]} : vector<8x192xf32> to vector<8x64xf32>
    %200 = vector.extract_strided_slice %198 {offsets = [0, 64], sizes = [8, 64], strides = [1, 1]} : vector<8x192xf32> to vector<8x64xf32>
    %201 = vector.extract_strided_slice %198 {offsets = [0, 128], sizes = [8, 64], strides = [1, 1]} : vector<8x192xf32> to vector<8x64xf32>
    %202 = vector.extract_strided_slice %192 {offsets = [0, 192], sizes = [8, 64], strides = [1, 1]} : vector<8x256xf32> to vector<8x64xf32>
    %203 = math.tanh %202 : vector<8x64xf32>
    %204 = arith.mulf %200, %181 : vector<8x64xf32>
    %205 = arith.mulf %199, %203 : vector<8x64xf32>
    %206 = arith.addf %204, %205 : vector<8x64xf32>
    %207 = math.tanh %206 : vector<8x64xf32>
    %208 = arith.mulf %201, %207 : vector<8x64xf32>
    %209 = arith.index_cast %187 : i32 to index
    %c0_49 = arith.constant 0 : index
    %210 = vector.load %arg14[%209, %c0_49] : memref<128x64xf32, #tpu.memory_space<vmem>>, vector<8x64xf32>
    tpu.vector_store %arg14[%209, %c0_49], %208 {strides = array<i32>} : memref<128x64xf32, #tpu.memory_space<vmem>>, vector<8x64xf32>,
    %c8_i32_50 = arith.constant 8 : i32
    %c8_i32_51 = arith.constant 8 : i32
    %211 = arith.muli %c8_i32_50, %c8_i32_51 : i32
    %212 = tpu.assume_multiple %211, 8 : i32
    %213 = arith.index_cast %212 : i32 to index
    %c0_52 = arith.constant 0 : index
    %214 = vector.load %arg13[%213, %c0_52] : memref<128x256xf32, #tpu.memory_space<vmem>>, vector<8x256xf32>
    %215 = arith.truncf %208 : vector<8x64xf32> to vector<8x64xbf16>
    %cst_53 = arith.constant dense<0.000000e+00> : vector<8x256xf32>
    %216 = tpu.matmul %215, %8, %cst_53 {dimension_numbers = #tpu.dot_dimension_numbers<[1], [0], [0], [1], [0, 0, 1, 1], [], []>} : vector<8x64xbf16>, vector<64x256xbf16>, vector<8x256xf32> -> vector<8x256xf32>
    %217 = arith.addf %214, %216 : vector<8x256xf32>
    %218 = vector.extract_strided_slice %217 {offsets = [0, 0], sizes = [8, 192], strides = [1, 1]} : vector<8x256xf32> to vector<8x192xf32>
    %219 = arith.negf %218 : vector<8x192xf32>
    %220 = math.exp %219 : vector<8x192xf32>
    %cst_54 = arith.constant 1.000000e+00 : f32
    %221 = vector.broadcast %cst_54 : f32 to vector<8x192xf32>
    %222 = arith.addf %221, %220 : vector<8x192xf32>
    %223 = arith.divf %221, %222 : vector<8x192xf32>
    %224 = vector.extract_strided_slice %223 {offsets = [0, 0], sizes = [8, 64], strides = [1, 1]} : vector<8x192xf32> to vector<8x64xf32>
    %225 = vector.extract_strided_slice %223 {offsets = [0, 64], sizes = [8, 64], strides = [1, 1]} : vector<8x192xf32> to vector<8x64xf32>
    %226 = vector.extract_strided_slice %223 {offsets = [0, 128], sizes = [8, 64], strides = [1, 1]} : vector<8x192xf32> to vector<8x64xf32>
    %227 = vector.extract_strided_slice %217 {offsets = [0, 192], sizes = [8, 64], strides = [1, 1]} : vector<8x256xf32> to vector<8x64xf32>
    %228 = math.tanh %227 : vector<8x64xf32>
    %229 = arith.mulf %225, %206 : vector<8x64xf32>
    %230 = arith.mulf %224, %228 : vector<8x64xf32>
    %231 = arith.addf %229, %230 : vector<8x64xf32>
    %232 = math.tanh %231 : vector<8x64xf32>
    %233 = arith.mulf %226, %232 : vector<8x64xf32>
    %234 = arith.index_cast %212 : i32 to index
    %c0_55 = arith.constant 0 : index
    %235 = vector.load %arg14[%234, %c0_55] : memref<128x64xf32, #tpu.memory_space<vmem>>, vector<8x64xf32>
    tpu.vector_store %arg14[%234, %c0_55], %233 {strides = array<i32>} : memref<128x64xf32, #tpu.memory_space<vmem>>, vector<8x64xf32>,
    %c9_i32 = arith.constant 9 : i32
    %c8_i32_56 = arith.constant 8 : i32
    %236 = arith.muli %c9_i32, %c8_i32_56 : i32
    %237 = tpu.assume_multiple %236, 8 : i32
    %238 = arith.index_cast %237 : i32 to index
    %c0_57 = arith.constant 0 : index
    %239 = vector.load %arg13[%238, %c0_57] : memref<128x256xf32, #tpu.memory_space<vmem>>, vector<8x256xf32>
    %240 = arith.truncf %233 : vector<8x64xf32> to vector<8x64xbf16>
    %cst_58 = arith.constant dense<0.000000e+00> : vector<8x256xf32>
    %241 = tpu.matmul %240, %8, %cst_58 {dimension_numbers = #tpu.dot_dimension_numbers<[1], [0], [0], [1], [0, 0, 1, 1], [], []>} : vector<8x64xbf16>, vector<64x256xbf16>, vector<8x256xf32> -> vector<8x256xf32>
    %242 = arith.addf %239, %241 : vector<8x256xf32>
    %243 = vector.extract_strided_slice %242 {offsets = [0, 0], sizes = [8, 192], strides = [1, 1]} : vector<8x256xf32> to vector<8x192xf32>
    %244 = arith.negf %243 : vector<8x192xf32>
    %245 = math.exp %244 : vector<8x192xf32>
    %cst_59 = arith.constant 1.000000e+00 : f32
    %246 = vector.broadcast %cst_59 : f32 to vector<8x192xf32>
    %247 = arith.addf %246, %245 : vector<8x192xf32>
    %248 = arith.divf %246, %247 : vector<8x192xf32>
    %249 = vector.extract_strided_slice %248 {offsets = [0, 0], sizes = [8, 64], strides = [1, 1]} : vector<8x192xf32> to vector<8x64xf32>
    %250 = vector.extract_strided_slice %248 {offsets = [0, 64], sizes = [8, 64], strides = [1, 1]} : vector<8x192xf32> to vector<8x64xf32>
    %251 = vector.extract_strided_slice %248 {offsets = [0, 128], sizes = [8, 64], strides = [1, 1]} : vector<8x192xf32> to vector<8x64xf32>
    %252 = vector.extract_strided_slice %242 {offsets = [0, 192], sizes = [8, 64], strides = [1, 1]} : vector<8x256xf32> to vector<8x64xf32>
    %253 = math.tanh %252 : vector<8x64xf32>
    %254 = arith.mulf %250, %231 : vector<8x64xf32>
    %255 = arith.mulf %249, %253 : vector<8x64xf32>
    %256 = arith.addf %254, %255 : vector<8x64xf32>
    %257 = math.tanh %256 : vector<8x64xf32>
    %258 = arith.mulf %251, %257 : vector<8x64xf32>
    %259 = arith.index_cast %237 : i32 to index
    %c0_60 = arith.constant 0 : index
    %260 = vector.load %arg14[%259, %c0_60] : memref<128x64xf32, #tpu.memory_space<vmem>>, vector<8x64xf32>
    tpu.vector_store %arg14[%259, %c0_60], %258 {strides = array<i32>} : memref<128x64xf32, #tpu.memory_space<vmem>>, vector<8x64xf32>,
    %c10_i32 = arith.constant 10 : i32
    %c8_i32_61 = arith.constant 8 : i32
    %261 = arith.muli %c10_i32, %c8_i32_61 : i32
    %262 = tpu.assume_multiple %261, 8 : i32
    %263 = arith.index_cast %262 : i32 to index
    %c0_62 = arith.constant 0 : index
    %264 = vector.load %arg13[%263, %c0_62] : memref<128x256xf32, #tpu.memory_space<vmem>>, vector<8x256xf32>
    %265 = arith.truncf %258 : vector<8x64xf32> to vector<8x64xbf16>
    %cst_63 = arith.constant dense<0.000000e+00> : vector<8x256xf32>
    %266 = tpu.matmul %265, %8, %cst_63 {dimension_numbers = #tpu.dot_dimension_numbers<[1], [0], [0], [1], [0, 0, 1, 1], [], []>} : vector<8x64xbf16>, vector<64x256xbf16>, vector<8x256xf32> -> vector<8x256xf32>
    %267 = arith.addf %264, %266 : vector<8x256xf32>
    %268 = vector.extract_strided_slice %267 {offsets = [0, 0], sizes = [8, 192], strides = [1, 1]} : vector<8x256xf32> to vector<8x192xf32>
    %269 = arith.negf %268 : vector<8x192xf32>
    %270 = math.exp %269 : vector<8x192xf32>
    %cst_64 = arith.constant 1.000000e+00 : f32
    %271 = vector.broadcast %cst_64 : f32 to vector<8x192xf32>
    %272 = arith.addf %271, %270 : vector<8x192xf32>
    %273 = arith.divf %271, %272 : vector<8x192xf32>
    %274 = vector.extract_strided_slice %273 {offsets = [0, 0], sizes = [8, 64], strides = [1, 1]} : vector<8x192xf32> to vector<8x64xf32>
    %275 = vector.extract_strided_slice %273 {offsets = [0, 64], sizes = [8, 64], strides = [1, 1]} : vector<8x192xf32> to vector<8x64xf32>
    %276 = vector.extract_strided_slice %273 {offsets = [0, 128], sizes = [8, 64], strides = [1, 1]} : vector<8x192xf32> to vector<8x64xf32>
    %277 = vector.extract_strided_slice %267 {offsets = [0, 192], sizes = [8, 64], strides = [1, 1]} : vector<8x256xf32> to vector<8x64xf32>
    %278 = math.tanh %277 : vector<8x64xf32>
    %279 = arith.mulf %275, %256 : vector<8x64xf32>
    %280 = arith.mulf %274, %278 : vector<8x64xf32>
    %281 = arith.addf %279, %280 : vector<8x64xf32>
    %282 = math.tanh %281 : vector<8x64xf32>
    %283 = arith.mulf %276, %282 : vector<8x64xf32>
    %284 = arith.index_cast %262 : i32 to index
    %c0_65 = arith.constant 0 : index
    %285 = vector.load %arg14[%284, %c0_65] : memref<128x64xf32, #tpu.memory_space<vmem>>, vector<8x64xf32>
    tpu.vector_store %arg14[%284, %c0_65], %283 {strides = array<i32>} : memref<128x64xf32, #tpu.memory_space<vmem>>, vector<8x64xf32>,
    %c11_i32 = arith.constant 11 : i32
    %c8_i32_66 = arith.constant 8 : i32
    %286 = arith.muli %c11_i32, %c8_i32_66 : i32
    %287 = tpu.assume_multiple %286, 8 : i32
    %288 = arith.index_cast %287 : i32 to index
    %c0_67 = arith.constant 0 : index
    %289 = vector.load %arg13[%288, %c0_67] : memref<128x256xf32, #tpu.memory_space<vmem>>, vector<8x256xf32>
    %290 = arith.truncf %283 : vector<8x64xf32> to vector<8x64xbf16>
    %cst_68 = arith.constant dense<0.000000e+00> : vector<8x256xf32>
    %291 = tpu.matmul %290, %8, %cst_68 {dimension_numbers = #tpu.dot_dimension_numbers<[1], [0], [0], [1], [0, 0, 1, 1], [], []>} : vector<8x64xbf16>, vector<64x256xbf16>, vector<8x256xf32> -> vector<8x256xf32>
    %292 = arith.addf %289, %291 : vector<8x256xf32>
    %293 = vector.extract_strided_slice %292 {offsets = [0, 0], sizes = [8, 192], strides = [1, 1]} : vector<8x256xf32> to vector<8x192xf32>
    %294 = arith.negf %293 : vector<8x192xf32>
    %295 = math.exp %294 : vector<8x192xf32>
    %cst_69 = arith.constant 1.000000e+00 : f32
    %296 = vector.broadcast %cst_69 : f32 to vector<8x192xf32>
    %297 = arith.addf %296, %295 : vector<8x192xf32>
    %298 = arith.divf %296, %297 : vector<8x192xf32>
    %299 = vector.extract_strided_slice %298 {offsets = [0, 0], sizes = [8, 64], strides = [1, 1]} : vector<8x192xf32> to vector<8x64xf32>
    %300 = vector.extract_strided_slice %298 {offsets = [0, 64], sizes = [8, 64], strides = [1, 1]} : vector<8x192xf32> to vector<8x64xf32>
    %301 = vector.extract_strided_slice %298 {offsets = [0, 128], sizes = [8, 64], strides = [1, 1]} : vector<8x192xf32> to vector<8x64xf32>
    %302 = vector.extract_strided_slice %292 {offsets = [0, 192], sizes = [8, 64], strides = [1, 1]} : vector<8x256xf32> to vector<8x64xf32>
    %303 = math.tanh %302 : vector<8x64xf32>
    %304 = arith.mulf %300, %281 : vector<8x64xf32>
    %305 = arith.mulf %299, %303 : vector<8x64xf32>
    %306 = arith.addf %304, %305 : vector<8x64xf32>
    %307 = math.tanh %306 : vector<8x64xf32>
    %308 = arith.mulf %301, %307 : vector<8x64xf32>
    %309 = arith.index_cast %287 : i32 to index
    %c0_70 = arith.constant 0 : index
    %310 = vector.load %arg14[%309, %c0_70] : memref<128x64xf32, #tpu.memory_space<vmem>>, vector<8x64xf32>
    tpu.vector_store %arg14[%309, %c0_70], %308 {strides = array<i32>} : memref<128x64xf32, #tpu.memory_space<vmem>>, vector<8x64xf32>,
    %c12_i32 = arith.constant 12 : i32
    %c8_i32_71 = arith.constant 8 : i32
    %311 = arith.muli %c12_i32, %c8_i32_71 : i32
    %312 = tpu.assume_multiple %311, 8 : i32
    %313 = arith.index_cast %312 : i32 to index
    %c0_72 = arith.constant 0 : index
    %314 = vector.load %arg13[%313, %c0_72] : memref<128x256xf32, #tpu.memory_space<vmem>>, vector<8x256xf32>
    %315 = arith.truncf %308 : vector<8x64xf32> to vector<8x64xbf16>
    %cst_73 = arith.constant dense<0.000000e+00> : vector<8x256xf32>
    %316 = tpu.matmul %315, %8, %cst_73 {dimension_numbers = #tpu.dot_dimension_numbers<[1], [0], [0], [1], [0, 0, 1, 1], [], []>} : vector<8x64xbf16>, vector<64x256xbf16>, vector<8x256xf32> -> vector<8x256xf32>
    %317 = arith.addf %314, %316 : vector<8x256xf32>
    %318 = vector.extract_strided_slice %317 {offsets = [0, 0], sizes = [8, 192], strides = [1, 1]} : vector<8x256xf32> to vector<8x192xf32>
    %319 = arith.negf %318 : vector<8x192xf32>
    %320 = math.exp %319 : vector<8x192xf32>
    %cst_74 = arith.constant 1.000000e+00 : f32
    %321 = vector.broadcast %cst_74 : f32 to vector<8x192xf32>
    %322 = arith.addf %321, %320 : vector<8x192xf32>
    %323 = arith.divf %321, %322 : vector<8x192xf32>
    %324 = vector.extract_strided_slice %323 {offsets = [0, 0], sizes = [8, 64], strides = [1, 1]} : vector<8x192xf32> to vector<8x64xf32>
    %325 = vector.extract_strided_slice %323 {offsets = [0, 64], sizes = [8, 64], strides = [1, 1]} : vector<8x192xf32> to vector<8x64xf32>
    %326 = vector.extract_strided_slice %323 {offsets = [0, 128], sizes = [8, 64], strides = [1, 1]} : vector<8x192xf32> to vector<8x64xf32>
    %327 = vector.extract_strided_slice %317 {offsets = [0, 192], sizes = [8, 64], strides = [1, 1]} : vector<8x256xf32> to vector<8x64xf32>
    %328 = math.tanh %327 : vector<8x64xf32>
    %329 = arith.mulf %325, %306 : vector<8x64xf32>
    %330 = arith.mulf %324, %328 : vector<8x64xf32>
    %331 = arith.addf %329, %330 : vector<8x64xf32>
    %332 = math.tanh %331 : vector<8x64xf32>
    %333 = arith.mulf %326, %332 : vector<8x64xf32>
    %334 = arith.index_cast %312 : i32 to index
    %c0_75 = arith.constant 0 : index
    %335 = vector.load %arg14[%334, %c0_75] : memref<128x64xf32, #tpu.memory_space<vmem>>, vector<8x64xf32>
    tpu.vector_store %arg14[%334, %c0_75], %333 {strides = array<i32>} : memref<128x64xf32, #tpu.memory_space<vmem>>, vector<8x64xf32>,
    %c13_i32 = arith.constant 13 : i32
    %c8_i32_76 = arith.constant 8 : i32
    %336 = arith.muli %c13_i32, %c8_i32_76 : i32
    %337 = tpu.assume_multiple %336, 8 : i32
    %338 = arith.index_cast %337 : i32 to index
    %c0_77 = arith.constant 0 : index
    %339 = vector.load %arg13[%338, %c0_77] : memref<128x256xf32, #tpu.memory_space<vmem>>, vector<8x256xf32>
    %340 = arith.truncf %333 : vector<8x64xf32> to vector<8x64xbf16>
    %cst_78 = arith.constant dense<0.000000e+00> : vector<8x256xf32>
    %341 = tpu.matmul %340, %8, %cst_78 {dimension_numbers = #tpu.dot_dimension_numbers<[1], [0], [0], [1], [0, 0, 1, 1], [], []>} : vector<8x64xbf16>, vector<64x256xbf16>, vector<8x256xf32> -> vector<8x256xf32>
    %342 = arith.addf %339, %341 : vector<8x256xf32>
    %343 = vector.extract_strided_slice %342 {offsets = [0, 0], sizes = [8, 192], strides = [1, 1]} : vector<8x256xf32> to vector<8x192xf32>
    %344 = arith.negf %343 : vector<8x192xf32>
    %345 = math.exp %344 : vector<8x192xf32>
    %cst_79 = arith.constant 1.000000e+00 : f32
    %346 = vector.broadcast %cst_79 : f32 to vector<8x192xf32>
    %347 = arith.addf %346, %345 : vector<8x192xf32>
    %348 = arith.divf %346, %347 : vector<8x192xf32>
    %349 = vector.extract_strided_slice %348 {offsets = [0, 0], sizes = [8, 64], strides = [1, 1]} : vector<8x192xf32> to vector<8x64xf32>
    %350 = vector.extract_strided_slice %348 {offsets = [0, 64], sizes = [8, 64], strides = [1, 1]} : vector<8x192xf32> to vector<8x64xf32>
    %351 = vector.extract_strided_slice %348 {offsets = [0, 128], sizes = [8, 64], strides = [1, 1]} : vector<8x192xf32> to vector<8x64xf32>
    %352 = vector.extract_strided_slice %342 {offsets = [0, 192], sizes = [8, 64], strides = [1, 1]} : vector<8x256xf32> to vector<8x64xf32>
    %353 = math.tanh %352 : vector<8x64xf32>
    %354 = arith.mulf %350, %331 : vector<8x64xf32>
    %355 = arith.mulf %349, %353 : vector<8x64xf32>
    %356 = arith.addf %354, %355 : vector<8x64xf32>
    %357 = math.tanh %356 : vector<8x64xf32>
    %358 = arith.mulf %351, %357 : vector<8x64xf32>
    %359 = arith.index_cast %337 : i32 to index
    %c0_80 = arith.constant 0 : index
    %360 = vector.load %arg14[%359, %c0_80] : memref<128x64xf32, #tpu.memory_space<vmem>>, vector<8x64xf32>
    tpu.vector_store %arg14[%359, %c0_80], %358 {strides = array<i32>} : memref<128x64xf32, #tpu.memory_space<vmem>>, vector<8x64xf32>,
    %c14_i32 = arith.constant 14 : i32
    %c8_i32_81 = arith.constant 8 : i32
    %361 = arith.muli %c14_i32, %c8_i32_81 : i32
    %362 = tpu.assume_multiple %361, 8 : i32
    %363 = arith.index_cast %362 : i32 to index
    %c0_82 = arith.constant 0 : index
    %364 = vector.load %arg13[%363, %c0_82] : memref<128x256xf32, #tpu.memory_space<vmem>>, vector<8x256xf32>
    %365 = arith.truncf %358 : vector<8x64xf32> to vector<8x64xbf16>
    %cst_83 = arith.constant dense<0.000000e+00> : vector<8x256xf32>
    %366 = tpu.matmul %365, %8, %cst_83 {dimension_numbers = #tpu.dot_dimension_numbers<[1], [0], [0], [1], [0, 0, 1, 1], [], []>} : vector<8x64xbf16>, vector<64x256xbf16>, vector<8x256xf32> -> vector<8x256xf32>
    %367 = arith.addf %364, %366 : vector<8x256xf32>
    %368 = vector.extract_strided_slice %367 {offsets = [0, 0], sizes = [8, 192], strides = [1, 1]} : vector<8x256xf32> to vector<8x192xf32>
    %369 = arith.negf %368 : vector<8x192xf32>
    %370 = math.exp %369 : vector<8x192xf32>
    %cst_84 = arith.constant 1.000000e+00 : f32
    %371 = vector.broadcast %cst_84 : f32 to vector<8x192xf32>
    %372 = arith.addf %371, %370 : vector<8x192xf32>
    %373 = arith.divf %371, %372 : vector<8x192xf32>
    %374 = vector.extract_strided_slice %373 {offsets = [0, 0], sizes = [8, 64], strides = [1, 1]} : vector<8x192xf32> to vector<8x64xf32>
    %375 = vector.extract_strided_slice %373 {offsets = [0, 64], sizes = [8, 64], strides = [1, 1]} : vector<8x192xf32> to vector<8x64xf32>
    %376 = vector.extract_strided_slice %373 {offsets = [0, 128], sizes = [8, 64], strides = [1, 1]} : vector<8x192xf32> to vector<8x64xf32>
    %377 = vector.extract_strided_slice %367 {offsets = [0, 192], sizes = [8, 64], strides = [1, 1]} : vector<8x256xf32> to vector<8x64xf32>
    %378 = math.tanh %377 : vector<8x64xf32>
    %379 = arith.mulf %375, %356 : vector<8x64xf32>
    %380 = arith.mulf %374, %378 : vector<8x64xf32>
    %381 = arith.addf %379, %380 : vector<8x64xf32>
    %382 = math.tanh %381 : vector<8x64xf32>
    %383 = arith.mulf %376, %382 : vector<8x64xf32>
    %384 = arith.index_cast %362 : i32 to index
    %c0_85 = arith.constant 0 : index
    %385 = vector.load %arg14[%384, %c0_85] : memref<128x64xf32, #tpu.memory_space<vmem>>, vector<8x64xf32>
    tpu.vector_store %arg14[%384, %c0_85], %383 {strides = array<i32>} : memref<128x64xf32, #tpu.memory_space<vmem>>, vector<8x64xf32>,
    %c15_i32 = arith.constant 15 : i32
    %c8_i32_86 = arith.constant 8 : i32
    %386 = arith.muli %c15_i32, %c8_i32_86 : i32
    %387 = tpu.assume_multiple %386, 8 : i32
    %388 = arith.index_cast %387 : i32 to index
    %c0_87 = arith.constant 0 : index
    %389 = vector.load %arg13[%388, %c0_87] : memref<128x256xf32, #tpu.memory_space<vmem>>, vector<8x256xf32>
    %390 = arith.truncf %383 : vector<8x64xf32> to vector<8x64xbf16>
    %cst_88 = arith.constant dense<0.000000e+00> : vector<8x256xf32>
    %391 = tpu.matmul %390, %8, %cst_88 {dimension_numbers = #tpu.dot_dimension_numbers<[1], [0], [0], [1], [0, 0, 1, 1], [], []>} : vector<8x64xbf16>, vector<64x256xbf16>, vector<8x256xf32> -> vector<8x256xf32>
    %392 = arith.addf %389, %391 : vector<8x256xf32>
    %393 = vector.extract_strided_slice %392 {offsets = [0, 0], sizes = [8, 192], strides = [1, 1]} : vector<8x256xf32> to vector<8x192xf32>
    %394 = arith.negf %393 : vector<8x192xf32>
    %395 = math.exp %394 : vector<8x192xf32>
    %cst_89 = arith.constant 1.000000e+00 : f32
    %396 = vector.broadcast %cst_89 : f32 to vector<8x192xf32>
    %397 = arith.addf %396, %395 : vector<8x192xf32>
    %398 = arith.divf %396, %397 : vector<8x192xf32>
    %399 = vector.extract_strided_slice %398 {offsets = [0, 0], sizes = [8, 64], strides = [1, 1]} : vector<8x192xf32> to vector<8x64xf32>
    %400 = vector.extract_strided_slice %398 {offsets = [0, 64], sizes = [8, 64], strides = [1, 1]} : vector<8x192xf32> to vector<8x64xf32>
    %401 = vector.extract_strided_slice %398 {offsets = [0, 128], sizes = [8, 64], strides = [1, 1]} : vector<8x192xf32> to vector<8x64xf32>
    %402 = vector.extract_strided_slice %392 {offsets = [0, 192], sizes = [8, 64], strides = [1, 1]} : vector<8x256xf32> to vector<8x64xf32>
    %403 = math.tanh %402 : vector<8x64xf32>
    %404 = arith.mulf %400, %381 : vector<8x64xf32>
    %405 = arith.mulf %399, %403 : vector<8x64xf32>
    %406 = arith.addf %404, %405 : vector<8x64xf32>
    %407 = math.tanh %406 : vector<8x64xf32>
    %408 = arith.mulf %401, %407 : vector<8x64xf32>
    %409 = arith.index_cast %387 : i32 to index
    %c0_90 = arith.constant 0 : index
    %410 = vector.load %arg14[%409, %c0_90] : memref<128x64xf32, #tpu.memory_space<vmem>>, vector<8x64xf32>
    tpu.vector_store %arg14[%409, %c0_90], %408 {strides = array<i32>} : memref<128x64xf32, #tpu.memory_space<vmem>>, vector<8x64xf32>,
    %c16_i32 = arith.constant 16 : i32
    %c0_91 = arith.constant 0 : index
    %c0_92 = arith.constant 0 : index
    %411 = vector.load %arg14[%c0_91, %c0_92] : memref<128x64xf32, #tpu.memory_space<vmem>>, vector<128x64xf32>
    %412 = arith.truncf %411 : vector<128x64xf32> to vector<128x64xbf16>
    %c0_93 = arith.constant 0 : index
    %c0_94 = arith.constant 0 : index
    %413 = vector.load %arg4[%c0_93, %c0_94] : memref<64x256xbf16, #tpu.memory_space<vmem>>, vector<64x256xbf16>
    %cst_95 = arith.constant dense<0.000000e+00> : vector<128x256xf32>
    %414 = tpu.matmul %412, %413, %cst_95 {dimension_numbers = #tpu.dot_dimension_numbers<[1], [0], [0], [1], [0, 0, 1, 1], [], []>} : vector<128x64xbf16>, vector<64x256xbf16>, vector<128x256xf32> -> vector<128x256xf32>
    %c0_96 = arith.constant 0 : index
    %c0_97 = arith.constant 0 : index
    %415 = vector.load %arg6[%c0_96, %c0_97] : memref<1x256xf32, #tpu.memory_space<vmem>>, vector<1x256xf32>
    %416 = vector.broadcast %415 : vector<1x256xf32> to vector<128x256xf32>
    %417 = arith.addf %414, %416 : vector<128x256xf32>
    %c0_98 = arith.constant 0 : index
    %c0_99 = arith.constant 0 : index
    %418 = vector.load %arg13[%c0_98, %c0_99] : memref<128x256xf32, #tpu.memory_space<vmem>>, vector<128x256xf32>
    tpu.vector_store %arg13[%c0_98, %c0_99], %417 {strides = array<i32>} : memref<128x256xf32, #tpu.memory_space<vmem>>, vector<128x256xf32>,
    %c0_100 = arith.constant 0 : index
    %c0_101 = arith.constant 0 : index
    %419 = vector.load %arg5[%c0_100, %c0_101] : memref<64x256xbf16, #tpu.memory_space<vmem>>, vector<64x256xbf16>
    %cst_102 = arith.constant 0.000000e+00 : f32
    %420 = vector.broadcast %cst_102 : f32 to vector<8x64xf32>
    %cst_103 = arith.constant 0.000000e+00 : f32
    %421 = vector.broadcast %cst_103 : f32 to vector<8x64xf32>
    %c0_i32_104 = arith.constant 0 : i32
    %c8_i32_105 = arith.constant 8 : i32
    %422 = arith.muli %c0_i32_104, %c8_i32_105 : i32
    %423 = tpu.assume_multiple %422, 8 : i32
    %424 = arith.index_cast %423 : i32 to index
    %c0_106 = arith.constant 0 : index
    %425 = vector.load %arg13[%424, %c0_106] : memref<128x256xf32, #tpu.memory_space<vmem>>, vector<8x256xf32>
    %426 = arith.truncf %420 : vector<8x64xf32> to vector<8x64xbf16>
    %cst_107 = arith.constant dense<0.000000e+00> : vector<8x256xf32>
    %427 = tpu.matmul %426, %419, %cst_107 {dimension_numbers = #tpu.dot_dimension_numbers<[1], [0], [0], [1], [0, 0, 1, 1], [], []>} : vector<8x64xbf16>, vector<64x256xbf16>, vector<8x256xf32> -> vector<8x256xf32>
    %428 = arith.addf %425, %427 : vector<8x256xf32>
    %429 = vector.extract_strided_slice %428 {offsets = [0, 0], sizes = [8, 192], strides = [1, 1]} : vector<8x256xf32> to vector<8x192xf32>
    %430 = arith.negf %429 : vector<8x192xf32>
    %431 = math.exp %430 : vector<8x192xf32>
    %cst_108 = arith.constant 1.000000e+00 : f32
    %432 = vector.broadcast %cst_108 : f32 to vector<8x192xf32>
    %433 = arith.addf %432, %431 : vector<8x192xf32>
    %434 = arith.divf %432, %433 : vector<8x192xf32>
    %435 = vector.extract_strided_slice %434 {offsets = [0, 0], sizes = [8, 64], strides = [1, 1]} : vector<8x192xf32> to vector<8x64xf32>
    %436 = vector.extract_strided_slice %434 {offsets = [0, 64], sizes = [8, 64], strides = [1, 1]} : vector<8x192xf32> to vector<8x64xf32>
    %437 = vector.extract_strided_slice %434 {offsets = [0, 128], sizes = [8, 64], strides = [1, 1]} : vector<8x192xf32> to vector<8x64xf32>
    %438 = vector.extract_strided_slice %428 {offsets = [0, 192], sizes = [8, 64], strides = [1, 1]} : vector<8x256xf32> to vector<8x64xf32>
    %439 = math.tanh %438 : vector<8x64xf32>
    %440 = arith.mulf %436, %421 : vector<8x64xf32>
    %441 = arith.mulf %435, %439 : vector<8x64xf32>
    %442 = arith.addf %440, %441 : vector<8x64xf32>
    %443 = math.tanh %442 : vector<8x64xf32>
    %444 = arith.mulf %437, %443 : vector<8x64xf32>
    %445 = arith.index_cast %423 : i32 to index
    %c0_109 = arith.constant 0 : index
    %446 = vector.load %arg14[%445, %c0_109] : memref<128x64xf32, #tpu.memory_space<vmem>>, vector<8x64xf32>
    tpu.vector_store %arg14[%445, %c0_109], %444 {strides = array<i32>} : memref<128x64xf32, #tpu.memory_space<vmem>>, vector<8x64xf32>,
    %c1_i32_110 = arith.constant 1 : i32
    %c8_i32_111 = arith.constant 8 : i32
    %447 = arith.muli %c1_i32_110, %c8_i32_111 : i32
    %448 = tpu.assume_multiple %447, 8 : i32
    %449 = arith.index_cast %448 : i32 to index
    %c0_112 = arith.constant 0 : index
    %450 = vector.load %arg13[%449, %c0_112] : memref<128x256xf32, #tpu.memory_space<vmem>>, vector<8x256xf32>
    %451 = arith.truncf %444 : vector<8x64xf32> to vector<8x64xbf16>
    %cst_113 = arith.constant dense<0.000000e+00> : vector<8x256xf32>
    %452 = tpu.matmul %451, %419, %cst_113 {dimension_numbers = #tpu.dot_dimension_numbers<[1], [0], [0], [1], [0, 0, 1, 1], [], []>} : vector<8x64xbf16>, vector<64x256xbf16>, vector<8x256xf32> -> vector<8x256xf32>
    %453 = arith.addf %450, %452 : vector<8x256xf32>
    %454 = vector.extract_strided_slice %453 {offsets = [0, 0], sizes = [8, 192], strides = [1, 1]} : vector<8x256xf32> to vector<8x192xf32>
    %455 = arith.negf %454 : vector<8x192xf32>
    %456 = math.exp %455 : vector<8x192xf32>
    %cst_114 = arith.constant 1.000000e+00 : f32
    %457 = vector.broadcast %cst_114 : f32 to vector<8x192xf32>
    %458 = arith.addf %457, %456 : vector<8x192xf32>
    %459 = arith.divf %457, %458 : vector<8x192xf32>
    %460 = vector.extract_strided_slice %459 {offsets = [0, 0], sizes = [8, 64], strides = [1, 1]} : vector<8x192xf32> to vector<8x64xf32>
    %461 = vector.extract_strided_slice %459 {offsets = [0, 64], sizes = [8, 64], strides = [1, 1]} : vector<8x192xf32> to vector<8x64xf32>
    %462 = vector.extract_strided_slice %459 {offsets = [0, 128], sizes = [8, 64], strides = [1, 1]} : vector<8x192xf32> to vector<8x64xf32>
    %463 = vector.extract_strided_slice %453 {offsets = [0, 192], sizes = [8, 64], strides = [1, 1]} : vector<8x256xf32> to vector<8x64xf32>
    %464 = math.tanh %463 : vector<8x64xf32>
    %465 = arith.mulf %461, %442 : vector<8x64xf32>
    %466 = arith.mulf %460, %464 : vector<8x64xf32>
    %467 = arith.addf %465, %466 : vector<8x64xf32>
    %468 = math.tanh %467 : vector<8x64xf32>
    %469 = arith.mulf %462, %468 : vector<8x64xf32>
    %470 = arith.index_cast %448 : i32 to index
    %c0_115 = arith.constant 0 : index
    %471 = vector.load %arg14[%470, %c0_115] : memref<128x64xf32, #tpu.memory_space<vmem>>, vector<8x64xf32>
    tpu.vector_store %arg14[%470, %c0_115], %469 {strides = array<i32>} : memref<128x64xf32, #tpu.memory_space<vmem>>, vector<8x64xf32>,
    %c2_i32_116 = arith.constant 2 : i32
    %c8_i32_117 = arith.constant 8 : i32
    %472 = arith.muli %c2_i32_116, %c8_i32_117 : i32
    %473 = tpu.assume_multiple %472, 8 : i32
    %474 = arith.index_cast %473 : i32 to index
    %c0_118 = arith.constant 0 : index
    %475 = vector.load %arg13[%474, %c0_118] : memref<128x256xf32, #tpu.memory_space<vmem>>, vector<8x256xf32>
    %476 = arith.truncf %469 : vector<8x64xf32> to vector<8x64xbf16>
    %cst_119 = arith.constant dense<0.000000e+00> : vector<8x256xf32>
    %477 = tpu.matmul %476, %419, %cst_119 {dimension_numbers = #tpu.dot_dimension_numbers<[1], [0], [0], [1], [0, 0, 1, 1], [], []>} : vector<8x64xbf16>, vector<64x256xbf16>, vector<8x256xf32> -> vector<8x256xf32>
    %478 = arith.addf %475, %477 : vector<8x256xf32>
    %479 = vector.extract_strided_slice %478 {offsets = [0, 0], sizes = [8, 192], strides = [1, 1]} : vector<8x256xf32> to vector<8x192xf32>
    %480 = arith.negf %479 : vector<8x192xf32>
    %481 = math.exp %480 : vector<8x192xf32>
    %cst_120 = arith.constant 1.000000e+00 : f32
    %482 = vector.broadcast %cst_120 : f32 to vector<8x192xf32>
    %483 = arith.addf %482, %481 : vector<8x192xf32>
    %484 = arith.divf %482, %483 : vector<8x192xf32>
    %485 = vector.extract_strided_slice %484 {offsets = [0, 0], sizes = [8, 64], strides = [1, 1]} : vector<8x192xf32> to vector<8x64xf32>
    %486 = vector.extract_strided_slice %484 {offsets = [0, 64], sizes = [8, 64], strides = [1, 1]} : vector<8x192xf32> to vector<8x64xf32>
    %487 = vector.extract_strided_slice %484 {offsets = [0, 128], sizes = [8, 64], strides = [1, 1]} : vector<8x192xf32> to vector<8x64xf32>
    %488 = vector.extract_strided_slice %478 {offsets = [0, 192], sizes = [8, 64], strides = [1, 1]} : vector<8x256xf32> to vector<8x64xf32>
    %489 = math.tanh %488 : vector<8x64xf32>
    %490 = arith.mulf %486, %467 : vector<8x64xf32>
    %491 = arith.mulf %485, %489 : vector<8x64xf32>
    %492 = arith.addf %490, %491 : vector<8x64xf32>
    %493 = math.tanh %492 : vector<8x64xf32>
    %494 = arith.mulf %487, %493 : vector<8x64xf32>
    %495 = arith.index_cast %473 : i32 to index
    %c0_121 = arith.constant 0 : index
    %496 = vector.load %arg14[%495, %c0_121] : memref<128x64xf32, #tpu.memory_space<vmem>>, vector<8x64xf32>
    tpu.vector_store %arg14[%495, %c0_121], %494 {strides = array<i32>} : memref<128x64xf32, #tpu.memory_space<vmem>>, vector<8x64xf32>,
    %c3_i32_122 = arith.constant 3 : i32
    %c8_i32_123 = arith.constant 8 : i32
    %497 = arith.muli %c3_i32_122, %c8_i32_123 : i32
    %498 = tpu.assume_multiple %497, 8 : i32
    %499 = arith.index_cast %498 : i32 to index
    %c0_124 = arith.constant 0 : index
    %500 = vector.load %arg13[%499, %c0_124] : memref<128x256xf32, #tpu.memory_space<vmem>>, vector<8x256xf32>
    %501 = arith.truncf %494 : vector<8x64xf32> to vector<8x64xbf16>
    %cst_125 = arith.constant dense<0.000000e+00> : vector<8x256xf32>
    %502 = tpu.matmul %501, %419, %cst_125 {dimension_numbers = #tpu.dot_dimension_numbers<[1], [0], [0], [1], [0, 0, 1, 1], [], []>} : vector<8x64xbf16>, vector<64x256xbf16>, vector<8x256xf32> -> vector<8x256xf32>
    %503 = arith.addf %500, %502 : vector<8x256xf32>
    %504 = vector.extract_strided_slice %503 {offsets = [0, 0], sizes = [8, 192], strides = [1, 1]} : vector<8x256xf32> to vector<8x192xf32>
    %505 = arith.negf %504 : vector<8x192xf32>
    %506 = math.exp %505 : vector<8x192xf32>
    %cst_126 = arith.constant 1.000000e+00 : f32
    %507 = vector.broadcast %cst_126 : f32 to vector<8x192xf32>
    %508 = arith.addf %507, %506 : vector<8x192xf32>
    %509 = arith.divf %507, %508 : vector<8x192xf32>
    %510 = vector.extract_strided_slice %509 {offsets = [0, 0], sizes = [8, 64], strides = [1, 1]} : vector<8x192xf32> to vector<8x64xf32>
    %511 = vector.extract_strided_slice %509 {offsets = [0, 64], sizes = [8, 64], strides = [1, 1]} : vector<8x192xf32> to vector<8x64xf32>
    %512 = vector.extract_strided_slice %509 {offsets = [0, 128], sizes = [8, 64], strides = [1, 1]} : vector<8x192xf32> to vector<8x64xf32>
    %513 = vector.extract_strided_slice %503 {offsets = [0, 192], sizes = [8, 64], strides = [1, 1]} : vector<8x256xf32> to vector<8x64xf32>
    %514 = math.tanh %513 : vector<8x64xf32>
    %515 = arith.mulf %511, %492 : vector<8x64xf32>
    %516 = arith.mulf %510, %514 : vector<8x64xf32>
    %517 = arith.addf %515, %516 : vector<8x64xf32>
    %518 = math.tanh %517 : vector<8x64xf32>
    %519 = arith.mulf %512, %518 : vector<8x64xf32>
    %520 = arith.index_cast %498 : i32 to index
    %c0_127 = arith.constant 0 : index
    %521 = vector.load %arg14[%520, %c0_127] : memref<128x64xf32, #tpu.memory_space<vmem>>, vector<8x64xf32>
    tpu.vector_store %arg14[%520, %c0_127], %519 {strides = array<i32>} : memref<128x64xf32, #tpu.memory_space<vmem>>, vector<8x64xf32>,
    %c4_i32_128 = arith.constant 4 : i32
    %c8_i32_129 = arith.constant 8 : i32
    %522 = arith.muli %c4_i32_128, %c8_i32_129 : i32
    %523 = tpu.assume_multiple %522, 8 : i32
    %524 = arith.index_cast %523 : i32 to index
    %c0_130 = arith.constant 0 : index
    %525 = vector.load %arg13[%524, %c0_130] : memref<128x256xf32, #tpu.memory_space<vmem>>, vector<8x256xf32>
    %526 = arith.truncf %519 : vector<8x64xf32> to vector<8x64xbf16>
    %cst_131 = arith.constant dense<0.000000e+00> : vector<8x256xf32>
    %527 = tpu.matmul %526, %419, %cst_131 {dimension_numbers = #tpu.dot_dimension_numbers<[1], [0], [0], [1], [0, 0, 1, 1], [], []>} : vector<8x64xbf16>, vector<64x256xbf16>, vector<8x256xf32> -> vector<8x256xf32>
    %528 = arith.addf %525, %527 : vector<8x256xf32>
    %529 = vector.extract_strided_slice %528 {offsets = [0, 0], sizes = [8, 192], strides = [1, 1]} : vector<8x256xf32> to vector<8x192xf32>
    %530 = arith.negf %529 : vector<8x192xf32>
    %531 = math.exp %530 : vector<8x192xf32>
    %cst_132 = arith.constant 1.000000e+00 : f32
    %532 = vector.broadcast %cst_132 : f32 to vector<8x192xf32>
    %533 = arith.addf %532, %531 : vector<8x192xf32>
    %534 = arith.divf %532, %533 : vector<8x192xf32>
    %535 = vector.extract_strided_slice %534 {offsets = [0, 0], sizes = [8, 64], strides = [1, 1]} : vector<8x192xf32> to vector<8x64xf32>
    %536 = vector.extract_strided_slice %534 {offsets = [0, 64], sizes = [8, 64], strides = [1, 1]} : vector<8x192xf32> to vector<8x64xf32>
    %537 = vector.extract_strided_slice %534 {offsets = [0, 128], sizes = [8, 64], strides = [1, 1]} : vector<8x192xf32> to vector<8x64xf32>
    %538 = vector.extract_strided_slice %528 {offsets = [0, 192], sizes = [8, 64], strides = [1, 1]} : vector<8x256xf32> to vector<8x64xf32>
    %539 = math.tanh %538 : vector<8x64xf32>
    %540 = arith.mulf %536, %517 : vector<8x64xf32>
    %541 = arith.mulf %535, %539 : vector<8x64xf32>
    %542 = arith.addf %540, %541 : vector<8x64xf32>
    %543 = math.tanh %542 : vector<8x64xf32>
    %544 = arith.mulf %537, %543 : vector<8x64xf32>
    %545 = arith.index_cast %523 : i32 to index
    %c0_133 = arith.constant 0 : index
    %546 = vector.load %arg14[%545, %c0_133] : memref<128x64xf32, #tpu.memory_space<vmem>>, vector<8x64xf32>
    tpu.vector_store %arg14[%545, %c0_133], %544 {strides = array<i32>} : memref<128x64xf32, #tpu.memory_space<vmem>>, vector<8x64xf32>,
    %c5_i32_134 = arith.constant 5 : i32
    %c8_i32_135 = arith.constant 8 : i32
    %547 = arith.muli %c5_i32_134, %c8_i32_135 : i32
    %548 = tpu.assume_multiple %547, 8 : i32
    %549 = arith.index_cast %548 : i32 to index
    %c0_136 = arith.constant 0 : index
    %550 = vector.load %arg13[%549, %c0_136] : memref<128x256xf32, #tpu.memory_space<vmem>>, vector<8x256xf32>
    %551 = arith.truncf %544 : vector<8x64xf32> to vector<8x64xbf16>
    %cst_137 = arith.constant dense<0.000000e+00> : vector<8x256xf32>
    %552 = tpu.matmul %551, %419, %cst_137 {dimension_numbers = #tpu.dot_dimension_numbers<[1], [0], [0], [1], [0, 0, 1, 1], [], []>} : vector<8x64xbf16>, vector<64x256xbf16>, vector<8x256xf32> -> vector<8x256xf32>
    %553 = arith.addf %550, %552 : vector<8x256xf32>
    %554 = vector.extract_strided_slice %553 {offsets = [0, 0], sizes = [8, 192], strides = [1, 1]} : vector<8x256xf32> to vector<8x192xf32>
    %555 = arith.negf %554 : vector<8x192xf32>
    %556 = math.exp %555 : vector<8x192xf32>
    %cst_138 = arith.constant 1.000000e+00 : f32
    %557 = vector.broadcast %cst_138 : f32 to vector<8x192xf32>
    %558 = arith.addf %557, %556 : vector<8x192xf32>
    %559 = arith.divf %557, %558 : vector<8x192xf32>
    %560 = vector.extract_strided_slice %559 {offsets = [0, 0], sizes = [8, 64], strides = [1, 1]} : vector<8x192xf32> to vector<8x64xf32>
    %561 = vector.extract_strided_slice %559 {offsets = [0, 64], sizes = [8, 64], strides = [1, 1]} : vector<8x192xf32> to vector<8x64xf32>
    %562 = vector.extract_strided_slice %559 {offsets = [0, 128], sizes = [8, 64], strides = [1, 1]} : vector<8x192xf32> to vector<8x64xf32>
    %563 = vector.extract_strided_slice %553 {offsets = [0, 192], sizes = [8, 64], strides = [1, 1]} : vector<8x256xf32> to vector<8x64xf32>
    %564 = math.tanh %563 : vector<8x64xf32>
    %565 = arith.mulf %561, %542 : vector<8x64xf32>
    %566 = arith.mulf %560, %564 : vector<8x64xf32>
    %567 = arith.addf %565, %566 : vector<8x64xf32>
    %568 = math.tanh %567 : vector<8x64xf32>
    %569 = arith.mulf %562, %568 : vector<8x64xf32>
    %570 = arith.index_cast %548 : i32 to index
    %c0_139 = arith.constant 0 : index
    %571 = vector.load %arg14[%570, %c0_139] : memref<128x64xf32, #tpu.memory_space<vmem>>, vector<8x64xf32>
    tpu.vector_store %arg14[%570, %c0_139], %569 {strides = array<i32>} : memref<128x64xf32, #tpu.memory_space<vmem>>, vector<8x64xf32>,
    %c6_i32_140 = arith.constant 6 : i32
    %c8_i32_141 = arith.constant 8 : i32
    %572 = arith.muli %c6_i32_140, %c8_i32_141 : i32
    %573 = tpu.assume_multiple %572, 8 : i32
    %574 = arith.index_cast %573 : i32 to index
    %c0_142 = arith.constant 0 : index
    %575 = vector.load %arg13[%574, %c0_142] : memref<128x256xf32, #tpu.memory_space<vmem>>, vector<8x256xf32>
    %576 = arith.truncf %569 : vector<8x64xf32> to vector<8x64xbf16>
    %cst_143 = arith.constant dense<0.000000e+00> : vector<8x256xf32>
    %577 = tpu.matmul %576, %419, %cst_143 {dimension_numbers = #tpu.dot_dimension_numbers<[1], [0], [0], [1], [0, 0, 1, 1], [], []>} : vector<8x64xbf16>, vector<64x256xbf16>, vector<8x256xf32> -> vector<8x256xf32>
    %578 = arith.addf %575, %577 : vector<8x256xf32>
    %579 = vector.extract_strided_slice %578 {offsets = [0, 0], sizes = [8, 192], strides = [1, 1]} : vector<8x256xf32> to vector<8x192xf32>
    %580 = arith.negf %579 : vector<8x192xf32>
    %581 = math.exp %580 : vector<8x192xf32>
    %cst_144 = arith.constant 1.000000e+00 : f32
    %582 = vector.broadcast %cst_144 : f32 to vector<8x192xf32>
    %583 = arith.addf %582, %581 : vector<8x192xf32>
    %584 = arith.divf %582, %583 : vector<8x192xf32>
    %585 = vector.extract_strided_slice %584 {offsets = [0, 0], sizes = [8, 64], strides = [1, 1]} : vector<8x192xf32> to vector<8x64xf32>
    %586 = vector.extract_strided_slice %584 {offsets = [0, 64], sizes = [8, 64], strides = [1, 1]} : vector<8x192xf32> to vector<8x64xf32>
    %587 = vector.extract_strided_slice %584 {offsets = [0, 128], sizes = [8, 64], strides = [1, 1]} : vector<8x192xf32> to vector<8x64xf32>
    %588 = vector.extract_strided_slice %578 {offsets = [0, 192], sizes = [8, 64], strides = [1, 1]} : vector<8x256xf32> to vector<8x64xf32>
    %589 = math.tanh %588 : vector<8x64xf32>
    %590 = arith.mulf %586, %567 : vector<8x64xf32>
    %591 = arith.mulf %585, %589 : vector<8x64xf32>
    %592 = arith.addf %590, %591 : vector<8x64xf32>
    %593 = math.tanh %592 : vector<8x64xf32>
    %594 = arith.mulf %587, %593 : vector<8x64xf32>
    %595 = arith.index_cast %573 : i32 to index
    %c0_145 = arith.constant 0 : index
    %596 = vector.load %arg14[%595, %c0_145] : memref<128x64xf32, #tpu.memory_space<vmem>>, vector<8x64xf32>
    tpu.vector_store %arg14[%595, %c0_145], %594 {strides = array<i32>} : memref<128x64xf32, #tpu.memory_space<vmem>>, vector<8x64xf32>,
    %c7_i32_146 = arith.constant 7 : i32
    %c8_i32_147 = arith.constant 8 : i32
    %597 = arith.muli %c7_i32_146, %c8_i32_147 : i32
    %598 = tpu.assume_multiple %597, 8 : i32
    %599 = arith.index_cast %598 : i32 to index
    %c0_148 = arith.constant 0 : index
    %600 = vector.load %arg13[%599, %c0_148] : memref<128x256xf32, #tpu.memory_space<vmem>>, vector<8x256xf32>
    %601 = arith.truncf %594 : vector<8x64xf32> to vector<8x64xbf16>
    %cst_149 = arith.constant dense<0.000000e+00> : vector<8x256xf32>
    %602 = tpu.matmul %601, %419, %cst_149 {dimension_numbers = #tpu.dot_dimension_numbers<[1], [0], [0], [1], [0, 0, 1, 1], [], []>} : vector<8x64xbf16>, vector<64x256xbf16>, vector<8x256xf32> -> vector<8x256xf32>
    %603 = arith.addf %600, %602 : vector<8x256xf32>
    %604 = vector.extract_strided_slice %603 {offsets = [0, 0], sizes = [8, 192], strides = [1, 1]} : vector<8x256xf32> to vector<8x192xf32>
    %605 = arith.negf %604 : vector<8x192xf32>
    %606 = math.exp %605 : vector<8x192xf32>
    %cst_150 = arith.constant 1.000000e+00 : f32
    %607 = vector.broadcast %cst_150 : f32 to vector<8x192xf32>
    %608 = arith.addf %607, %606 : vector<8x192xf32>
    %609 = arith.divf %607, %608 : vector<8x192xf32>
    %610 = vector.extract_strided_slice %609 {offsets = [0, 0], sizes = [8, 64], strides = [1, 1]} : vector<8x192xf32> to vector<8x64xf32>
    %611 = vector.extract_strided_slice %609 {offsets = [0, 64], sizes = [8, 64], strides = [1, 1]} : vector<8x192xf32> to vector<8x64xf32>
    %612 = vector.extract_strided_slice %609 {offsets = [0, 128], sizes = [8, 64], strides = [1, 1]} : vector<8x192xf32> to vector<8x64xf32>
    %613 = vector.extract_strided_slice %603 {offsets = [0, 192], sizes = [8, 64], strides = [1, 1]} : vector<8x256xf32> to vector<8x64xf32>
    %614 = math.tanh %613 : vector<8x64xf32>
    %615 = arith.mulf %611, %592 : vector<8x64xf32>
    %616 = arith.mulf %610, %614 : vector<8x64xf32>
    %617 = arith.addf %615, %616 : vector<8x64xf32>
    %618 = math.tanh %617 : vector<8x64xf32>
    %619 = arith.mulf %612, %618 : vector<8x64xf32>
    %620 = arith.index_cast %598 : i32 to index
    %c0_151 = arith.constant 0 : index
    %621 = vector.load %arg14[%620, %c0_151] : memref<128x64xf32, #tpu.memory_space<vmem>>, vector<8x64xf32>
    tpu.vector_store %arg14[%620, %c0_151], %619 {strides = array<i32>} : memref<128x64xf32, #tpu.memory_space<vmem>>, vector<8x64xf32>,
    %c8_i32_152 = arith.constant 8 : i32
    %c8_i32_153 = arith.constant 8 : i32
    %622 = arith.muli %c8_i32_152, %c8_i32_153 : i32
    %623 = tpu.assume_multiple %622, 8 : i32
    %624 = arith.index_cast %623 : i32 to index
    %c0_154 = arith.constant 0 : index
    %625 = vector.load %arg13[%624, %c0_154] : memref<128x256xf32, #tpu.memory_space<vmem>>, vector<8x256xf32>
    %626 = arith.truncf %619 : vector<8x64xf32> to vector<8x64xbf16>
    %cst_155 = arith.constant dense<0.000000e+00> : vector<8x256xf32>
    %627 = tpu.matmul %626, %419, %cst_155 {dimension_numbers = #tpu.dot_dimension_numbers<[1], [0], [0], [1], [0, 0, 1, 1], [], []>} : vector<8x64xbf16>, vector<64x256xbf16>, vector<8x256xf32> -> vector<8x256xf32>
    %628 = arith.addf %625, %627 : vector<8x256xf32>
    %629 = vector.extract_strided_slice %628 {offsets = [0, 0], sizes = [8, 192], strides = [1, 1]} : vector<8x256xf32> to vector<8x192xf32>
    %630 = arith.negf %629 : vector<8x192xf32>
    %631 = math.exp %630 : vector<8x192xf32>
    %cst_156 = arith.constant 1.000000e+00 : f32
    %632 = vector.broadcast %cst_156 : f32 to vector<8x192xf32>
    %633 = arith.addf %632, %631 : vector<8x192xf32>
    %634 = arith.divf %632, %633 : vector<8x192xf32>
    %635 = vector.extract_strided_slice %634 {offsets = [0, 0], sizes = [8, 64], strides = [1, 1]} : vector<8x192xf32> to vector<8x64xf32>
    %636 = vector.extract_strided_slice %634 {offsets = [0, 64], sizes = [8, 64], strides = [1, 1]} : vector<8x192xf32> to vector<8x64xf32>
    %637 = vector.extract_strided_slice %634 {offsets = [0, 128], sizes = [8, 64], strides = [1, 1]} : vector<8x192xf32> to vector<8x64xf32>
    %638 = vector.extract_strided_slice %628 {offsets = [0, 192], sizes = [8, 64], strides = [1, 1]} : vector<8x256xf32> to vector<8x64xf32>
    %639 = math.tanh %638 : vector<8x64xf32>
    %640 = arith.mulf %636, %617 : vector<8x64xf32>
    %641 = arith.mulf %635, %639 : vector<8x64xf32>
    %642 = arith.addf %640, %641 : vector<8x64xf32>
    %643 = math.tanh %642 : vector<8x64xf32>
    %644 = arith.mulf %637, %643 : vector<8x64xf32>
    %645 = arith.index_cast %623 : i32 to index
    %c0_157 = arith.constant 0 : index
    %646 = vector.load %arg14[%645, %c0_157] : memref<128x64xf32, #tpu.memory_space<vmem>>, vector<8x64xf32>
    tpu.vector_store %arg14[%645, %c0_157], %644 {strides = array<i32>} : memref<128x64xf32, #tpu.memory_space<vmem>>, vector<8x64xf32>,
    %c9_i32_158 = arith.constant 9 : i32
    %c8_i32_159 = arith.constant 8 : i32
    %647 = arith.muli %c9_i32_158, %c8_i32_159 : i32
    %648 = tpu.assume_multiple %647, 8 : i32
    %649 = arith.index_cast %648 : i32 to index
    %c0_160 = arith.constant 0 : index
    %650 = vector.load %arg13[%649, %c0_160] : memref<128x256xf32, #tpu.memory_space<vmem>>, vector<8x256xf32>
    %651 = arith.truncf %644 : vector<8x64xf32> to vector<8x64xbf16>
    %cst_161 = arith.constant dense<0.000000e+00> : vector<8x256xf32>
    %652 = tpu.matmul %651, %419, %cst_161 {dimension_numbers = #tpu.dot_dimension_numbers<[1], [0], [0], [1], [0, 0, 1, 1], [], []>} : vector<8x64xbf16>, vector<64x256xbf16>, vector<8x256xf32> -> vector<8x256xf32>
    %653 = arith.addf %650, %652 : vector<8x256xf32>
    %654 = vector.extract_strided_slice %653 {offsets = [0, 0], sizes = [8, 192], strides = [1, 1]} : vector<8x256xf32> to vector<8x192xf32>
    %655 = arith.negf %654 : vector<8x192xf32>
    %656 = math.exp %655 : vector<8x192xf32>
    %cst_162 = arith.constant 1.000000e+00 : f32
    %657 = vector.broadcast %cst_162 : f32 to vector<8x192xf32>
    %658 = arith.addf %657, %656 : vector<8x192xf32>
    %659 = arith.divf %657, %658 : vector<8x192xf32>
    %660 = vector.extract_strided_slice %659 {offsets = [0, 0], sizes = [8, 64], strides = [1, 1]} : vector<8x192xf32> to vector<8x64xf32>
    %661 = vector.extract_strided_slice %659 {offsets = [0, 64], sizes = [8, 64], strides = [1, 1]} : vector<8x192xf32> to vector<8x64xf32>
    %662 = vector.extract_strided_slice %659 {offsets = [0, 128], sizes = [8, 64], strides = [1, 1]} : vector<8x192xf32> to vector<8x64xf32>
    %663 = vector.extract_strided_slice %653 {offsets = [0, 192], sizes = [8, 64], strides = [1, 1]} : vector<8x256xf32> to vector<8x64xf32>
    %664 = math.tanh %663 : vector<8x64xf32>
    %665 = arith.mulf %661, %642 : vector<8x64xf32>
    %666 = arith.mulf %660, %664 : vector<8x64xf32>
    %667 = arith.addf %665, %666 : vector<8x64xf32>
    %668 = math.tanh %667 : vector<8x64xf32>
    %669 = arith.mulf %662, %668 : vector<8x64xf32>
    %670 = arith.index_cast %648 : i32 to index
    %c0_163 = arith.constant 0 : index
    %671 = vector.load %arg14[%670, %c0_163] : memref<128x64xf32, #tpu.memory_space<vmem>>, vector<8x64xf32>
    tpu.vector_store %arg14[%670, %c0_163], %669 {strides = array<i32>} : memref<128x64xf32, #tpu.memory_space<vmem>>, vector<8x64xf32>,
    %c10_i32_164 = arith.constant 10 : i32
    %c8_i32_165 = arith.constant 8 : i32
    %672 = arith.muli %c10_i32_164, %c8_i32_165 : i32
    %673 = tpu.assume_multiple %672, 8 : i32
    %674 = arith.index_cast %673 : i32 to index
    %c0_166 = arith.constant 0 : index
    %675 = vector.load %arg13[%674, %c0_166] : memref<128x256xf32, #tpu.memory_space<vmem>>, vector<8x256xf32>
    %676 = arith.truncf %669 : vector<8x64xf32> to vector<8x64xbf16>
    %cst_167 = arith.constant dense<0.000000e+00> : vector<8x256xf32>
    %677 = tpu.matmul %676, %419, %cst_167 {dimension_numbers = #tpu.dot_dimension_numbers<[1], [0], [0], [1], [0, 0, 1, 1], [], []>} : vector<8x64xbf16>, vector<64x256xbf16>, vector<8x256xf32> -> vector<8x256xf32>
    %678 = arith.addf %675, %677 : vector<8x256xf32>
    %679 = vector.extract_strided_slice %678 {offsets = [0, 0], sizes = [8, 192], strides = [1, 1]} : vector<8x256xf32> to vector<8x192xf32>
    %680 = arith.negf %679 : vector<8x192xf32>
    %681 = math.exp %680 : vector<8x192xf32>
    %cst_168 = arith.constant 1.000000e+00 : f32
    %682 = vector.broadcast %cst_168 : f32 to vector<8x192xf32>
    %683 = arith.addf %682, %681 : vector<8x192xf32>
    %684 = arith.divf %682, %683 : vector<8x192xf32>
    %685 = vector.extract_strided_slice %684 {offsets = [0, 0], sizes = [8, 64], strides = [1, 1]} : vector<8x192xf32> to vector<8x64xf32>
    %686 = vector.extract_strided_slice %684 {offsets = [0, 64], sizes = [8, 64], strides = [1, 1]} : vector<8x192xf32> to vector<8x64xf32>
    %687 = vector.extract_strided_slice %684 {offsets = [0, 128], sizes = [8, 64], strides = [1, 1]} : vector<8x192xf32> to vector<8x64xf32>
    %688 = vector.extract_strided_slice %678 {offsets = [0, 192], sizes = [8, 64], strides = [1, 1]} : vector<8x256xf32> to vector<8x64xf32>
    %689 = math.tanh %688 : vector<8x64xf32>
    %690 = arith.mulf %686, %667 : vector<8x64xf32>
    %691 = arith.mulf %685, %689 : vector<8x64xf32>
    %692 = arith.addf %690, %691 : vector<8x64xf32>
    %693 = math.tanh %692 : vector<8x64xf32>
    %694 = arith.mulf %687, %693 : vector<8x64xf32>
    %695 = arith.index_cast %673 : i32 to index
    %c0_169 = arith.constant 0 : index
    %696 = vector.load %arg14[%695, %c0_169] : memref<128x64xf32, #tpu.memory_space<vmem>>, vector<8x64xf32>
    tpu.vector_store %arg14[%695, %c0_169], %694 {strides = array<i32>} : memref<128x64xf32, #tpu.memory_space<vmem>>, vector<8x64xf32>,
    %c11_i32_170 = arith.constant 11 : i32
    %c8_i32_171 = arith.constant 8 : i32
    %697 = arith.muli %c11_i32_170, %c8_i32_171 : i32
    %698 = tpu.assume_multiple %697, 8 : i32
    %699 = arith.index_cast %698 : i32 to index
    %c0_172 = arith.constant 0 : index
    %700 = vector.load %arg13[%699, %c0_172] : memref<128x256xf32, #tpu.memory_space<vmem>>, vector<8x256xf32>
    %701 = arith.truncf %694 : vector<8x64xf32> to vector<8x64xbf16>
    %cst_173 = arith.constant dense<0.000000e+00> : vector<8x256xf32>
    %702 = tpu.matmul %701, %419, %cst_173 {dimension_numbers = #tpu.dot_dimension_numbers<[1], [0], [0], [1], [0, 0, 1, 1], [], []>} : vector<8x64xbf16>, vector<64x256xbf16>, vector<8x256xf32> -> vector<8x256xf32>
    %703 = arith.addf %700, %702 : vector<8x256xf32>
    %704 = vector.extract_strided_slice %703 {offsets = [0, 0], sizes = [8, 192], strides = [1, 1]} : vector<8x256xf32> to vector<8x192xf32>
    %705 = arith.negf %704 : vector<8x192xf32>
    %706 = math.exp %705 : vector<8x192xf32>
    %cst_174 = arith.constant 1.000000e+00 : f32
    %707 = vector.broadcast %cst_174 : f32 to vector<8x192xf32>
    %708 = arith.addf %707, %706 : vector<8x192xf32>
    %709 = arith.divf %707, %708 : vector<8x192xf32>
    %710 = vector.extract_strided_slice %709 {offsets = [0, 0], sizes = [8, 64], strides = [1, 1]} : vector<8x192xf32> to vector<8x64xf32>
    %711 = vector.extract_strided_slice %709 {offsets = [0, 64], sizes = [8, 64], strides = [1, 1]} : vector<8x192xf32> to vector<8x64xf32>
    %712 = vector.extract_strided_slice %709 {offsets = [0, 128], sizes = [8, 64], strides = [1, 1]} : vector<8x192xf32> to vector<8x64xf32>
    %713 = vector.extract_strided_slice %703 {offsets = [0, 192], sizes = [8, 64], strides = [1, 1]} : vector<8x256xf32> to vector<8x64xf32>
    %714 = math.tanh %713 : vector<8x64xf32>
    %715 = arith.mulf %711, %692 : vector<8x64xf32>
    %716 = arith.mulf %710, %714 : vector<8x64xf32>
    %717 = arith.addf %715, %716 : vector<8x64xf32>
    %718 = math.tanh %717 : vector<8x64xf32>
    %719 = arith.mulf %712, %718 : vector<8x64xf32>
    %720 = arith.index_cast %698 : i32 to index
    %c0_175 = arith.constant 0 : index
    %721 = vector.load %arg14[%720, %c0_175] : memref<128x64xf32, #tpu.memory_space<vmem>>, vector<8x64xf32>
    tpu.vector_store %arg14[%720, %c0_175], %719 {strides = array<i32>} : memref<128x64xf32, #tpu.memory_space<vmem>>, vector<8x64xf32>,
    %c12_i32_176 = arith.constant 12 : i32
    %c8_i32_177 = arith.constant 8 : i32
    %722 = arith.muli %c12_i32_176, %c8_i32_177 : i32
    %723 = tpu.assume_multiple %722, 8 : i32
    %724 = arith.index_cast %723 : i32 to index
    %c0_178 = arith.constant 0 : index
    %725 = vector.load %arg13[%724, %c0_178] : memref<128x256xf32, #tpu.memory_space<vmem>>, vector<8x256xf32>
    %726 = arith.truncf %719 : vector<8x64xf32> to vector<8x64xbf16>
    %cst_179 = arith.constant dense<0.000000e+00> : vector<8x256xf32>
    %727 = tpu.matmul %726, %419, %cst_179 {dimension_numbers = #tpu.dot_dimension_numbers<[1], [0], [0], [1], [0, 0, 1, 1], [], []>} : vector<8x64xbf16>, vector<64x256xbf16>, vector<8x256xf32> -> vector<8x256xf32>
    %728 = arith.addf %725, %727 : vector<8x256xf32>
    %729 = vector.extract_strided_slice %728 {offsets = [0, 0], sizes = [8, 192], strides = [1, 1]} : vector<8x256xf32> to vector<8x192xf32>
    %730 = arith.negf %729 : vector<8x192xf32>
    %731 = math.exp %730 : vector<8x192xf32>
    %cst_180 = arith.constant 1.000000e+00 : f32
    %732 = vector.broadcast %cst_180 : f32 to vector<8x192xf32>
    %733 = arith.addf %732, %731 : vector<8x192xf32>
    %734 = arith.divf %732, %733 : vector<8x192xf32>
    %735 = vector.extract_strided_slice %734 {offsets = [0, 0], sizes = [8, 64], strides = [1, 1]} : vector<8x192xf32> to vector<8x64xf32>
    %736 = vector.extract_strided_slice %734 {offsets = [0, 64], sizes = [8, 64], strides = [1, 1]} : vector<8x192xf32> to vector<8x64xf32>
    %737 = vector.extract_strided_slice %734 {offsets = [0, 128], sizes = [8, 64], strides = [1, 1]} : vector<8x192xf32> to vector<8x64xf32>
    %738 = vector.extract_strided_slice %728 {offsets = [0, 192], sizes = [8, 64], strides = [1, 1]} : vector<8x256xf32> to vector<8x64xf32>
    %739 = math.tanh %738 : vector<8x64xf32>
    %740 = arith.mulf %736, %717 : vector<8x64xf32>
    %741 = arith.mulf %735, %739 : vector<8x64xf32>
    %742 = arith.addf %740, %741 : vector<8x64xf32>
    %743 = math.tanh %742 : vector<8x64xf32>
    %744 = arith.mulf %737, %743 : vector<8x64xf32>
    %745 = arith.index_cast %723 : i32 to index
    %c0_181 = arith.constant 0 : index
    %746 = vector.load %arg14[%745, %c0_181] : memref<128x64xf32, #tpu.memory_space<vmem>>, vector<8x64xf32>
    tpu.vector_store %arg14[%745, %c0_181], %744 {strides = array<i32>} : memref<128x64xf32, #tpu.memory_space<vmem>>, vector<8x64xf32>,
    %c13_i32_182 = arith.constant 13 : i32
    %c8_i32_183 = arith.constant 8 : i32
    %747 = arith.muli %c13_i32_182, %c8_i32_183 : i32
    %748 = tpu.assume_multiple %747, 8 : i32
    %749 = arith.index_cast %748 : i32 to index
    %c0_184 = arith.constant 0 : index
    %750 = vector.load %arg13[%749, %c0_184] : memref<128x256xf32, #tpu.memory_space<vmem>>, vector<8x256xf32>
    %751 = arith.truncf %744 : vector<8x64xf32> to vector<8x64xbf16>
    %cst_185 = arith.constant dense<0.000000e+00> : vector<8x256xf32>
    %752 = tpu.matmul %751, %419, %cst_185 {dimension_numbers = #tpu.dot_dimension_numbers<[1], [0], [0], [1], [0, 0, 1, 1], [], []>} : vector<8x64xbf16>, vector<64x256xbf16>, vector<8x256xf32> -> vector<8x256xf32>
    %753 = arith.addf %750, %752 : vector<8x256xf32>
    %754 = vector.extract_strided_slice %753 {offsets = [0, 0], sizes = [8, 192], strides = [1, 1]} : vector<8x256xf32> to vector<8x192xf32>
    %755 = arith.negf %754 : vector<8x192xf32>
    %756 = math.exp %755 : vector<8x192xf32>
    %cst_186 = arith.constant 1.000000e+00 : f32
    %757 = vector.broadcast %cst_186 : f32 to vector<8x192xf32>
    %758 = arith.addf %757, %756 : vector<8x192xf32>
    %759 = arith.divf %757, %758 : vector<8x192xf32>
    %760 = vector.extract_strided_slice %759 {offsets = [0, 0], sizes = [8, 64], strides = [1, 1]} : vector<8x192xf32> to vector<8x64xf32>
    %761 = vector.extract_strided_slice %759 {offsets = [0, 64], sizes = [8, 64], strides = [1, 1]} : vector<8x192xf32> to vector<8x64xf32>
    %762 = vector.extract_strided_slice %759 {offsets = [0, 128], sizes = [8, 64], strides = [1, 1]} : vector<8x192xf32> to vector<8x64xf32>
    %763 = vector.extract_strided_slice %753 {offsets = [0, 192], sizes = [8, 64], strides = [1, 1]} : vector<8x256xf32> to vector<8x64xf32>
    %764 = math.tanh %763 : vector<8x64xf32>
    %765 = arith.mulf %761, %742 : vector<8x64xf32>
    %766 = arith.mulf %760, %764 : vector<8x64xf32>
    %767 = arith.addf %765, %766 : vector<8x64xf32>
    %768 = math.tanh %767 : vector<8x64xf32>
    %769 = arith.mulf %762, %768 : vector<8x64xf32>
    %770 = arith.index_cast %748 : i32 to index
    %c0_187 = arith.constant 0 : index
    %771 = vector.load %arg14[%770, %c0_187] : memref<128x64xf32, #tpu.memory_space<vmem>>, vector<8x64xf32>
    tpu.vector_store %arg14[%770, %c0_187], %769 {strides = array<i32>} : memref<128x64xf32, #tpu.memory_space<vmem>>, vector<8x64xf32>,
    %c14_i32_188 = arith.constant 14 : i32
    %c8_i32_189 = arith.constant 8 : i32
    %772 = arith.muli %c14_i32_188, %c8_i32_189 : i32
    %773 = tpu.assume_multiple %772, 8 : i32
    %774 = arith.index_cast %773 : i32 to index
    %c0_190 = arith.constant 0 : index
    %775 = vector.load %arg13[%774, %c0_190] : memref<128x256xf32, #tpu.memory_space<vmem>>, vector<8x256xf32>
    %776 = arith.truncf %769 : vector<8x64xf32> to vector<8x64xbf16>
    %cst_191 = arith.constant dense<0.000000e+00> : vector<8x256xf32>
    %777 = tpu.matmul %776, %419, %cst_191 {dimension_numbers = #tpu.dot_dimension_numbers<[1], [0], [0], [1], [0, 0, 1, 1], [], []>} : vector<8x64xbf16>, vector<64x256xbf16>, vector<8x256xf32> -> vector<8x256xf32>
    %778 = arith.addf %775, %777 : vector<8x256xf32>
    %779 = vector.extract_strided_slice %778 {offsets = [0, 0], sizes = [8, 192], strides = [1, 1]} : vector<8x256xf32> to vector<8x192xf32>
    %780 = arith.negf %779 : vector<8x192xf32>
    %781 = math.exp %780 : vector<8x192xf32>
    %cst_192 = arith.constant 1.000000e+00 : f32
    %782 = vector.broadcast %cst_192 : f32 to vector<8x192xf32>
    %783 = arith.addf %782, %781 : vector<8x192xf32>
    %784 = arith.divf %782, %783 : vector<8x192xf32>
    %785 = vector.extract_strided_slice %784 {offsets = [0, 0], sizes = [8, 64], strides = [1, 1]} : vector<8x192xf32> to vector<8x64xf32>
    %786 = vector.extract_strided_slice %784 {offsets = [0, 64], sizes = [8, 64], strides = [1, 1]} : vector<8x192xf32> to vector<8x64xf32>
    %787 = vector.extract_strided_slice %784 {offsets = [0, 128], sizes = [8, 64], strides = [1, 1]} : vector<8x192xf32> to vector<8x64xf32>
    %788 = vector.extract_strided_slice %778 {offsets = [0, 192], sizes = [8, 64], strides = [1, 1]} : vector<8x256xf32> to vector<8x64xf32>
    %789 = math.tanh %788 : vector<8x64xf32>
    %790 = arith.mulf %786, %767 : vector<8x64xf32>
    %791 = arith.mulf %785, %789 : vector<8x64xf32>
    %792 = arith.addf %790, %791 : vector<8x64xf32>
    %793 = math.tanh %792 : vector<8x64xf32>
    %794 = arith.mulf %787, %793 : vector<8x64xf32>
    %795 = arith.index_cast %773 : i32 to index
    %c0_193 = arith.constant 0 : index
    %796 = vector.load %arg14[%795, %c0_193] : memref<128x64xf32, #tpu.memory_space<vmem>>, vector<8x64xf32>
    tpu.vector_store %arg14[%795, %c0_193], %794 {strides = array<i32>} : memref<128x64xf32, #tpu.memory_space<vmem>>, vector<8x64xf32>,
    %c15_i32_194 = arith.constant 15 : i32
    %c8_i32_195 = arith.constant 8 : i32
    %797 = arith.muli %c15_i32_194, %c8_i32_195 : i32
    %798 = tpu.assume_multiple %797, 8 : i32
    %799 = arith.index_cast %798 : i32 to index
    %c0_196 = arith.constant 0 : index
    %800 = vector.load %arg13[%799, %c0_196] : memref<128x256xf32, #tpu.memory_space<vmem>>, vector<8x256xf32>
    %801 = arith.truncf %794 : vector<8x64xf32> to vector<8x64xbf16>
    %cst_197 = arith.constant dense<0.000000e+00> : vector<8x256xf32>
    %802 = tpu.matmul %801, %419, %cst_197 {dimension_numbers = #tpu.dot_dimension_numbers<[1], [0], [0], [1], [0, 0, 1, 1], [], []>} : vector<8x64xbf16>, vector<64x256xbf16>, vector<8x256xf32> -> vector<8x256xf32>
    %803 = arith.addf %800, %802 : vector<8x256xf32>
    %804 = vector.extract_strided_slice %803 {offsets = [0, 0], sizes = [8, 192], strides = [1, 1]} : vector<8x256xf32> to vector<8x192xf32>
    %805 = arith.negf %804 : vector<8x192xf32>
    %806 = math.exp %805 : vector<8x192xf32>
    %cst_198 = arith.constant 1.000000e+00 : f32
    %807 = vector.broadcast %cst_198 : f32 to vector<8x192xf32>
    %808 = arith.addf %807, %806 : vector<8x192xf32>
    %809 = arith.divf %807, %808 : vector<8x192xf32>
    %810 = vector.extract_strided_slice %809 {offsets = [0, 0], sizes = [8, 64], strides = [1, 1]} : vector<8x192xf32> to vector<8x64xf32>
    %811 = vector.extract_strided_slice %809 {offsets = [0, 64], sizes = [8, 64], strides = [1, 1]} : vector<8x192xf32> to vector<8x64xf32>
    %812 = vector.extract_strided_slice %809 {offsets = [0, 128], sizes = [8, 64], strides = [1, 1]} : vector<8x192xf32> to vector<8x64xf32>
    %813 = vector.extract_strided_slice %803 {offsets = [0, 192], sizes = [8, 64], strides = [1, 1]} : vector<8x256xf32> to vector<8x64xf32>
    %814 = math.tanh %813 : vector<8x64xf32>
    %815 = arith.mulf %811, %792 : vector<8x64xf32>
    %816 = arith.mulf %810, %814 : vector<8x64xf32>
    %817 = arith.addf %815, %816 : vector<8x64xf32>
    %818 = math.tanh %817 : vector<8x64xf32>
    %819 = arith.mulf %812, %818 : vector<8x64xf32>
    %820 = arith.index_cast %798 : i32 to index
    %c0_199 = arith.constant 0 : index
    %821 = vector.load %arg14[%820, %c0_199] : memref<128x64xf32, #tpu.memory_space<vmem>>, vector<8x64xf32>
    tpu.vector_store %arg14[%820, %c0_199], %819 {strides = array<i32>} : memref<128x64xf32, #tpu.memory_space<vmem>>, vector<8x64xf32>,
    %c16_i32_200 = arith.constant 16 : i32
    %c0_201 = arith.constant 0 : index
    %c0_202 = arith.constant 0 : index
    %822 = vector.load %arg14[%c0_201, %c0_202] : memref<128x64xf32, #tpu.memory_space<vmem>>, vector<128x64xf32>
    %823 = arith.truncf %822 : vector<128x64xf32> to vector<128x64xbf16>
    %c0_203 = arith.constant 0 : index
    %c0_204 = arith.constant 0 : index
    %824 = vector.load %arg7[%c0_203, %c0_204] : memref<64x256xbf16, #tpu.memory_space<vmem>>, vector<64x256xbf16>
    %cst_205 = arith.constant dense<0.000000e+00> : vector<128x256xf32>
    %825 = tpu.matmul %823, %824, %cst_205 {dimension_numbers = #tpu.dot_dimension_numbers<[1], [0], [0], [1], [0, 0, 1, 1], [], []>} : vector<128x64xbf16>, vector<64x256xbf16>, vector<128x256xf32> -> vector<128x256xf32>
    %c0_206 = arith.constant 0 : index
    %c0_207 = arith.constant 0 : index
    %826 = vector.load %arg9[%c0_206, %c0_207] : memref<1x256xf32, #tpu.memory_space<vmem>>, vector<1x256xf32>
    %827 = vector.broadcast %826 : vector<1x256xf32> to vector<128x256xf32>
    %828 = arith.addf %825, %827 : vector<128x256xf32>
    %c0_208 = arith.constant 0 : index
    %c0_209 = arith.constant 0 : index
    %829 = vector.load %arg13[%c0_208, %c0_209] : memref<128x256xf32, #tpu.memory_space<vmem>>, vector<128x256xf32>
    tpu.vector_store %arg13[%c0_208, %c0_209], %828 {strides = array<i32>} : memref<128x256xf32, #tpu.memory_space<vmem>>, vector<128x256xf32>,
    %c0_210 = arith.constant 0 : index
    %c0_211 = arith.constant 0 : index
    %830 = vector.load %arg8[%c0_210, %c0_211] : memref<64x256xbf16, #tpu.memory_space<vmem>>, vector<64x256xbf16>
    %cst_212 = arith.constant 0.000000e+00 : f32
    %831 = vector.broadcast %cst_212 : f32 to vector<8x64xf32>
    %cst_213 = arith.constant 0.000000e+00 : f32
    %832 = vector.broadcast %cst_213 : f32 to vector<8x64xf32>
    %c0_i32_214 = arith.constant 0 : i32
    %c8_i32_215 = arith.constant 8 : i32
    %833 = arith.muli %c0_i32_214, %c8_i32_215 : i32
    %834 = tpu.assume_multiple %833, 8 : i32
    %835 = arith.index_cast %834 : i32 to index
    %c0_216 = arith.constant 0 : index
    %836 = vector.load %arg13[%835, %c0_216] : memref<128x256xf32, #tpu.memory_space<vmem>>, vector<8x256xf32>
    %837 = arith.truncf %831 : vector<8x64xf32> to vector<8x64xbf16>
    %cst_217 = arith.constant dense<0.000000e+00> : vector<8x256xf32>
    %838 = tpu.matmul %837, %830, %cst_217 {dimension_numbers = #tpu.dot_dimension_numbers<[1], [0], [0], [1], [0, 0, 1, 1], [], []>} : vector<8x64xbf16>, vector<64x256xbf16>, vector<8x256xf32> -> vector<8x256xf32>
    %839 = arith.addf %836, %838 : vector<8x256xf32>
    %840 = vector.extract_strided_slice %839 {offsets = [0, 0], sizes = [8, 192], strides = [1, 1]} : vector<8x256xf32> to vector<8x192xf32>
    %841 = arith.negf %840 : vector<8x192xf32>
    %842 = math.exp %841 : vector<8x192xf32>
    %cst_218 = arith.constant 1.000000e+00 : f32
    %843 = vector.broadcast %cst_218 : f32 to vector<8x192xf32>
    %844 = arith.addf %843, %842 : vector<8x192xf32>
    %845 = arith.divf %843, %844 : vector<8x192xf32>
    %846 = vector.extract_strided_slice %845 {offsets = [0, 0], sizes = [8, 64], strides = [1, 1]} : vector<8x192xf32> to vector<8x64xf32>
    %847 = vector.extract_strided_slice %845 {offsets = [0, 64], sizes = [8, 64], strides = [1, 1]} : vector<8x192xf32> to vector<8x64xf32>
    %848 = vector.extract_strided_slice %845 {offsets = [0, 128], sizes = [8, 64], strides = [1, 1]} : vector<8x192xf32> to vector<8x64xf32>
    %849 = vector.extract_strided_slice %839 {offsets = [0, 192], sizes = [8, 64], strides = [1, 1]} : vector<8x256xf32> to vector<8x64xf32>
    %850 = math.tanh %849 : vector<8x64xf32>
    %851 = arith.mulf %847, %832 : vector<8x64xf32>
    %852 = arith.mulf %846, %850 : vector<8x64xf32>
    %853 = arith.addf %851, %852 : vector<8x64xf32>
    %854 = math.tanh %853 : vector<8x64xf32>
    %855 = arith.mulf %848, %854 : vector<8x64xf32>
    %c1_i32_219 = arith.constant 1 : i32
    %c8_i32_220 = arith.constant 8 : i32
    %856 = arith.muli %c1_i32_219, %c8_i32_220 : i32
    %857 = tpu.assume_multiple %856, 8 : i32
    %858 = arith.index_cast %857 : i32 to index
    %c0_221 = arith.constant 0 : index
    %859 = vector.load %arg13[%858, %c0_221] : memref<128x256xf32, #tpu.memory_space<vmem>>, vector<8x256xf32>
    %860 = arith.truncf %855 : vector<8x64xf32> to vector<8x64xbf16>
    %cst_222 = arith.constant dense<0.000000e+00> : vector<8x256xf32>
    %861 = tpu.matmul %860, %830, %cst_222 {dimension_numbers = #tpu.dot_dimension_numbers<[1], [0], [0], [1], [0, 0, 1, 1], [], []>} : vector<8x64xbf16>, vector<64x256xbf16>, vector<8x256xf32> -> vector<8x256xf32>
    %862 = arith.addf %859, %861 : vector<8x256xf32>
    %863 = vector.extract_strided_slice %862 {offsets = [0, 0], sizes = [8, 192], strides = [1, 1]} : vector<8x256xf32> to vector<8x192xf32>
    %864 = arith.negf %863 : vector<8x192xf32>
    %865 = math.exp %864 : vector<8x192xf32>
    %cst_223 = arith.constant 1.000000e+00 : f32
    %866 = vector.broadcast %cst_223 : f32 to vector<8x192xf32>
    %867 = arith.addf %866, %865 : vector<8x192xf32>
    %868 = arith.divf %866, %867 : vector<8x192xf32>
    %869 = vector.extract_strided_slice %868 {offsets = [0, 0], sizes = [8, 64], strides = [1, 1]} : vector<8x192xf32> to vector<8x64xf32>
    %870 = vector.extract_strided_slice %868 {offsets = [0, 64], sizes = [8, 64], strides = [1, 1]} : vector<8x192xf32> to vector<8x64xf32>
    %871 = vector.extract_strided_slice %868 {offsets = [0, 128], sizes = [8, 64], strides = [1, 1]} : vector<8x192xf32> to vector<8x64xf32>
    %872 = vector.extract_strided_slice %862 {offsets = [0, 192], sizes = [8, 64], strides = [1, 1]} : vector<8x256xf32> to vector<8x64xf32>
    %873 = math.tanh %872 : vector<8x64xf32>
    %874 = arith.mulf %870, %853 : vector<8x64xf32>
    %875 = arith.mulf %869, %873 : vector<8x64xf32>
    %876 = arith.addf %874, %875 : vector<8x64xf32>
    %877 = math.tanh %876 : vector<8x64xf32>
    %878 = arith.mulf %871, %877 : vector<8x64xf32>
    %c2_i32_224 = arith.constant 2 : i32
    %c8_i32_225 = arith.constant 8 : i32
    %879 = arith.muli %c2_i32_224, %c8_i32_225 : i32
    %880 = tpu.assume_multiple %879, 8 : i32
    %881 = arith.index_cast %880 : i32 to index
    %c0_226 = arith.constant 0 : index
    %882 = vector.load %arg13[%881, %c0_226] : memref<128x256xf32, #tpu.memory_space<vmem>>, vector<8x256xf32>
    %883 = arith.truncf %878 : vector<8x64xf32> to vector<8x64xbf16>
    %cst_227 = arith.constant dense<0.000000e+00> : vector<8x256xf32>
    %884 = tpu.matmul %883, %830, %cst_227 {dimension_numbers = #tpu.dot_dimension_numbers<[1], [0], [0], [1], [0, 0, 1, 1], [], []>} : vector<8x64xbf16>, vector<64x256xbf16>, vector<8x256xf32> -> vector<8x256xf32>
    %885 = arith.addf %882, %884 : vector<8x256xf32>
    %886 = vector.extract_strided_slice %885 {offsets = [0, 0], sizes = [8, 192], strides = [1, 1]} : vector<8x256xf32> to vector<8x192xf32>
    %887 = arith.negf %886 : vector<8x192xf32>
    %888 = math.exp %887 : vector<8x192xf32>
    %cst_228 = arith.constant 1.000000e+00 : f32
    %889 = vector.broadcast %cst_228 : f32 to vector<8x192xf32>
    %890 = arith.addf %889, %888 : vector<8x192xf32>
    %891 = arith.divf %889, %890 : vector<8x192xf32>
    %892 = vector.extract_strided_slice %891 {offsets = [0, 0], sizes = [8, 64], strides = [1, 1]} : vector<8x192xf32> to vector<8x64xf32>
    %893 = vector.extract_strided_slice %891 {offsets = [0, 64], sizes = [8, 64], strides = [1, 1]} : vector<8x192xf32> to vector<8x64xf32>
    %894 = vector.extract_strided_slice %891 {offsets = [0, 128], sizes = [8, 64], strides = [1, 1]} : vector<8x192xf32> to vector<8x64xf32>
    %895 = vector.extract_strided_slice %885 {offsets = [0, 192], sizes = [8, 64], strides = [1, 1]} : vector<8x256xf32> to vector<8x64xf32>
    %896 = math.tanh %895 : vector<8x64xf32>
    %897 = arith.mulf %893, %876 : vector<8x64xf32>
    %898 = arith.mulf %892, %896 : vector<8x64xf32>
    %899 = arith.addf %897, %898 : vector<8x64xf32>
    %900 = math.tanh %899 : vector<8x64xf32>
    %901 = arith.mulf %894, %900 : vector<8x64xf32>
    %c3_i32_229 = arith.constant 3 : i32
    %c8_i32_230 = arith.constant 8 : i32
    %902 = arith.muli %c3_i32_229, %c8_i32_230 : i32
    %903 = tpu.assume_multiple %902, 8 : i32
    %904 = arith.index_cast %903 : i32 to index
    %c0_231 = arith.constant 0 : index
    %905 = vector.load %arg13[%904, %c0_231] : memref<128x256xf32, #tpu.memory_space<vmem>>, vector<8x256xf32>
    %906 = arith.truncf %901 : vector<8x64xf32> to vector<8x64xbf16>
    %cst_232 = arith.constant dense<0.000000e+00> : vector<8x256xf32>
    %907 = tpu.matmul %906, %830, %cst_232 {dimension_numbers = #tpu.dot_dimension_numbers<[1], [0], [0], [1], [0, 0, 1, 1], [], []>} : vector<8x64xbf16>, vector<64x256xbf16>, vector<8x256xf32> -> vector<8x256xf32>
    %908 = arith.addf %905, %907 : vector<8x256xf32>
    %909 = vector.extract_strided_slice %908 {offsets = [0, 0], sizes = [8, 192], strides = [1, 1]} : vector<8x256xf32> to vector<8x192xf32>
    %910 = arith.negf %909 : vector<8x192xf32>
    %911 = math.exp %910 : vector<8x192xf32>
    %cst_233 = arith.constant 1.000000e+00 : f32
    %912 = vector.broadcast %cst_233 : f32 to vector<8x192xf32>
    %913 = arith.addf %912, %911 : vector<8x192xf32>
    %914 = arith.divf %912, %913 : vector<8x192xf32>
    %915 = vector.extract_strided_slice %914 {offsets = [0, 0], sizes = [8, 64], strides = [1, 1]} : vector<8x192xf32> to vector<8x64xf32>
    %916 = vector.extract_strided_slice %914 {offsets = [0, 64], sizes = [8, 64], strides = [1, 1]} : vector<8x192xf32> to vector<8x64xf32>
    %917 = vector.extract_strided_slice %914 {offsets = [0, 128], sizes = [8, 64], strides = [1, 1]} : vector<8x192xf32> to vector<8x64xf32>
    %918 = vector.extract_strided_slice %908 {offsets = [0, 192], sizes = [8, 64], strides = [1, 1]} : vector<8x256xf32> to vector<8x64xf32>
    %919 = math.tanh %918 : vector<8x64xf32>
    %920 = arith.mulf %916, %899 : vector<8x64xf32>
    %921 = arith.mulf %915, %919 : vector<8x64xf32>
    %922 = arith.addf %920, %921 : vector<8x64xf32>
    %923 = math.tanh %922 : vector<8x64xf32>
    %924 = arith.mulf %917, %923 : vector<8x64xf32>
    %c4_i32_234 = arith.constant 4 : i32
    %c8_i32_235 = arith.constant 8 : i32
    %925 = arith.muli %c4_i32_234, %c8_i32_235 : i32
    %926 = tpu.assume_multiple %925, 8 : i32
    %927 = arith.index_cast %926 : i32 to index
    %c0_236 = arith.constant 0 : index
    %928 = vector.load %arg13[%927, %c0_236] : memref<128x256xf32, #tpu.memory_space<vmem>>, vector<8x256xf32>
    %929 = arith.truncf %924 : vector<8x64xf32> to vector<8x64xbf16>
    %cst_237 = arith.constant dense<0.000000e+00> : vector<8x256xf32>
    %930 = tpu.matmul %929, %830, %cst_237 {dimension_numbers = #tpu.dot_dimension_numbers<[1], [0], [0], [1], [0, 0, 1, 1], [], []>} : vector<8x64xbf16>, vector<64x256xbf16>, vector<8x256xf32> -> vector<8x256xf32>
    %931 = arith.addf %928, %930 : vector<8x256xf32>
    %932 = vector.extract_strided_slice %931 {offsets = [0, 0], sizes = [8, 192], strides = [1, 1]} : vector<8x256xf32> to vector<8x192xf32>
    %933 = arith.negf %932 : vector<8x192xf32>
    %934 = math.exp %933 : vector<8x192xf32>
    %cst_238 = arith.constant 1.000000e+00 : f32
    %935 = vector.broadcast %cst_238 : f32 to vector<8x192xf32>
    %936 = arith.addf %935, %934 : vector<8x192xf32>
    %937 = arith.divf %935, %936 : vector<8x192xf32>
    %938 = vector.extract_strided_slice %937 {offsets = [0, 0], sizes = [8, 64], strides = [1, 1]} : vector<8x192xf32> to vector<8x64xf32>
    %939 = vector.extract_strided_slice %937 {offsets = [0, 64], sizes = [8, 64], strides = [1, 1]} : vector<8x192xf32> to vector<8x64xf32>
    %940 = vector.extract_strided_slice %937 {offsets = [0, 128], sizes = [8, 64], strides = [1, 1]} : vector<8x192xf32> to vector<8x64xf32>
    %941 = vector.extract_strided_slice %931 {offsets = [0, 192], sizes = [8, 64], strides = [1, 1]} : vector<8x256xf32> to vector<8x64xf32>
    %942 = math.tanh %941 : vector<8x64xf32>
    %943 = arith.mulf %939, %922 : vector<8x64xf32>
    %944 = arith.mulf %938, %942 : vector<8x64xf32>
    %945 = arith.addf %943, %944 : vector<8x64xf32>
    %946 = math.tanh %945 : vector<8x64xf32>
    %947 = arith.mulf %940, %946 : vector<8x64xf32>
    %c5_i32_239 = arith.constant 5 : i32
    %c8_i32_240 = arith.constant 8 : i32
    %948 = arith.muli %c5_i32_239, %c8_i32_240 : i32
    %949 = tpu.assume_multiple %948, 8 : i32
    %950 = arith.index_cast %949 : i32 to index
    %c0_241 = arith.constant 0 : index
    %951 = vector.load %arg13[%950, %c0_241] : memref<128x256xf32, #tpu.memory_space<vmem>>, vector<8x256xf32>
    %952 = arith.truncf %947 : vector<8x64xf32> to vector<8x64xbf16>
    %cst_242 = arith.constant dense<0.000000e+00> : vector<8x256xf32>
    %953 = tpu.matmul %952, %830, %cst_242 {dimension_numbers = #tpu.dot_dimension_numbers<[1], [0], [0], [1], [0, 0, 1, 1], [], []>} : vector<8x64xbf16>, vector<64x256xbf16>, vector<8x256xf32> -> vector<8x256xf32>
    %954 = arith.addf %951, %953 : vector<8x256xf32>
    %955 = vector.extract_strided_slice %954 {offsets = [0, 0], sizes = [8, 192], strides = [1, 1]} : vector<8x256xf32> to vector<8x192xf32>
    %956 = arith.negf %955 : vector<8x192xf32>
    %957 = math.exp %956 : vector<8x192xf32>
    %cst_243 = arith.constant 1.000000e+00 : f32
    %958 = vector.broadcast %cst_243 : f32 to vector<8x192xf32>
    %959 = arith.addf %958, %957 : vector<8x192xf32>
    %960 = arith.divf %958, %959 : vector<8x192xf32>
    %961 = vector.extract_strided_slice %960 {offsets = [0, 0], sizes = [8, 64], strides = [1, 1]} : vector<8x192xf32> to vector<8x64xf32>
    %962 = vector.extract_strided_slice %960 {offsets = [0, 64], sizes = [8, 64], strides = [1, 1]} : vector<8x192xf32> to vector<8x64xf32>
    %963 = vector.extract_strided_slice %960 {offsets = [0, 128], sizes = [8, 64], strides = [1, 1]} : vector<8x192xf32> to vector<8x64xf32>
    %964 = vector.extract_strided_slice %954 {offsets = [0, 192], sizes = [8, 64], strides = [1, 1]} : vector<8x256xf32> to vector<8x64xf32>
    %965 = math.tanh %964 : vector<8x64xf32>
    %966 = arith.mulf %962, %945 : vector<8x64xf32>
    %967 = arith.mulf %961, %965 : vector<8x64xf32>
    %968 = arith.addf %966, %967 : vector<8x64xf32>
    %969 = math.tanh %968 : vector<8x64xf32>
    %970 = arith.mulf %963, %969 : vector<8x64xf32>
    %c6_i32_244 = arith.constant 6 : i32
    %c8_i32_245 = arith.constant 8 : i32
    %971 = arith.muli %c6_i32_244, %c8_i32_245 : i32
    %972 = tpu.assume_multiple %971, 8 : i32
    %973 = arith.index_cast %972 : i32 to index
    %c0_246 = arith.constant 0 : index
    %974 = vector.load %arg13[%973, %c0_246] : memref<128x256xf32, #tpu.memory_space<vmem>>, vector<8x256xf32>
    %975 = arith.truncf %970 : vector<8x64xf32> to vector<8x64xbf16>
    %cst_247 = arith.constant dense<0.000000e+00> : vector<8x256xf32>
    %976 = tpu.matmul %975, %830, %cst_247 {dimension_numbers = #tpu.dot_dimension_numbers<[1], [0], [0], [1], [0, 0, 1, 1], [], []>} : vector<8x64xbf16>, vector<64x256xbf16>, vector<8x256xf32> -> vector<8x256xf32>
    %977 = arith.addf %974, %976 : vector<8x256xf32>
    %978 = vector.extract_strided_slice %977 {offsets = [0, 0], sizes = [8, 192], strides = [1, 1]} : vector<8x256xf32> to vector<8x192xf32>
    %979 = arith.negf %978 : vector<8x192xf32>
    %980 = math.exp %979 : vector<8x192xf32>
    %cst_248 = arith.constant 1.000000e+00 : f32
    %981 = vector.broadcast %cst_248 : f32 to vector<8x192xf32>
    %982 = arith.addf %981, %980 : vector<8x192xf32>
    %983 = arith.divf %981, %982 : vector<8x192xf32>
    %984 = vector.extract_strided_slice %983 {offsets = [0, 0], sizes = [8, 64], strides = [1, 1]} : vector<8x192xf32> to vector<8x64xf32>
    %985 = vector.extract_strided_slice %983 {offsets = [0, 64], sizes = [8, 64], strides = [1, 1]} : vector<8x192xf32> to vector<8x64xf32>
    %986 = vector.extract_strided_slice %983 {offsets = [0, 128], sizes = [8, 64], strides = [1, 1]} : vector<8x192xf32> to vector<8x64xf32>
    %987 = vector.extract_strided_slice %977 {offsets = [0, 192], sizes = [8, 64], strides = [1, 1]} : vector<8x256xf32> to vector<8x64xf32>
    %988 = math.tanh %987 : vector<8x64xf32>
    %989 = arith.mulf %985, %968 : vector<8x64xf32>
    %990 = arith.mulf %984, %988 : vector<8x64xf32>
    %991 = arith.addf %989, %990 : vector<8x64xf32>
    %992 = math.tanh %991 : vector<8x64xf32>
    %993 = arith.mulf %986, %992 : vector<8x64xf32>
    %c7_i32_249 = arith.constant 7 : i32
    %c8_i32_250 = arith.constant 8 : i32
    %994 = arith.muli %c7_i32_249, %c8_i32_250 : i32
    %995 = tpu.assume_multiple %994, 8 : i32
    %996 = arith.index_cast %995 : i32 to index
    %c0_251 = arith.constant 0 : index
    %997 = vector.load %arg13[%996, %c0_251] : memref<128x256xf32, #tpu.memory_space<vmem>>, vector<8x256xf32>
    %998 = arith.truncf %993 : vector<8x64xf32> to vector<8x64xbf16>
    %cst_252 = arith.constant dense<0.000000e+00> : vector<8x256xf32>
    %999 = tpu.matmul %998, %830, %cst_252 {dimension_numbers = #tpu.dot_dimension_numbers<[1], [0], [0], [1], [0, 0, 1, 1], [], []>} : vector<8x64xbf16>, vector<64x256xbf16>, vector<8x256xf32> -> vector<8x256xf32>
    %1000 = arith.addf %997, %999 : vector<8x256xf32>
    %1001 = vector.extract_strided_slice %1000 {offsets = [0, 0], sizes = [8, 192], strides = [1, 1]} : vector<8x256xf32> to vector<8x192xf32>
    %1002 = arith.negf %1001 : vector<8x192xf32>
    %1003 = math.exp %1002 : vector<8x192xf32>
    %cst_253 = arith.constant 1.000000e+00 : f32
    %1004 = vector.broadcast %cst_253 : f32 to vector<8x192xf32>
    %1005 = arith.addf %1004, %1003 : vector<8x192xf32>
    %1006 = arith.divf %1004, %1005 : vector<8x192xf32>
    %1007 = vector.extract_strided_slice %1006 {offsets = [0, 0], sizes = [8, 64], strides = [1, 1]} : vector<8x192xf32> to vector<8x64xf32>
    %1008 = vector.extract_strided_slice %1006 {offsets = [0, 64], sizes = [8, 64], strides = [1, 1]} : vector<8x192xf32> to vector<8x64xf32>
    %1009 = vector.extract_strided_slice %1006 {offsets = [0, 128], sizes = [8, 64], strides = [1, 1]} : vector<8x192xf32> to vector<8x64xf32>
    %1010 = vector.extract_strided_slice %1000 {offsets = [0, 192], sizes = [8, 64], strides = [1, 1]} : vector<8x256xf32> to vector<8x64xf32>
    %1011 = math.tanh %1010 : vector<8x64xf32>
    %1012 = arith.mulf %1008, %991 : vector<8x64xf32>
    %1013 = arith.mulf %1007, %1011 : vector<8x64xf32>
    %1014 = arith.addf %1012, %1013 : vector<8x64xf32>
    %1015 = math.tanh %1014 : vector<8x64xf32>
    %1016 = arith.mulf %1009, %1015 : vector<8x64xf32>
    %c8_i32_254 = arith.constant 8 : i32
    %c8_i32_255 = arith.constant 8 : i32
    %1017 = arith.muli %c8_i32_254, %c8_i32_255 : i32
    %1018 = tpu.assume_multiple %1017, 8 : i32
    %1019 = arith.index_cast %1018 : i32 to index
    %c0_256 = arith.constant 0 : index
    %1020 = vector.load %arg13[%1019, %c0_256] : memref<128x256xf32, #tpu.memory_space<vmem>>, vector<8x256xf32>
    %1021 = arith.truncf %1016 : vector<8x64xf32> to vector<8x64xbf16>
    %cst_257 = arith.constant dense<0.000000e+00> : vector<8x256xf32>
    %1022 = tpu.matmul %1021, %830, %cst_257 {dimension_numbers = #tpu.dot_dimension_numbers<[1], [0], [0], [1], [0, 0, 1, 1], [], []>} : vector<8x64xbf16>, vector<64x256xbf16>, vector<8x256xf32> -> vector<8x256xf32>
    %1023 = arith.addf %1020, %1022 : vector<8x256xf32>
    %1024 = vector.extract_strided_slice %1023 {offsets = [0, 0], sizes = [8, 192], strides = [1, 1]} : vector<8x256xf32> to vector<8x192xf32>
    %1025 = arith.negf %1024 : vector<8x192xf32>
    %1026 = math.exp %1025 : vector<8x192xf32>
    %cst_258 = arith.constant 1.000000e+00 : f32
    %1027 = vector.broadcast %cst_258 : f32 to vector<8x192xf32>
    %1028 = arith.addf %1027, %1026 : vector<8x192xf32>
    %1029 = arith.divf %1027, %1028 : vector<8x192xf32>
    %1030 = vector.extract_strided_slice %1029 {offsets = [0, 0], sizes = [8, 64], strides = [1, 1]} : vector<8x192xf32> to vector<8x64xf32>
    %1031 = vector.extract_strided_slice %1029 {offsets = [0, 64], sizes = [8, 64], strides = [1, 1]} : vector<8x192xf32> to vector<8x64xf32>
    %1032 = vector.extract_strided_slice %1029 {offsets = [0, 128], sizes = [8, 64], strides = [1, 1]} : vector<8x192xf32> to vector<8x64xf32>
    %1033 = vector.extract_strided_slice %1023 {offsets = [0, 192], sizes = [8, 64], strides = [1, 1]} : vector<8x256xf32> to vector<8x64xf32>
    %1034 = math.tanh %1033 : vector<8x64xf32>
    %1035 = arith.mulf %1031, %1014 : vector<8x64xf32>
    %1036 = arith.mulf %1030, %1034 : vector<8x64xf32>
    %1037 = arith.addf %1035, %1036 : vector<8x64xf32>
    %1038 = math.tanh %1037 : vector<8x64xf32>
    %1039 = arith.mulf %1032, %1038 : vector<8x64xf32>
    %c9_i32_259 = arith.constant 9 : i32
    %c8_i32_260 = arith.constant 8 : i32
    %1040 = arith.muli %c9_i32_259, %c8_i32_260 : i32
    %1041 = tpu.assume_multiple %1040, 8 : i32
    %1042 = arith.index_cast %1041 : i32 to index
    %c0_261 = arith.constant 0 : index
    %1043 = vector.load %arg13[%1042, %c0_261] : memref<128x256xf32, #tpu.memory_space<vmem>>, vector<8x256xf32>
    %1044 = arith.truncf %1039 : vector<8x64xf32> to vector<8x64xbf16>
    %cst_262 = arith.constant dense<0.000000e+00> : vector<8x256xf32>
    %1045 = tpu.matmul %1044, %830, %cst_262 {dimension_numbers = #tpu.dot_dimension_numbers<[1], [0], [0], [1], [0, 0, 1, 1], [], []>} : vector<8x64xbf16>, vector<64x256xbf16>, vector<8x256xf32> -> vector<8x256xf32>
    %1046 = arith.addf %1043, %1045 : vector<8x256xf32>
    %1047 = vector.extract_strided_slice %1046 {offsets = [0, 0], sizes = [8, 192], strides = [1, 1]} : vector<8x256xf32> to vector<8x192xf32>
    %1048 = arith.negf %1047 : vector<8x192xf32>
    %1049 = math.exp %1048 : vector<8x192xf32>
    %cst_263 = arith.constant 1.000000e+00 : f32
    %1050 = vector.broadcast %cst_263 : f32 to vector<8x192xf32>
    %1051 = arith.addf %1050, %1049 : vector<8x192xf32>
    %1052 = arith.divf %1050, %1051 : vector<8x192xf32>
    %1053 = vector.extract_strided_slice %1052 {offsets = [0, 0], sizes = [8, 64], strides = [1, 1]} : vector<8x192xf32> to vector<8x64xf32>
    %1054 = vector.extract_strided_slice %1052 {offsets = [0, 64], sizes = [8, 64], strides = [1, 1]} : vector<8x192xf32> to vector<8x64xf32>
    %1055 = vector.extract_strided_slice %1052 {offsets = [0, 128], sizes = [8, 64], strides = [1, 1]} : vector<8x192xf32> to vector<8x64xf32>
    %1056 = vector.extract_strided_slice %1046 {offsets = [0, 192], sizes = [8, 64], strides = [1, 1]} : vector<8x256xf32> to vector<8x64xf32>
    %1057 = math.tanh %1056 : vector<8x64xf32>
    %1058 = arith.mulf %1054, %1037 : vector<8x64xf32>
    %1059 = arith.mulf %1053, %1057 : vector<8x64xf32>
    %1060 = arith.addf %1058, %1059 : vector<8x64xf32>
    %1061 = math.tanh %1060 : vector<8x64xf32>
    %1062 = arith.mulf %1055, %1061 : vector<8x64xf32>
    %c10_i32_264 = arith.constant 10 : i32
    %c8_i32_265 = arith.constant 8 : i32
    %1063 = arith.muli %c10_i32_264, %c8_i32_265 : i32
    %1064 = tpu.assume_multiple %1063, 8 : i32
    %1065 = arith.index_cast %1064 : i32 to index
    %c0_266 = arith.constant 0 : index
    %1066 = vector.load %arg13[%1065, %c0_266] : memref<128x256xf32, #tpu.memory_space<vmem>>, vector<8x256xf32>
    %1067 = arith.truncf %1062 : vector<8x64xf32> to vector<8x64xbf16>
    %cst_267 = arith.constant dense<0.000000e+00> : vector<8x256xf32>
    %1068 = tpu.matmul %1067, %830, %cst_267 {dimension_numbers = #tpu.dot_dimension_numbers<[1], [0], [0], [1], [0, 0, 1, 1], [], []>} : vector<8x64xbf16>, vector<64x256xbf16>, vector<8x256xf32> -> vector<8x256xf32>
    %1069 = arith.addf %1066, %1068 : vector<8x256xf32>
    %1070 = vector.extract_strided_slice %1069 {offsets = [0, 0], sizes = [8, 192], strides = [1, 1]} : vector<8x256xf32> to vector<8x192xf32>
    %1071 = arith.negf %1070 : vector<8x192xf32>
    %1072 = math.exp %1071 : vector<8x192xf32>
    %cst_268 = arith.constant 1.000000e+00 : f32
    %1073 = vector.broadcast %cst_268 : f32 to vector<8x192xf32>
    %1074 = arith.addf %1073, %1072 : vector<8x192xf32>
    %1075 = arith.divf %1073, %1074 : vector<8x192xf32>
    %1076 = vector.extract_strided_slice %1075 {offsets = [0, 0], sizes = [8, 64], strides = [1, 1]} : vector<8x192xf32> to vector<8x64xf32>
    %1077 = vector.extract_strided_slice %1075 {offsets = [0, 64], sizes = [8, 64], strides = [1, 1]} : vector<8x192xf32> to vector<8x64xf32>
    %1078 = vector.extract_strided_slice %1075 {offsets = [0, 128], sizes = [8, 64], strides = [1, 1]} : vector<8x192xf32> to vector<8x64xf32>
    %1079 = vector.extract_strided_slice %1069 {offsets = [0, 192], sizes = [8, 64], strides = [1, 1]} : vector<8x256xf32> to vector<8x64xf32>
    %1080 = math.tanh %1079 : vector<8x64xf32>
    %1081 = arith.mulf %1077, %1060 : vector<8x64xf32>
    %1082 = arith.mulf %1076, %1080 : vector<8x64xf32>
    %1083 = arith.addf %1081, %1082 : vector<8x64xf32>
    %1084 = math.tanh %1083 : vector<8x64xf32>
    %1085 = arith.mulf %1078, %1084 : vector<8x64xf32>
    %c11_i32_269 = arith.constant 11 : i32
    %c8_i32_270 = arith.constant 8 : i32
    %1086 = arith.muli %c11_i32_269, %c8_i32_270 : i32
    %1087 = tpu.assume_multiple %1086, 8 : i32
    %1088 = arith.index_cast %1087 : i32 to index
    %c0_271 = arith.constant 0 : index
    %1089 = vector.load %arg13[%1088, %c0_271] : memref<128x256xf32, #tpu.memory_space<vmem>>, vector<8x256xf32>
    %1090 = arith.truncf %1085 : vector<8x64xf32> to vector<8x64xbf16>
    %cst_272 = arith.constant dense<0.000000e+00> : vector<8x256xf32>
    %1091 = tpu.matmul %1090, %830, %cst_272 {dimension_numbers = #tpu.dot_dimension_numbers<[1], [0], [0], [1], [0, 0, 1, 1], [], []>} : vector<8x64xbf16>, vector<64x256xbf16>, vector<8x256xf32> -> vector<8x256xf32>
    %1092 = arith.addf %1089, %1091 : vector<8x256xf32>
    %1093 = vector.extract_strided_slice %1092 {offsets = [0, 0], sizes = [8, 192], strides = [1, 1]} : vector<8x256xf32> to vector<8x192xf32>
    %1094 = arith.negf %1093 : vector<8x192xf32>
    %1095 = math.exp %1094 : vector<8x192xf32>
    %cst_273 = arith.constant 1.000000e+00 : f32
    %1096 = vector.broadcast %cst_273 : f32 to vector<8x192xf32>
    %1097 = arith.addf %1096, %1095 : vector<8x192xf32>
    %1098 = arith.divf %1096, %1097 : vector<8x192xf32>
    %1099 = vector.extract_strided_slice %1098 {offsets = [0, 0], sizes = [8, 64], strides = [1, 1]} : vector<8x192xf32> to vector<8x64xf32>
    %1100 = vector.extract_strided_slice %1098 {offsets = [0, 64], sizes = [8, 64], strides = [1, 1]} : vector<8x192xf32> to vector<8x64xf32>
    %1101 = vector.extract_strided_slice %1098 {offsets = [0, 128], sizes = [8, 64], strides = [1, 1]} : vector<8x192xf32> to vector<8x64xf32>
    %1102 = vector.extract_strided_slice %1092 {offsets = [0, 192], sizes = [8, 64], strides = [1, 1]} : vector<8x256xf32> to vector<8x64xf32>
    %1103 = math.tanh %1102 : vector<8x64xf32>
    %1104 = arith.mulf %1100, %1083 : vector<8x64xf32>
    %1105 = arith.mulf %1099, %1103 : vector<8x64xf32>
    %1106 = arith.addf %1104, %1105 : vector<8x64xf32>
    %1107 = math.tanh %1106 : vector<8x64xf32>
    %1108 = arith.mulf %1101, %1107 : vector<8x64xf32>
    %c12_i32_274 = arith.constant 12 : i32
    %c8_i32_275 = arith.constant 8 : i32
    %1109 = arith.muli %c12_i32_274, %c8_i32_275 : i32
    %1110 = tpu.assume_multiple %1109, 8 : i32
    %1111 = arith.index_cast %1110 : i32 to index
    %c0_276 = arith.constant 0 : index
    %1112 = vector.load %arg13[%1111, %c0_276] : memref<128x256xf32, #tpu.memory_space<vmem>>, vector<8x256xf32>
    %1113 = arith.truncf %1108 : vector<8x64xf32> to vector<8x64xbf16>
    %cst_277 = arith.constant dense<0.000000e+00> : vector<8x256xf32>
    %1114 = tpu.matmul %1113, %830, %cst_277 {dimension_numbers = #tpu.dot_dimension_numbers<[1], [0], [0], [1], [0, 0, 1, 1], [], []>} : vector<8x64xbf16>, vector<64x256xbf16>, vector<8x256xf32> -> vector<8x256xf32>
    %1115 = arith.addf %1112, %1114 : vector<8x256xf32>
    %1116 = vector.extract_strided_slice %1115 {offsets = [0, 0], sizes = [8, 192], strides = [1, 1]} : vector<8x256xf32> to vector<8x192xf32>
    %1117 = arith.negf %1116 : vector<8x192xf32>
    %1118 = math.exp %1117 : vector<8x192xf32>
    %cst_278 = arith.constant 1.000000e+00 : f32
    %1119 = vector.broadcast %cst_278 : f32 to vector<8x192xf32>
    %1120 = arith.addf %1119, %1118 : vector<8x192xf32>
    %1121 = arith.divf %1119, %1120 : vector<8x192xf32>
    %1122 = vector.extract_strided_slice %1121 {offsets = [0, 0], sizes = [8, 64], strides = [1, 1]} : vector<8x192xf32> to vector<8x64xf32>
    %1123 = vector.extract_strided_slice %1121 {offsets = [0, 64], sizes = [8, 64], strides = [1, 1]} : vector<8x192xf32> to vector<8x64xf32>
    %1124 = vector.extract_strided_slice %1121 {offsets = [0, 128], sizes = [8, 64], strides = [1, 1]} : vector<8x192xf32> to vector<8x64xf32>
    %1125 = vector.extract_strided_slice %1115 {offsets = [0, 192], sizes = [8, 64], strides = [1, 1]} : vector<8x256xf32> to vector<8x64xf32>
    %1126 = math.tanh %1125 : vector<8x64xf32>
    %1127 = arith.mulf %1123, %1106 : vector<8x64xf32>
    %1128 = arith.mulf %1122, %1126 : vector<8x64xf32>
    %1129 = arith.addf %1127, %1128 : vector<8x64xf32>
    %1130 = math.tanh %1129 : vector<8x64xf32>
    %1131 = arith.mulf %1124, %1130 : vector<8x64xf32>
    %c13_i32_279 = arith.constant 13 : i32
    %c8_i32_280 = arith.constant 8 : i32
    %1132 = arith.muli %c13_i32_279, %c8_i32_280 : i32
    %1133 = tpu.assume_multiple %1132, 8 : i32
    %1134 = arith.index_cast %1133 : i32 to index
    %c0_281 = arith.constant 0 : index
    %1135 = vector.load %arg13[%1134, %c0_281] : memref<128x256xf32, #tpu.memory_space<vmem>>, vector<8x256xf32>
    %1136 = arith.truncf %1131 : vector<8x64xf32> to vector<8x64xbf16>
    %cst_282 = arith.constant dense<0.000000e+00> : vector<8x256xf32>
    %1137 = tpu.matmul %1136, %830, %cst_282 {dimension_numbers = #tpu.dot_dimension_numbers<[1], [0], [0], [1], [0, 0, 1, 1], [], []>} : vector<8x64xbf16>, vector<64x256xbf16>, vector<8x256xf32> -> vector<8x256xf32>
    %1138 = arith.addf %1135, %1137 : vector<8x256xf32>
    %1139 = vector.extract_strided_slice %1138 {offsets = [0, 0], sizes = [8, 192], strides = [1, 1]} : vector<8x256xf32> to vector<8x192xf32>
    %1140 = arith.negf %1139 : vector<8x192xf32>
    %1141 = math.exp %1140 : vector<8x192xf32>
    %cst_283 = arith.constant 1.000000e+00 : f32
    %1142 = vector.broadcast %cst_283 : f32 to vector<8x192xf32>
    %1143 = arith.addf %1142, %1141 : vector<8x192xf32>
    %1144 = arith.divf %1142, %1143 : vector<8x192xf32>
    %1145 = vector.extract_strided_slice %1144 {offsets = [0, 0], sizes = [8, 64], strides = [1, 1]} : vector<8x192xf32> to vector<8x64xf32>
    %1146 = vector.extract_strided_slice %1144 {offsets = [0, 64], sizes = [8, 64], strides = [1, 1]} : vector<8x192xf32> to vector<8x64xf32>
    %1147 = vector.extract_strided_slice %1144 {offsets = [0, 128], sizes = [8, 64], strides = [1, 1]} : vector<8x192xf32> to vector<8x64xf32>
    %1148 = vector.extract_strided_slice %1138 {offsets = [0, 192], sizes = [8, 64], strides = [1, 1]} : vector<8x256xf32> to vector<8x64xf32>
    %1149 = math.tanh %1148 : vector<8x64xf32>
    %1150 = arith.mulf %1146, %1129 : vector<8x64xf32>
    %1151 = arith.mulf %1145, %1149 : vector<8x64xf32>
    %1152 = arith.addf %1150, %1151 : vector<8x64xf32>
    %1153 = math.tanh %1152 : vector<8x64xf32>
    %1154 = arith.mulf %1147, %1153 : vector<8x64xf32>
    %c14_i32_284 = arith.constant 14 : i32
    %c8_i32_285 = arith.constant 8 : i32
    %1155 = arith.muli %c14_i32_284, %c8_i32_285 : i32
    %1156 = tpu.assume_multiple %1155, 8 : i32
    %1157 = arith.index_cast %1156 : i32 to index
    %c0_286 = arith.constant 0 : index
    %1158 = vector.load %arg13[%1157, %c0_286] : memref<128x256xf32, #tpu.memory_space<vmem>>, vector<8x256xf32>
    %1159 = arith.truncf %1154 : vector<8x64xf32> to vector<8x64xbf16>
    %cst_287 = arith.constant dense<0.000000e+00> : vector<8x256xf32>
    %1160 = tpu.matmul %1159, %830, %cst_287 {dimension_numbers = #tpu.dot_dimension_numbers<[1], [0], [0], [1], [0, 0, 1, 1], [], []>} : vector<8x64xbf16>, vector<64x256xbf16>, vector<8x256xf32> -> vector<8x256xf32>
    %1161 = arith.addf %1158, %1160 : vector<8x256xf32>
    %1162 = vector.extract_strided_slice %1161 {offsets = [0, 0], sizes = [8, 192], strides = [1, 1]} : vector<8x256xf32> to vector<8x192xf32>
    %1163 = arith.negf %1162 : vector<8x192xf32>
    %1164 = math.exp %1163 : vector<8x192xf32>
    %cst_288 = arith.constant 1.000000e+00 : f32
    %1165 = vector.broadcast %cst_288 : f32 to vector<8x192xf32>
    %1166 = arith.addf %1165, %1164 : vector<8x192xf32>
    %1167 = arith.divf %1165, %1166 : vector<8x192xf32>
    %1168 = vector.extract_strided_slice %1167 {offsets = [0, 0], sizes = [8, 64], strides = [1, 1]} : vector<8x192xf32> to vector<8x64xf32>
    %1169 = vector.extract_strided_slice %1167 {offsets = [0, 64], sizes = [8, 64], strides = [1, 1]} : vector<8x192xf32> to vector<8x64xf32>
    %1170 = vector.extract_strided_slice %1167 {offsets = [0, 128], sizes = [8, 64], strides = [1, 1]} : vector<8x192xf32> to vector<8x64xf32>
    %1171 = vector.extract_strided_slice %1161 {offsets = [0, 192], sizes = [8, 64], strides = [1, 1]} : vector<8x256xf32> to vector<8x64xf32>
    %1172 = math.tanh %1171 : vector<8x64xf32>
    %1173 = arith.mulf %1169, %1152 : vector<8x64xf32>
    %1174 = arith.mulf %1168, %1172 : vector<8x64xf32>
    %1175 = arith.addf %1173, %1174 : vector<8x64xf32>
    %1176 = math.tanh %1175 : vector<8x64xf32>
    %1177 = arith.mulf %1170, %1176 : vector<8x64xf32>
    %c15_i32_289 = arith.constant 15 : i32
    %c8_i32_290 = arith.constant 8 : i32
    %1178 = arith.muli %c15_i32_289, %c8_i32_290 : i32
    %1179 = tpu.assume_multiple %1178, 8 : i32
    %1180 = arith.index_cast %1179 : i32 to index
    %c0_291 = arith.constant 0 : index
    %1181 = vector.load %arg13[%1180, %c0_291] : memref<128x256xf32, #tpu.memory_space<vmem>>, vector<8x256xf32>
    %1182 = arith.truncf %1177 : vector<8x64xf32> to vector<8x64xbf16>
    %cst_292 = arith.constant dense<0.000000e+00> : vector<8x256xf32>
    %1183 = tpu.matmul %1182, %830, %cst_292 {dimension_numbers = #tpu.dot_dimension_numbers<[1], [0], [0], [1], [0, 0, 1, 1], [], []>} : vector<8x64xbf16>, vector<64x256xbf16>, vector<8x256xf32> -> vector<8x256xf32>
    %1184 = arith.addf %1181, %1183 : vector<8x256xf32>
    %1185 = vector.extract_strided_slice %1184 {offsets = [0, 0], sizes = [8, 192], strides = [1, 1]} : vector<8x256xf32> to vector<8x192xf32>
    %1186 = arith.negf %1185 : vector<8x192xf32>
    %1187 = math.exp %1186 : vector<8x192xf32>
    %cst_293 = arith.constant 1.000000e+00 : f32
    %1188 = vector.broadcast %cst_293 : f32 to vector<8x192xf32>
    %1189 = arith.addf %1188, %1187 : vector<8x192xf32>
    %1190 = arith.divf %1188, %1189 : vector<8x192xf32>
    %1191 = vector.extract_strided_slice %1190 {offsets = [0, 0], sizes = [8, 64], strides = [1, 1]} : vector<8x192xf32> to vector<8x64xf32>
    %1192 = vector.extract_strided_slice %1190 {offsets = [0, 64], sizes = [8, 64], strides = [1, 1]} : vector<8x192xf32> to vector<8x64xf32>
    %1193 = vector.extract_strided_slice %1190 {offsets = [0, 128], sizes = [8, 64], strides = [1, 1]} : vector<8x192xf32> to vector<8x64xf32>
    %1194 = vector.extract_strided_slice %1184 {offsets = [0, 192], sizes = [8, 64], strides = [1, 1]} : vector<8x256xf32> to vector<8x64xf32>
    %1195 = math.tanh %1194 : vector<8x64xf32>
    %1196 = arith.mulf %1192, %1175 : vector<8x64xf32>
    %1197 = arith.mulf %1191, %1195 : vector<8x64xf32>
    %1198 = arith.addf %1196, %1197 : vector<8x64xf32>
    %1199 = math.tanh %1198 : vector<8x64xf32>
    %1200 = arith.mulf %1193, %1199 : vector<8x64xf32>
    %c16_i32_294 = arith.constant 16 : i32
    %1201 = arith.truncf %1200 : vector<8x64xf32> to vector<8x64xbf16>
    %c0_295 = arith.constant 0 : index
    %c0_296 = arith.constant 0 : index
    %1202 = vector.load %arg10[%c0_295, %c0_296] : memref<64x9xbf16, #tpu.memory_space<vmem>>, vector<64x9xbf16>
    %cst_297 = arith.constant dense<0.000000e+00> : vector<8x9xf32>
    %1203 = tpu.matmul %1201, %1202, %cst_297 {dimension_numbers = #tpu.dot_dimension_numbers<[1], [0], [0], [1], [0, 0, 1, 1], [], []>} : vector<8x64xbf16>, vector<64x9xbf16>, vector<8x9xf32> -> vector<8x9xf32>
    %c0_298 = arith.constant 0 : index
    %c0_299 = arith.constant 0 : index
    %1204 = vector.load %arg11[%c0_298, %c0_299] : memref<1x9xf32, #tpu.memory_space<vmem>>, vector<1x9xf32>
    %1205 = vector.broadcast %1204 : vector<1x9xf32> to vector<8x9xf32>
    %1206 = arith.addf %1203, %1205 : vector<8x9xf32>
    %c0_300 = arith.constant 0 : index
    %c0_301 = arith.constant 0 : index
    %1207 = vector.load %arg12[%c0_300, %c0_301] : memref<8x9xf32, #tpu.memory_space<vmem>>, vector<8x9xf32>
    tpu.vector_store %arg12[%c0_300, %c0_301], %1206 {strides = array<i32>} : memref<8x9xf32, #tpu.memory_space<vmem>>, vector<8x9xf32>,
    return
  }
}

</mosaic_0001>

<llo_original>
// kernel: tpu_custom_call.1
$region0: #{tpu_custom_call.1}
  #allocation0 [shape = 'u32[]', space=smem, size = 0x4, offset = 0x4, fixed_abs, tag = 'smem constant byte address 0x4 - core index']
  #allocation1 [shape = 'u32[144,128]{1,0:T(1,128)}', space=vmem, size = 0x12000, scoped, tag = 'internal scratch']
  #allocation2 [shape = 'f32[128,256]{1,0:T(8,128)}', space=vmem, size = 0x20000, scoped, tag = 'scratch operand']
  #allocation3 [shape = 'f32[128,64]{1,0:T(8,128)}', space=vmem, size = 0x10000, scoped, tag = 'scratch operand']
  %s0 = inlined_call_operand.vmem [shape: f32[128,32], index: 0, kind: input, shape index: {}]
  %s1 = inlined_call_operand.hbm [shape: bf16[32,256], index: 1, kind: input, shape index: {}]
  %s2 = inlined_call_operand.vmem [shape: bf16[64,256], index: 2, kind: input, shape index: {}]
  %s3 = inlined_call_operand.vmem [shape: f32[1,256], index: 3, kind: input, shape index: {}]
  %s4 = inlined_call_operand.vmem [shape: bf16[64,256], index: 4, kind: input, shape index: {}]
  %s5 = inlined_call_operand.vmem [shape: bf16[64,256], index: 5, kind: input, shape index: {}]
  %s6 = inlined_call_operand.vmem [shape: f32[1,256], index: 6, kind: input, shape index: {}]
  %s7 = inlined_call_operand.hbm [shape: bf16[64,256], index: 7, kind: input, shape index: {}]
  %s8 = inlined_call_operand.hbm [shape: bf16[64,256], index: 8, kind: input, shape index: {}]
  %s9 = inlined_call_operand.vmem [shape: f32[1,256], index: 9, kind: input, shape index: {}]
  %s10 = inlined_call_operand.vmem [shape: bf16[64,9], index: 10, kind: input, shape index: {}]
  %s11 = inlined_call_operand.vmem [shape: f32[1,9], index: 11, kind: input, shape index: {}]
  %s12 = inlined_call_operand.hbm [shape: f32[8,9], index: 12, kind: output, shape index: {}]
  %s13 = sld [smem:[#allocation0]]
  $region70: #{tpu_custom_call.1} parent=0
    _
  %s15 = ssub.s32 1, %s13
  %s16 = scalar_select 0, %s15, %s13
  $region1: #{tpu_custom_call.1} parent=0
    #allocation4 [shape = 'u8[16384]{0}', space=vmem, size = 0x4000, scoped, tag = 'input window, operand 1, single buffered']
    #allocation5 [shape = 's32[1]{0}', space=sflag, size = 0x4, scoped, tag = 'scoped memory for tpu_custom_call.1']
    #allocation6 [shape = 's32[1]{0}', space=sflag, size = 0x4, scoped, tag = 'scoped memory for tpu_custom_call.1']
    #allocation7 [shape = 'u8[32768]{0}', space=vmem, size = 0x8000, scoped, tag = 'input window, operand 7, single buffered']
    #allocation8 [shape = 's32[1]{0}', space=sflag, size = 0x4, scoped, tag = 'scoped memory for tpu_custom_call.1']
    #allocation9 [shape = 'u8[32768]{0}', space=vmem, size = 0x8000, scoped, tag = 'input window, operand 8, single buffered']
    #allocation10 [shape = 'u8[4096]{0}', space=vmem, size = 0x1000, scoped, tag = 'output window, operand 0, single buffered']
    %17 = vsyncpa [#allocation5], 0
    %18 = vsyncpa [#allocation8], 0
    %19 = vsyncpa [#allocation6], 0
    // Predicated region
    $region2: #{tpu_custom_call.1} parent=1 // pred_check
      _
    $region3: #{tpu_custom_call.1} parent=1 // pred_check_branch
      %21 = sbr.rel (0) target = $region5
    $region4: #{tpu_custom_call.1} parent=1 // pred_region
      _
    $region5: #{tpu_custom_call.1} parent=1 // pred_fallthru
      _
    // Predicated region
    $region6: #{tpu_custom_call.1} parent=1 // pred_check
      _
    $region7: #{tpu_custom_call.1} parent=1 // pred_check_branch
      %23 = sbr.rel (0) target = $region9
    $region8: #{tpu_custom_call.1} parent=1 // pred_region
      %s25 = ssub.s32 512, 512
      %26 = vsyncadd [#allocation5], %s25
      %s27 = sshll.u32 [#allocation4], 4
      %s28 = int_to_ptr.vmem [resolvable:$true] %s27
      %33 = dma.hbm_to_vmem [thread:$0]  %s1, 512, %s28, [#allocation5], 128, 128, 8
    $region9: #{tpu_custom_call.1} parent=1 // pred_fallthru
      _
    // Predicated region
    $region10: #{tpu_custom_call.1} parent=1 // pred_check
      _
    $region11: #{tpu_custom_call.1} parent=1 // pred_check_branch
      %35 = sbr.rel (0) target = $region13
    $region12: #{tpu_custom_call.1} parent=1 // pred_region
      _
    $region13: #{tpu_custom_call.1} parent=1 // pred_fallthru
      _
    // Predicated region
    $region14: #{tpu_custom_call.1} parent=1 // pred_check
      _
    $region15: #{tpu_custom_call.1} parent=1 // pred_check_branch
      %37 = sbr.rel (0) target = $region17
    $region16: #{tpu_custom_call.1} parent=1 // pred_region
      _
    $region17: #{tpu_custom_call.1} parent=1 // pred_fallthru
      _
    // Predicated region
    $region18: #{tpu_custom_call.1} parent=1 // pred_check
      _
    $region19: #{tpu_custom_call.1} parent=1 // pred_check_branch
      %39 = sbr.rel (0) target = $region21
    $region20: #{tpu_custom_call.1} parent=1 // pred_region
      _
    $region21: #{tpu_custom_call.1} parent=1 // pred_fallthru
      _
    // Predicated region
    $region22: #{tpu_custom_call.1} parent=1 // pred_check
      _
    $region23: #{tpu_custom_call.1} parent=1 // pred_check_branch
      %41 = sbr.rel (0) target = $region25
    $region24: #{tpu_custom_call.1} parent=1 // pred_region
      _
    $region25: #{tpu_custom_call.1} parent=1 // pred_fallthru
      _
    // Predicated region
    $region26: #{tpu_custom_call.1} parent=1 // pred_check
      _
    $region27: #{tpu_custom_call.1} parent=1 // pred_check_branch
      %43 = sbr.rel (0) target = $region29
    $region28: #{tpu_custom_call.1} parent=1 // pred_region
      _
    $region29: #{tpu_custom_call.1} parent=1 // pred_fallthru
      _
    // Predicated region
    $region30: #{tpu_custom_call.1} parent=1 // pred_check
      _
    $region31: #{tpu_custom_call.1} parent=1 // pred_check_branch
      %45 = sbr.rel (0) target = $region33
    $region32: #{tpu_custom_call.1} parent=1 // pred_region
      %s47 = ssub.s32 1024, 1024
      %48 = vsyncadd [#allocation8], %s47
      %s49 = sshll.u32 [#allocation7], 4
      %s50 = int_to_ptr.vmem [resolvable:$true] %s49
      %55 = dma.hbm_to_vmem [thread:$0]  %s7, 1024, %s50, [#allocation8], 128, 128, 8
    $region33: #{tpu_custom_call.1} parent=1 // pred_fallthru
      _
    // Predicated region
    $region34: #{tpu_custom_call.1} parent=1 // pred_check
      _
    $region35: #{tpu_custom_call.1} parent=1 // pred_check_branch
      %57 = sbr.rel (0) target = $region37
    $region36: #{tpu_custom_call.1} parent=1 // pred_region
      %s59 = ssub.s32 1024, 1024
      %60 = vsyncadd [#allocation8], %s59
      %s61 = sshll.u32 [#allocation9], 4
      %s62 = int_to_ptr.vmem [resolvable:$true] %s61
      %67 = dma.hbm_to_vmem [thread:$0]  %s8, 1024, %s62, [#allocation8], 128, 128, 8
    $region37: #{tpu_custom_call.1} parent=1 // pred_fallthru
      _
    // Predicated region
    $region38: #{tpu_custom_call.1} parent=1 // pred_check
      _
    $region39: #{tpu_custom_call.1} parent=1 // pred_check_branch
      %69 = sbr.rel (0) target = $region41
    $region40: #{tpu_custom_call.1} parent=1 // pred_region
      _
    $region41: #{tpu_custom_call.1} parent=1 // pred_fallthru
      _
    // Predicated region
    $region42: #{tpu_custom_call.1} parent=1 // pred_check
      _
    $region43: #{tpu_custom_call.1} parent=1 // pred_check_branch
      %71 = sbr.rel (0) target = $region45
    $region44: #{tpu_custom_call.1} parent=1 // pred_region
      _
    $region45: #{tpu_custom_call.1} parent=1 // pred_fallthru
      _
    // Predicated region
    $region46: #{tpu_custom_call.1} parent=1 // pred_check
      _
    $region47: #{tpu_custom_call.1} parent=1 // pred_check_branch
      %73 = sbr.rel (0) target = $region49
    $region48: #{tpu_custom_call.1} parent=1 // pred_region
      _
    $region49: #{tpu_custom_call.1} parent=1 // pred_fallthru
      _
    // Predicated region
    $region50: #{tpu_custom_call.1} parent=1 // pred_check
      _
    $region51: #{tpu_custom_call.1} parent=1 // pred_check_branch
      %75 = sbr.rel (0) target = $region53
    $region52: #{tpu_custom_call.1} parent=1 // pred_region
      %76 = dma.done [#allocation5], 512
    $region53: #{tpu_custom_call.1} parent=1 // pred_fallthru
      _
    // Predicated region
    $region54: #{tpu_custom_call.1} parent=1 // pred_check
      _
    $region55: #{tpu_custom_call.1} parent=1 // pred_check_branch
      %78 = sbr.rel (0) target = $region57
    $region56: #{tpu_custom_call.1} parent=1 // pred_region
      %79 = dma.done [#allocation8], 1024
    $region57: #{tpu_custom_call.1} parent=1 // pred_fallthru
      _
    // Predicated region
    $region58: #{tpu_custom_call.1} parent=1 // pred_check
      _
    $region59: #{tpu_custom_call.1} parent=1 // pred_check_branch
      %81 = sbr.rel (0) target = $region61
    $region60: #{tpu_custom_call.1} parent=1 // pred_region
      %82 = dma.done [#allocation8], 1024
    $region61: #{tpu_custom_call.1} parent=1 // pred_fallthru
      _
    %v84 = vld [vmem:[%s0] sm:$0xff]
    %v85 = vld [vmem:[%s0 + $0x8] sm:$0xff]
    %v86 = vld [vmem:[%s0 + $0x10] sm:$0xff]
    %v87 = vld [vmem:[%s0 + $0x18] sm:$0xff]
    %v88 = vld [vmem:[%s0 + $0x20] sm:$0xff]
    %v89 = vld [vmem:[%s0 + $0x28] sm:$0xff]
    %v90 = vld [vmem:[%s0 + $0x30] sm:$0xff]
    %v91 = vld [vmem:[%s0 + $0x38] sm:$0xff]
    %v92 = vld [vmem:[%s0 + $0x40] sm:$0xff]
    %v93 = vld [vmem:[%s0 + $0x48] sm:$0xff]
    %v94 = vld [vmem:[%s0 + $0x50] sm:$0xff]
    %v95 = vld [vmem:[%s0 + $0x58] sm:$0xff]
    %v96 = vld [vmem:[%s0 + $0x60] sm:$0xff]
    %v97 = vld [vmem:[%s0 + $0x68] sm:$0xff]
    %v98 = vld [vmem:[%s0 + $0x70] sm:$0xff]
    %v99 = vld [vmem:[%s0 + $0x78] sm:$0xff]
    %v100 = vpack.c.bf16 %v85, %v84
    %v101 = vpack.c.bf16 %v87, %v86
    %v102 = vpack.c.bf16 %v89, %v88
    %v103 = vpack.c.bf16 %v91, %v90
    %v104 = vpack.c.bf16 %v93, %v92
    %v105 = vpack.c.bf16 %v95, %v94
    %v106 = vpack.c.bf16 %v97, %v96
    %v107 = vpack.c.bf16 %v99, %v98
    %v108 = vld [vmem:[#allocation4] sm:$0xff]
    %v109 = vld [vmem:[#allocation4 + $0x8] sm:$0xff]
    %v110 = vld [vmem:[#allocation4 + $0x10] sm:$0xff]
    %v111 = vld [vmem:[#allocation4 + $0x18] sm:$0xff]
    %v112 = vld [vmem:[%s3] sm:$0x3]
    %v114 = vlaneseq
    %v115 = vshrl.u32 %v114, 7
    %v116 = vsub.s32 0, %v115
    %v117 = vrot.slane %v112, %v116
    %v118 = vlaneseq
    %v119 = vshrl.u32 %v118, 7
    %v120 = vsub.s32 1, %v119
    %v121 = vrot.slane %v112, %v120
    %v128 = vunpack.c.l.b16 %v108
    %v129 = vunpack.c.h.b16 %v108
    %v130 = vunpack.c.l.b16 %v109
    %v131 = vunpack.c.h.b16 %v109
    %v132 = vunpack.c.l.b16 %v110
    %v133 = vunpack.c.h.b16 %v110
    %v134 = vunpack.c.l.b16 %v111
    %v135 = vunpack.c.h.b16 %v111
    %v136 = vpack.c.b16 %v130, %v128
    %v137 = vpack.c.b16 %v131, %v129
    %v138 = vpack.c.b16 %v134, %v132
    %v139 = vpack.c.b16 %v135, %v133
    %vm144 = vcmask 261120
    %v146 = vsel %vm144, %v100, 0
    %v149 = vsel %vm144, %v101, 0
    %v152 = vsel %vm144, %v102, 0
    %v155 = vsel %vm144, %v103, 0
    %v158 = vsel %vm144, %v104, 0
    %v161 = vsel %vm144, %v105, 0
    %v164 = vsel %vm144, %v106, 0
    %v167 = vsel %vm144, %v107, 0
    %169 = vmatprep.subr.bf16.mxu0 %v137
    %170 = vmatpush1.bf16.msra.mxu0 %v136
    %171 = vmatprep.subr.bf16.mxu0 %v139
    %172 = vmatpush1.bf16.msra.mxu0 %v138
    %173 = vmatprep.subr.bf16.mxu0 0
    %174 = vmatpush1.bf16.msra.mxu0 0
    %175 = vmatprep.subr.bf16.mxu0 0
    %176 = vmatpush1.bf16.msra.mxu0 0
    %177 = vmatprep.subr.bf16.mxu0 0
    %178 = vmatpush1.bf16.msra.mxu0 0
    %179 = vmatprep.subr.bf16.mxu0 0
    %180 = vmatpush1.bf16.msra.mxu0 0
    %181 = vmatprep.subr.bf16.mxu0 0
    %182 = vmatpush1.bf16.msra.mxu0 0
    %183 = vmatprep.subr.bf16.mxu0 0
    %184 = vmatpush1.bf16.msra.mxu0 0
    %185 = vmatprep.subr.bf16.mxu0 0
    %186 = vmatpush1.bf16.msra.mxu0 0
    %187 = vmatprep.subr.bf16.mxu0 0
    %188 = vmatpush1.bf16.msra.mxu0 0
    %189 = vmatprep.subr.bf16.mxu0 0
    %190 = vmatpush1.bf16.msra.mxu0 0
    %191 = vmatprep.subr.bf16.mxu0 0
    %192 = vmatpush1.bf16.msra.mxu0 0
    %193 = vmatprep.subr.bf16.mxu0 0
    %194 = vmatpush1.bf16.msra.mxu0 0
    %195 = vmatprep.subr.bf16.mxu0 0
    %196 = vmatpush1.bf16.msra.mxu0 0
    %197 = vmatprep.subr.bf16.mxu0 0
    %198 = vmatpush1.bf16.msra.mxu0 0
    %199 = vmatprep.subr.bf16.mxu0 0
    %200 = vmatpush1.bf16.msra.mxu0 0
    %201 = vmatprep.mubr.bf16.mxu0 0
    %202 = vmatmul.mubr.bf16.gmra.mrb[0].mxu0 %v146
    %v203 = vpop.f32.mrb[0].mxu0
    %v204 = vadd.f32 %v117, %v203
    %v205 = vpop.f32.mrb[0].mxu0
    %v206 = vadd.f32 %v121, %v205
    %v207 = vpop.f32.mrb[0].mxu0
    %v208 = vadd.f32 %v117, %v207
    %v209 = vpop.f32.mrb[0].mxu0
    %v210 = vadd.f32 %v121, %v209
    %211 = vmatprep.mubr.bf16.mxu0 0
    %212 = vmatmul.mubr.bf16.gmra.mrb[0].mxu0 %v149
    %v213 = vpop.f32.mrb[0].mxu0
    %v214 = vadd.f32 %v117, %v213
    %v215 = vpop.f32.mrb[0].mxu0
    %v216 = vadd.f32 %v121, %v215
    %v217 = vpop.f32.mrb[0].mxu0
    %v218 = vadd.f32 %v117, %v217
    %v219 = vpop.f32.mrb[0].mxu0
    %v220 = vadd.f32 %v121, %v219
    %221 = vmatprep.mubr.bf16.mxu0 0
    %222 = vmatmul.mubr.bf16.gmra.mrb[0].mxu0 %v152
    %v223 = vpop.f32.mrb[0].mxu0
    %v224 = vadd.f32 %v117, %v223
    %v225 = vpop.f32.mrb[0].mxu0
    %v226 = vadd.f32 %v121, %v225
    %v227 = vpop.f32.mrb[0].mxu0
    %v228 = vadd.f32 %v117, %v227
    %v229 = vpop.f32.mrb[0].mxu0
    %v230 = vadd.f32 %v121, %v229
    %231 = vmatprep.mubr.bf16.mxu0 0
    %232 = vmatmul.mubr.bf16.gmra.mrb[0].mxu0 %v155
    %v233 = vpop.f32.mrb[0].mxu0
    %v234 = vadd.f32 %v117, %v233
    %v235 = vpop.f32.mrb[0].mxu0
    %v236 = vadd.f32 %v121, %v235
    %v237 = vpop.f32.mrb[0].mxu0
    %v238 = vadd.f32 %v117, %v237
    %v239 = vpop.f32.mrb[0].mxu0
    %v240 = vadd.f32 %v121, %v239
    %241 = vmatprep.mubr.bf16.mxu0 0
    %242 = vmatmul.mubr.bf16.gmra.mrb[0].mxu0 %v158
    %v243 = vpop.f32.mrb[0].mxu0
    %v244 = vadd.f32 %v117, %v243
    %v245 = vpop.f32.mrb[0].mxu0
    %v246 = vadd.f32 %v121, %v245
    %v247 = vpop.f32.mrb[0].mxu0
    %v248 = vadd.f32 %v117, %v247
    %v249 = vpop.f32.mrb[0].mxu0
    %v250 = vadd.f32 %v121, %v249
    %251 = vmatprep.mubr.bf16.mxu0 0
    %252 = vmatmul.mubr.bf16.gmra.mrb[0].mxu0 %v161
    %v253 = vpop.f32.mrb[0].mxu0
    %v254 = vadd.f32 %v117, %v253
    %v255 = vpop.f32.mrb[0].mxu0
    %v256 = vadd.f32 %v121, %v255
    %v257 = vpop.f32.mrb[0].mxu0
    %v258 = vadd.f32 %v117, %v257
    %v259 = vpop.f32.mrb[0].mxu0
    %v260 = vadd.f32 %v121, %v259
    %261 = vmatprep.mubr.bf16.mxu0 0
    %262 = vmatmul.mubr.bf16.gmra.mrb[0].mxu0 %v164
    %v263 = vpop.f32.mrb[0].mxu0
    %v264 = vadd.f32 %v117, %v263
    %v265 = vpop.f32.mrb[0].mxu0
    %v266 = vadd.f32 %v121, %v265
    %v267 = vpop.f32.mrb[0].mxu0
    %v268 = vadd.f32 %v117, %v267
    %v269 = vpop.f32.mrb[0].mxu0
    %v270 = vadd.f32 %v121, %v269
    %271 = vmatprep.mubr.bf16.mxu0 0
    %272 = vmatmul.mubr.bf16.gmra.mrb[0].mxu0 %v167
    %v273 = vpop.f32.mrb[0].mxu0
    %v274 = vadd.f32 %v117, %v273
    %v275 = vpop.f32.mrb[0].mxu0
    %v276 = vadd.f32 %v121, %v275
    %v277 = vpop.f32.mrb[0].mxu0
    %v278 = vadd.f32 %v117, %v277
    %v279 = vpop.f32.mrb[0].mxu0
    %v280 = vadd.f32 %v121, %v279
    %281 = vdwg.mxu0
    %282 = vst [vmem:[#allocation2] sm:$0xff] %v204
    %283 = vst [vmem:[#allocation2 + $0x8] sm:$0xff] %v206
    %284 = vst [vmem:[#allocation2 + $0x10] sm:$0xff] %v208
    %285 = vst [vmem:[#allocation2 + $0x18] sm:$0xff] %v210
    %286 = vst [vmem:[#allocation2 + $0x20] sm:$0xff] %v214
    %287 = vst [vmem:[#allocation2 + $0x28] sm:$0xff] %v216
    %288 = vst [vmem:[#allocation2 + $0x30] sm:$0xff] %v218
    %289 = vst [vmem:[#allocation2 + $0x38] sm:$0xff] %v220
    %290 = vst [vmem:[#allocation2 + $0x40] sm:$0xff] %v224
    %291 = vst [vmem:[#allocation2 + $0x48] sm:$0xff] %v226
    %292 = vst [vmem:[#allocation2 + $0x50] sm:$0xff] %v228
    %293 = vst [vmem:[#allocation2 + $0x58] sm:$0xff] %v230
    %294 = vst [vmem:[#allocation2 + $0x60] sm:$0xff] %v234
    %295 = vst [vmem:[#allocation2 + $0x68] sm:$0xff] %v236
    %296 = vst [vmem:[#allocation2 + $0x70] sm:$0xff] %v238
    %297 = vst [vmem:[#allocation2 + $0x78] sm:$0xff] %v240
    %298 = vst [vmem:[#allocation2 + $0x80] sm:$0xff] %v244
    %299 = vst [vmem:[#allocation2 + $0x88] sm:$0xff] %v246
    %300 = vst [vmem:[#allocation2 + $0x90] sm:$0xff] %v248
    %301 = vst [vmem:[#allocation2 + $0x98] sm:$0xff] %v250
    %302 = vst [vmem:[#allocation2 + $0xa0] sm:$0xff] %v254
    %303 = vst [vmem:[#allocation2 + $0xa8] sm:$0xff] %v256
    %304 = vst [vmem:[#allocation2 + $0xb0] sm:$0xff] %v258
    %305 = vst [vmem:[#allocation2 + $0xb8] sm:$0xff] %v260
    %306 = vst [vmem:[#allocation2 + $0xc0] sm:$0xff] %v264
    %307 = vst [vmem:[#allocation2 + $0xc8] sm:$0xff] %v266
    %308 = vst [vmem:[#allocation2 + $0xd0] sm:$0xff] %v268
    %309 = vst [vmem:[#allocation2 + $0xd8] sm:$0xff] %v270
    %310 = vst [vmem:[#allocation2 + $0xe0] sm:$0xff] %v274
    %311 = vst [vmem:[#allocation2 + $0xe8] sm:$0xff] %v276
    %312 = vst [vmem:[#allocation2 + $0xf0] sm:$0xff] %v278
    %313 = vst [vmem:[#allocation2 + $0xf8] sm:$0xff] %v280
    %v314 = vld [vmem:[%s2] sm:$0xff]
    %v315 = vld [vmem:[%s2 + $0x8] sm:$0xff]
    %v316 = vld [vmem:[%s2 + $0x10] sm:$0xff]
    %v317 = vld [vmem:[%s2 + $0x18] sm:$0xff]
    %v318 = vld [vmem:[%s2 + $0x20] sm:$0xff]
    %v319 = vld [vmem:[%s2 + $0x28] sm:$0xff]
    %v320 = vld [vmem:[%s2 + $0x30] sm:$0xff]
    %v321 = vld [vmem:[%s2 + $0x38] sm:$0xff]
    %s322 = smul.u32 0, 2
    %s323 = smul.addr %s322, 8
    %s324 = scalar_lea.vmem [#allocation2], %s323
    %v325 = vld [vmem:[%s324] sm:$0xff]
    %v326 = vld [vmem:[%s324 + $0x8] sm:$0xff]
    %v335 = vunpack.c.l.b16 %v314
    %v336 = vunpack.c.h.b16 %v314
    %v337 = vunpack.c.l.b16 %v315
    %v338 = vunpack.c.h.b16 %v315
    %v339 = vunpack.c.l.b16 %v316
    %v340 = vunpack.c.h.b16 %v316
    %v341 = vunpack.c.l.b16 %v317
    %v342 = vunpack.c.h.b16 %v317
    %v343 = vunpack.c.l.b16 %v318
    %v344 = vunpack.c.h.b16 %v318
    %v345 = vunpack.c.l.b16 %v319
    %v346 = vunpack.c.h.b16 %v319
    %v347 = vunpack.c.l.b16 %v320
    %v348 = vunpack.c.h.b16 %v320
    %v349 = vunpack.c.l.b16 %v321
    %v350 = vunpack.c.h.b16 %v321
    %v351 = vpack.c.b16 %v337, %v335
    %v352 = vpack.c.b16 %v338, %v336
    %v353 = vpack.c.b16 %v341, %v339
    %v354 = vpack.c.b16 %v342, %v340
    %v355 = vpack.c.b16 %v345, %v343
    %v356 = vpack.c.b16 %v346, %v344
    %v357 = vpack.c.b16 %v349, %v347
    %v358 = vpack.c.b16 %v350, %v348
    %vm367 = vcmask 523264
    %v369 = vsel %vm367, 0, 0
    %371 = vmatprep.subr.bf16.mxu0 %v352
    %372 = vmatpush1.bf16.msra.mxu0 %v351
    %373 = vmatprep.subr.bf16.mxu0 %v354
    %374 = vmatpush1.bf16.msra.mxu0 %v353
    %375 = vmatprep.subr.bf16.mxu0 %v356
    %376 = vmatpush1.bf16.msra.mxu0 %v355
    %377 = vmatprep.subr.bf16.mxu0 %v358
    %378 = vmatpush1.bf16.msra.mxu0 %v357
    %379 = vmatprep.subr.bf16.mxu0 0
    %380 = vmatpush1.bf16.msra.mxu0 0
    %381 = vmatprep.subr.bf16.mxu0 0
    %382 = vmatpush1.bf16.msra.mxu0 0
    %383 = vmatprep.subr.bf16.mxu0 0
    %384 = vmatpush1.bf16.msra.mxu0 0
    %385 = vmatprep.subr.bf16.mxu0 0
    %386 = vmatpush1.bf16.msra.mxu0 0
    %387 = vmatprep.subr.bf16.mxu0 0
    %388 = vmatpush1.bf16.msra.mxu0 0
    %389 = vmatprep.subr.bf16.mxu0 0
    %390 = vmatpush1.bf16.msra.mxu0 0
    %391 = vmatprep.subr.bf16.mxu0 0
    %392 = vmatpush1.bf16.msra.mxu0 0
    %393 = vmatprep.subr.bf16.mxu0 0
    %394 = vmatpush1.bf16.msra.mxu0 0
    %395 = vmatprep.subr.bf16.mxu0 0
    %396 = vmatpush1.bf16.msra.mxu0 0
    %397 = vmatprep.subr.bf16.mxu0 0
    %398 = vmatpush1.bf16.msra.mxu0 0
    %399 = vmatprep.subr.bf16.mxu0 0
    %400 = vmatpush1.bf16.msra.mxu0 0
    %401 = vmatprep.subr.bf16.mxu0 0
    %402 = vmatpush1.bf16.msra.mxu0 0
    %403 = vmatprep.mubr.bf16.mxu0 0
    %404 = vmatmul.mubr.bf16.gmra.mrb[0].mxu0 %v369
    %v405 = vpop.f32.mrb[0].mxu0
    %v406 = vadd.f32 0.0, %v405
    %v407 = vpop.f32.mrb[0].mxu0
    %v408 = vadd.f32 0.0, %v407
    %v409 = vpop.f32.mrb[0].mxu0
    %v410 = vpop.f32.mrb[0].mxu0
    %411 = vdwg.mxu0
    %v412 = vadd.f32 %v325, %v406
    %v413 = vadd.f32 %v326, %v408
    %v414 = vxor.u32 %v412, 2147483648
    %v415 = vxor.u32 %v413, 2147483648
    %v416 = vmul.f32 %v414, 1.442695
    %v417 = vpow.pop %v416
    %v418 = vmul.f32 %v415, 1.442695
    %v419 = vpow.pop %v418
    %v420 = vadd.f32 %v417, 1.0
    %v421 = vadd.f32 %v419, 1.0
    %v422 = vrcp.pop %v420
    %v423 = vmul.f32 1.0, %v422
    %v424 = vrcp.pop %v421
    %v425 = vmul.f32 1.0, %v424
    %v426 = vtanh.pop %v413
    %v427 = vmul.f32 %v423, 0.0
    %429 = vrot.lane.b32.xlu0 %v426, 64
    %v430 = vpop.permute.xlu0 %429
    %v432 = vmul.f32 %v423, %v430
    %434 = vrot.lane.b32.xlu0 %v432, 64
    %v435 = vpop.permute.xlu0 %434
    %v437 = vadd.f32 %v427, %v435
    %v438 = vtanh.pop %v437
    %440 = vrot.lane.b32.xlu0 %v438, 64
    %v441 = vpop.permute.xlu0 %440
    %v443 = vmul.f32 %v425, %v441
    %444 = vst.msk [vmem:[#allocation3] sm:$0xff] %vm367, %v443
    %s445 = smul.u32 1, 2
    %s446 = smul.addr %s445, 8
    %s447 = scalar_lea.vmem [#allocation2], %s446
    %v448 = vld [vmem:[%s447] sm:$0xff]
    %v449 = vld [vmem:[%s447 + $0x8] sm:$0xff]
    %v450 = vpack.c.bf16 %v443, %v443
    %v452 = vsel %vm367, %v450, 0
    %454 = vmatprep.subr.bf16.mxu0 %v352
    %455 = vmatpush1.bf16.msra.mxu0 %v351
    %456 = vmatprep.subr.bf16.mxu0 %v354
    %457 = vmatpush1.bf16.msra.mxu0 %v353
    %458 = vmatprep.subr.bf16.mxu0 %v356
    %459 = vmatpush1.bf16.msra.mxu0 %v355
    %460 = vmatprep.subr.bf16.mxu0 %v358
    %461 = vmatpush1.bf16.msra.mxu0 %v357
    %462 = vmatprep.subr.bf16.mxu0 0
    %463 = vmatpush1.bf16.msra.mxu0 0
    %464 = vmatprep.subr.bf16.mxu0 0
    %465 = vmatpush1.bf16.msra.mxu0 0
    %466 = vmatprep.subr.bf16.mxu0 0
    %467 = vmatpush1.bf16.msra.mxu0 0
    %468 = vmatprep.subr.bf16.mxu0 0
    %469 = vmatpush1.bf16.msra.mxu0 0
    %470 = vmatprep.subr.bf16.mxu0 0
    %471 = vmatpush1.bf16.msra.mxu0 0
    %472 = vmatprep.subr.bf16.mxu0 0
    %473 = vmatpush1.bf16.msra.mxu0 0
    %474 = vmatprep.subr.bf16.mxu0 0
    %475 = vmatpush1.bf16.msra.mxu0 0
    %476 = vmatprep.subr.bf16.mxu0 0
    %477 = vmatpush1.bf16.msra.mxu0 0
    %478 = vmatprep.subr.bf16.mxu0 0
    %479 = vmatpush1.bf16.msra.mxu0 0
    %480 = vmatprep.subr.bf16.mxu0 0
    %481 = vmatpush1.bf16.msra.mxu0 0
    %482 = vmatprep.subr.bf16.mxu0 0
    %483 = vmatpush1.bf16.msra.mxu0 0
    %484 = vmatprep.subr.bf16.mxu0 0
    %485 = vmatpush1.bf16.msra.mxu0 0
    %486 = vmatprep.mubr.bf16.mxu0 0
    %487 = vmatmul.mubr.bf16.gmra.mrb[0].mxu0 %v452
    %v488 = vpop.f32.mrb[0].mxu0
    %v489 = vadd.f32 0.0, %v488
    %v490 = vpop.f32.mrb[0].mxu0
    %v491 = vadd.f32 0.0, %v490
    %v492 = vpop.f32.mrb[0].mxu0
    %v493 = vpop.f32.mrb[0].mxu0
    %494 = vdwg.mxu0
    %v495 = vadd.f32 %v448, %v489
    %v496 = vadd.f32 %v449, %v491
    %v497 = vxor.u32 %v495, 2147483648
    %v498 = vxor.u32 %v496, 2147483648
    %v499 = vmul.f32 %v497, 1.442695
    %v500 = vpow.pop %v499
    %v501 = vmul.f32 %v498, 1.442695
    %v502 = vpow.pop %v501
    %v503 = vadd.f32 %v500, 1.0
    %v504 = vadd.f32 %v502, 1.0
    %v505 = vrcp.pop %v503
    %v506 = vmul.f32 1.0, %v505
    %v507 = vrcp.pop %v504
    %v508 = vmul.f32 1.0, %v507
    %v509 = vtanh.pop %v496
    %v510 = vmul.f32 %v506, %v437
    %512 = vrot.lane.b32.xlu0 %v509, 64
    %v513 = vpop.permute.xlu0 %512
    %v515 = vmul.f32 %v506, %v513
    %517 = vrot.lane.b32.xlu0 %v515, 64
    %v518 = vpop.permute.xlu0 %517
    %v520 = vadd.f32 %v510, %v518
    %v521 = vtanh.pop %v520
    %523 = vrot.lane.b32.xlu0 %v521, 64
    %v524 = vpop.permute.xlu0 %523
    %v526 = vmul.f32 %v508, %v524
    %s527 = scalar_lea.vmem [#allocation3], 8
    %528 = vst.msk [vmem:[%s527] sm:$0xff] %vm367, %v526
    %s529 = smul.u32 2, 2
    %s530 = smul.addr %s529, 8
    %s531 = scalar_lea.vmem [#allocation2], %s530
    %v532 = vld [vmem:[%s531] sm:$0xff]
    %v533 = vld [vmem:[%s531 + $0x8] sm:$0xff]
    %v534 = vpack.c.bf16 %v526, %v526
    %v536 = vsel %vm367, %v534, 0
    %538 = vmatprep.subr.bf16.mxu0 %v352
    %539 = vmatpush1.bf16.msra.mxu0 %v351
    %540 = vmatprep.subr.bf16.mxu0 %v354
    %541 = vmatpush1.bf16.msra.mxu0 %v353
    %542 = vmatprep.subr.bf16.mxu0 %v356
    %543 = vmatpush1.bf16.msra.mxu0 %v355
    %544 = vmatprep.subr.bf16.mxu0 %v358
    %545 = vmatpush1.bf16.msra.mxu0 %v357
    %546 = vmatprep.subr.bf16.mxu0 0
    %547 = vmatpush1.bf16.msra.mxu0 0
    %548 = vmatprep.subr.bf16.mxu0 0
    %549 = vmatpush1.bf16.msra.mxu0 0
    %550 = vmatprep.subr.bf16.mxu0 0
    %551 = vmatpush1.bf16.msra.mxu0 0
    %552 = vmatprep.subr.bf16.mxu0 0
    %553 = vmatpush1.bf16.msra.mxu0 0
    %554 = vmatprep.subr.bf16.mxu0 0
    %555 = vmatpush1.bf16.msra.mxu0 0
    %556 = vmatprep.subr.bf16.mxu0 0
    %557 = vmatpush1.bf16.msra.mxu0 0
    %558 = vmatprep.subr.bf16.mxu0 0
    %559 = vmatpush1.bf16.msra.mxu0 0
    %560 = vmatprep.subr.bf16.mxu0 0
    %561 = vmatpush1.bf16.msra.mxu0 0
    %562 = vmatprep.subr.bf16.mxu0 0
    %563 = vmatpush1.bf16.msra.mxu0 0
    %564 = vmatprep.subr.bf16.mxu0 0
    %565 = vmatpush1.bf16.msra.mxu0 0
    %566 = vmatprep.subr.bf16.mxu0 0
    %567 = vmatpush1.bf16.msra.mxu0 0
    %568 = vmatprep.subr.bf16.mxu0 0
    %569 = vmatpush1.bf16.msra.mxu0 0
    %570 = vmatprep.mubr.bf16.mxu0 0
    %571 = vmatmul.mubr.bf16.gmra.mrb[0].mxu0 %v536
    %v572 = vpop.f32.mrb[0].mxu0
    %v573 = vadd.f32 0.0, %v572
    %v574 = vpop.f32.mrb[0].mxu0
    %v575 = vadd.f32 0.0, %v574
    %v576 = vpop.f32.mrb[0].mxu0
    %v577 = vpop.f32.mrb[0].mxu0
    %578 = vdwg.mxu0
    %v579 = vadd.f32 %v532, %v573
    %v580 = vadd.f32 %v533, %v575
    %v581 = vxor.u32 %v579, 2147483648
    %v582 = vxor.u32 %v580, 2147483648
    %v583 = vmul.f32 %v581, 1.442695
    %v584 = vpow.pop %v583
    %v585 = vmul.f32 %v582, 1.442695
    %v586 = vpow.pop %v585
    %v587 = vadd.f32 %v584, 1.0
    %v588 = vadd.f32 %v586, 1.0
    %v589 = vrcp.pop %v587
    %v590 = vmul.f32 1.0, %v589
    %v591 = vrcp.pop %v588
    %v592 = vmul.f32 1.0, %v591
    %v593 = vtanh.pop %v580
    %v594 = vmul.f32 %v590, %v520
    %596 = vrot.lane.b32.xlu0 %v593, 64
    %v597 = vpop.permute.xlu0 %596
    %v599 = vmul.f32 %v590, %v597
    %601 = vrot.lane.b32.xlu0 %v599, 64
    %v602 = vpop.permute.xlu0 %601
    %v604 = vadd.f32 %v594, %v602
    %v605 = vtanh.pop %v604
    %607 = vrot.lane.b32.xlu0 %v605, 64
    %v608 = vpop.permute.xlu0 %607
    %v610 = vmul.f32 %v592, %v608
    %s611 = scalar_lea.vmem [#allocation3], 16
    %612 = vst.msk [vmem:[%s611] sm:$0xff] %vm367, %v610
    %s613 = smul.u32 3, 2
    %s614 = smul.addr %s613, 8
    %s615 = scalar_lea.vmem [#allocation2], %s614
    %v616 = vld [vmem:[%s615] sm:$0xff]
    %v617 = vld [vmem:[%s615 + $0x8] sm:$0xff]
    %v618 = vpack.c.bf16 %v610, %v610
    %v620 = vsel %vm367, %v618, 0
    %622 = vmatprep.subr.bf16.mxu0 %v352
    %623 = vmatpush1.bf16.msra.mxu0 %v351
    %624 = vmatprep.subr.bf16.mxu0 %v354
    %625 = vmatpush1.bf16.msra.mxu0 %v353
    %626 = vmatprep.subr.bf16.mxu0 %v356
    %627 = vmatpush1.bf16.msra.mxu0 %v355
    %628 = vmatprep.subr.bf16.mxu0 %v358
    %629 = vmatpush1.bf16.msra.mxu0 %v357
    %630 = vmatprep.subr.bf16.mxu0 0
    %631 = vmatpush1.bf16.msra.mxu0 0
    %632 = vmatprep.subr.bf16.mxu0 0
    %633 = vmatpush1.bf16.msra.mxu0 0
    %634 = vmatprep.subr.bf16.mxu0 0
    %635 = vmatpush1.bf16.msra.mxu0 0
    %636 = vmatprep.subr.bf16.mxu0 0
    %637 = vmatpush1.bf16.msra.mxu0 0
    %638 = vmatprep.subr.bf16.mxu0 0
    %639 = vmatpush1.bf16.msra.mxu0 0
    %640 = vmatprep.subr.bf16.mxu0 0
    %641 = vmatpush1.bf16.msra.mxu0 0
    %642 = vmatprep.subr.bf16.mxu0 0
    %643 = vmatpush1.bf16.msra.mxu0 0
    %644 = vmatprep.subr.bf16.mxu0 0
    %645 = vmatpush1.bf16.msra.mxu0 0
    %646 = vmatprep.subr.bf16.mxu0 0
    %647 = vmatpush1.bf16.msra.mxu0 0
    %648 = vmatprep.subr.bf16.mxu0 0
    %649 = vmatpush1.bf16.msra.mxu0 0
    %650 = vmatprep.subr.bf16.mxu0 0
    %651 = vmatpush1.bf16.msra.mxu0 0
    %652 = vmatprep.subr.bf16.mxu0 0
    %653 = vmatpush1.bf16.msra.mxu0 0
    %654 = vmatprep.mubr.bf16.mxu0 0
    %655 = vmatmul.mubr.bf16.gmra.mrb[0].mxu0 %v620
    %v656 = vpop.f32.mrb[0].mxu0
    %v657 = vadd.f32 0.0, %v656
    %v658 = vpop.f32.mrb[0].mxu0
    %v659 = vadd.f32 0.0, %v658
    %v660 = vpop.f32.mrb[0].mxu0
    %v661 = vpop.f32.mrb[0].mxu0
    %662 = vdwg.mxu0
    %v663 = vadd.f32 %v616, %v657
    %v664 = vadd.f32 %v617, %v659
    %v665 = vxor.u32 %v663, 2147483648
    %v666 = vxor.u32 %v664, 2147483648
    %v667 = vmul.f32 %v665, 1.442695
    %v668 = vpow.pop %v667
    %v669 = vmul.f32 %v666, 1.442695
    %v670 = vpow.pop %v669
    %v671 = vadd.f32 %v668, 1.0
    %v672 = vadd.f32 %v670, 1.0
    %v673 = vrcp.pop %v671
    %v674 = vmul.f32 1.0, %v673
    %v675 = vrcp.pop %v672
    %v676 = vmul.f32 1.0, %v675
    %v677 = vtanh.pop %v664
    %v678 = vmul.f32 %v674, %v604
    %680 = vrot.lane.b32.xlu0 %v677, 64
    %v681 = vpop.permute.xlu0 %680
    %v683 = vmul.f32 %v674, %v681
    %685 = vrot.lane.b32.xlu0 %v683, 64
    %v686 = vpop.permute.xlu0 %685
    %v688 = vadd.f32 %v678, %v686
    %v689 = vtanh.pop %v688
    %691 = vrot.lane.b32.xlu0 %v689, 64
    %v692 = vpop.permute.xlu0 %691
    %v694 = vmul.f32 %v676, %v692
    %s695 = scalar_lea.vmem [#allocation3], 24
    %696 = vst.msk [vmem:[%s695] sm:$0xff] %vm367, %v694
    %s697 = smul.u32 4, 2
    %s698 = smul.addr %s697, 8
    %s699 = scalar_lea.vmem [#allocation2], %s698
    %v700 = vld [vmem:[%s699] sm:$0xff]
    %v701 = vld [vmem:[%s699 + $0x8] sm:$0xff]
    %v702 = vpack.c.bf16 %v694, %v694
    %v704 = vsel %vm367, %v702, 0
    %706 = vmatprep.subr.bf16.mxu0 %v352
    %707 = vmatpush1.bf16.msra.mxu0 %v351
    %708 = vmatprep.subr.bf16.mxu0 %v354
    %709 = vmatpush1.bf16.msra.mxu0 %v353
    %710 = vmatprep.subr.bf16.mxu0 %v356
    %711 = vmatpush1.bf16.msra.mxu0 %v355
    %712 = vmatprep.subr.bf16.mxu0 %v358
    %713 = vmatpush1.bf16.msra.mxu0 %v357
    %714 = vmatprep.subr.bf16.mxu0 0
    %715 = vmatpush1.bf16.msra.mxu0 0
    %716 = vmatprep.subr.bf16.mxu0 0
    %717 = vmatpush1.bf16.msra.mxu0 0
    %718 = vmatprep.subr.bf16.mxu0 0
    %719 = vmatpush1.bf16.msra.mxu0 0
    %720 = vmatprep.subr.bf16.mxu0 0
    %721 = vmatpush1.bf16.msra.mxu0 0
    %722 = vmatprep.subr.bf16.mxu0 0
    %723 = vmatpush1.bf16.msra.mxu0 0
    %724 = vmatprep.subr.bf16.mxu0 0
    %725 = vmatpush1.bf16.msra.mxu0 0
    %726 = vmatprep.subr.bf16.mxu0 0
    %727 = vmatpush1.bf16.msra.mxu0 0
    %728 = vmatprep.subr.bf16.mxu0 0
    %729 = vmatpush1.bf16.msra.mxu0 0
    %730 = vmatprep.subr.bf16.mxu0 0
    %731 = vmatpush1.bf16.msra.mxu0 0
    %732 = vmatprep.subr.bf16.mxu0 0
    %733 = vmatpush1.bf16.msra.mxu0 0
    %734 = vmatprep.subr.bf16.mxu0 0
    %735 = vmatpush1.bf16.msra.mxu0 0
    %736 = vmatprep.subr.bf16.mxu0 0
    %737 = vmatpush1.bf16.msra.mxu0 0
    %738 = vmatprep.mubr.bf16.mxu0 0
    %739 = vmatmul.mubr.bf16.gmra.mrb[0].mxu0 %v704
    %v740 = vpop.f32.mrb[0].mxu0
    %v741 = vadd.f32 0.0, %v740
    %v742 = vpop.f32.mrb[0].mxu0
    %v743 = vadd.f32 0.0, %v742
    %v744 = vpop.f32.mrb[0].mxu0
    %v745 = vpop.f32.mrb[0].mxu0
    %746 = vdwg.mxu0
    %v747 = vadd.f32 %v700, %v741
    %v748 = vadd.f32 %v701, %v743
    %v749 = vxor.u32 %v747, 2147483648
    %v750 = vxor.u32 %v748, 2147483648
    %v751 = vmul.f32 %v749, 1.442695
    %v752 = vpow.pop %v751
    %v753 = vmul.f32 %v750, 1.442695
    %v754 = vpow.pop %v753
    %v755 = vadd.f32 %v752, 1.0
    %v756 = vadd.f32 %v754, 1.0
    %v757 = vrcp.pop %v755
    %v758 = vmul.f32 1.0, %v757
    %v759 = vrcp.pop %v756
    %v760 = vmul.f32 1.0, %v759
    %v761 = vtanh.pop %v748
    %v762 = vmul.f32 %v758, %v688
    %764 = vrot.lane.b32.xlu0 %v761, 64
    %v765 = vpop.permute.xlu0 %764
    %v767 = vmul.f32 %v758, %v765
    %769 = vrot.lane.b32.xlu0 %v767, 64
    %v770 = vpop.permute.xlu0 %769
    %v772 = vadd.f32 %v762, %v770
    %v773 = vtanh.pop %v772
    %775 = vrot.lane.b32.xlu0 %v773, 64
    %v776 = vpop.permute.xlu0 %775
    %v778 = vmul.f32 %v760, %v776
    %s779 = scalar_lea.vmem [#allocation3], 32
    %780 = vst.msk [vmem:[%s779] sm:$0xff] %vm367, %v778
    %s781 = smul.u32 5, 2
    %s782 = smul.addr %s781, 8
    %s783 = scalar_lea.vmem [#allocation2], %s782
    %v784 = vld [vmem:[%s783] sm:$0xff]
    %v785 = vld [vmem:[%s783 + $0x8] sm:$0xff]
    %v786 = vpack.c.bf16 %v778, %v778
    %v788 = vsel %vm367, %v786, 0
    %790 = vmatprep.subr.bf16.mxu0 %v352
    %791 = vmatpush1.bf16.msra.mxu0 %v351
    %792 = vmatprep.subr.bf16.mxu0 %v354
    %793 = vmatpush1.bf16.msra.mxu0 %v353
    %794 = vmatprep.subr.bf16.mxu0 %v356
    %795 = vmatpush1.bf16.msra.mxu0 %v355
    %796 = vmatprep.subr.bf16.mxu0 %v358
    %797 = vmatpush1.bf16.msra.mxu0 %v357
    %798 = vmatprep.subr.bf16.mxu0 0
    %799 = vmatpush1.bf16.msra.mxu0 0
    %800 = vmatprep.subr.bf16.mxu0 0
    %801 = vmatpush1.bf16.msra.mxu0 0
    %802 = vmatprep.subr.bf16.mxu0 0
    %803 = vmatpush1.bf16.msra.mxu0 0
    %804 = vmatprep.subr.bf16.mxu0 0
    %805 = vmatpush1.bf16.msra.mxu0 0
    %806 = vmatprep.subr.bf16.mxu0 0
    %807 = vmatpush1.bf16.msra.mxu0 0
    %808 = vmatprep.subr.bf16.mxu0 0
    %809 = vmatpush1.bf16.msra.mxu0 0
    %810 = vmatprep.subr.bf16.mxu0 0
    %811 = vmatpush1.bf16.msra.mxu0 0
    %812 = vmatprep.subr.bf16.mxu0 0
    %813 = vmatpush1.bf16.msra.mxu0 0
    %814 = vmatprep.subr.bf16.mxu0 0
    %815 = vmatpush1.bf16.msra.mxu0 0
    %816 = vmatprep.subr.bf16.mxu0 0
    %817 = vmatpush1.bf16.msra.mxu0 0
    %818 = vmatprep.subr.bf16.mxu0 0
    %819 = vmatpush1.bf16.msra.mxu0 0
    %820 = vmatprep.subr.bf16.mxu0 0
    %821 = vmatpush1.bf16.msra.mxu0 0
    %822 = vmatprep.mubr.bf16.mxu0 0
    %823 = vmatmul.mubr.bf16.gmra.mrb[0].mxu0 %v788
    %v824 = vpop.f32.mrb[0].mxu0
    %v825 = vadd.f32 0.0, %v824
    %v826 = vpop.f32.mrb[0].mxu0
    %v827 = vadd.f32 0.0, %v826
    %v828 = vpop.f32.mrb[0].mxu0
    %v829 = vpop.f32.mrb[0].mxu0
    %830 = vdwg.mxu0
    %v831 = vadd.f32 %v784, %v825
    %v832 = vadd.f32 %v785, %v827
    %v833 = vxor.u32 %v831, 2147483648
    %v834 = vxor.u32 %v832, 2147483648
    %v835 = vmul.f32 %v833, 1.442695
    %v836 = vpow.pop %v835
    %v837 = vmul.f32 %v834, 1.442695
    %v838 = vpow.pop %v837
    %v839 = vadd.f32 %v836, 1.0
    %v840 = vadd.f32 %v838, 1.0
    %v841 = vrcp.pop %v839
    %v842 = vmul.f32 1.0, %v841
    %v843 = vrcp.pop %v840
    %v844 = vmul.f32 1.0, %v843
    %v845 = vtanh.pop %v832
    %v846 = vmul.f32 %v842, %v772
    %848 = vrot.lane.b32.xlu0 %v845, 64
    %v849 = vpop.permute.xlu0 %848
    %v851 = vmul.f32 %v842, %v849
    %853 = vrot.lane.b32.xlu0 %v851, 64
    %v854 = vpop.permute.xlu0 %853
    %v856 = vadd.f32 %v846, %v854
    %v857 = vtanh.pop %v856
    %859 = vrot.lane.b32.xlu0 %v857, 64
    %v860 = vpop.permute.xlu0 %859
    %v862 = vmul.f32 %v844, %v860
    %s863 = scalar_lea.vmem [#allocation3], 40
    %864 = vst.msk [vmem:[%s863] sm:$0xff] %vm367, %v862
    %s865 = smul.u32 6, 2
    %s866 = smul.addr %s865, 8
    %s867 = scalar_lea.vmem [#allocation2], %s866
    %v868 = vld [vmem:[%s867] sm:$0xff]
    %v869 = vld [vmem:[%s867 + $0x8] sm:$0xff]
    %v870 = vpack.c.bf16 %v862, %v862
    %v872 = vsel %vm367, %v870, 0
    %874 = vmatprep.subr.bf16.mxu0 %v352
    %875 = vmatpush1.bf16.msra.mxu0 %v351
    %876 = vmatprep.subr.bf16.mxu0 %v354
    %877 = vmatpush1.bf16.msra.mxu0 %v353
    %878 = vmatprep.subr.bf16.mxu0 %v356
    %879 = vmatpush1.bf16.msra.mxu0 %v355
    %880 = vmatprep.subr.bf16.mxu0 %v358
    %881 = vmatpush1.bf16.msra.mxu0 %v357
    %882 = vmatprep.subr.bf16.mxu0 0
    %883 = vmatpush1.bf16.msra.mxu0 0
    %884 = vmatprep.subr.bf16.mxu0 0
    %885 = vmatpush1.bf16.msra.mxu0 0
    %886 = vmatprep.subr.bf16.mxu0 0
    %887 = vmatpush1.bf16.msra.mxu0 0
    %888 = vmatprep.subr.bf16.mxu0 0
    %889 = vmatpush1.bf16.msra.mxu0 0
    %890 = vmatprep.subr.bf16.mxu0 0
    %891 = vmatpush1.bf16.msra.mxu0 0
    %892 = vmatprep.subr.bf16.mxu0 0
    %893 = vmatpush1.bf16.msra.mxu0 0
    %894 = vmatprep.subr.bf16.mxu0 0
    %895 = vmatpush1.bf16.msra.mxu0 0
    %896 = vmatprep.subr.bf16.mxu0 0
    %897 = vmatpush1.bf16.msra.mxu0 0
    %898 = vmatprep.subr.bf16.mxu0 0
    %899 = vmatpush1.bf16.msra.mxu0 0
    %900 = vmatprep.subr.bf16.mxu0 0
    %901 = vmatpush1.bf16.msra.mxu0 0
    %902 = vmatprep.subr.bf16.mxu0 0
    %903 = vmatpush1.bf16.msra.mxu0 0
    %904 = vmatprep.subr.bf16.mxu0 0
    %905 = vmatpush1.bf16.msra.mxu0 0
    %906 = vmatprep.mubr.bf16.mxu0 0
    %907 = vmatmul.mubr.bf16.gmra.mrb[0].mxu0 %v872
    %v908 = vpop.f32.mrb[0].mxu0
    %v909 = vadd.f32 0.0, %v908
    %v910 = vpop.f32.mrb[0].mxu0
    %v911 = vadd.f32 0.0, %v910
    %v912 = vpop.f32.mrb[0].mxu0
    %v913 = vpop.f32.mrb[0].mxu0
    %914 = vdwg.mxu0
    %v915 = vadd.f32 %v868, %v909
    %v916 = vadd.f32 %v869, %v911
    %v917 = vxor.u32 %v915, 2147483648
    %v918 = vxor.u32 %v916, 2147483648
    %v919 = vmul.f32 %v917, 1.442695
    %v920 = vpow.pop %v919
    %v921 = vmul.f32 %v918, 1.442695
    %v922 = vpow.pop %v921
    %v923 = vadd.f32 %v920, 1.0
    %v924 = vadd.f32 %v922, 1.0
    %v925 = vrcp.pop %v923
    %v926 = vmul.f32 1.0, %v925
    %v927 = vrcp.pop %v924
    %v928 = vmul.f32 1.0, %v927
    %v929 = vtanh.pop %v916
    %v930 = vmul.f32 %v926, %v856
    %932 = vrot.lane.b32.xlu0 %v929, 64
    %v933 = vpop.permute.xlu0 %932
    %v935 = vmul.f32 %v926, %v933
    %937 = vrot.lane.b32.xlu0 %v935, 64
    %v938 = vpop.permute.xlu0 %937
    %v940 = vadd.f32 %v930, %v938
    %v941 = vtanh.pop %v940
    %943 = vrot.lane.b32.xlu0 %v941, 64
    %v944 = vpop.permute.xlu0 %943
    %v946 = vmul.f32 %v928, %v944
    %s947 = scalar_lea.vmem [#allocation3], 48
    %948 = vst.msk [vmem:[%s947] sm:$0xff] %vm367, %v946
    %s949 = smul.u32 7, 2
    %s950 = smul.addr %s949, 8
    %s951 = scalar_lea.vmem [#allocation2], %s950
    %v952 = vld [vmem:[%s951] sm:$0xff]
    %v953 = vld [vmem:[%s951 + $0x8] sm:$0xff]
    %v954 = vpack.c.bf16 %v946, %v946
    %v956 = vsel %vm367, %v954, 0
    %958 = vmatprep.subr.bf16.mxu0 %v352
    %959 = vmatpush1.bf16.msra.mxu0 %v351
    %960 = vmatprep.subr.bf16.mxu0 %v354
    %961 = vmatpush1.bf16.msra.mxu0 %v353
    %962 = vmatprep.subr.bf16.mxu0 %v356
    %963 = vmatpush1.bf16.msra.mxu0 %v355
    %964 = vmatprep.subr.bf16.mxu0 %v358
    %965 = vmatpush1.bf16.msra.mxu0 %v357
    %966 = vmatprep.subr.bf16.mxu0 0
    %967 = vmatpush1.bf16.msra.mxu0 0
    %968 = vmatprep.subr.bf16.mxu0 0
    %969 = vmatpush1.bf16.msra.mxu0 0
    %970 = vmatprep.subr.bf16.mxu0 0
    %971 = vmatpush1.bf16.msra.mxu0 0
    %972 = vmatprep.subr.bf16.mxu0 0
    %973 = vmatpush1.bf16.msra.mxu0 0
    %974 = vmatprep.subr.bf16.mxu0 0
    %975 = vmatpush1.bf16.msra.mxu0 0
    %976 = vmatprep.subr.bf16.mxu0 0
    %977 = vmatpush1.bf16.msra.mxu0 0
    %978 = vmatprep.subr.bf16.mxu0 0
    %979 = vmatpush1.bf16.msra.mxu0 0
    %980 = vmatprep.subr.bf16.mxu0 0
    %981 = vmatpush1.bf16.msra.mxu0 0
    %982 = vmatprep.subr.bf16.mxu0 0
    %983 = vmatpush1.bf16.msra.mxu0 0
    %984 = vmatprep.subr.bf16.mxu0 0
    %985 = vmatpush1.bf16.msra.mxu0 0
    %986 = vmatprep.subr.bf16.mxu0 0
    %987 = vmatpush1.bf16.msra.mxu0 0
    %988 = vmatprep.subr.bf16.mxu0 0
    %989 = vmatpush1.bf16.msra.mxu0 0
    %990 = vmatprep.mubr.bf16.mxu0 0
    %991 = vmatmul.mubr.bf16.gmra.mrb[0].mxu0 %v956
    %v992 = vpop.f32.mrb[0].mxu0
    %v993 = vadd.f32 0.0, %v992
    %v994 = vpop.f32.mrb[0].mxu0
    %v995 = vadd.f32 0.0, %v994
    %v996 = vpop.f32.mrb[0].mxu0
    %v997 = vpop.f32.mrb[0].mxu0
    %998 = vdwg.mxu0
    %v999 = vadd.f32 %v952, %v993
    %v1000 = vadd.f32 %v953, %v995
    %v1001 = vxor.u32 %v999, 2147483648
    %v1002 = vxor.u32 %v1000, 2147483648
    %v1003 = vmul.f32 %v1001, 1.442695
    %v1004 = vpow.pop %v1003
    %v1005 = vmul.f32 %v1002, 1.442695
    %v1006 = vpow.pop %v1005
    %v1007 = vadd.f32 %v1004, 1.0
    %v1008 = vadd.f32 %v1006, 1.0
    %v1009 = vrcp.pop %v1007
    %v1010 = vmul.f32 1.0, %v1009
    %v1011 = vrcp.pop %v1008
    %v1012 = vmul.f32 1.0, %v1011
    %v1013 = vtanh.pop %v1000
    %v1014 = vmul.f32 %v1010, %v940
    %1016 = vrot.lane.b32.xlu0 %v1013, 64
    %v1017 = vpop.permute.xlu0 %1016
    %v1019 = vmul.f32 %v1010, %v1017
    %1021 = vrot.lane.b32.xlu0 %v1019, 64
    %v1022 = vpop.permute.xlu0 %1021
    %v1024 = vadd.f32 %v1014, %v1022
    %v1025 = vtanh.pop %v1024
    %1027 = vrot.lane.b32.xlu0 %v1025, 64
    %v1028 = vpop.permute.xlu0 %1027
    %v1030 = vmul.f32 %v1012, %v1028
    %s1031 = scalar_lea.vmem [#allocation3], 56
    %1032 = vst.msk [vmem:[%s1031] sm:$0xff] %vm367, %v1030
    %s1033 = smul.u32 8, 2
    %s1034 = smul.addr %s1033, 8
    %s1035 = scalar_lea.vmem [#allocation2], %s1034
    %v1036 = vld [vmem:[%s1035] sm:$0xff]
    %v1037 = vld [vmem:[%s1035 + $0x8] sm:$0xff]
    %v1038 = vpack.c.bf16 %v1030, %v1030
    %v1040 = vsel %vm367, %v1038, 0
    %1042 = vmatprep.subr.bf16.mxu0 %v352
    %1043 = vmatpush1.bf16.msra.mxu0 %v351
    %1044 = vmatprep.subr.bf16.mxu0 %v354
    %1045 = vmatpush1.bf16.msra.mxu0 %v353
    %1046 = vmatprep.subr.bf16.mxu0 %v356
    %1047 = vmatpush1.bf16.msra.mxu0 %v355
    %1048 = vmatprep.subr.bf16.mxu0 %v358
    %1049 = vmatpush1.bf16.msra.mxu0 %v357
    %1050 = vmatprep.subr.bf16.mxu0 0
    %1051 = vmatpush1.bf16.msra.mxu0 0
    %1052 = vmatprep.subr.bf16.mxu0 0
    %1053 = vmatpush1.bf16.msra.mxu0 0
    %1054 = vmatprep.subr.bf16.mxu0 0
    %1055 = vmatpush1.bf16.msra.mxu0 0
    %1056 = vmatprep.subr.bf16.mxu0 0
    %1057 = vmatpush1.bf16.msra.mxu0 0
    %1058 = vmatprep.subr.bf16.mxu0 0
    %1059 = vmatpush1.bf16.msra.mxu0 0
    %1060 = vmatprep.subr.bf16.mxu0 0
    %1061 = vmatpush1.bf16.msra.mxu0 0
    %1062 = vmatprep.subr.bf16.mxu0 0
    %1063 = vmatpush1.bf16.msra.mxu0 0
    %1064 = vmatprep.subr.bf16.mxu0 0
    %1065 = vmatpush1.bf16.msra.mxu0 0
    %1066 = vmatprep.subr.bf16.mxu0 0
    %1067 = vmatpush1.bf16.msra.mxu0 0
    %1068 = vmatprep.subr.bf16.mxu0 0
    %1069 = vmatpush1.bf16.msra.mxu0 0
    %1070 = vmatprep.subr.bf16.mxu0 0
    %1071 = vmatpush1.bf16.msra.mxu0 0
    %1072 = vmatprep.subr.bf16.mxu0 0
    %1073 = vmatpush1.bf16.msra.mxu0 0
    %1074 = vmatprep.mubr.bf16.mxu0 0
    %1075 = vmatmul.mubr.bf16.gmra.mrb[0].mxu0 %v1040
    %v1076 = vpop.f32.mrb[0].mxu0
    %v1077 = vadd.f32 0.0, %v1076
    %v1078 = vpop.f32.mrb[0].mxu0
    %v1079 = vadd.f32 0.0, %v1078
    %v1080 = vpop.f32.mrb[0].mxu0
    %v1081 = vpop.f32.mrb[0].mxu0
    %1082 = vdwg.mxu0
    %v1083 = vadd.f32 %v1036, %v1077
    %v1084 = vadd.f32 %v1037, %v1079
    %v1085 = vxor.u32 %v1083, 2147483648
    %v1086 = vxor.u32 %v1084, 2147483648
    %v1087 = vmul.f32 %v1085, 1.442695
    %v1088 = vpow.pop %v1087
    %v1089 = vmul.f32 %v1086, 1.442695
    %v1090 = vpow.pop %v1089
    %v1091 = vadd.f32 %v1088, 1.0
    %v1092 = vadd.f32 %v1090, 1.0
    %v1093 = vrcp.pop %v1091
    %v1094 = vmul.f32 1.0, %v1093
    %v1095 = vrcp.pop %v1092
    %v1096 = vmul.f32 1.0, %v1095
    %v1097 = vtanh.pop %v1084
    %v1098 = vmul.f32 %v1094, %v1024
    %1100 = vrot.lane.b32.xlu0 %v1097, 64
    %v1101 = vpop.permute.xlu0 %1100
    %v1103 = vmul.f32 %v1094, %v1101
    %1105 = vrot.lane.b32.xlu0 %v1103, 64
    %v1106 = vpop.permute.xlu0 %1105
    %v1108 = vadd.f32 %v1098, %v1106
    %v1109 = vtanh.pop %v1108
    %1111 = vrot.lane.b32.xlu0 %v1109, 64
    %v1112 = vpop.permute.xlu0 %1111
    %v1114 = vmul.f32 %v1096, %v1112
    %s1115 = scalar_lea.vmem [#allocation3], 64
    %1116 = vst.msk [vmem:[%s1115] sm:$0xff] %vm367, %v1114
    %s1117 = smul.u32 9, 2
    %s1118 = smul.addr %s1117, 8
    %s1119 = scalar_lea.vmem [#allocation2], %s1118
    %v1120 = vld [vmem:[%s1119] sm:$0xff]
    %v1121 = vld [vmem:[%s1119 + $0x8] sm:$0xff]
    %v1122 = vpack.c.bf16 %v1114, %v1114
    %v1124 = vsel %vm367, %v1122, 0
    %1126 = vmatprep.subr.bf16.mxu0 %v352
    %1127 = vmatpush1.bf16.msra.mxu0 %v351
    %1128 = vmatprep.subr.bf16.mxu0 %v354
    %1129 = vmatpush1.bf16.msra.mxu0 %v353
    %1130 = vmatprep.subr.bf16.mxu0 %v356
    %1131 = vmatpush1.bf16.msra.mxu0 %v355
    %1132 = vmatprep.subr.bf16.mxu0 %v358
    %1133 = vmatpush1.bf16.msra.mxu0 %v357
    %1134 = vmatprep.subr.bf16.mxu0 0
    %1135 = vmatpush1.bf16.msra.mxu0 0
    %1136 = vmatprep.subr.bf16.mxu0 0
    %1137 = vmatpush1.bf16.msra.mxu0 0
    %1138 = vmatprep.subr.bf16.mxu0 0
    %1139 = vmatpush1.bf16.msra.mxu0 0
    %1140 = vmatprep.subr.bf16.mxu0 0
    %1141 = vmatpush1.bf16.msra.mxu0 0
    %1142 = vmatprep.subr.bf16.mxu0 0
    %1143 = vmatpush1.bf16.msra.mxu0 0
    %1144 = vmatprep.subr.bf16.mxu0 0
    %1145 = vmatpush1.bf16.msra.mxu0 0
    %1146 = vmatprep.subr.bf16.mxu0 0
    %1147 = vmatpush1.bf16.msra.mxu0 0
    %1148 = vmatprep.subr.bf16.mxu0 0
    %1149 = vmatpush1.bf16.msra.mxu0 0
    %1150 = vmatprep.subr.bf16.mxu0 0
    %1151 = vmatpush1.bf16.msra.mxu0 0
    %1152 = vmatprep.subr.bf16.mxu0 0
    %1153 = vmatpush1.bf16.msra.mxu0 0
    %1154 = vmatprep.subr.bf16.mxu0 0
    %1155 = vmatpush1.bf16.msra.mxu0 0
    %1156 = vmatprep.subr.bf16.mxu0 0
    %1157 = vmatpush1.bf16.msra.mxu0 0
    %1158 = vmatprep.mubr.bf16.mxu0 0
    %1159 = vmatmul.mubr.bf16.gmra.mrb[0].mxu0 %v1124
    %v1160 = vpop.f32.mrb[0].mxu0
    %v1161 = vadd.f32 0.0, %v1160
    %v1162 = vpop.f32.mrb[0].mxu0
    %v1163 = vadd.f32 0.0, %v1162
    %v1164 = vpop.f32.mrb[0].mxu0
    %v1165 = vpop.f32.mrb[0].mxu0
    %1166 = vdwg.mxu0
    %v1167 = vadd.f32 %v1120, %v1161
    %v1168 = vadd.f32 %v1121, %v1163
    %v1169 = vxor.u32 %v1167, 2147483648
    %v1170 = vxor.u32 %v1168, 2147483648
    %v1171 = vmul.f32 %v1169, 1.442695
    %v1172 = vpow.pop %v1171
    %v1173 = vmul.f32 %v1170, 1.442695
    %v1174 = vpow.pop %v1173
    %v1175 = vadd.f32 %v1172, 1.0
    %v1176 = vadd.f32 %v1174, 1.0
    %v1177 = vrcp.pop %v1175
    %v1178 = vmul.f32 1.0, %v1177
    %v1179 = vrcp.pop %v1176
    %v1180 = vmul.f32 1.0, %v1179
    %v1181 = vtanh.pop %v1168
    %v1182 = vmul.f32 %v1178, %v1108
    %1184 = vrot.lane.b32.xlu0 %v1181, 64
    %v1185 = vpop.permute.xlu0 %1184
    %v1187 = vmul.f32 %v1178, %v1185
    %1189 = vrot.lane.b32.xlu0 %v1187, 64
    %v1190 = vpop.permute.xlu0 %1189
    %v1192 = vadd.f32 %v1182, %v1190
    %v1193 = vtanh.pop %v1192
    %1195 = vrot.lane.b32.xlu0 %v1193, 64
    %v1196 = vpop.permute.xlu0 %1195
    %v1198 = vmul.f32 %v1180, %v1196
    %s1199 = scalar_lea.vmem [#allocation3], 72
    %1200 = vst.msk [vmem:[%s1199] sm:$0xff] %vm367, %v1198
    %s1201 = smul.u32 10, 2
    %s1202 = smul.addr %s1201, 8
    %s1203 = scalar_lea.vmem [#allocation2], %s1202
    %v1204 = vld [vmem:[%s1203] sm:$0xff]
    %v1205 = vld [vmem:[%s1203 + $0x8] sm:$0xff]
    %v1206 = vpack.c.bf16 %v1198, %v1198
    %v1208 = vsel %vm367, %v1206, 0
    %1210 = vmatprep.subr.bf16.mxu0 %v352
    %1211 = vmatpush1.bf16.msra.mxu0 %v351
    %1212 = vmatprep.subr.bf16.mxu0 %v354
    %1213 = vmatpush1.bf16.msra.mxu0 %v353
    %1214 = vmatprep.subr.bf16.mxu0 %v356
    %1215 = vmatpush1.bf16.msra.mxu0 %v355
    %1216 = vmatprep.subr.bf16.mxu0 %v358
    %1217 = vmatpush1.bf16.msra.mxu0 %v357
    %1218 = vmatprep.subr.bf16.mxu0 0
    %1219 = vmatpush1.bf16.msra.mxu0 0
    %1220 = vmatprep.subr.bf16.mxu0 0
    %1221 = vmatpush1.bf16.msra.mxu0 0
    %1222 = vmatprep.subr.bf16.mxu0 0
    %1223 = vmatpush1.bf16.msra.mxu0 0
    %1224 = vmatprep.subr.bf16.mxu0 0
    %1225 = vmatpush1.bf16.msra.mxu0 0
    %1226 = vmatprep.subr.bf16.mxu0 0
    %1227 = vmatpush1.bf16.msra.mxu0 0
    %1228 = vmatprep.subr.bf16.mxu0 0
    %1229 = vmatpush1.bf16.msra.mxu0 0
    %1230 = vmatprep.subr.bf16.mxu0 0
    %1231 = vmatpush1.bf16.msra.mxu0 0
    %1232 = vmatprep.subr.bf16.mxu0 0
    %1233 = vmatpush1.bf16.msra.mxu0 0
    %1234 = vmatprep.subr.bf16.mxu0 0
    %1235 = vmatpush1.bf16.msra.mxu0 0
    %1236 = vmatprep.subr.bf16.mxu0 0
    %1237 = vmatpush1.bf16.msra.mxu0 0
    %1238 = vmatprep.subr.bf16.mxu0 0
    %1239 = vmatpush1.bf16.msra.mxu0 0
    %1240 = vmatprep.subr.bf16.mxu0 0
    %1241 = vmatpush1.bf16.msra.mxu0 0
    %1242 = vmatprep.mubr.bf16.mxu0 0
    %1243 = vmatmul.mubr.bf16.gmra.mrb[0].mxu0 %v1208
    %v1244 = vpop.f32.mrb[0].mxu0
    %v1245 = vadd.f32 0.0, %v1244
    %v1246 = vpop.f32.mrb[0].mxu0
    %v1247 = vadd.f32 0.0, %v1246
    %v1248 = vpop.f32.mrb[0].mxu0
    %v1249 = vpop.f32.mrb[0].mxu0
    %1250 = vdwg.mxu0
    %v1251 = vadd.f32 %v1204, %v1245
    %v1252 = vadd.f32 %v1205, %v1247
    %v1253 = vxor.u32 %v1251, 2147483648
    %v1254 = vxor.u32 %v1252, 2147483648
    %v1255 = vmul.f32 %v1253, 1.442695
    %v1256 = vpow.pop %v1255
    %v1257 = vmul.f32 %v1254, 1.442695
    %v1258 = vpow.pop %v1257
    %v1259 = vadd.f32 %v1256, 1.0
    %v1260 = vadd.f32 %v1258, 1.0
    %v1261 = vrcp.pop %v1259
    %v1262 = vmul.f32 1.0, %v1261
    %v1263 = vrcp.pop %v1260
    %v1264 = vmul.f32 1.0, %v1263
    %v1265 = vtanh.pop %v1252
    %v1266 = vmul.f32 %v1262, %v1192
    %1268 = vrot.lane.b32.xlu0 %v1265, 64
    %v1269 = vpop.permute.xlu0 %1268
    %v1271 = vmul.f32 %v1262, %v1269
    %1273 = vrot.lane.b32.xlu0 %v1271, 64
    %v1274 = vpop.permute.xlu0 %1273
    %v1276 = vadd.f32 %v1266, %v1274
    %v1277 = vtanh.pop %v1276
    %1279 = vrot.lane.b32.xlu0 %v1277, 64
    %v1280 = vpop.permute.xlu0 %1279
    %v1282 = vmul.f32 %v1264, %v1280
    %s1283 = scalar_lea.vmem [#allocation3], 80
    %1284 = vst.msk [vmem:[%s1283] sm:$0xff] %vm367, %v1282
    %s1285 = smul.u32 11, 2
    %s1286 = smul.addr %s1285, 8
    %s1287 = scalar_lea.vmem [#allocation2], %s1286
    %v1288 = vld [vmem:[%s1287] sm:$0xff]
    %v1289 = vld [vmem:[%s1287 + $0x8] sm:$0xff]
    %v1290 = vpack.c.bf16 %v1282, %v1282
    %v1292 = vsel %vm367, %v1290, 0
    %1294 = vmatprep.subr.bf16.mxu0 %v352
    %1295 = vmatpush1.bf16.msra.mxu0 %v351
    %1296 = vmatprep.subr.bf16.mxu0 %v354
    %1297 = vmatpush1.bf16.msra.mxu0 %v353
    %1298 = vmatprep.subr.bf16.mxu0 %v356
    %1299 = vmatpush1.bf16.msra.mxu0 %v355
    %1300 = vmatprep.subr.bf16.mxu0 %v358
    %1301 = vmatpush1.bf16.msra.mxu0 %v357
    %1302 = vmatprep.subr.bf16.mxu0 0
    %1303 = vmatpush1.bf16.msra.mxu0 0
    %1304 = vmatprep.subr.bf16.mxu0 0
    %1305 = vmatpush1.bf16.msra.mxu0 0
    %1306 = vmatprep.subr.bf16.mxu0 0
    %1307 = vmatpush1.bf16.msra.mxu0 0
    %1308 = vmatprep.subr.bf16.mxu0 0
    %1309 = vmatpush1.bf16.msra.mxu0 0
    %1310 = vmatprep.subr.bf16.mxu0 0
    %1311 = vmatpush1.bf16.msra.mxu0 0
    %1312 = vmatprep.subr.bf16.mxu0 0
    %1313 = vmatpush1.bf16.msra.mxu0 0
    %1314 = vmatprep.subr.bf16.mxu0 0
    %1315 = vmatpush1.bf16.msra.mxu0 0
    %1316 = vmatprep.subr.bf16.mxu0 0
    %1317 = vmatpush1.bf16.msra.mxu0 0
    %1318 = vmatprep.subr.bf16.mxu0 0
    %1319 = vmatpush1.bf16.msra.mxu0 0
    %1320 = vmatprep.subr.bf16.mxu0 0
    %1321 = vmatpush1.bf16.msra.mxu0 0
    %1322 = vmatprep.subr.bf16.mxu0 0
    %1323 = vmatpush1.bf16.msra.mxu0 0
    %1324 = vmatprep.subr.bf16.mxu0 0
    %1325 = vmatpush1.bf16.msra.mxu0 0
    %1326 = vmatprep.mubr.bf16.mxu0 0
    %1327 = vmatmul.mubr.bf16.gmra.mrb[0].mxu0 %v1292
    %v1328 = vpop.f32.mrb[0].mxu0
    %v1329 = vadd.f32 0.0, %v1328
    %v1330 = vpop.f32.mrb[0].mxu0
    %v1331 = vadd.f32 0.0, %v1330
    %v1332 = vpop.f32.mrb[0].mxu0
    %v1333 = vpop.f32.mrb[0].mxu0
    %1334 = vdwg.mxu0
    %v1335 = vadd.f32 %v1288, %v1329
    %v1336 = vadd.f32 %v1289, %v1331
    %v1337 = vxor.u32 %v1335, 2147483648
    %v1338 = vxor.u32 %v1336, 2147483648
    %v1339 = vmul.f32 %v1337, 1.442695
    %v1340 = vpow.pop %v1339
    %v1341 = vmul.f32 %v1338, 1.442695
    %v1342 = vpow.pop %v1341
    %v1343 = vadd.f32 %v1340, 1.0
    %v1344 = vadd.f32 %v1342, 1.0
    %v1345 = vrcp.pop %v1343
    %v1346 = vmul.f32 1.0, %v1345
    %v1347 = vrcp.pop %v1344
    %v1348 = vmul.f32 1.0, %v1347
    %v1349 = vtanh.pop %v1336
    %v1350 = vmul.f32 %v1346, %v1276
    %1352 = vrot.lane.b32.xlu0 %v1349, 64
    %v1353 = vpop.permute.xlu0 %1352
    %v1355 = vmul.f32 %v1346, %v1353
    %1357 = vrot.lane.b32.xlu0 %v1355, 64
    %v1358 = vpop.permute.xlu0 %1357
    %v1360 = vadd.f32 %v1350, %v1358
    %v1361 = vtanh.pop %v1360
    %1363 = vrot.lane.b32.xlu0 %v1361, 64
    %v1364 = vpop.permute.xlu0 %1363
    %v1366 = vmul.f32 %v1348, %v1364
    %s1367 = scalar_lea.vmem [#allocation3], 88
    %1368 = vst.msk [vmem:[%s1367] sm:$0xff] %vm367, %v1366
    %s1369 = smul.u32 12, 2
    %s1370 = smul.addr %s1369, 8
    %s1371 = scalar_lea.vmem [#allocation2], %s1370
    %v1372 = vld [vmem:[%s1371] sm:$0xff]
    %v1373 = vld [vmem:[%s1371 + $0x8] sm:$0xff]
    %v1374 = vpack.c.bf16 %v1366, %v1366
    %v1376 = vsel %vm367, %v1374, 0
    %1378 = vmatprep.subr.bf16.mxu0 %v352
    %1379 = vmatpush1.bf16.msra.mxu0 %v351
    %1380 = vmatprep.subr.bf16.mxu0 %v354
    %1381 = vmatpush1.bf16.msra.mxu0 %v353
    %1382 = vmatprep.subr.bf16.mxu0 %v356
    %1383 = vmatpush1.bf16.msra.mxu0 %v355
    %1384 = vmatprep.subr.bf16.mxu0 %v358
    %1385 = vmatpush1.bf16.msra.mxu0 %v357
    %1386 = vmatprep.subr.bf16.mxu0 0
    %1387 = vmatpush1.bf16.msra.mxu0 0
    %1388 = vmatprep.subr.bf16.mxu0 0
    %1389 = vmatpush1.bf16.msra.mxu0 0
    %1390 = vmatprep.subr.bf16.mxu0 0
    %1391 = vmatpush1.bf16.msra.mxu0 0
    %1392 = vmatprep.subr.bf16.mxu0 0
    %1393 = vmatpush1.bf16.msra.mxu0 0
    %1394 = vmatprep.subr.bf16.mxu0 0
    %1395 = vmatpush1.bf16.msra.mxu0 0
    %1396 = vmatprep.subr.bf16.mxu0 0
    %1397 = vmatpush1.bf16.msra.mxu0 0
    %1398 = vmatprep.subr.bf16.mxu0 0
    %1399 = vmatpush1.bf16.msra.mxu0 0
    %1400 = vmatprep.subr.bf16.mxu0 0
    %1401 = vmatpush1.bf16.msra.mxu0 0
    %1402 = vmatprep.subr.bf16.mxu0 0
    %1403 = vmatpush1.bf16.msra.mxu0 0
    %1404 = vmatprep.subr.bf16.mxu0 0
    %1405 = vmatpush1.bf16.msra.mxu0 0
    %1406 = vmatprep.subr.bf16.mxu0 0
    %1407 = vmatpush1.bf16.msra.mxu0 0
    %1408 = vmatprep.subr.bf16.mxu0 0
    %1409 = vmatpush1.bf16.msra.mxu0 0
    %1410 = vmatprep.mubr.bf16.mxu0 0
    %1411 = vmatmul.mubr.bf16.gmra.mrb[0].mxu0 %v1376
    %v1412 = vpop.f32.mrb[0].mxu0
    %v1413 = vadd.f32 0.0, %v1412
    %v1414 = vpop.f32.mrb[0].mxu0
    %v1415 = vadd.f32 0.0, %v1414
    %v1416 = vpop.f32.mrb[0].mxu0
    %v1417 = vpop.f32.mrb[0].mxu0
    %1418 = vdwg.mxu0
    %v1419 = vadd.f32 %v1372, %v1413
    %v1420 = vadd.f32 %v1373, %v1415
    %v1421 = vxor.u32 %v1419, 2147483648
    %v1422 = vxor.u32 %v1420, 2147483648
    %v1423 = vmul.f32 %v1421, 1.442695
    %v1424 = vpow.pop %v1423
    %v1425 = vmul.f32 %v1422, 1.442695
    %v1426 = vpow.pop %v1425
    %v1427 = vadd.f32 %v1424, 1.0
    %v1428 = vadd.f32 %v1426, 1.0
    %v1429 = vrcp.pop %v1427
    %v1430 = vmul.f32 1.0, %v1429
    %v1431 = vrcp.pop %v1428
    %v1432 = vmul.f32 1.0, %v1431
    %v1433 = vtanh.pop %v1420
    %v1434 = vmul.f32 %v1430, %v1360
    %1436 = vrot.lane.b32.xlu0 %v1433, 64
    %v1437 = vpop.permute.xlu0 %1436
    %v1439 = vmul.f32 %v1430, %v1437
    %1441 = vrot.lane.b32.xlu0 %v1439, 64
    %v1442 = vpop.permute.xlu0 %1441
    %v1444 = vadd.f32 %v1434, %v1442
    %v1445 = vtanh.pop %v1444
    %1447 = vrot.lane.b32.xlu0 %v1445, 64
    %v1448 = vpop.permute.xlu0 %1447
    %v1450 = vmul.f32 %v1432, %v1448
    %s1451 = scalar_lea.vmem [#allocation3], 96
    %1452 = vst.msk [vmem:[%s1451] sm:$0xff] %vm367, %v1450
    %s1453 = smul.u32 13, 2
    %s1454 = smul.addr %s1453, 8
    %s1455 = scalar_lea.vmem [#allocation2], %s1454
    %v1456 = vld [vmem:[%s1455] sm:$0xff]
    %v1457 = vld [vmem:[%s1455 + $0x8] sm:$0xff]
    %v1458 = vpack.c.bf16 %v1450, %v1450
    %v1460 = vsel %vm367, %v1458, 0
    %1462 = vmatprep.subr.bf16.mxu0 %v352
    %1463 = vmatpush1.bf16.msra.mxu0 %v351
    %1464 = vmatprep.subr.bf16.mxu0 %v354
    %1465 = vmatpush1.bf16.msra.mxu0 %v353
    %1466 = vmatprep.subr.bf16.mxu0 %v356
    %1467 = vmatpush1.bf16.msra.mxu0 %v355
    %1468 = vmatprep.subr.bf16.mxu0 %v358
    %1469 = vmatpush1.bf16.msra.mxu0 %v357
    %1470 = vmatprep.subr.bf16.mxu0 0
    %1471 = vmatpush1.bf16.msra.mxu0 0
    %1472 = vmatprep.subr.bf16.mxu0 0
    %1473 = vmatpush1.bf16.msra.mxu0 0
    %1474 = vmatprep.subr.bf16.mxu0 0
    %1475 = vmatpush1.bf16.msra.mxu0 0
    %1476 = vmatprep.subr.bf16.mxu0 0
    %1477 = vmatpush1.bf16.msra.mxu0 0
    %1478 = vmatprep.subr.bf16.mxu0 0
    %1479 = vmatpush1.bf16.msra.mxu0 0
    %1480 = vmatprep.subr.bf16.mxu0 0
    %1481 = vmatpush1.bf16.msra.mxu0 0
    %1482 = vmatprep.subr.bf16.mxu0 0
    %1483 = vmatpush1.bf16.msra.mxu0 0
    %1484 = vmatprep.subr.bf16.mxu0 0
    %1485 = vmatpush1.bf16.msra.mxu0 0
    %1486 = vmatprep.subr.bf16.mxu0 0
    %1487 = vmatpush1.bf16.msra.mxu0 0
    %1488 = vmatprep.subr.bf16.mxu0 0
    %1489 = vmatpush1.bf16.msra.mxu0 0
    %1490 = vmatprep.subr.bf16.mxu0 0
    %1491 = vmatpush1.bf16.msra.mxu0 0
    %1492 = vmatprep.subr.bf16.mxu0 0
    %1493 = vmatpush1.bf16.msra.mxu0 0
    %1494 = vmatprep.mubr.bf16.mxu0 0
    %1495 = vmatmul.mubr.bf16.gmra.mrb[0].mxu0 %v1460
    %v1496 = vpop.f32.mrb[0].mxu0
    %v1497 = vadd.f32 0.0, %v1496
    %v1498 = vpop.f32.mrb[0].mxu0
    %v1499 = vadd.f32 0.0, %v1498
    %v1500 = vpop.f32.mrb[0].mxu0
    %v1501 = vpop.f32.mrb[0].mxu0
    %1502 = vdwg.mxu0
    %v1503 = vadd.f32 %v1456, %v1497
    %v1504 = vadd.f32 %v1457, %v1499
    %v1505 = vxor.u32 %v1503, 2147483648
    %v1506 = vxor.u32 %v1504, 2147483648
    %v1507 = vmul.f32 %v1505, 1.442695
    %v1508 = vpow.pop %v1507
    %v1509 = vmul.f32 %v1506, 1.442695
    %v1510 = vpow.pop %v1509
    %v1511 = vadd.f32 %v1508, 1.0
    %v1512 = vadd.f32 %v1510, 1.0
    %v1513 = vrcp.pop %v1511
    %v1514 = vmul.f32 1.0, %v1513
    %v1515 = vrcp.pop %v1512
    %v1516 = vmul.f32 1.0, %v1515
    %v1517 = vtanh.pop %v1504
    %v1518 = vmul.f32 %v1514, %v1444
    %1520 = vrot.lane.b32.xlu0 %v1517, 64
    %v1521 = vpop.permute.xlu0 %1520
    %v1523 = vmul.f32 %v1514, %v1521
    %1525 = vrot.lane.b32.xlu0 %v1523, 64
    %v1526 = vpop.permute.xlu0 %1525
    %v1528 = vadd.f32 %v1518, %v1526
    %v1529 = vtanh.pop %v1528
    %1531 = vrot.lane.b32.xlu0 %v1529, 64
    %v1532 = vpop.permute.xlu0 %1531
    %v1534 = vmul.f32 %v1516, %v1532
    %s1535 = scalar_lea.vmem [#allocation3], 104
    %1536 = vst.msk [vmem:[%s1535] sm:$0xff] %vm367, %v1534
    %s1537 = smul.u32 14, 2
    %s1538 = smul.addr %s1537, 8
    %s1539 = scalar_lea.vmem [#allocation2], %s1538
    %v1540 = vld [vmem:[%s1539] sm:$0xff]
    %v1541 = vld [vmem:[%s1539 + $0x8] sm:$0xff]
    %v1542 = vpack.c.bf16 %v1534, %v1534
    %v1544 = vsel %vm367, %v1542, 0
    %1546 = vmatprep.subr.bf16.mxu0 %v352
    %1547 = vmatpush1.bf16.msra.mxu0 %v351
    %1548 = vmatprep.subr.bf16.mxu0 %v354
    %1549 = vmatpush1.bf16.msra.mxu0 %v353
    %1550 = vmatprep.subr.bf16.mxu0 %v356
    %1551 = vmatpush1.bf16.msra.mxu0 %v355
    %1552 = vmatprep.subr.bf16.mxu0 %v358
    %1553 = vmatpush1.bf16.msra.mxu0 %v357
    %1554 = vmatprep.subr.bf16.mxu0 0
    %1555 = vmatpush1.bf16.msra.mxu0 0
    %1556 = vmatprep.subr.bf16.mxu0 0
    %1557 = vmatpush1.bf16.msra.mxu0 0
    %1558 = vmatprep.subr.bf16.mxu0 0
    %1559 = vmatpush1.bf16.msra.mxu0 0
    %1560 = vmatprep.subr.bf16.mxu0 0
    %1561 = vmatpush1.bf16.msra.mxu0 0
    %1562 = vmatprep.subr.bf16.mxu0 0
    %1563 = vmatpush1.bf16.msra.mxu0 0
    %1564 = vmatprep.subr.bf16.mxu0 0
    %1565 = vmatpush1.bf16.msra.mxu0 0
    %1566 = vmatprep.subr.bf16.mxu0 0
    %1567 = vmatpush1.bf16.msra.mxu0 0
    %1568 = vmatprep.subr.bf16.mxu0 0
    %1569 = vmatpush1.bf16.msra.mxu0 0
    %1570 = vmatprep.subr.bf16.mxu0 0
    %1571 = vmatpush1.bf16.msra.mxu0 0
    %1572 = vmatprep.subr.bf16.mxu0 0
    %1573 = vmatpush1.bf16.msra.mxu0 0
    %1574 = vmatprep.subr.bf16.mxu0 0
    %1575 = vmatpush1.bf16.msra.mxu0 0
    %1576 = vmatprep.subr.bf16.mxu0 0
    %1577 = vmatpush1.bf16.msra.mxu0 0
    %1578 = vmatprep.mubr.bf16.mxu0 0
    %1579 = vmatmul.mubr.bf16.gmra.mrb[0].mxu0 %v1544
    %v1580 = vpop.f32.mrb[0].mxu0
    %v1581 = vadd.f32 0.0, %v1580
    %v1582 = vpop.f32.mrb[0].mxu0
    %v1583 = vadd.f32 0.0, %v1582
    %v1584 = vpop.f32.mrb[0].mxu0
    %v1585 = vpop.f32.mrb[0].mxu0
    %1586 = vdwg.mxu0
    %v1587 = vadd.f32 %v1540, %v1581
    %v1588 = vadd.f32 %v1541, %v1583
    %v1589 = vxor.u32 %v1587, 2147483648
    %v1590 = vxor.u32 %v1588, 2147483648
    %v1591 = vmul.f32 %v1589, 1.442695
    %v1592 = vpow.pop %v1591
    %v1593 = vmul.f32 %v1590, 1.442695
    %v1594 = vpow.pop %v1593
    %v1595 = vadd.f32 %v1592, 1.0
    %v1596 = vadd.f32 %v1594, 1.0
    %v1597 = vrcp.pop %v1595
    %v1598 = vmul.f32 1.0, %v1597
    %v1599 = vrcp.pop %v1596
    %v1600 = vmul.f32 1.0, %v1599
    %v1601 = vtanh.pop %v1588
    %v1602 = vmul.f32 %v1598, %v1528
    %1604 = vrot.lane.b32.xlu0 %v1601, 64
    %v1605 = vpop.permute.xlu0 %1604
    %v1607 = vmul.f32 %v1598, %v1605
    %1609 = vrot.lane.b32.xlu0 %v1607, 64
    %v1610 = vpop.permute.xlu0 %1609
    %v1612 = vadd.f32 %v1602, %v1610
    %v1613 = vtanh.pop %v1612
    %1615 = vrot.lane.b32.xlu0 %v1613, 64
    %v1616 = vpop.permute.xlu0 %1615
    %v1618 = vmul.f32 %v1600, %v1616
    %s1619 = scalar_lea.vmem [#allocation3], 112
    %1620 = vst.msk [vmem:[%s1619] sm:$0xff] %vm367, %v1618
    %s1621 = smul.u32 15, 2
    %s1622 = smul.addr %s1621, 8
    %s1623 = scalar_lea.vmem [#allocation2], %s1622
    %v1624 = vld [vmem:[%s1623] sm:$0xff]
    %v1625 = vld [vmem:[%s1623 + $0x8] sm:$0xff]
    %v1626 = vpack.c.bf16 %v1618, %v1618
    %v1628 = vsel %vm367, %v1626, 0
    %1630 = vmatprep.subr.bf16.mxu0 %v352
    %1631 = vmatpush1.bf16.msra.mxu0 %v351
    %1632 = vmatprep.subr.bf16.mxu0 %v354
    %1633 = vmatpush1.bf16.msra.mxu0 %v353
    %1634 = vmatprep.subr.bf16.mxu0 %v356
    %1635 = vmatpush1.bf16.msra.mxu0 %v355
    %1636 = vmatprep.subr.bf16.mxu0 %v358
    %1637 = vmatpush1.bf16.msra.mxu0 %v357
    %1638 = vmatprep.subr.bf16.mxu0 0
    %1639 = vmatpush1.bf16.msra.mxu0 0
    %1640 = vmatprep.subr.bf16.mxu0 0
    %1641 = vmatpush1.bf16.msra.mxu0 0
    %1642 = vmatprep.subr.bf16.mxu0 0
    %1643 = vmatpush1.bf16.msra.mxu0 0
    %1644 = vmatprep.subr.bf16.mxu0 0
    %1645 = vmatpush1.bf16.msra.mxu0 0
    %1646 = vmatprep.subr.bf16.mxu0 0
    %1647 = vmatpush1.bf16.msra.mxu0 0
    %1648 = vmatprep.subr.bf16.mxu0 0
    %1649 = vmatpush1.bf16.msra.mxu0 0
    %1650 = vmatprep.subr.bf16.mxu0 0
    %1651 = vmatpush1.bf16.msra.mxu0 0
    %1652 = vmatprep.subr.bf16.mxu0 0
    %1653 = vmatpush1.bf16.msra.mxu0 0
    %1654 = vmatprep.subr.bf16.mxu0 0
    %1655 = vmatpush1.bf16.msra.mxu0 0
    %1656 = vmatprep.subr.bf16.mxu0 0
    %1657 = vmatpush1.bf16.msra.mxu0 0
    %1658 = vmatprep.subr.bf16.mxu0 0
    %1659 = vmatpush1.bf16.msra.mxu0 0
    %1660 = vmatprep.subr.bf16.mxu0 0
    %1661 = vmatpush1.bf16.msra.mxu0 0
    %1662 = vmatprep.mubr.bf16.mxu0 0
    %1663 = vmatmul.mubr.bf16.gmra.mrb[0].mxu0 %v1628
    %v1664 = vpop.f32.mrb[0].mxu0
    %v1665 = vadd.f32 0.0, %v1664
    %v1666 = vpop.f32.mrb[0].mxu0
    %v1667 = vadd.f32 0.0, %v1666
    %v1668 = vpop.f32.mrb[0].mxu0
    %v1669 = vpop.f32.mrb[0].mxu0
    %1670 = vdwg.mxu0
    %v1671 = vadd.f32 %v1624, %v1665
    %v1672 = vadd.f32 %v1625, %v1667
    %v1673 = vxor.u32 %v1671, 2147483648
    %v1674 = vxor.u32 %v1672, 2147483648
    %v1675 = vmul.f32 %v1673, 1.442695
    %v1676 = vpow.pop %v1675
    %v1677 = vmul.f32 %v1674, 1.442695
    %v1678 = vpow.pop %v1677
    %v1679 = vadd.f32 %v1676, 1.0
    %v1680 = vadd.f32 %v1678, 1.0
    %v1681 = vrcp.pop %v1679
    %v1682 = vmul.f32 1.0, %v1681
    %v1683 = vrcp.pop %v1680
    %v1684 = vmul.f32 1.0, %v1683
    %v1685 = vtanh.pop %v1672
    %v1686 = vmul.f32 %v1682, %v1612
    %1688 = vrot.lane.b32.xlu0 %v1685, 64
    %v1689 = vpop.permute.xlu0 %1688
    %v1691 = vmul.f32 %v1682, %v1689
    %1693 = vrot.lane.b32.xlu0 %v1691, 64
    %v1694 = vpop.permute.xlu0 %1693
    %v1696 = vadd.f32 %v1686, %v1694
    %v1697 = vtanh.pop %v1696
    %1699 = vrot.lane.b32.xlu0 %v1697, 64
    %v1700 = vpop.permute.xlu0 %1699
    %v1702 = vmul.f32 %v1684, %v1700
    %s1703 = scalar_lea.vmem [#allocation3], 120
    %1704 = vst.msk [vmem:[%s1703] sm:$0xff] %vm367, %v1702
    %v1705 = vld [vmem:[#allocation3] sm:$0xff]
    %v1706 = vld [vmem:[#allocation3 + $0x8] sm:$0xff]
    %v1707 = vld [vmem:[#allocation3 + $0x10] sm:$0xff]
    %v1708 = vld [vmem:[#allocation3 + $0x18] sm:$0xff]
    %v1709 = vld [vmem:[#allocation3 + $0x20] sm:$0xff]
    %v1710 = vld [vmem:[#allocation3 + $0x28] sm:$0xff]
    %v1711 = vld [vmem:[#allocation3 + $0x30] sm:$0xff]
    %v1712 = vld [vmem:[#allocation3 + $0x38] sm:$0xff]
    %v1713 = vld [vmem:[#allocation3 + $0x40] sm:$0xff]
    %v1714 = vld [vmem:[#allocation3 + $0x48] sm:$0xff]
    %v1715 = vld [vmem:[#allocation3 + $0x50] sm:$0xff]
    %v1716 = vld [vmem:[#allocation3 + $0x58] sm:$0xff]
    %v1717 = vld [vmem:[#allocation3 + $0x60] sm:$0xff]
    %v1718 = vld [vmem:[#allocation3 + $0x68] sm:$0xff]
    %v1719 = vld [vmem:[#allocation3 + $0x70] sm:$0xff]
    %v1720 = vld [vmem:[#allocation3 + $0x78] sm:$0xff]
    %v1721 = vpack.c.bf16 %v1706, %v1705
    %v1722 = vpack.c.bf16 %v1708, %v1707
    %v1723 = vpack.c.bf16 %v1710, %v1709
    %v1724 = vpack.c.bf16 %v1712, %v1711
    %v1725 = vpack.c.bf16 %v1714, %v1713
    %v1726 = vpack.c.bf16 %v1716, %v1715
    %v1727 = vpack.c.bf16 %v1718, %v1717
    %v1728 = vpack.c.bf16 %v1720, %v1719
    %v1729 = vld [vmem:[%s4] sm:$0xff]
    %v1730 = vld [vmem:[%s4 + $0x8] sm:$0xff]
    %v1731 = vld [vmem:[%s4 + $0x10] sm:$0xff]
    %v1732 = vld [vmem:[%s4 + $0x18] sm:$0xff]
    %v1733 = vld [vmem:[%s4 + $0x20] sm:$0xff]
    %v1734 = vld [vmem:[%s4 + $0x28] sm:$0xff]
    %v1735 = vld [vmem:[%s4 + $0x30] sm:$0xff]
    %v1736 = vld [vmem:[%s4 + $0x38] sm:$0xff]
    %v1737 = vld [vmem:[%s6] sm:$0x3]
    %v1739 = vlaneseq
    %v1740 = vshrl.u32 %v1739, 7
    %v1741 = vsub.s32 0, %v1740
    %v1742 = vrot.slane %v1737, %v1741
    %v1743 = vlaneseq
    %v1744 = vshrl.u32 %v1743, 7
    %v1745 = vsub.s32 1, %v1744
    %v1746 = vrot.slane %v1737, %v1745
    %v1757 = vunpack.c.l.b16 %v1729
    %v1758 = vunpack.c.h.b16 %v1729
    %v1759 = vunpack.c.l.b16 %v1730
    %v1760 = vunpack.c.h.b16 %v1730
    %v1761 = vunpack.c.l.b16 %v1731
    %v1762 = vunpack.c.h.b16 %v1731
    %v1763 = vunpack.c.l.b16 %v1732
    %v1764 = vunpack.c.h.b16 %v1732
    %v1765 = vunpack.c.l.b16 %v1733
    %v1766 = vunpack.c.h.b16 %v1733
    %v1767 = vunpack.c.l.b16 %v1734
    %v1768 = vunpack.c.h.b16 %v1734
    %v1769 = vunpack.c.l.b16 %v1735
    %v1770 = vunpack.c.h.b16 %v1735
    %v1771 = vunpack.c.l.b16 %v1736
    %v1772 = vunpack.c.h.b16 %v1736
    %v1773 = vpack.c.b16 %v1759, %v1757
    %v1774 = vpack.c.b16 %v1760, %v1758
    %v1775 = vpack.c.b16 %v1763, %v1761
    %v1776 = vpack.c.b16 %v1764, %v1762
    %v1777 = vpack.c.b16 %v1767, %v1765
    %v1778 = vpack.c.b16 %v1768, %v1766
    %v1779 = vpack.c.b16 %v1771, %v1769
    %v1780 = vpack.c.b16 %v1772, %v1770
    %v1790 = vsel %vm367, %v1721, 0
    %v1793 = vsel %vm367, %v1722, 0
    %v1796 = vsel %vm367, %v1723, 0
    %v1799 = vsel %vm367, %v1724, 0
    %v1802 = vsel %vm367, %v1725, 0
    %v1805 = vsel %vm367, %v1726, 0
    %v1808 = vsel %vm367, %v1727, 0
    %v1811 = vsel %vm367, %v1728, 0
    %1813 = vmatprep.subr.bf16.mxu0 %v1774
    %1814 = vmatpush1.bf16.msra.mxu0 %v1773
    %1815 = vmatprep.subr.bf16.mxu0 %v1776
    %1816 = vmatpush1.bf16.msra.mxu0 %v1775
    %1817 = vmatprep.subr.bf16.mxu0 %v1778
    %1818 = vmatpush1.bf16.msra.mxu0 %v1777
    %1819 = vmatprep.subr.bf16.mxu0 %v1780
    %1820 = vmatpush1.bf16.msra.mxu0 %v1779
    %1821 = vmatprep.subr.bf16.mxu0 0
    %1822 = vmatpush1.bf16.msra.mxu0 0
    %1823 = vmatprep.subr.bf16.mxu0 0
    %1824 = vmatpush1.bf16.msra.mxu0 0
    %1825 = vmatprep.subr.bf16.mxu0 0
    %1826 = vmatpush1.bf16.msra.mxu0 0
    %1827 = vmatprep.subr.bf16.mxu0 0
    %1828 = vmatpush1.bf16.msra.mxu0 0
    %1829 = vmatprep.subr.bf16.mxu0 0
    %1830 = vmatpush1.bf16.msra.mxu0 0
    %1831 = vmatprep.subr.bf16.mxu0 0
    %1832 = vmatpush1.bf16.msra.mxu0 0
    %1833 = vmatprep.subr.bf16.mxu0 0
    %1834 = vmatpush1.bf16.msra.mxu0 0
    %1835 = vmatprep.subr.bf16.mxu0 0
    %1836 = vmatpush1.bf16.msra.mxu0 0
    %1837 = vmatprep.subr.bf16.mxu0 0
    %1838 = vmatpush1.bf16.msra.mxu0 0
    %1839 = vmatprep.subr.bf16.mxu0 0
    %1840 = vmatpush1.bf16.msra.mxu0 0
    %1841 = vmatprep.subr.bf16.mxu0 0
    %1842 = vmatpush1.bf16.msra.mxu0 0
    %1843 = vmatprep.subr.bf16.mxu0 0
    %1844 = vmatpush1.bf16.msra.mxu0 0
    %1845 = vmatprep.mubr.bf16.mxu0 0
    %1846 = vmatmul.mubr.bf16.gmra.mrb[0].mxu0 %v1790
    %v1847 = vpop.f32.mrb[0].mxu0
    %v1848 = vadd.f32 %v1742, %v1847
    %v1849 = vpop.f32.mrb[0].mxu0
    %v1850 = vadd.f32 %v1746, %v1849
    %v1851 = vpop.f32.mrb[0].mxu0
    %v1852 = vadd.f32 %v1742, %v1851
    %v1853 = vpop.f32.mrb[0].mxu0
    %v1854 = vadd.f32 %v1746, %v1853
    %1855 = vmatprep.mubr.bf16.mxu0 0
    %1856 = vmatmul.mubr.bf16.gmra.mrb[0].mxu0 %v1793
    %v1857 = vpop.f32.mrb[0].mxu0
    %v1858 = vadd.f32 %v1742, %v1857
    %v1859 = vpop.f32.mrb[0].mxu0
    %v1860 = vadd.f32 %v1746, %v1859
    %v1861 = vpop.f32.mrb[0].mxu0
    %v1862 = vadd.f32 %v1742, %v1861
    %v1863 = vpop.f32.mrb[0].mxu0
    %v1864 = vadd.f32 %v1746, %v1863
    %1865 = vmatprep.mubr.bf16.mxu0 0
    %1866 = vmatmul.mubr.bf16.gmra.mrb[0].mxu0 %v1796
    %v1867 = vpop.f32.mrb[0].mxu0
    %v1868 = vadd.f32 %v1742, %v1867
    %v1869 = vpop.f32.mrb[0].mxu0
    %v1870 = vadd.f32 %v1746, %v1869
    %v1871 = vpop.f32.mrb[0].mxu0
    %v1872 = vadd.f32 %v1742, %v1871
    %v1873 = vpop.f32.mrb[0].mxu0
    %v1874 = vadd.f32 %v1746, %v1873
    %1875 = vmatprep.mubr.bf16.mxu0 0
    %1876 = vmatmul.mubr.bf16.gmra.mrb[0].mxu0 %v1799
    %v1877 = vpop.f32.mrb[0].mxu0
    %v1878 = vadd.f32 %v1742, %v1877
    %v1879 = vpop.f32.mrb[0].mxu0
    %v1880 = vadd.f32 %v1746, %v1879
    %v1881 = vpop.f32.mrb[0].mxu0
    %v1882 = vadd.f32 %v1742, %v1881
    %v1883 = vpop.f32.mrb[0].mxu0
    %v1884 = vadd.f32 %v1746, %v1883
    %1885 = vmatprep.mubr.bf16.mxu0 0
    %1886 = vmatmul.mubr.bf16.gmra.mrb[0].mxu0 %v1802
    %v1887 = vpop.f32.mrb[0].mxu0
    %v1888 = vadd.f32 %v1742, %v1887
    %v1889 = vpop.f32.mrb[0].mxu0
    %v1890 = vadd.f32 %v1746, %v1889
    %v1891 = vpop.f32.mrb[0].mxu0
    %v1892 = vadd.f32 %v1742, %v1891
    %v1893 = vpop.f32.mrb[0].mxu0
    %v1894 = vadd.f32 %v1746, %v1893
    %1895 = vmatprep.mubr.bf16.mxu0 0
    %1896 = vmatmul.mubr.bf16.gmra.mrb[0].mxu0 %v1805
    %v1897 = vpop.f32.mrb[0].mxu0
    %v1898 = vadd.f32 %v1742, %v1897
    %v1899 = vpop.f32.mrb[0].mxu0
    %v1900 = vadd.f32 %v1746, %v1899
    %v1901 = vpop.f32.mrb[0].mxu0
    %v1902 = vadd.f32 %v1742, %v1901
    %v1903 = vpop.f32.mrb[0].mxu0
    %v1904 = vadd.f32 %v1746, %v1903
    %1905 = vmatprep.mubr.bf16.mxu0 0
    %1906 = vmatmul.mubr.bf16.gmra.mrb[0].mxu0 %v1808
    %v1907 = vpop.f32.mrb[0].mxu0
    %v1908 = vadd.f32 %v1742, %v1907
    %v1909 = vpop.f32.mrb[0].mxu0
    %v1910 = vadd.f32 %v1746, %v1909
    %v1911 = vpop.f32.mrb[0].mxu0
    %v1912 = vadd.f32 %v1742, %v1911
    %v1913 = vpop.f32.mrb[0].mxu0
    %v1914 = vadd.f32 %v1746, %v1913
    %1915 = vmatprep.mubr.bf16.mxu0 0
    %1916 = vmatmul.mubr.bf16.gmra.mrb[0].mxu0 %v1811
    %v1917 = vpop.f32.mrb[0].mxu0
    %v1918 = vadd.f32 %v1742, %v1917
    %v1919 = vpop.f32.mrb[0].mxu0
    %v1920 = vadd.f32 %v1746, %v1919
    %v1921 = vpop.f32.mrb[0].mxu0
    %v1922 = vadd.f32 %v1742, %v1921
    %v1923 = vpop.f32.mrb[0].mxu0
    %v1924 = vadd.f32 %v1746, %v1923
    %1925 = vdwg.mxu0
    %1926 = vst [vmem:[#allocation2] sm:$0xff] %v1848
    %1927 = vst [vmem:[#allocation2 + $0x8] sm:$0xff] %v1850
    %1928 = vst [vmem:[#allocation2 + $0x10] sm:$0xff] %v1852
    %1929 = vst [vmem:[#allocation2 + $0x18] sm:$0xff] %v1854
    %1930 = vst [vmem:[#allocation2 + $0x20] sm:$0xff] %v1858
    %1931 = vst [vmem:[#allocation2 + $0x28] sm:$0xff] %v1860
    %1932 = vst [vmem:[#allocation2 + $0x30] sm:$0xff] %v1862
    %1933 = vst [vmem:[#allocation2 + $0x38] sm:$0xff] %v1864
    %1934 = vst [vmem:[#allocation2 + $0x40] sm:$0xff] %v1868
    %1935 = vst [vmem:[#allocation2 + $0x48] sm:$0xff] %v1870
    %1936 = vst [vmem:[#allocation2 + $0x50] sm:$0xff] %v1872
    %1937 = vst [vmem:[#allocation2 + $0x58] sm:$0xff] %v1874
    %1938 = vst [vmem:[#allocation2 + $0x60] sm:$0xff] %v1878
    %1939 = vst [vmem:[#allocation2 + $0x68] sm:$0xff] %v1880
    %1940 = vst [vmem:[#allocation2 + $0x70] sm:$0xff] %v1882
    %1941 = vst [vmem:[#allocation2 + $0x78] sm:$0xff] %v1884
    %1942 = vst [vmem:[#allocation2 + $0x80] sm:$0xff] %v1888
    %1943 = vst [vmem:[#allocation2 + $0x88] sm:$0xff] %v1890
    %1944 = vst [vmem:[#allocation2 + $0x90] sm:$0xff] %v1892
    %1945 = vst [vmem:[#allocation2 + $0x98] sm:$0xff] %v1894
    %1946 = vst [vmem:[#allocation2 + $0xa0] sm:$0xff] %v1898
    %1947 = vst [vmem:[#allocation2 + $0xa8] sm:$0xff] %v1900
    %1948 = vst [vmem:[#allocation2 + $0xb0] sm:$0xff] %v1902
    %1949 = vst [vmem:[#allocation2 + $0xb8] sm:$0xff] %v1904
    %1950 = vst [vmem:[#allocation2 + $0xc0] sm:$0xff] %v1908
    %1951 = vst [vmem:[#allocation2 + $0xc8] sm:$0xff] %v1910
    %1952 = vst [vmem:[#allocation2 + $0xd0] sm:$0xff] %v1912
    %1953 = vst [vmem:[#allocation2 + $0xd8] sm:$0xff] %v1914
    %1954 = vst [vmem:[#allocation2 + $0xe0] sm:$0xff] %v1918
    %1955 = vst [vmem:[#allocation2 + $0xe8] sm:$0xff] %v1920
    %1956 = vst [vmem:[#allocation2 + $0xf0] sm:$0xff] %v1922
    %1957 = vst [vmem:[#allocation2 + $0xf8] sm:$0xff] %v1924
    %v1958 = vld [vmem:[%s5] sm:$0xff]
    %v1959 = vld [vmem:[%s5 + $0x8] sm:$0xff]
    %v1960 = vld [vmem:[%s5 + $0x10] sm:$0xff]
    %v1961 = vld [vmem:[%s5 + $0x18] sm:$0xff]
    %v1962 = vld [vmem:[%s5 + $0x20] sm:$0xff]
    %v1963 = vld [vmem:[%s5 + $0x28] sm:$0xff]
    %v1964 = vld [vmem:[%s5 + $0x30] sm:$0xff]
    %v1965 = vld [vmem:[%s5 + $0x38] sm:$0xff]
    %v1966 = vld [vmem:[%s324] sm:$0xff]
    %v1967 = vld [vmem:[%s324 + $0x8] sm:$0xff]
    %v1976 = vunpack.c.l.b16 %v1958
    %v1977 = vunpack.c.h.b16 %v1958
    %v1978 = vunpack.c.l.b16 %v1959
    %v1979 = vunpack.c.h.b16 %v1959
    %v1980 = vunpack.c.l.b16 %v1960
    %v1981 = vunpack.c.h.b16 %v1960
    %v1982 = vunpack.c.l.b16 %v1961
    %v1983 = vunpack.c.h.b16 %v1961
    %v1984 = vunpack.c.l.b16 %v1962
    %v1985 = vunpack.c.h.b16 %v1962
    %v1986 = vunpack.c.l.b16 %v1963
    %v1987 = vunpack.c.h.b16 %v1963
    %v1988 = vunpack.c.l.b16 %v1964
    %v1989 = vunpack.c.h.b16 %v1964
    %v1990 = vunpack.c.l.b16 %v1965
    %v1991 = vunpack.c.h.b16 %v1965
    %v1992 = vpack.c.b16 %v1978, %v1976
    %v1993 = vpack.c.b16 %v1979, %v1977
    %v1994 = vpack.c.b16 %v1982, %v1980
    %v1995 = vpack.c.b16 %v1983, %v1981
    %v1996 = vpack.c.b16 %v1986, %v1984
    %v1997 = vpack.c.b16 %v1987, %v1985
    %v1998 = vpack.c.b16 %v1990, %v1988
    %v1999 = vpack.c.b16 %v1991, %v1989
    %2008 = vmatprep.subr.bf16.mxu0 %v1993
    %2009 = vmatpush1.bf16.msra.mxu0 %v1992
    %2010 = vmatprep.subr.bf16.mxu0 %v1995
    %2011 = vmatpush1.bf16.msra.mxu0 %v1994
    %2012 = vmatprep.subr.bf16.mxu0 %v1997
    %2013 = vmatpush1.bf16.msra.mxu0 %v1996
    %2014 = vmatprep.subr.bf16.mxu0 %v1999
    %2015 = vmatpush1.bf16.msra.mxu0 %v1998
    %2016 = vmatprep.subr.bf16.mxu0 0
    %2017 = vmatpush1.bf16.msra.mxu0 0
    %2018 = vmatprep.subr.bf16.mxu0 0
    %2019 = vmatpush1.bf16.msra.mxu0 0
    %2020 = vmatprep.subr.bf16.mxu0 0
    %2021 = vmatpush1.bf16.msra.mxu0 0
    %2022 = vmatprep.subr.bf16.mxu0 0
    %2023 = vmatpush1.bf16.msra.mxu0 0
    %2024 = vmatprep.subr.bf16.mxu0 0
    %2025 = vmatpush1.bf16.msra.mxu0 0
    %2026 = vmatprep.subr.bf16.mxu0 0
    %2027 = vmatpush1.bf16.msra.mxu0 0
    %2028 = vmatprep.subr.bf16.mxu0 0
    %2029 = vmatpush1.bf16.msra.mxu0 0
    %2030 = vmatprep.subr.bf16.mxu0 0
    %2031 = vmatpush1.bf16.msra.mxu0 0
    %2032 = vmatprep.subr.bf16.mxu0 0
    %2033 = vmatpush1.bf16.msra.mxu0 0
    %2034 = vmatprep.subr.bf16.mxu0 0
    %2035 = vmatpush1.bf16.msra.mxu0 0
    %2036 = vmatprep.subr.bf16.mxu0 0
    %2037 = vmatpush1.bf16.msra.mxu0 0
    %2038 = vmatprep.subr.bf16.mxu0 0
    %2039 = vmatpush1.bf16.msra.mxu0 0
    %2040 = vmatprep.mubr.bf16.mxu0 0
    %2041 = vmatmul.mubr.bf16.gmra.mrb[0].mxu0 %v369
    %v2042 = vpop.f32.mrb[0].mxu0
    %v2043 = vadd.f32 0.0, %v2042
    %v2044 = vpop.f32.mrb[0].mxu0
    %v2045 = vadd.f32 0.0, %v2044
    %v2046 = vpop.f32.mrb[0].mxu0
    %v2047 = vpop.f32.mrb[0].mxu0
    %2048 = vdwg.mxu0
    %v2049 = vadd.f32 %v1966, %v2043
    %v2050 = vadd.f32 %v1967, %v2045
    %v2051 = vxor.u32 %v2049, 2147483648
    %v2052 = vxor.u32 %v2050, 2147483648
    %v2053 = vmul.f32 %v2051, 1.442695
    %v2054 = vpow.pop %v2053
    %v2055 = vmul.f32 %v2052, 1.442695
    %v2056 = vpow.pop %v2055
    %v2057 = vadd.f32 %v2054, 1.0
    %v2058 = vadd.f32 %v2056, 1.0
    %v2059 = vrcp.pop %v2057
    %v2060 = vmul.f32 1.0, %v2059
    %v2061 = vrcp.pop %v2058
    %v2062 = vmul.f32 1.0, %v2061
    %v2063 = vtanh.pop %v2050
    %v2064 = vmul.f32 %v2060, 0.0
    %2066 = vrot.lane.b32.xlu0 %v2063, 64
    %v2067 = vpop.permute.xlu0 %2066
    %v2069 = vmul.f32 %v2060, %v2067
    %2071 = vrot.lane.b32.xlu0 %v2069, 64
    %v2072 = vpop.permute.xlu0 %2071
    %v2074 = vadd.f32 %v2064, %v2072
    %v2075 = vtanh.pop %v2074
    %2077 = vrot.lane.b32.xlu0 %v2075, 64
    %v2078 = vpop.permute.xlu0 %2077
    %v2080 = vmul.f32 %v2062, %v2078
    %2081 = vst.msk [vmem:[#allocation3] sm:$0xff] %vm367, %v2080
    %v2082 = vld [vmem:[%s447] sm:$0xff]
    %v2083 = vld [vmem:[%s447 + $0x8] sm:$0xff]
    %v2084 = vpack.c.bf16 %v2080, %v2080
    %v2086 = vsel %vm367, %v2084, 0
    %2088 = vmatprep.subr.bf16.mxu0 %v1993
    %2089 = vmatpush1.bf16.msra.mxu0 %v1992
    %2090 = vmatprep.subr.bf16.mxu0 %v1995
    %2091 = vmatpush1.bf16.msra.mxu0 %v1994
    %2092 = vmatprep.subr.bf16.mxu0 %v1997
    %2093 = vmatpush1.bf16.msra.mxu0 %v1996
    %2094 = vmatprep.subr.bf16.mxu0 %v1999
    %2095 = vmatpush1.bf16.msra.mxu0 %v1998
    %2096 = vmatprep.subr.bf16.mxu0 0
    %2097 = vmatpush1.bf16.msra.mxu0 0
    %2098 = vmatprep.subr.bf16.mxu0 0
    %2099 = vmatpush1.bf16.msra.mxu0 0
    %2100 = vmatprep.subr.bf16.mxu0 0
    %2101 = vmatpush1.bf16.msra.mxu0 0
    %2102 = vmatprep.subr.bf16.mxu0 0
    %2103 = vmatpush1.bf16.msra.mxu0 0
    %2104 = vmatprep.subr.bf16.mxu0 0
    %2105 = vmatpush1.bf16.msra.mxu0 0
    %2106 = vmatprep.subr.bf16.mxu0 0
    %2107 = vmatpush1.bf16.msra.mxu0 0
    %2108 = vmatprep.subr.bf16.mxu0 0
    %2109 = vmatpush1.bf16.msra.mxu0 0
    %2110 = vmatprep.subr.bf16.mxu0 0
    %2111 = vmatpush1.bf16.msra.mxu0 0
    %2112 = vmatprep.subr.bf16.mxu0 0
    %2113 = vmatpush1.bf16.msra.mxu0 0
    %2114 = vmatprep.subr.bf16.mxu0 0
    %2115 = vmatpush1.bf16.msra.mxu0 0
    %2116 = vmatprep.subr.bf16.mxu0 0
    %2117 = vmatpush1.bf16.msra.mxu0 0
    %2118 = vmatprep.subr.bf16.mxu0 0
    %2119 = vmatpush1.bf16.msra.mxu0 0
    %2120 = vmatprep.mubr.bf16.mxu0 0
    %2121 = vmatmul.mubr.bf16.gmra.mrb[0].mxu0 %v2086
    %v2122 = vpop.f32.mrb[0].mxu0
    %v2123 = vadd.f32 0.0, %v2122
    %v2124 = vpop.f32.mrb[0].mxu0
    %v2125 = vadd.f32 0.0, %v2124
    %v2126 = vpop.f32.mrb[0].mxu0
    %v2127 = vpop.f32.mrb[0].mxu0
    %2128 = vdwg.mxu0
    %v2129 = vadd.f32 %v2082, %v2123
    %v2130 = vadd.f32 %v2083, %v2125
    %v2131 = vxor.u32 %v2129, 2147483648
    %v2132 = vxor.u32 %v2130, 2147483648
    %v2133 = vmul.f32 %v2131, 1.442695
    %v2134 = vpow.pop %v2133
    %v2135 = vmul.f32 %v2132, 1.442695
    %v2136 = vpow.pop %v2135
    %v2137 = vadd.f32 %v2134, 1.0
    %v2138 = vadd.f32 %v2136, 1.0
    %v2139 = vrcp.pop %v2137
    %v2140 = vmul.f32 1.0, %v2139
    %v2141 = vrcp.pop %v2138
    %v2142 = vmul.f32 1.0, %v2141
    %v2143 = vtanh.pop %v2130
    %v2144 = vmul.f32 %v2140, %v2074
    %2146 = vrot.lane.b32.xlu0 %v2143, 64
    %v2147 = vpop.permute.xlu0 %2146
    %v2149 = vmul.f32 %v2140, %v2147
    %2151 = vrot.lane.b32.xlu0 %v2149, 64
    %v2152 = vpop.permute.xlu0 %2151
    %v2154 = vadd.f32 %v2144, %v2152
    %v2155 = vtanh.pop %v2154
    %2157 = vrot.lane.b32.xlu0 %v2155, 64
    %v2158 = vpop.permute.xlu0 %2157
    %v2160 = vmul.f32 %v2142, %v2158
    %2161 = vst.msk [vmem:[%s527] sm:$0xff] %vm367, %v2160
    %v2162 = vld [vmem:[%s531] sm:$0xff]
    %v2163 = vld [vmem:[%s531 + $0x8] sm:$0xff]
    %v2164 = vpack.c.bf16 %v2160, %v2160
    %v2166 = vsel %vm367, %v2164, 0
    %2168 = vmatprep.subr.bf16.mxu0 %v1993
    %2169 = vmatpush1.bf16.msra.mxu0 %v1992
    %2170 = vmatprep.subr.bf16.mxu0 %v1995
    %2171 = vmatpush1.bf16.msra.mxu0 %v1994
    %2172 = vmatprep.subr.bf16.mxu0 %v1997
    %2173 = vmatpush1.bf16.msra.mxu0 %v1996
    %2174 = vmatprep.subr.bf16.mxu0 %v1999
    %2175 = vmatpush1.bf16.msra.mxu0 %v1998
    %2176 = vmatprep.subr.bf16.mxu0 0
    %2177 = vmatpush1.bf16.msra.mxu0 0
    %2178 = vmatprep.subr.bf16.mxu0 0
    %2179 = vmatpush1.bf16.msra.mxu0 0
    %2180 = vmatprep.subr.bf16.mxu0 0
    %2181 = vmatpush1.bf16.msra.mxu0 0
    %2182 = vmatprep.subr.bf16.mxu0 0
    %2183 = vmatpush1.bf16.msra.mxu0 0
    %2184 = vmatprep.subr.bf16.mxu0 0
    %2185 = vmatpush1.bf16.msra.mxu0 0
    %2186 = vmatprep.subr.bf16.mxu0 0
    %2187 = vmatpush1.bf16.msra.mxu0 0
    %2188 = vmatprep.subr.bf16.mxu0 0
    %2189 = vmatpush1.bf16.msra.mxu0 0
    %2190 = vmatprep.subr.bf16.mxu0 0
    %2191 = vmatpush1.bf16.msra.mxu0 0
    %2192 = vmatprep.subr.bf16.mxu0 0
    %2193 = vmatpush1.bf16.msra.mxu0 0
    %2194 = vmatprep.subr.bf16.mxu0 0
    %2195 = vmatpush1.bf16.msra.mxu0 0
    %2196 = vmatprep.subr.bf16.mxu0 0
    %2197 = vmatpush1.bf16.msra.mxu0 0
    %2198 = vmatprep.subr.bf16.mxu0 0
    %2199 = vmatpush1.bf16.msra.mxu0 0
    %2200 = vmatprep.mubr.bf16.mxu0 0
    %2201 = vmatmul.mubr.bf16.gmra.mrb[0].mxu0 %v2166
    %v2202 = vpop.f32.mrb[0].mxu0
    %v2203 = vadd.f32 0.0, %v2202
    %v2204 = vpop.f32.mrb[0].mxu0
    %v2205 = vadd.f32 0.0, %v2204
    %v2206 = vpop.f32.mrb[0].mxu0
    %v2207 = vpop.f32.mrb[0].mxu0
    %2208 = vdwg.mxu0
    %v2209 = vadd.f32 %v2162, %v2203
    %v2210 = vadd.f32 %v2163, %v2205
    %v2211 = vxor.u32 %v2209, 2147483648
    %v2212 = vxor.u32 %v2210, 2147483648
    %v2213 = vmul.f32 %v2211, 1.442695
    %v2214 = vpow.pop %v2213
    %v2215 = vmul.f32 %v2212, 1.442695
    %v2216 = vpow.pop %v2215
    %v2217 = vadd.f32 %v2214, 1.0
    %v2218 = vadd.f32 %v2216, 1.0
    %v2219 = vrcp.pop %v2217
    %v2220 = vmul.f32 1.0, %v2219
    %v2221 = vrcp.pop %v2218
    %v2222 = vmul.f32 1.0, %v2221
    %v2223 = vtanh.pop %v2210
    %v2224 = vmul.f32 %v2220, %v2154
    %2226 = vrot.lane.b32.xlu0 %v2223, 64
    %v2227 = vpop.permute.xlu0 %2226
    %v2229 = vmul.f32 %v2220, %v2227
    %2231 = vrot.lane.b32.xlu0 %v2229, 64
    %v2232 = vpop.permute.xlu0 %2231
    %v2234 = vadd.f32 %v2224, %v2232
    %v2235 = vtanh.pop %v2234
    %2237 = vrot.lane.b32.xlu0 %v2235, 64
    %v2238 = vpop.permute.xlu0 %2237
    %v2240 = vmul.f32 %v2222, %v2238
    %2241 = vst.msk [vmem:[%s611] sm:$0xff] %vm367, %v2240
    %v2242 = vld [vmem:[%s615] sm:$0xff]
    %v2243 = vld [vmem:[%s615 + $0x8] sm:$0xff]
    %v2244 = vpack.c.bf16 %v2240, %v2240
    %v2246 = vsel %vm367, %v2244, 0
    %2248 = vmatprep.subr.bf16.mxu0 %v1993
    %2249 = vmatpush1.bf16.msra.mxu0 %v1992
    %2250 = vmatprep.subr.bf16.mxu0 %v1995
    %2251 = vmatpush1.bf16.msra.mxu0 %v1994
    %2252 = vmatprep.subr.bf16.mxu0 %v1997
    %2253 = vmatpush1.bf16.msra.mxu0 %v1996
    %2254 = vmatprep.subr.bf16.mxu0 %v1999
    %2255 = vmatpush1.bf16.msra.mxu0 %v1998
    %2256 = vmatprep.subr.bf16.mxu0 0
    %2257 = vmatpush1.bf16.msra.mxu0 0
    %2258 = vmatprep.subr.bf16.mxu0 0
    %2259 = vmatpush1.bf16.msra.mxu0 0
    %2260 = vmatprep.subr.bf16.mxu0 0
    %2261 = vmatpush1.bf16.msra.mxu0 0
    %2262 = vmatprep.subr.bf16.mxu0 0
    %2263 = vmatpush1.bf16.msra.mxu0 0
    %2264 = vmatprep.subr.bf16.mxu0 0
    %2265 = vmatpush1.bf16.msra.mxu0 0
    %2266 = vmatprep.subr.bf16.mxu0 0
    %2267 = vmatpush1.bf16.msra.mxu0 0
    %2268 = vmatprep.subr.bf16.mxu0 0
    %2269 = vmatpush1.bf16.msra.mxu0 0
    %2270 = vmatprep.subr.bf16.mxu0 0
    %2271 = vmatpush1.bf16.msra.mxu0 0
    %2272 = vmatprep.subr.bf16.mxu0 0
    %2273 = vmatpush1.bf16.msra.mxu0 0
    %2274 = vmatprep.subr.bf16.mxu0 0
    %2275 = vmatpush1.bf16.msra.mxu0 0
    %2276 = vmatprep.subr.bf16.mxu0 0
    %2277 = vmatpush1.bf16.msra.mxu0 0
    %2278 = vmatprep.subr.bf16.mxu0 0
    %2279 = vmatpush1.bf16.msra.mxu0 0
    %2280 = vmatprep.mubr.bf16.mxu0 0
    %2281 = vmatmul.mubr.bf16.gmra.mrb[0].mxu0 %v2246
    %v2282 = vpop.f32.mrb[0].mxu0
    %v2283 = vadd.f32 0.0, %v2282
    %v2284 = vpop.f32.mrb[0].mxu0
    %v2285 = vadd.f32 0.0, %v2284
    %v2286 = vpop.f32.mrb[0].mxu0
    %v2287 = vpop.f32.mrb[0].mxu0
    %2288 = vdwg.mxu0
    %v2289 = vadd.f32 %v2242, %v2283
    %v2290 = vadd.f32 %v2243, %v2285
    %v2291 = vxor.u32 %v2289, 2147483648
    %v2292 = vxor.u32 %v2290, 2147483648
    %v2293 = vmul.f32 %v2291, 1.442695
    %v2294 = vpow.pop %v2293
    %v2295 = vmul.f32 %v2292, 1.442695
    %v2296 = vpow.pop %v2295
    %v2297 = vadd.f32 %v2294, 1.0
    %v2298 = vadd.f32 %v2296, 1.0
    %v2299 = vrcp.pop %v2297
    %v2300 = vmul.f32 1.0, %v2299
    %v2301 = vrcp.pop %v2298
    %v2302 = vmul.f32 1.0, %v2301
    %v2303 = vtanh.pop %v2290
    %v2304 = vmul.f32 %v2300, %v2234
    %2306 = vrot.lane.b32.xlu0 %v2303, 64
    %v2307 = vpop.permute.xlu0 %2306
    %v2309 = vmul.f32 %v2300, %v2307
    %2311 = vrot.lane.b32.xlu0 %v2309, 64
    %v2312 = vpop.permute.xlu0 %2311
    %v2314 = vadd.f32 %v2304, %v2312
    %v2315 = vtanh.pop %v2314
    %2317 = vrot.lane.b32.xlu0 %v2315, 64
    %v2318 = vpop.permute.xlu0 %2317
    %v2320 = vmul.f32 %v2302, %v2318
    %2321 = vst.msk [vmem:[%s695] sm:$0xff] %vm367, %v2320
    %v2322 = vld [vmem:[%s699] sm:$0xff]
    %v2323 = vld [vmem:[%s699 + $0x8] sm:$0xff]
    %v2324 = vpack.c.bf16 %v2320, %v2320
    %v2326 = vsel %vm367, %v2324, 0
    %2328 = vmatprep.subr.bf16.mxu0 %v1993
    %2329 = vmatpush1.bf16.msra.mxu0 %v1992
    %2330 = vmatprep.subr.bf16.mxu0 %v1995
    %2331 = vmatpush1.bf16.msra.mxu0 %v1994
    %2332 = vmatprep.subr.bf16.mxu0 %v1997
    %2333 = vmatpush1.bf16.msra.mxu0 %v1996
    %2334 = vmatprep.subr.bf16.mxu0 %v1999
    %2335 = vmatpush1.bf16.msra.mxu0 %v1998
    %2336 = vmatprep.subr.bf16.mxu0 0
    %2337 = vmatpush1.bf16.msra.mxu0 0
    %2338 = vmatprep.subr.bf16.mxu0 0
    %2339 = vmatpush1.bf16.msra.mxu0 0
    %2340 = vmatprep.subr.bf16.mxu0 0
    %2341 = vmatpush1.bf16.msra.mxu0 0
    %2342 = vmatprep.subr.bf16.mxu0 0
    %2343 = vmatpush1.bf16.msra.mxu0 0
    %2344 = vmatprep.subr.bf16.mxu0 0
    %2345 = vmatpush1.bf16.msra.mxu0 0
    %2346 = vmatprep.subr.bf16.mxu0 0
    %2347 = vmatpush1.bf16.msra.mxu0 0
    %2348 = vmatprep.subr.bf16.mxu0 0
    %2349 = vmatpush1.bf16.msra.mxu0 0
    %2350 = vmatprep.subr.bf16.mxu0 0
    %2351 = vmatpush1.bf16.msra.mxu0 0
    %2352 = vmatprep.subr.bf16.mxu0 0
    %2353 = vmatpush1.bf16.msra.mxu0 0
    %2354 = vmatprep.subr.bf16.mxu0 0
    %2355 = vmatpush1.bf16.msra.mxu0 0
    %2356 = vmatprep.subr.bf16.mxu0 0
    %2357 = vmatpush1.bf16.msra.mxu0 0
    %2358 = vmatprep.subr.bf16.mxu0 0
    %2359 = vmatpush1.bf16.msra.mxu0 0
    %2360 = vmatprep.mubr.bf16.mxu0 0
    %2361 = vmatmul.mubr.bf16.gmra.mrb[0].mxu0 %v2326
    %v2362 = vpop.f32.mrb[0].mxu0
    %v2363 = vadd.f32 0.0, %v2362
    %v2364 = vpop.f32.mrb[0].mxu0
    %v2365 = vadd.f32 0.0, %v2364
    %v2366 = vpop.f32.mrb[0].mxu0
    %v2367 = vpop.f32.mrb[0].mxu0
    %2368 = vdwg.mxu0
    %v2369 = vadd.f32 %v2322, %v2363
    %v2370 = vadd.f32 %v2323, %v2365
    %v2371 = vxor.u32 %v2369, 2147483648
    %v2372 = vxor.u32 %v2370, 2147483648
    %v2373 = vmul.f32 %v2371, 1.442695
    %v2374 = vpow.pop %v2373
    %v2375 = vmul.f32 %v2372, 1.442695
    %v2376 = vpow.pop %v2375
    %v2377 = vadd.f32 %v2374, 1.0
    %v2378 = vadd.f32 %v2376, 1.0
    %v2379 = vrcp.pop %v2377
    %v2380 = vmul.f32 1.0, %v2379
    %v2381 = vrcp.pop %v2378
    %v2382 = vmul.f32 1.0, %v2381
    %v2383 = vtanh.pop %v2370
    %v2384 = vmul.f32 %v2380, %v2314
    %2386 = vrot.lane.b32.xlu0 %v2383, 64
    %v2387 = vpop.permute.xlu0 %2386
    %v2389 = vmul.f32 %v2380, %v2387
    %2391 = vrot.lane.b32.xlu0 %v2389, 64
    %v2392 = vpop.permute.xlu0 %2391
    %v2394 = vadd.f32 %v2384, %v2392
    %v2395 = vtanh.pop %v2394
    %2397 = vrot.lane.b32.xlu0 %v2395, 64
    %v2398 = vpop.permute.xlu0 %2397
    %v2400 = vmul.f32 %v2382, %v2398
    %2401 = vst.msk [vmem:[%s779] sm:$0xff] %vm367, %v2400
    %v2402 = vld [vmem:[%s783] sm:$0xff]
    %v2403 = vld [vmem:[%s783 + $0x8] sm:$0xff]
    %v2404 = vpack.c.bf16 %v2400, %v2400
    %v2406 = vsel %vm367, %v2404, 0
    %2408 = vmatprep.subr.bf16.mxu0 %v1993
    %2409 = vmatpush1.bf16.msra.mxu0 %v1992
    %2410 = vmatprep.subr.bf16.mxu0 %v1995
    %2411 = vmatpush1.bf16.msra.mxu0 %v1994
    %2412 = vmatprep.subr.bf16.mxu0 %v1997
    %2413 = vmatpush1.bf16.msra.mxu0 %v1996
    %2414 = vmatprep.subr.bf16.mxu0 %v1999
    %2415 = vmatpush1.bf16.msra.mxu0 %v1998
    %2416 = vmatprep.subr.bf16.mxu0 0
    %2417 = vmatpush1.bf16.msra.mxu0 0
    %2418 = vmatprep.subr.bf16.mxu0 0
    %2419 = vmatpush1.bf16.msra.mxu0 0
    %2420 = vmatprep.subr.bf16.mxu0 0
    %2421 = vmatpush1.bf16.msra.mxu0 0
    %2422 = vmatprep.subr.bf16.mxu0 0
    %2423 = vmatpush1.bf16.msra.mxu0 0
    %2424 = vmatprep.subr.bf16.mxu0 0
    %2425 = vmatpush1.bf16.msra.mxu0 0
    %2426 = vmatprep.subr.bf16.mxu0 0
    %2427 = vmatpush1.bf16.msra.mxu0 0
    %2428 = vmatprep.subr.bf16.mxu0 0
    %2429 = vmatpush1.bf16.msra.mxu0 0
    %2430 = vmatprep.subr.bf16.mxu0 0
    %2431 = vmatpush1.bf16.msra.mxu0 0
    %2432 = vmatprep.subr.bf16.mxu0 0
    %2433 = vmatpush1.bf16.msra.mxu0 0
    %2434 = vmatprep.subr.bf16.mxu0 0
    %2435 = vmatpush1.bf16.msra.mxu0 0
    %2436 = vmatprep.subr.bf16.mxu0 0
    %2437 = vmatpush1.bf16.msra.mxu0 0
    %2438 = vmatprep.subr.bf16.mxu0 0
    %2439 = vmatpush1.bf16.msra.mxu0 0
    %2440 = vmatprep.mubr.bf16.mxu0 0
    %2441 = vmatmul.mubr.bf16.gmra.mrb[0].mxu0 %v2406
    %v2442 = vpop.f32.mrb[0].mxu0
    %v2443 = vadd.f32 0.0, %v2442
    %v2444 = vpop.f32.mrb[0].mxu0
    %v2445 = vadd.f32 0.0, %v2444
    %v2446 = vpop.f32.mrb[0].mxu0
    %v2447 = vpop.f32.mrb[0].mxu0
    %2448 = vdwg.mxu0
    %v2449 = vadd.f32 %v2402, %v2443
    %v2450 = vadd.f32 %v2403, %v2445
    %v2451 = vxor.u32 %v2449, 2147483648
    %v2452 = vxor.u32 %v2450, 2147483648
    %v2453 = vmul.f32 %v2451, 1.442695
    %v2454 = vpow.pop %v2453
    %v2455 = vmul.f32 %v2452, 1.442695
    %v2456 = vpow.pop %v2455
    %v2457 = vadd.f32 %v2454, 1.0
    %v2458 = vadd.f32 %v2456, 1.0
    %v2459 = vrcp.pop %v2457
    %v2460 = vmul.f32 1.0, %v2459
    %v2461 = vrcp.pop %v2458
    %v2462 = vmul.f32 1.0, %v2461
    %v2463 = vtanh.pop %v2450
    %v2464 = vmul.f32 %v2460, %v2394
    %2466 = vrot.lane.b32.xlu0 %v2463, 64
    %v2467 = vpop.permute.xlu0 %2466
    %v2469 = vmul.f32 %v2460, %v2467
    %2471 = vrot.lane.b32.xlu0 %v2469, 64
    %v2472 = vpop.permute.xlu0 %2471
    %v2474 = vadd.f32 %v2464, %v2472
    %v2475 = vtanh.pop %v2474
    %2477 = vrot.lane.b32.xlu0 %v2475, 64
    %v2478 = vpop.permute.xlu0 %2477
    %v2480 = vmul.f32 %v2462, %v2478
    %2481 = vst.msk [vmem:[%s863] sm:$0xff] %vm367, %v2480
    %v2482 = vld [vmem:[%s867] sm:$0xff]
    %v2483 = vld [vmem:[%s867 + $0x8] sm:$0xff]
    %v2484 = vpack.c.bf16 %v2480, %v2480
    %v2486 = vsel %vm367, %v2484, 0
    %2488 = vmatprep.subr.bf16.mxu0 %v1993
    %2489 = vmatpush1.bf16.msra.mxu0 %v1992
    %2490 = vmatprep.subr.bf16.mxu0 %v1995
    %2491 = vmatpush1.bf16.msra.mxu0 %v1994
    %2492 = vmatprep.subr.bf16.mxu0 %v1997
    %2493 = vmatpush1.bf16.msra.mxu0 %v1996
    %2494 = vmatprep.subr.bf16.mxu0 %v1999
    %2495 = vmatpush1.bf16.msra.mxu0 %v1998
    %2496 = vmatprep.subr.bf16.mxu0 0
    %2497 = vmatpush1.bf16.msra.mxu0 0
    %2498 = vmatprep.subr.bf16.mxu0 0
    %2499 = vmatpush1.bf16.msra.mxu0 0
    %2500 = vmatprep.subr.bf16.mxu0 0
    %2501 = vmatpush1.bf16.msra.mxu0 0
    %2502 = vmatprep.subr.bf16.mxu0 0
    %2503 = vmatpush1.bf16.msra.mxu0 0
    %2504 = vmatprep.subr.bf16.mxu0 0
    %2505 = vmatpush1.bf16.msra.mxu0 0
    %2506 = vmatprep.subr.bf16.mxu0 0
    %2507 = vmatpush1.bf16.msra.mxu0 0
    %2508 = vmatprep.subr.bf16.mxu0 0
    %2509 = vmatpush1.bf16.msra.mxu0 0
    %2510 = vmatprep.subr.bf16.mxu0 0
    %2511 = vmatpush1.bf16.msra.mxu0 0
    %2512 = vmatprep.subr.bf16.mxu0 0
    %2513 = vmatpush1.bf16.msra.mxu0 0
    %2514 = vmatprep.subr.bf16.mxu0 0
    %2515 = vmatpush1.bf16.msra.mxu0 0
    %2516 = vmatprep.subr.bf16.mxu0 0
    %2517 = vmatpush1.bf16.msra.mxu0 0
    %2518 = vmatprep.subr.bf16.mxu0 0
    %2519 = vmatpush1.bf16.msra.mxu0 0
    %2520 = vmatprep.mubr.bf16.mxu0 0
    %2521 = vmatmul.mubr.bf16.gmra.mrb[0].mxu0 %v2486
    %v2522 = vpop.f32.mrb[0].mxu0
    %v2523 = vadd.f32 0.0, %v2522
    %v2524 = vpop.f32.mrb[0].mxu0
    %v2525 = vadd.f32 0.0, %v2524
    %v2526 = vpop.f32.mrb[0].mxu0
    %v2527 = vpop.f32.mrb[0].mxu0
    %2528 = vdwg.mxu0
    %v2529 = vadd.f32 %v2482, %v2523
    %v2530 = vadd.f32 %v2483, %v2525
    %v2531 = vxor.u32 %v2529, 2147483648
    %v2532 = vxor.u32 %v2530, 2147483648
    %v2533 = vmul.f32 %v2531, 1.442695
    %v2534 = vpow.pop %v2533
    %v2535 = vmul.f32 %v2532, 1.442695
    %v2536 = vpow.pop %v2535
    %v2537 = vadd.f32 %v2534, 1.0
    %v2538 = vadd.f32 %v2536, 1.0
    %v2539 = vrcp.pop %v2537
    %v2540 = vmul.f32 1.0, %v2539
    %v2541 = vrcp.pop %v2538
    %v2542 = vmul.f32 1.0, %v2541
    %v2543 = vtanh.pop %v2530
    %v2544 = vmul.f32 %v2540, %v2474
    %2546 = vrot.lane.b32.xlu0 %v2543, 64
    %v2547 = vpop.permute.xlu0 %2546
    %v2549 = vmul.f32 %v2540, %v2547
    %2551 = vrot.lane.b32.xlu0 %v2549, 64
    %v2552 = vpop.permute.xlu0 %2551
    %v2554 = vadd.f32 %v2544, %v2552
    %v2555 = vtanh.pop %v2554
    %2557 = vrot.lane.b32.xlu0 %v2555, 64
    %v2558 = vpop.permute.xlu0 %2557
    %v2560 = vmul.f32 %v2542, %v2558
    %2561 = vst.msk [vmem:[%s947] sm:$0xff] %vm367, %v2560
    %v2562 = vld [vmem:[%s951] sm:$0xff]
    %v2563 = vld [vmem:[%s951 + $0x8] sm:$0xff]
    %v2564 = vpack.c.bf16 %v2560, %v2560
    %v2566 = vsel %vm367, %v2564, 0
    %2568 = vmatprep.subr.bf16.mxu0 %v1993
    %2569 = vmatpush1.bf16.msra.mxu0 %v1992
    %2570 = vmatprep.subr.bf16.mxu0 %v1995
    %2571 = vmatpush1.bf16.msra.mxu0 %v1994
    %2572 = vmatprep.subr.bf16.mxu0 %v1997
    %2573 = vmatpush1.bf16.msra.mxu0 %v1996
    %2574 = vmatprep.subr.bf16.mxu0 %v1999
    %2575 = vmatpush1.bf16.msra.mxu0 %v1998
    %2576 = vmatprep.subr.bf16.mxu0 0
    %2577 = vmatpush1.bf16.msra.mxu0 0
    %2578 = vmatprep.subr.bf16.mxu0 0
    %2579 = vmatpush1.bf16.msra.mxu0 0
    %2580 = vmatprep.subr.bf16.mxu0 0
    %2581 = vmatpush1.bf16.msra.mxu0 0
    %2582 = vmatprep.subr.bf16.mxu0 0
    %2583 = vmatpush1.bf16.msra.mxu0 0
    %2584 = vmatprep.subr.bf16.mxu0 0
    %2585 = vmatpush1.bf16.msra.mxu0 0
    %2586 = vmatprep.subr.bf16.mxu0 0
    %2587 = vmatpush1.bf16.msra.mxu0 0
    %2588 = vmatprep.subr.bf16.mxu0 0
    %2589 = vmatpush1.bf16.msra.mxu0 0
    %2590 = vmatprep.subr.bf16.mxu0 0
    %2591 = vmatpush1.bf16.msra.mxu0 0
    %2592 = vmatprep.subr.bf16.mxu0 0
    %2593 = vmatpush1.bf16.msra.mxu0 0
    %2594 = vmatprep.subr.bf16.mxu0 0
    %2595 = vmatpush1.bf16.msra.mxu0 0
    %2596 = vmatprep.subr.bf16.mxu0 0
    %2597 = vmatpush1.bf16.msra.mxu0 0
    %2598 = vmatprep.subr.bf16.mxu0 0
    %2599 = vmatpush1.bf16.msra.mxu0 0
    %2600 = vmatprep.mubr.bf16.mxu0 0
    %2601 = vmatmul.mubr.bf16.gmra.mrb[0].mxu0 %v2566
    %v2602 = vpop.f32.mrb[0].mxu0
    %v2603 = vadd.f32 0.0, %v2602
    %v2604 = vpop.f32.mrb[0].mxu0
    %v2605 = vadd.f32 0.0, %v2604
    %v2606 = vpop.f32.mrb[0].mxu0
    %v2607 = vpop.f32.mrb[0].mxu0
    %2608 = vdwg.mxu0
    %v2609 = vadd.f32 %v2562, %v2603
    %v2610 = vadd.f32 %v2563, %v2605
    %v2611 = vxor.u32 %v2609, 2147483648
    %v2612 = vxor.u32 %v2610, 2147483648
    %v2613 = vmul.f32 %v2611, 1.442695
    %v2614 = vpow.pop %v2613
    %v2615 = vmul.f32 %v2612, 1.442695
    %v2616 = vpow.pop %v2615
    %v2617 = vadd.f32 %v2614, 1.0
    %v2618 = vadd.f32 %v2616, 1.0
    %v2619 = vrcp.pop %v2617
    %v2620 = vmul.f32 1.0, %v2619
    %v2621 = vrcp.pop %v2618
    %v2622 = vmul.f32 1.0, %v2621
    %v2623 = vtanh.pop %v2610
    %v2624 = vmul.f32 %v2620, %v2554
    %2626 = vrot.lane.b32.xlu0 %v2623, 64
    %v2627 = vpop.permute.xlu0 %2626
    %v2629 = vmul.f32 %v2620, %v2627
    %2631 = vrot.lane.b32.xlu0 %v2629, 64
    %v2632 = vpop.permute.xlu0 %2631
    %v2634 = vadd.f32 %v2624, %v2632
    %v2635 = vtanh.pop %v2634
    %2637 = vrot.lane.b32.xlu0 %v2635, 64
    %v2638 = vpop.permute.xlu0 %2637
    %v2640 = vmul.f32 %v2622, %v2638
    %2641 = vst.msk [vmem:[%s1031] sm:$0xff] %vm367, %v2640
    %v2642 = vld [vmem:[%s1035] sm:$0xff]
    %v2643 = vld [vmem:[%s1035 + $0x8] sm:$0xff]
    %v2644 = vpack.c.bf16 %v2640, %v2640
    %v2646 = vsel %vm367, %v2644, 0
    %2648 = vmatprep.subr.bf16.mxu0 %v1993
    %2649 = vmatpush1.bf16.msra.mxu0 %v1992
    %2650 = vmatprep.subr.bf16.mxu0 %v1995
    %2651 = vmatpush1.bf16.msra.mxu0 %v1994
    %2652 = vmatprep.subr.bf16.mxu0 %v1997
    %2653 = vmatpush1.bf16.msra.mxu0 %v1996
    %2654 = vmatprep.subr.bf16.mxu0 %v1999
    %2655 = vmatpush1.bf16.msra.mxu0 %v1998
    %2656 = vmatprep.subr.bf16.mxu0 0
    %2657 = vmatpush1.bf16.msra.mxu0 0
    %2658 = vmatprep.subr.bf16.mxu0 0
    %2659 = vmatpush1.bf16.msra.mxu0 0
    %2660 = vmatprep.subr.bf16.mxu0 0
    %2661 = vmatpush1.bf16.msra.mxu0 0
    %2662 = vmatprep.subr.bf16.mxu0 0
    %2663 = vmatpush1.bf16.msra.mxu0 0
    %2664 = vmatprep.subr.bf16.mxu0 0
    %2665 = vmatpush1.bf16.msra.mxu0 0
    %2666 = vmatprep.subr.bf16.mxu0 0
    %2667 = vmatpush1.bf16.msra.mxu0 0
    %2668 = vmatprep.subr.bf16.mxu0 0
    %2669 = vmatpush1.bf16.msra.mxu0 0
    %2670 = vmatprep.subr.bf16.mxu0 0
    %2671 = vmatpush1.bf16.msra.mxu0 0
    %2672 = vmatprep.subr.bf16.mxu0 0
    %2673 = vmatpush1.bf16.msra.mxu0 0
    %2674 = vmatprep.subr.bf16.mxu0 0
    %2675 = vmatpush1.bf16.msra.mxu0 0
    %2676 = vmatprep.subr.bf16.mxu0 0
    %2677 = vmatpush1.bf16.msra.mxu0 0
    %2678 = vmatprep.subr.bf16.mxu0 0
    %2679 = vmatpush1.bf16.msra.mxu0 0
    %2680 = vmatprep.mubr.bf16.mxu0 0
    %2681 = vmatmul.mubr.bf16.gmra.mrb[0].mxu0 %v2646
    %v2682 = vpop.f32.mrb[0].mxu0
    %v2683 = vadd.f32 0.0, %v2682
    %v2684 = vpop.f32.mrb[0].mxu0
    %v2685 = vadd.f32 0.0, %v2684
    %v2686 = vpop.f32.mrb[0].mxu0
    %v2687 = vpop.f32.mrb[0].mxu0
    %2688 = vdwg.mxu0
    %v2689 = vadd.f32 %v2642, %v2683
    %v2690 = vadd.f32 %v2643, %v2685
    %v2691 = vxor.u32 %v2689, 2147483648
    %v2692 = vxor.u32 %v2690, 2147483648
    %v2693 = vmul.f32 %v2691, 1.442695
    %v2694 = vpow.pop %v2693
    %v2695 = vmul.f32 %v2692, 1.442695
    %v2696 = vpow.pop %v2695
    %v2697 = vadd.f32 %v2694, 1.0
    %v2698 = vadd.f32 %v2696, 1.0
    %v2699 = vrcp.pop %v2697
    %v2700 = vmul.f32 1.0, %v2699
    %v2701 = vrcp.pop %v2698
    %v2702 = vmul.f32 1.0, %v2701
    %v2703 = vtanh.pop %v2690
    %v2704 = vmul.f32 %v2700, %v2634
    %2706 = vrot.lane.b32.xlu0 %v2703, 64
    %v2707 = vpop.permute.xlu0 %2706
    %v2709 = vmul.f32 %v2700, %v2707
    %2711 = vrot.lane.b32.xlu0 %v2709, 64
    %v2712 = vpop.permute.xlu0 %2711
    %v2714 = vadd.f32 %v2704, %v2712
    %v2715 = vtanh.pop %v2714
    %2717 = vrot.lane.b32.xlu0 %v2715, 64
    %v2718 = vpop.permute.xlu0 %2717
    %v2720 = vmul.f32 %v2702, %v2718
    %2721 = vst.msk [vmem:[%s1115] sm:$0xff] %vm367, %v2720
    %v2722 = vld [vmem:[%s1119] sm:$0xff]
    %v2723 = vld [vmem:[%s1119 + $0x8] sm:$0xff]
    %v2724 = vpack.c.bf16 %v2720, %v2720
    %v2726 = vsel %vm367, %v2724, 0
    %2728 = vmatprep.subr.bf16.mxu0 %v1993
    %2729 = vmatpush1.bf16.msra.mxu0 %v1992
    %2730 = vmatprep.subr.bf16.mxu0 %v1995
    %2731 = vmatpush1.bf16.msra.mxu0 %v1994
    %2732 = vmatprep.subr.bf16.mxu0 %v1997
    %2733 = vmatpush1.bf16.msra.mxu0 %v1996
    %2734 = vmatprep.subr.bf16.mxu0 %v1999
    %2735 = vmatpush1.bf16.msra.mxu0 %v1998
    %2736 = vmatprep.subr.bf16.mxu0 0
    %2737 = vmatpush1.bf16.msra.mxu0 0
    %2738 = vmatprep.subr.bf16.mxu0 0
    %2739 = vmatpush1.bf16.msra.mxu0 0
    %2740 = vmatprep.subr.bf16.mxu0 0
    %2741 = vmatpush1.bf16.msra.mxu0 0
    %2742 = vmatprep.subr.bf16.mxu0 0
    %2743 = vmatpush1.bf16.msra.mxu0 0
    %2744 = vmatprep.subr.bf16.mxu0 0
    %2745 = vmatpush1.bf16.msra.mxu0 0
    %2746 = vmatprep.subr.bf16.mxu0 0
    %2747 = vmatpush1.bf16.msra.mxu0 0
    %2748 = vmatprep.subr.bf16.mxu0 0
    %2749 = vmatpush1.bf16.msra.mxu0 0
    %2750 = vmatprep.subr.bf16.mxu0 0
    %2751 = vmatpush1.bf16.msra.mxu0 0
    %2752 = vmatprep.subr.bf16.mxu0 0
    %2753 = vmatpush1.bf16.msra.mxu0 0
    %2754 = vmatprep.subr.bf16.mxu0 0
    %2755 = vmatpush1.bf16.msra.mxu0 0
    %2756 = vmatprep.subr.bf16.mxu0 0
    %2757 = vmatpush1.bf16.msra.mxu0 0
    %2758 = vmatprep.subr.bf16.mxu0 0
    %2759 = vmatpush1.bf16.msra.mxu0 0
    %2760 = vmatprep.mubr.bf16.mxu0 0
    %2761 = vmatmul.mubr.bf16.gmra.mrb[0].mxu0 %v2726
    %v2762 = vpop.f32.mrb[0].mxu0
    %v2763 = vadd.f32 0.0, %v2762
    %v2764 = vpop.f32.mrb[0].mxu0
    %v2765 = vadd.f32 0.0, %v2764
    %v2766 = vpop.f32.mrb[0].mxu0
    %v2767 = vpop.f32.mrb[0].mxu0
    %2768 = vdwg.mxu0
    %v2769 = vadd.f32 %v2722, %v2763
    %v2770 = vadd.f32 %v2723, %v2765
    %v2771 = vxor.u32 %v2769, 2147483648
    %v2772 = vxor.u32 %v2770, 2147483648
    %v2773 = vmul.f32 %v2771, 1.442695
    %v2774 = vpow.pop %v2773
    %v2775 = vmul.f32 %v2772, 1.442695
    %v2776 = vpow.pop %v2775
    %v2777 = vadd.f32 %v2774, 1.0
    %v2778 = vadd.f32 %v2776, 1.0
    %v2779 = vrcp.pop %v2777
    %v2780 = vmul.f32 1.0, %v2779
    %v2781 = vrcp.pop %v2778
    %v2782 = vmul.f32 1.0, %v2781
    %v2783 = vtanh.pop %v2770
    %v2784 = vmul.f32 %v2780, %v2714
    %2786 = vrot.lane.b32.xlu0 %v2783, 64
    %v2787 = vpop.permute.xlu0 %2786
    %v2789 = vmul.f32 %v2780, %v2787
    %2791 = vrot.lane.b32.xlu0 %v2789, 64
    %v2792 = vpop.permute.xlu0 %2791
    %v2794 = vadd.f32 %v2784, %v2792
    %v2795 = vtanh.pop %v2794
    %2797 = vrot.lane.b32.xlu0 %v2795, 64
    %v2798 = vpop.permute.xlu0 %2797
    %v2800 = vmul.f32 %v2782, %v2798
    %2801 = vst.msk [vmem:[%s1199] sm:$0xff] %vm367, %v2800
    %v2802 = vld [vmem:[%s1203] sm:$0xff]
    %v2803 = vld [vmem:[%s1203 + $0x8] sm:$0xff]
    %v2804 = vpack.c.bf16 %v2800, %v2800
    %v2806 = vsel %vm367, %v2804, 0
    %2808 = vmatprep.subr.bf16.mxu0 %v1993
    %2809 = vmatpush1.bf16.msra.mxu0 %v1992
    %2810 = vmatprep.subr.bf16.mxu0 %v1995
    %2811 = vmatpush1.bf16.msra.mxu0 %v1994
    %2812 = vmatprep.subr.bf16.mxu0 %v1997
    %2813 = vmatpush1.bf16.msra.mxu0 %v1996
    %2814 = vmatprep.subr.bf16.mxu0 %v1999
    %2815 = vmatpush1.bf16.msra.mxu0 %v1998
    %2816 = vmatprep.subr.bf16.mxu0 0
    %2817 = vmatpush1.bf16.msra.mxu0 0
    %2818 = vmatprep.subr.bf16.mxu0 0
    %2819 = vmatpush1.bf16.msra.mxu0 0
    %2820 = vmatprep.subr.bf16.mxu0 0
    %2821 = vmatpush1.bf16.msra.mxu0 0
    %2822 = vmatprep.subr.bf16.mxu0 0
    %2823 = vmatpush1.bf16.msra.mxu0 0
    %2824 = vmatprep.subr.bf16.mxu0 0
    %2825 = vmatpush1.bf16.msra.mxu0 0
    %2826 = vmatprep.subr.bf16.mxu0 0
    %2827 = vmatpush1.bf16.msra.mxu0 0
    %2828 = vmatprep.subr.bf16.mxu0 0
    %2829 = vmatpush1.bf16.msra.mxu0 0
    %2830 = vmatprep.subr.bf16.mxu0 0
    %2831 = vmatpush1.bf16.msra.mxu0 0
    %2832 = vmatprep.subr.bf16.mxu0 0
    %2833 = vmatpush1.bf16.msra.mxu0 0
    %2834 = vmatprep.subr.bf16.mxu0 0
    %2835 = vmatpush1.bf16.msra.mxu0 0
    %2836 = vmatprep.subr.bf16.mxu0 0
    %2837 = vmatpush1.bf16.msra.mxu0 0
    %2838 = vmatprep.subr.bf16.mxu0 0
    %2839 = vmatpush1.bf16.msra.mxu0 0
    %2840 = vmatprep.mubr.bf16.mxu0 0
    %2841 = vmatmul.mubr.bf16.gmra.mrb[0].mxu0 %v2806
    %v2842 = vpop.f32.mrb[0].mxu0
    %v2843 = vadd.f32 0.0, %v2842
    %v2844 = vpop.f32.mrb[0].mxu0
    %v2845 = vadd.f32 0.0, %v2844
    %v2846 = vpop.f32.mrb[0].mxu0
    %v2847 = vpop.f32.mrb[0].mxu0
    %2848 = vdwg.mxu0
    %v2849 = vadd.f32 %v2802, %v2843
    %v2850 = vadd.f32 %v2803, %v2845
    %v2851 = vxor.u32 %v2849, 2147483648
    %v2852 = vxor.u32 %v2850, 2147483648
    %v2853 = vmul.f32 %v2851, 1.442695
    %v2854 = vpow.pop %v2853
    %v2855 = vmul.f32 %v2852, 1.442695
    %v2856 = vpow.pop %v2855
    %v2857 = vadd.f32 %v2854, 1.0
    %v2858 = vadd.f32 %v2856, 1.0
    %v2859 = vrcp.pop %v2857
    %v2860 = vmul.f32 1.0, %v2859
    %v2861 = vrcp.pop %v2858
    %v2862 = vmul.f32 1.0, %v2861
    %v2863 = vtanh.pop %v2850
    %v2864 = vmul.f32 %v2860, %v2794
    %2866 = vrot.lane.b32.xlu0 %v2863, 64
    %v2867 = vpop.permute.xlu0 %2866
    %v2869 = vmul.f32 %v2860, %v2867
    %2871 = vrot.lane.b32.xlu0 %v2869, 64
    %v2872 = vpop.permute.xlu0 %2871
    %v2874 = vadd.f32 %v2864, %v2872
    %v2875 = vtanh.pop %v2874
    %2877 = vrot.lane.b32.xlu0 %v2875, 64
    %v2878 = vpop.permute.xlu0 %2877
    %v2880 = vmul.f32 %v2862, %v2878
    %2881 = vst.msk [vmem:[%s1283] sm:$0xff] %vm367, %v2880
    %v2882 = vld [vmem:[%s1287] sm:$0xff]
    %v2883 = vld [vmem:[%s1287 + $0x8] sm:$0xff]
    %v2884 = vpack.c.bf16 %v2880, %v2880
    %v2886 = vsel %vm367, %v2884, 0
    %2888 = vmatprep.subr.bf16.mxu0 %v1993
    %2889 = vmatpush1.bf16.msra.mxu0 %v1992
    %2890 = vmatprep.subr.bf16.mxu0 %v1995
    %2891 = vmatpush1.bf16.msra.mxu0 %v1994
    %2892 = vmatprep.subr.bf16.mxu0 %v1997
    %2893 = vmatpush1.bf16.msra.mxu0 %v1996
    %2894 = vmatprep.subr.bf16.mxu0 %v1999
    %2895 = vmatpush1.bf16.msra.mxu0 %v1998
    %2896 = vmatprep.subr.bf16.mxu0 0
    %2897 = vmatpush1.bf16.msra.mxu0 0
    %2898 = vmatprep.subr.bf16.mxu0 0
    %2899 = vmatpush1.bf16.msra.mxu0 0
    %2900 = vmatprep.subr.bf16.mxu0 0
    %2901 = vmatpush1.bf16.msra.mxu0 0
    %2902 = vmatprep.subr.bf16.mxu0 0
    %2903 = vmatpush1.bf16.msra.mxu0 0
    %2904 = vmatprep.subr.bf16.mxu0 0
    %2905 = vmatpush1.bf16.msra.mxu0 0
    %2906 = vmatprep.subr.bf16.mxu0 0
    %2907 = vmatpush1.bf16.msra.mxu0 0
    %2908 = vmatprep.subr.bf16.mxu0 0
    %2909 = vmatpush1.bf16.msra.mxu0 0
    %2910 = vmatprep.subr.bf16.mxu0 0
    %2911 = vmatpush1.bf16.msra.mxu0 0
    %2912 = vmatprep.subr.bf16.mxu0 0
    %2913 = vmatpush1.bf16.msra.mxu0 0
    %2914 = vmatprep.subr.bf16.mxu0 0
    %2915 = vmatpush1.bf16.msra.mxu0 0
    %2916 = vmatprep.subr.bf16.mxu0 0
    %2917 = vmatpush1.bf16.msra.mxu0 0
    %2918 = vmatprep.subr.bf16.mxu0 0
    %2919 = vmatpush1.bf16.msra.mxu0 0
    %2920 = vmatprep.mubr.bf16.mxu0 0
    %2921 = vmatmul.mubr.bf16.gmra.mrb[0].mxu0 %v2886
    %v2922 = vpop.f32.mrb[0].mxu0
    %v2923 = vadd.f32 0.0, %v2922
    %v2924 = vpop.f32.mrb[0].mxu0
    %v2925 = vadd.f32 0.0, %v2924
    %v2926 = vpop.f32.mrb[0].mxu0
    %v2927 = vpop.f32.mrb[0].mxu0
    %2928 = vdwg.mxu0
    %v2929 = vadd.f32 %v2882, %v2923
    %v2930 = vadd.f32 %v2883, %v2925
    %v2931 = vxor.u32 %v2929, 2147483648
    %v2932 = vxor.u32 %v2930, 2147483648
    %v2933 = vmul.f32 %v2931, 1.442695
    %v2934 = vpow.pop %v2933
    %v2935 = vmul.f32 %v2932, 1.442695
    %v2936 = vpow.pop %v2935
    %v2937 = vadd.f32 %v2934, 1.0
    %v2938 = vadd.f32 %v2936, 1.0
    %v2939 = vrcp.pop %v2937
    %v2940 = vmul.f32 1.0, %v2939
    %v2941 = vrcp.pop %v2938
    %v2942 = vmul.f32 1.0, %v2941
    %v2943 = vtanh.pop %v2930
    %v2944 = vmul.f32 %v2940, %v2874
    %2946 = vrot.lane.b32.xlu0 %v2943, 64
    %v2947 = vpop.permute.xlu0 %2946
    %v2949 = vmul.f32 %v2940, %v2947
    %2951 = vrot.lane.b32.xlu0 %v2949, 64
    %v2952 = vpop.permute.xlu0 %2951
    %v2954 = vadd.f32 %v2944, %v2952
    %v2955 = vtanh.pop %v2954
    %2957 = vrot.lane.b32.xlu0 %v2955, 64
    %v2958 = vpop.permute.xlu0 %2957
    %v2960 = vmul.f32 %v2942, %v2958
    %2961 = vst.msk [vmem:[%s1367] sm:$0xff] %vm367, %v2960
    %v2962 = vld [vmem:[%s1371] sm:$0xff]
    %v2963 = vld [vmem:[%s1371 + $0x8] sm:$0xff]
    %v2964 = vpack.c.bf16 %v2960, %v2960
    %v2966 = vsel %vm367, %v2964, 0
    %2968 = vmatprep.subr.bf16.mxu0 %v1993
    %2969 = vmatpush1.bf16.msra.mxu0 %v1992
    %2970 = vmatprep.subr.bf16.mxu0 %v1995
    %2971 = vmatpush1.bf16.msra.mxu0 %v1994
    %2972 = vmatprep.subr.bf16.mxu0 %v1997
    %2973 = vmatpush1.bf16.msra.mxu0 %v1996
    %2974 = vmatprep.subr.bf16.mxu0 %v1999
    %2975 = vmatpush1.bf16.msra.mxu0 %v1998
    %2976 = vmatprep.subr.bf16.mxu0 0
    %2977 = vmatpush1.bf16.msra.mxu0 0
    %2978 = vmatprep.subr.bf16.mxu0 0
    %2979 = vmatpush1.bf16.msra.mxu0 0
    %2980 = vmatprep.subr.bf16.mxu0 0
    %2981 = vmatpush1.bf16.msra.mxu0 0
    %2982 = vmatprep.subr.bf16.mxu0 0
    %2983 = vmatpush1.bf16.msra.mxu0 0
    %2984 = vmatprep.subr.bf16.mxu0 0
    %2985 = vmatpush1.bf16.msra.mxu0 0
    %2986 = vmatprep.subr.bf16.mxu0 0
    %2987 = vmatpush1.bf16.msra.mxu0 0
    %2988 = vmatprep.subr.bf16.mxu0 0
    %2989 = vmatpush1.bf16.msra.mxu0 0
    %2990 = vmatprep.subr.bf16.mxu0 0
    %2991 = vmatpush1.bf16.msra.mxu0 0
    %2992 = vmatprep.subr.bf16.mxu0 0
    %2993 = vmatpush1.bf16.msra.mxu0 0
    %2994 = vmatprep.subr.bf16.mxu0 0
    %2995 = vmatpush1.bf16.msra.mxu0 0
    %2996 = vmatprep.subr.bf16.mxu0 0
    %2997 = vmatpush1.bf16.msra.mxu0 0
    %2998 = vmatprep.subr.bf16.mxu0 0
    %2999 = vmatpush1.bf16.msra.mxu0 0
    %3000 = vmatprep.mubr.bf16.mxu0 0
    %3001 = vmatmul.mubr.bf16.gmra.mrb[0].mxu0 %v2966
    %v3002 = vpop.f32.mrb[0].mxu0
    %v3003 = vadd.f32 0.0, %v3002
    %v3004 = vpop.f32.mrb[0].mxu0
    %v3005 = vadd.f32 0.0, %v3004
    %v3006 = vpop.f32.mrb[0].mxu0
    %v3007 = vpop.f32.mrb[0].mxu0
    %3008 = vdwg.mxu0
    %v3009 = vadd.f32 %v2962, %v3003
    %v3010 = vadd.f32 %v2963, %v3005
    %v3011 = vxor.u32 %v3009, 2147483648
    %v3012 = vxor.u32 %v3010, 2147483648
    %v3013 = vmul.f32 %v3011, 1.442695
    %v3014 = vpow.pop %v3013
    %v3015 = vmul.f32 %v3012, 1.442695
    %v3016 = vpow.pop %v3015
    %v3017 = vadd.f32 %v3014, 1.0
    %v3018 = vadd.f32 %v3016, 1.0
    %v3019 = vrcp.pop %v3017
    %v3020 = vmul.f32 1.0, %v3019
    %v3021 = vrcp.pop %v3018
    %v3022 = vmul.f32 1.0, %v3021
    %v3023 = vtanh.pop %v3010
    %v3024 = vmul.f32 %v3020, %v2954
    %3026 = vrot.lane.b32.xlu0 %v3023, 64
    %v3027 = vpop.permute.xlu0 %3026
    %v3029 = vmul.f32 %v3020, %v3027
    %3031 = vrot.lane.b32.xlu0 %v3029, 64
    %v3032 = vpop.permute.xlu0 %3031
    %v3034 = vadd.f32 %v3024, %v3032
    %v3035 = vtanh.pop %v3034
    %3037 = vrot.lane.b32.xlu0 %v3035, 64
    %v3038 = vpop.permute.xlu0 %3037
    %v3040 = vmul.f32 %v3022, %v3038
    %3041 = vst.msk [vmem:[%s1451] sm:$0xff] %vm367, %v3040
    %v3042 = vld [vmem:[%s1455] sm:$0xff]
    %v3043 = vld [vmem:[%s1455 + $0x8] sm:$0xff]
    %v3044 = vpack.c.bf16 %v3040, %v3040
    %v3046 = vsel %vm367, %v3044, 0
    %3048 = vmatprep.subr.bf16.mxu0 %v1993
    %3049 = vmatpush1.bf16.msra.mxu0 %v1992
    %3050 = vmatprep.subr.bf16.mxu0 %v1995
    %3051 = vmatpush1.bf16.msra.mxu0 %v1994
    %3052 = vmatprep.subr.bf16.mxu0 %v1997
    %3053 = vmatpush1.bf16.msra.mxu0 %v1996
    %3054 = vmatprep.subr.bf16.mxu0 %v1999
    %3055 = vmatpush1.bf16.msra.mxu0 %v1998
    %3056 = vmatprep.subr.bf16.mxu0 0
    %3057 = vmatpush1.bf16.msra.mxu0 0
    %3058 = vmatprep.subr.bf16.mxu0 0
    %3059 = vmatpush1.bf16.msra.mxu0 0
    %3060 = vmatprep.subr.bf16.mxu0 0
    %3061 = vmatpush1.bf16.msra.mxu0 0
    %3062 = vmatprep.subr.bf16.mxu0 0
    %3063 = vmatpush1.bf16.msra.mxu0 0
    %3064 = vmatprep.subr.bf16.mxu0 0
    %3065 = vmatpush1.bf16.msra.mxu0 0
    %3066 = vmatprep.subr.bf16.mxu0 0
    %3067 = vmatpush1.bf16.msra.mxu0 0
    %3068 = vmatprep.subr.bf16.mxu0 0
    %3069 = vmatpush1.bf16.msra.mxu0 0
    %3070 = vmatprep.subr.bf16.mxu0 0
    %3071 = vmatpush1.bf16.msra.mxu0 0
    %3072 = vmatprep.subr.bf16.mxu0 0
    %3073 = vmatpush1.bf16.msra.mxu0 0
    %3074 = vmatprep.subr.bf16.mxu0 0
    %3075 = vmatpush1.bf16.msra.mxu0 0
    %3076 = vmatprep.subr.bf16.mxu0 0
    %3077 = vmatpush1.bf16.msra.mxu0 0
    %3078 = vmatprep.subr.bf16.mxu0 0
    %3079 = vmatpush1.bf16.msra.mxu0 0
    %3080 = vmatprep.mubr.bf16.mxu0 0
    %3081 = vmatmul.mubr.bf16.gmra.mrb[0].mxu0 %v3046
    %v3082 = vpop.f32.mrb[0].mxu0
    %v3083 = vadd.f32 0.0, %v3082
    %v3084 = vpop.f32.mrb[0].mxu0
    %v3085 = vadd.f32 0.0, %v3084
    %v3086 = vpop.f32.mrb[0].mxu0
    %v3087 = vpop.f32.mrb[0].mxu0
    %3088 = vdwg.mxu0
    %v3089 = vadd.f32 %v3042, %v3083
    %v3090 = vadd.f32 %v3043, %v3085
    %v3091 = vxor.u32 %v3089, 2147483648
    %v3092 = vxor.u32 %v3090, 2147483648
    %v3093 = vmul.f32 %v3091, 1.442695
    %v3094 = vpow.pop %v3093
    %v3095 = vmul.f32 %v3092, 1.442695
    %v3096 = vpow.pop %v3095
    %v3097 = vadd.f32 %v3094, 1.0
    %v3098 = vadd.f32 %v3096, 1.0
    %v3099 = vrcp.pop %v3097
    %v3100 = vmul.f32 1.0, %v3099
    %v3101 = vrcp.pop %v3098
    %v3102 = vmul.f32 1.0, %v3101
    %v3103 = vtanh.pop %v3090
    %v3104 = vmul.f32 %v3100, %v3034
    %3106 = vrot.lane.b32.xlu0 %v3103, 64
    %v3107 = vpop.permute.xlu0 %3106
    %v3109 = vmul.f32 %v3100, %v3107
    %3111 = vrot.lane.b32.xlu0 %v3109, 64
    %v3112 = vpop.permute.xlu0 %3111
    %v3114 = vadd.f32 %v3104, %v3112
    %v3115 = vtanh.pop %v3114
    %3117 = vrot.lane.b32.xlu0 %v3115, 64
    %v3118 = vpop.permute.xlu0 %3117
    %v3120 = vmul.f32 %v3102, %v3118
    %3121 = vst.msk [vmem:[%s1535] sm:$0xff] %vm367, %v3120
    %v3122 = vld [vmem:[%s1539] sm:$0xff]
    %v3123 = vld [vmem:[%s1539 + $0x8] sm:$0xff]
    %v3124 = vpack.c.bf16 %v3120, %v3120
    %v3126 = vsel %vm367, %v3124, 0
    %3128 = vmatprep.subr.bf16.mxu0 %v1993
    %3129 = vmatpush1.bf16.msra.mxu0 %v1992
    %3130 = vmatprep.subr.bf16.mxu0 %v1995
    %3131 = vmatpush1.bf16.msra.mxu0 %v1994
    %3132 = vmatprep.subr.bf16.mxu0 %v1997
    %3133 = vmatpush1.bf16.msra.mxu0 %v1996
    %3134 = vmatprep.subr.bf16.mxu0 %v1999
    %3135 = vmatpush1.bf16.msra.mxu0 %v1998
    %3136 = vmatprep.subr.bf16.mxu0 0
    %3137 = vmatpush1.bf16.msra.mxu0 0
    %3138 = vmatprep.subr.bf16.mxu0 0
    %3139 = vmatpush1.bf16.msra.mxu0 0
    %3140 = vmatprep.subr.bf16.mxu0 0
    %3141 = vmatpush1.bf16.msra.mxu0 0
    %3142 = vmatprep.subr.bf16.mxu0 0
    %3143 = vmatpush1.bf16.msra.mxu0 0
    %3144 = vmatprep.subr.bf16.mxu0 0
    %3145 = vmatpush1.bf16.msra.mxu0 0
    %3146 = vmatprep.subr.bf16.mxu0 0
    %3147 = vmatpush1.bf16.msra.mxu0 0
    %3148 = vmatprep.subr.bf16.mxu0 0
    %3149 = vmatpush1.bf16.msra.mxu0 0
    %3150 = vmatprep.subr.bf16.mxu0 0
    %3151 = vmatpush1.bf16.msra.mxu0 0
    %3152 = vmatprep.subr.bf16.mxu0 0
    %3153 = vmatpush1.bf16.msra.mxu0 0
    %3154 = vmatprep.subr.bf16.mxu0 0
    %3155 = vmatpush1.bf16.msra.mxu0 0
    %3156 = vmatprep.subr.bf16.mxu0 0
    %3157 = vmatpush1.bf16.msra.mxu0 0
    %3158 = vmatprep.subr.bf16.mxu0 0
    %3159 = vmatpush1.bf16.msra.mxu0 0
    %3160 = vmatprep.mubr.bf16.mxu0 0
    %3161 = vmatmul.mubr.bf16.gmra.mrb[0].mxu0 %v3126
    %v3162 = vpop.f32.mrb[0].mxu0
    %v3163 = vadd.f32 0.0, %v3162
    %v3164 = vpop.f32.mrb[0].mxu0
    %v3165 = vadd.f32 0.0, %v3164
    %v3166 = vpop.f32.mrb[0].mxu0
    %v3167 = vpop.f32.mrb[0].mxu0
    %3168 = vdwg.mxu0
    %v3169 = vadd.f32 %v3122, %v3163
    %v3170 = vadd.f32 %v3123, %v3165
    %v3171 = vxor.u32 %v3169, 2147483648
    %v3172 = vxor.u32 %v3170, 2147483648
    %v3173 = vmul.f32 %v3171, 1.442695
    %v3174 = vpow.pop %v3173
    %v3175 = vmul.f32 %v3172, 1.442695
    %v3176 = vpow.pop %v3175
    %v3177 = vadd.f32 %v3174, 1.0
    %v3178 = vadd.f32 %v3176, 1.0
    %v3179 = vrcp.pop %v3177
    %v3180 = vmul.f32 1.0, %v3179
    %v3181 = vrcp.pop %v3178
    %v3182 = vmul.f32 1.0, %v3181
    %v3183 = vtanh.pop %v3170
    %v3184 = vmul.f32 %v3180, %v3114
    %3186 = vrot.lane.b32.xlu0 %v3183, 64
    %v3187 = vpop.permute.xlu0 %3186
    %v3189 = vmul.f32 %v3180, %v3187
    %3191 = vrot.lane.b32.xlu0 %v3189, 64
    %v3192 = vpop.permute.xlu0 %3191
    %v3194 = vadd.f32 %v3184, %v3192
    %v3195 = vtanh.pop %v3194
    %3197 = vrot.lane.b32.xlu0 %v3195, 64
    %v3198 = vpop.permute.xlu0 %3197
    %v3200 = vmul.f32 %v3182, %v3198
    %3201 = vst.msk [vmem:[%s1619] sm:$0xff] %vm367, %v3200
    %v3202 = vld [vmem:[%s1623] sm:$0xff]
    %v3203 = vld [vmem:[%s1623 + $0x8] sm:$0xff]
    %v3204 = vpack.c.bf16 %v3200, %v3200
    %v3206 = vsel %vm367, %v3204, 0
    %3208 = vmatprep.subr.bf16.mxu0 %v1993
    %3209 = vmatpush1.bf16.msra.mxu0 %v1992
    %3210 = vmatprep.subr.bf16.mxu0 %v1995
    %3211 = vmatpush1.bf16.msra.mxu0 %v1994
    %3212 = vmatprep.subr.bf16.mxu0 %v1997
    %3213 = vmatpush1.bf16.msra.mxu0 %v1996
    %3214 = vmatprep.subr.bf16.mxu0 %v1999
    %3215 = vmatpush1.bf16.msra.mxu0 %v1998
    %3216 = vmatprep.subr.bf16.mxu0 0
    %3217 = vmatpush1.bf16.msra.mxu0 0
    %3218 = vmatprep.subr.bf16.mxu0 0
    %3219 = vmatpush1.bf16.msra.mxu0 0
    %3220 = vmatprep.subr.bf16.mxu0 0
    %3221 = vmatpush1.bf16.msra.mxu0 0
    %3222 = vmatprep.subr.bf16.mxu0 0
    %3223 = vmatpush1.bf16.msra.mxu0 0
    %3224 = vmatprep.subr.bf16.mxu0 0
    %3225 = vmatpush1.bf16.msra.mxu0 0
    %3226 = vmatprep.subr.bf16.mxu0 0
    %3227 = vmatpush1.bf16.msra.mxu0 0
    %3228 = vmatprep.subr.bf16.mxu0 0
    %3229 = vmatpush1.bf16.msra.mxu0 0
    %3230 = vmatprep.subr.bf16.mxu0 0
    %3231 = vmatpush1.bf16.msra.mxu0 0
    %3232 = vmatprep.subr.bf16.mxu0 0
    %3233 = vmatpush1.bf16.msra.mxu0 0
    %3234 = vmatprep.subr.bf16.mxu0 0
    %3235 = vmatpush1.bf16.msra.mxu0 0
    %3236 = vmatprep.subr.bf16.mxu0 0
    %3237 = vmatpush1.bf16.msra.mxu0 0
    %3238 = vmatprep.subr.bf16.mxu0 0
    %3239 = vmatpush1.bf16.msra.mxu0 0
    %3240 = vmatprep.mubr.bf16.mxu0 0
    %3241 = vmatmul.mubr.bf16.gmra.mrb[0].mxu0 %v3206
    %v3242 = vpop.f32.mrb[0].mxu0
    %v3243 = vadd.f32 0.0, %v3242
    %v3244 = vpop.f32.mrb[0].mxu0
    %v3245 = vadd.f32 0.0, %v3244
    %v3246 = vpop.f32.mrb[0].mxu0
    %v3247 = vpop.f32.mrb[0].mxu0
    %3248 = vdwg.mxu0
    %v3249 = vadd.f32 %v3202, %v3243
    %v3250 = vadd.f32 %v3203, %v3245
    %v3251 = vxor.u32 %v3249, 2147483648
    %v3252 = vxor.u32 %v3250, 2147483648
    %v3253 = vmul.f32 %v3251, 1.442695
    %v3254 = vpow.pop %v3253
    %v3255 = vmul.f32 %v3252, 1.442695
    %v3256 = vpow.pop %v3255
    %v3257 = vadd.f32 %v3254, 1.0
    %v3258 = vadd.f32 %v3256, 1.0
    %v3259 = vrcp.pop %v3257
    %v3260 = vmul.f32 1.0, %v3259
    %v3261 = vrcp.pop %v3258
    %v3262 = vmul.f32 1.0, %v3261
    %v3263 = vtanh.pop %v3250
    %v3264 = vmul.f32 %v3260, %v3194
    %3266 = vrot.lane.b32.xlu0 %v3263, 64
    %v3267 = vpop.permute.xlu0 %3266
    %v3269 = vmul.f32 %v3260, %v3267
    %3271 = vrot.lane.b32.xlu0 %v3269, 64
    %v3272 = vpop.permute.xlu0 %3271
    %v3274 = vadd.f32 %v3264, %v3272
    %v3275 = vtanh.pop %v3274
    %3277 = vrot.lane.b32.xlu0 %v3275, 64
    %v3278 = vpop.permute.xlu0 %3277
    %v3280 = vmul.f32 %v3262, %v3278
    %3281 = vst.msk [vmem:[%s1703] sm:$0xff] %vm367, %v3280
    %v3282 = vld [vmem:[#allocation3] sm:$0xff]
    %v3283 = vld [vmem:[#allocation3 + $0x8] sm:$0xff]
    %v3284 = vld [vmem:[#allocation3 + $0x10] sm:$0xff]
    %v3285 = vld [vmem:[#allocation3 + $0x18] sm:$0xff]
    %v3286 = vld [vmem:[#allocation3 + $0x20] sm:$0xff]
    %v3287 = vld [vmem:[#allocation3 + $0x28] sm:$0xff]
    %v3288 = vld [vmem:[#allocation3 + $0x30] sm:$0xff]
    %v3289 = vld [vmem:[#allocation3 + $0x38] sm:$0xff]
    %v3290 = vld [vmem:[#allocation3 + $0x40] sm:$0xff]
    %v3291 = vld [vmem:[#allocation3 + $0x48] sm:$0xff]
    %v3292 = vld [vmem:[#allocation3 + $0x50] sm:$0xff]
    %v3293 = vld [vmem:[#allocation3 + $0x58] sm:$0xff]
    %v3294 = vld [vmem:[#allocation3 + $0x60] sm:$0xff]
    %v3295 = vld [vmem:[#allocation3 + $0x68] sm:$0xff]
    %v3296 = vld [vmem:[#allocation3 + $0x70] sm:$0xff]
    %v3297 = vld [vmem:[#allocation3 + $0x78] sm:$0xff]
    %v3298 = vpack.c.bf16 %v3283, %v3282
    %v3299 = vpack.c.bf16 %v3285, %v3284
    %v3300 = vpack.c.bf16 %v3287, %v3286
    %v3301 = vpack.c.bf16 %v3289, %v3288
    %v3302 = vpack.c.bf16 %v3291, %v3290
    %v3303 = vpack.c.bf16 %v3293, %v3292
    %v3304 = vpack.c.bf16 %v3295, %v3294
    %v3305 = vpack.c.bf16 %v3297, %v3296
    %v3306 = vld [vmem:[#allocation7] sm:$0xff]
    %v3307 = vld [vmem:[#allocation7 + $0x8] sm:$0xff]
    %v3308 = vld [vmem:[#allocation7 + $0x10] sm:$0xff]
    %v3309 = vld [vmem:[#allocation7 + $0x18] sm:$0xff]
    %v3310 = vld [vmem:[#allocation7 + $0x20] sm:$0xff]
    %v3311 = vld [vmem:[#allocation7 + $0x28] sm:$0xff]
    %v3312 = vld [vmem:[#allocation7 + $0x30] sm:$0xff]
    %v3313 = vld [vmem:[#allocation7 + $0x38] sm:$0xff]
    %v3314 = vld [vmem:[%s9] sm:$0x3]
    %v3316 = vlaneseq
    %v3317 = vshrl.u32 %v3316, 7
    %v3318 = vsub.s32 0, %v3317
    %v3319 = vrot.slane %v3314, %v3318
    %v3320 = vlaneseq
    %v3321 = vshrl.u32 %v3320, 7
    %v3322 = vsub.s32 1, %v3321
    %v3323 = vrot.slane %v3314, %v3322
    %v3334 = vunpack.c.l.b16 %v3306
    %v3335 = vunpack.c.h.b16 %v3306
    %v3336 = vunpack.c.l.b16 %v3307
    %v3337 = vunpack.c.h.b16 %v3307
    %v3338 = vunpack.c.l.b16 %v3308
    %v3339 = vunpack.c.h.b16 %v3308
    %v3340 = vunpack.c.l.b16 %v3309
    %v3341 = vunpack.c.h.b16 %v3309
    %v3342 = vunpack.c.l.b16 %v3310
    %v3343 = vunpack.c.h.b16 %v3310
    %v3344 = vunpack.c.l.b16 %v3311
    %v3345 = vunpack.c.h.b16 %v3311
    %v3346 = vunpack.c.l.b16 %v3312
    %v3347 = vunpack.c.h.b16 %v3312
    %v3348 = vunpack.c.l.b16 %v3313
    %v3349 = vunpack.c.h.b16 %v3313
    %v3350 = vpack.c.b16 %v3336, %v3334
    %v3351 = vpack.c.b16 %v3337, %v3335
    %v3352 = vpack.c.b16 %v3340, %v3338
    %v3353 = vpack.c.b16 %v3341, %v3339
    %v3354 = vpack.c.b16 %v3344, %v3342
    %v3355 = vpack.c.b16 %v3345, %v3343
    %v3356 = vpack.c.b16 %v3348, %v3346
    %v3357 = vpack.c.b16 %v3349, %v3347
    %v3367 = vsel %vm367, %v3298, 0
    %v3370 = vsel %vm367, %v3299, 0
    %v3373 = vsel %vm367, %v3300, 0
    %v3376 = vsel %vm367, %v3301, 0
    %v3379 = vsel %vm367, %v3302, 0
    %v3382 = vsel %vm367, %v3303, 0
    %v3385 = vsel %vm367, %v3304, 0
    %v3388 = vsel %vm367, %v3305, 0
    %3390 = vmatprep.subr.bf16.mxu0 %v3351
    %3391 = vmatpush1.bf16.msra.mxu0 %v3350
    %3392 = vmatprep.subr.bf16.mxu0 %v3353
    %3393 = vmatpush1.bf16.msra.mxu0 %v3352
    %3394 = vmatprep.subr.bf16.mxu0 %v3355
    %3395 = vmatpush1.bf16.msra.mxu0 %v3354
    %3396 = vmatprep.subr.bf16.mxu0 %v3357
    %3397 = vmatpush1.bf16.msra.mxu0 %v3356
    %3398 = vmatprep.subr.bf16.mxu0 0
    %3399 = vmatpush1.bf16.msra.mxu0 0
    %3400 = vmatprep.subr.bf16.mxu0 0
    %3401 = vmatpush1.bf16.msra.mxu0 0
    %3402 = vmatprep.subr.bf16.mxu0 0
    %3403 = vmatpush1.bf16.msra.mxu0 0
    %3404 = vmatprep.subr.bf16.mxu0 0
    %3405 = vmatpush1.bf16.msra.mxu0 0
    %3406 = vmatprep.subr.bf16.mxu0 0
    %3407 = vmatpush1.bf16.msra.mxu0 0
    %3408 = vmatprep.subr.bf16.mxu0 0
    %3409 = vmatpush1.bf16.msra.mxu0 0
    %3410 = vmatprep.subr.bf16.mxu0 0
    %3411 = vmatpush1.bf16.msra.mxu0 0
    %3412 = vmatprep.subr.bf16.mxu0 0
    %3413 = vmatpush1.bf16.msra.mxu0 0
    %3414 = vmatprep.subr.bf16.mxu0 0
    %3415 = vmatpush1.bf16.msra.mxu0 0
    %3416 = vmatprep.subr.bf16.mxu0 0
    %3417 = vmatpush1.bf16.msra.mxu0 0
    %3418 = vmatprep.subr.bf16.mxu0 0
    %3419 = vmatpush1.bf16.msra.mxu0 0
    %3420 = vmatprep.subr.bf16.mxu0 0
    %3421 = vmatpush1.bf16.msra.mxu0 0
    %3422 = vmatprep.mubr.bf16.mxu0 0
    %3423 = vmatmul.mubr.bf16.gmra.mrb[0].mxu0 %v3367
    %v3424 = vpop.f32.mrb[0].mxu0
    %v3425 = vadd.f32 %v3319, %v3424
    %v3426 = vpop.f32.mrb[0].mxu0
    %v3427 = vadd.f32 %v3323, %v3426
    %v3428 = vpop.f32.mrb[0].mxu0
    %v3429 = vadd.f32 %v3319, %v3428
    %v3430 = vpop.f32.mrb[0].mxu0
    %v3431 = vadd.f32 %v3323, %v3430
    %3432 = vmatprep.mubr.bf16.mxu0 0
    %3433 = vmatmul.mubr.bf16.gmra.mrb[0].mxu0 %v3370
    %v3434 = vpop.f32.mrb[0].mxu0
    %v3435 = vadd.f32 %v3319, %v3434
    %v3436 = vpop.f32.mrb[0].mxu0
    %v3437 = vadd.f32 %v3323, %v3436
    %v3438 = vpop.f32.mrb[0].mxu0
    %v3439 = vadd.f32 %v3319, %v3438
    %v3440 = vpop.f32.mrb[0].mxu0
    %v3441 = vadd.f32 %v3323, %v3440
    %3442 = vmatprep.mubr.bf16.mxu0 0
    %3443 = vmatmul.mubr.bf16.gmra.mrb[0].mxu0 %v3373
    %v3444 = vpop.f32.mrb[0].mxu0
    %v3445 = vadd.f32 %v3319, %v3444
    %v3446 = vpop.f32.mrb[0].mxu0
    %v3447 = vadd.f32 %v3323, %v3446
    %v3448 = vpop.f32.mrb[0].mxu0
    %v3449 = vadd.f32 %v3319, %v3448
    %v3450 = vpop.f32.mrb[0].mxu0
    %v3451 = vadd.f32 %v3323, %v3450
    %3452 = vmatprep.mubr.bf16.mxu0 0
    %3453 = vmatmul.mubr.bf16.gmra.mrb[0].mxu0 %v3376
    %v3454 = vpop.f32.mrb[0].mxu0
    %v3455 = vadd.f32 %v3319, %v3454
    %v3456 = vpop.f32.mrb[0].mxu0
    %v3457 = vadd.f32 %v3323, %v3456
    %v3458 = vpop.f32.mrb[0].mxu0
    %v3459 = vadd.f32 %v3319, %v3458
    %v3460 = vpop.f32.mrb[0].mxu0
    %v3461 = vadd.f32 %v3323, %v3460
    %3462 = vmatprep.mubr.bf16.mxu0 0
    %3463 = vmatmul.mubr.bf16.gmra.mrb[0].mxu0 %v3379
    %v3464 = vpop.f32.mrb[0].mxu0
    %v3465 = vadd.f32 %v3319, %v3464
    %v3466 = vpop.f32.mrb[0].mxu0
    %v3467 = vadd.f32 %v3323, %v3466
    %v3468 = vpop.f32.mrb[0].mxu0
    %v3469 = vadd.f32 %v3319, %v3468
    %v3470 = vpop.f32.mrb[0].mxu0
    %v3471 = vadd.f32 %v3323, %v3470
    %3472 = vmatprep.mubr.bf16.mxu0 0
    %3473 = vmatmul.mubr.bf16.gmra.mrb[0].mxu0 %v3382
    %v3474 = vpop.f32.mrb[0].mxu0
    %v3475 = vadd.f32 %v3319, %v3474
    %v3476 = vpop.f32.mrb[0].mxu0
    %v3477 = vadd.f32 %v3323, %v3476
    %v3478 = vpop.f32.mrb[0].mxu0
    %v3479 = vadd.f32 %v3319, %v3478
    %v3480 = vpop.f32.mrb[0].mxu0
    %v3481 = vadd.f32 %v3323, %v3480
    %3482 = vmatprep.mubr.bf16.mxu0 0
    %3483 = vmatmul.mubr.bf16.gmra.mrb[0].mxu0 %v3385
    %v3484 = vpop.f32.mrb[0].mxu0
    %v3485 = vadd.f32 %v3319, %v3484
    %v3486 = vpop.f32.mrb[0].mxu0
    %v3487 = vadd.f32 %v3323, %v3486
    %v3488 = vpop.f32.mrb[0].mxu0
    %v3489 = vadd.f32 %v3319, %v3488
    %v3490 = vpop.f32.mrb[0].mxu0
    %v3491 = vadd.f32 %v3323, %v3490
    %3492 = vmatprep.mubr.bf16.mxu0 0
    %3493 = vmatmul.mubr.bf16.gmra.mrb[0].mxu0 %v3388
    %v3494 = vpop.f32.mrb[0].mxu0
    %v3495 = vadd.f32 %v3319, %v3494
    %v3496 = vpop.f32.mrb[0].mxu0
    %v3497 = vadd.f32 %v3323, %v3496
    %v3498 = vpop.f32.mrb[0].mxu0
    %v3499 = vadd.f32 %v3319, %v3498
    %v3500 = vpop.f32.mrb[0].mxu0
    %v3501 = vadd.f32 %v3323, %v3500
    %3502 = vdwg.mxu0
    %3503 = vst [vmem:[#allocation2] sm:$0xff] %v3425
    %3504 = vst [vmem:[#allocation2 + $0x8] sm:$0xff] %v3427
    %3505 = vst [vmem:[#allocation2 + $0x10] sm:$0xff] %v3429
    %3506 = vst [vmem:[#allocation2 + $0x18] sm:$0xff] %v3431
    %3507 = vst [vmem:[#allocation2 + $0x20] sm:$0xff] %v3435
    %3508 = vst [vmem:[#allocation2 + $0x28] sm:$0xff] %v3437
    %3509 = vst [vmem:[#allocation2 + $0x30] sm:$0xff] %v3439
    %3510 = vst [vmem:[#allocation2 + $0x38] sm:$0xff] %v3441
    %3511 = vst [vmem:[#allocation2 + $0x40] sm:$0xff] %v3445
    %3512 = vst [vmem:[#allocation2 + $0x48] sm:$0xff] %v3447
    %3513 = vst [vmem:[#allocation2 + $0x50] sm:$0xff] %v3449
    %3514 = vst [vmem:[#allocation2 + $0x58] sm:$0xff] %v3451
    %3515 = vst [vmem:[#allocation2 + $0x60] sm:$0xff] %v3455
    %3516 = vst [vmem:[#allocation2 + $0x68] sm:$0xff] %v3457
    %3517 = vst [vmem:[#allocation2 + $0x70] sm:$0xff] %v3459
    %3518 = vst [vmem:[#allocation2 + $0x78] sm:$0xff] %v3461
    %3519 = vst [vmem:[#allocation2 + $0x80] sm:$0xff] %v3465
    %3520 = vst [vmem:[#allocation2 + $0x88] sm:$0xff] %v3467
    %3521 = vst [vmem:[#allocation2 + $0x90] sm:$0xff] %v3469
    %3522 = vst [vmem:[#allocation2 + $0x98] sm:$0xff] %v3471
    %3523 = vst [vmem:[#allocation2 + $0xa0] sm:$0xff] %v3475
    %3524 = vst [vmem:[#allocation2 + $0xa8] sm:$0xff] %v3477
    %3525 = vst [vmem:[#allocation2 + $0xb0] sm:$0xff] %v3479
    %3526 = vst [vmem:[#allocation2 + $0xb8] sm:$0xff] %v3481
    %3527 = vst [vmem:[#allocation2 + $0xc0] sm:$0xff] %v3485
    %3528 = vst [vmem:[#allocation2 + $0xc8] sm:$0xff] %v3487
    %3529 = vst [vmem:[#allocation2 + $0xd0] sm:$0xff] %v3489
    %3530 = vst [vmem:[#allocation2 + $0xd8] sm:$0xff] %v3491
    %3531 = vst [vmem:[#allocation2 + $0xe0] sm:$0xff] %v3495
    %3532 = vst [vmem:[#allocation2 + $0xe8] sm:$0xff] %v3497
    %3533 = vst [vmem:[#allocation2 + $0xf0] sm:$0xff] %v3499
    %3534 = vst [vmem:[#allocation2 + $0xf8] sm:$0xff] %v3501
    %v3535 = vld [vmem:[#allocation9] sm:$0xff]
    %v3536 = vld [vmem:[#allocation9 + $0x8] sm:$0xff]
    %v3537 = vld [vmem:[#allocation9 + $0x10] sm:$0xff]
    %v3538 = vld [vmem:[#allocation9 + $0x18] sm:$0xff]
    %v3539 = vld [vmem:[#allocation9 + $0x20] sm:$0xff]
    %v3540 = vld [vmem:[#allocation9 + $0x28] sm:$0xff]
    %v3541 = vld [vmem:[#allocation9 + $0x30] sm:$0xff]
    %v3542 = vld [vmem:[#allocation9 + $0x38] sm:$0xff]
    %v3543 = vld [vmem:[%s324] sm:$0xff]
    %v3544 = vld [vmem:[%s324 + $0x8] sm:$0xff]
    %v3553 = vunpack.c.l.b16 %v3535
    %v3554 = vunpack.c.h.b16 %v3535
    %v3555 = vunpack.c.l.b16 %v3536
    %v3556 = vunpack.c.h.b16 %v3536
    %v3557 = vunpack.c.l.b16 %v3537
    %v3558 = vunpack.c.h.b16 %v3537
    %v3559 = vunpack.c.l.b16 %v3538
    %v3560 = vunpack.c.h.b16 %v3538
    %v3561 = vunpack.c.l.b16 %v3539
    %v3562 = vunpack.c.h.b16 %v3539
    %v3563 = vunpack.c.l.b16 %v3540
    %v3564 = vunpack.c.h.b16 %v3540
    %v3565 = vunpack.c.l.b16 %v3541
    %v3566 = vunpack.c.h.b16 %v3541
    %v3567 = vunpack.c.l.b16 %v3542
    %v3568 = vunpack.c.h.b16 %v3542
    %v3569 = vpack.c.b16 %v3555, %v3553
    %v3570 = vpack.c.b16 %v3556, %v3554
    %v3571 = vpack.c.b16 %v3559, %v3557
    %v3572 = vpack.c.b16 %v3560, %v3558
    %v3573 = vpack.c.b16 %v3563, %v3561
    %v3574 = vpack.c.b16 %v3564, %v3562
    %v3575 = vpack.c.b16 %v3567, %v3565
    %v3576 = vpack.c.b16 %v3568, %v3566
    %3585 = vmatprep.subr.bf16.mxu0 %v3570
    %3586 = vmatpush1.bf16.msra.mxu0 %v3569
    %3587 = vmatprep.subr.bf16.mxu0 %v3572
    %3588 = vmatpush1.bf16.msra.mxu0 %v3571
    %3589 = vmatprep.subr.bf16.mxu0 %v3574
    %3590 = vmatpush1.bf16.msra.mxu0 %v3573
    %3591 = vmatprep.subr.bf16.mxu0 %v3576
    %3592 = vmatpush1.bf16.msra.mxu0 %v3575
    %3593 = vmatprep.subr.bf16.mxu0 0
    %3594 = vmatpush1.bf16.msra.mxu0 0
    %3595 = vmatprep.subr.bf16.mxu0 0
    %3596 = vmatpush1.bf16.msra.mxu0 0
    %3597 = vmatprep.subr.bf16.mxu0 0
    %3598 = vmatpush1.bf16.msra.mxu0 0
    %3599 = vmatprep.subr.bf16.mxu0 0
    %3600 = vmatpush1.bf16.msra.mxu0 0
    %3601 = vmatprep.subr.bf16.mxu0 0
    %3602 = vmatpush1.bf16.msra.mxu0 0
    %3603 = vmatprep.subr.bf16.mxu0 0
    %3604 = vmatpush1.bf16.msra.mxu0 0
    %3605 = vmatprep.subr.bf16.mxu0 0
    %3606 = vmatpush1.bf16.msra.mxu0 0
    %3607 = vmatprep.subr.bf16.mxu0 0
    %3608 = vmatpush1.bf16.msra.mxu0 0
    %3609 = vmatprep.subr.bf16.mxu0 0
    %3610 = vmatpush1.bf16.msra.mxu0 0
    %3611 = vmatprep.subr.bf16.mxu0 0
    %3612 = vmatpush1.bf16.msra.mxu0 0
    %3613 = vmatprep.subr.bf16.mxu0 0
    %3614 = vmatpush1.bf16.msra.mxu0 0
    %3615 = vmatprep.subr.bf16.mxu0 0
    %3616 = vmatpush1.bf16.msra.mxu0 0
    %3617 = vmatprep.mubr.bf16.mxu0 0
    %3618 = vmatmul.mubr.bf16.gmra.mrb[0].mxu0 %v369
    %v3619 = vpop.f32.mrb[0].mxu0
    %v3620 = vadd.f32 0.0, %v3619
    %v3621 = vpop.f32.mrb[0].mxu0
    %v3622 = vadd.f32 0.0, %v3621
    %v3623 = vpop.f32.mrb[0].mxu0
    %v3624 = vpop.f32.mrb[0].mxu0
    %3625 = vdwg.mxu0
    %v3626 = vadd.f32 %v3543, %v3620
    %v3627 = vadd.f32 %v3544, %v3622
    %v3628 = vxor.u32 %v3626, 2147483648
    %v3629 = vxor.u32 %v3627, 2147483648
    %v3630 = vmul.f32 %v3628, 1.442695
    %v3631 = vpow.pop %v3630
    %v3632 = vmul.f32 %v3629, 1.442695
    %v3633 = vpow.pop %v3632
    %v3634 = vadd.f32 %v3631, 1.0
    %v3635 = vadd.f32 %v3633, 1.0
    %v3636 = vrcp.pop %v3634
    %v3637 = vmul.f32 1.0, %v3636
    %v3638 = vrcp.pop %v3635
    %v3639 = vmul.f32 1.0, %v3638
    %v3640 = vtanh.pop %v3627
    %v3641 = vmul.f32 %v3637, 0.0
    %3643 = vrot.lane.b32.xlu0 %v3640, 64
    %v3644 = vpop.permute.xlu0 %3643
    %v3646 = vmul.f32 %v3637, %v3644
    %3648 = vrot.lane.b32.xlu0 %v3646, 64
    %v3649 = vpop.permute.xlu0 %3648
    %v3651 = vadd.f32 %v3641, %v3649
    %v3652 = vtanh.pop %v3651
    %3654 = vrot.lane.b32.xlu0 %v3652, 64
    %v3655 = vpop.permute.xlu0 %3654
    %v3657 = vmul.f32 %v3639, %v3655
    %v3658 = vld [vmem:[%s447] sm:$0xff]
    %v3659 = vld [vmem:[%s447 + $0x8] sm:$0xff]
    %v3660 = vpack.c.bf16 %v3657, %v3657
    %v3662 = vsel %vm367, %v3660, 0
    %3664 = vmatprep.subr.bf16.mxu0 %v3570
    %3665 = vmatpush1.bf16.msra.mxu0 %v3569
    %3666 = vmatprep.subr.bf16.mxu0 %v3572
    %3667 = vmatpush1.bf16.msra.mxu0 %v3571
    %3668 = vmatprep.subr.bf16.mxu0 %v3574
    %3669 = vmatpush1.bf16.msra.mxu0 %v3573
    %3670 = vmatprep.subr.bf16.mxu0 %v3576
    %3671 = vmatpush1.bf16.msra.mxu0 %v3575
    %3672 = vmatprep.subr.bf16.mxu0 0
    %3673 = vmatpush1.bf16.msra.mxu0 0
    %3674 = vmatprep.subr.bf16.mxu0 0
    %3675 = vmatpush1.bf16.msra.mxu0 0
    %3676 = vmatprep.subr.bf16.mxu0 0
    %3677 = vmatpush1.bf16.msra.mxu0 0
    %3678 = vmatprep.subr.bf16.mxu0 0
    %3679 = vmatpush1.bf16.msra.mxu0 0
    %3680 = vmatprep.subr.bf16.mxu0 0
    %3681 = vmatpush1.bf16.msra.mxu0 0
    %3682 = vmatprep.subr.bf16.mxu0 0
    %3683 = vmatpush1.bf16.msra.mxu0 0
    %3684 = vmatprep.subr.bf16.mxu0 0
    %3685 = vmatpush1.bf16.msra.mxu0 0
    %3686 = vmatprep.subr.bf16.mxu0 0
    %3687 = vmatpush1.bf16.msra.mxu0 0
    %3688 = vmatprep.subr.bf16.mxu0 0
    %3689 = vmatpush1.bf16.msra.mxu0 0
    %3690 = vmatprep.subr.bf16.mxu0 0
    %3691 = vmatpush1.bf16.msra.mxu0 0
    %3692 = vmatprep.subr.bf16.mxu0 0
    %3693 = vmatpush1.bf16.msra.mxu0 0
    %3694 = vmatprep.subr.bf16.mxu0 0
    %3695 = vmatpush1.bf16.msra.mxu0 0
    %3696 = vmatprep.mubr.bf16.mxu0 0
    %3697 = vmatmul.mubr.bf16.gmra.mrb[0].mxu0 %v3662
    %v3698 = vpop.f32.mrb[0].mxu0
    %v3699 = vadd.f32 0.0, %v3698
    %v3700 = vpop.f32.mrb[0].mxu0
    %v3701 = vadd.f32 0.0, %v3700
    %v3702 = vpop.f32.mrb[0].mxu0
    %v3703 = vpop.f32.mrb[0].mxu0
    %3704 = vdwg.mxu0
    %v3705 = vadd.f32 %v3658, %v3699
    %v3706 = vadd.f32 %v3659, %v3701
    %v3707 = vxor.u32 %v3705, 2147483648
    %v3708 = vxor.u32 %v3706, 2147483648
    %v3709 = vmul.f32 %v3707, 1.442695
    %v3710 = vpow.pop %v3709
    %v3711 = vmul.f32 %v3708, 1.442695
    %v3712 = vpow.pop %v3711
    %v3713 = vadd.f32 %v3710, 1.0
    %v3714 = vadd.f32 %v3712, 1.0
    %v3715 = vrcp.pop %v3713
    %v3716 = vmul.f32 1.0, %v3715
    %v3717 = vrcp.pop %v3714
    %v3718 = vmul.f32 1.0, %v3717
    %v3719 = vtanh.pop %v3706
    %v3720 = vmul.f32 %v3716, %v3651
    %3722 = vrot.lane.b32.xlu0 %v3719, 64
    %v3723 = vpop.permute.xlu0 %3722
    %v3725 = vmul.f32 %v3716, %v3723
    %3727 = vrot.lane.b32.xlu0 %v3725, 64
    %v3728 = vpop.permute.xlu0 %3727
    %v3730 = vadd.f32 %v3720, %v3728
    %v3731 = vtanh.pop %v3730
    %3733 = vrot.lane.b32.xlu0 %v3731, 64
    %v3734 = vpop.permute.xlu0 %3733
    %v3736 = vmul.f32 %v3718, %v3734
    %v3737 = vld [vmem:[%s531] sm:$0xff]
    %v3738 = vld [vmem:[%s531 + $0x8] sm:$0xff]
    %v3739 = vpack.c.bf16 %v3736, %v3736
    %v3741 = vsel %vm367, %v3739, 0
    %3743 = vmatprep.subr.bf16.mxu0 %v3570
    %3744 = vmatpush1.bf16.msra.mxu0 %v3569
    %3745 = vmatprep.subr.bf16.mxu0 %v3572
    %3746 = vmatpush1.bf16.msra.mxu0 %v3571
    %3747 = vmatprep.subr.bf16.mxu0 %v3574
    %3748 = vmatpush1.bf16.msra.mxu0 %v3573
    %3749 = vmatprep.subr.bf16.mxu0 %v3576
    %3750 = vmatpush1.bf16.msra.mxu0 %v3575
    %3751 = vmatprep.subr.bf16.mxu0 0
    %3752 = vmatpush1.bf16.msra.mxu0 0
    %3753 = vmatprep.subr.bf16.mxu0 0
    %3754 = vmatpush1.bf16.msra.mxu0 0
    %3755 = vmatprep.subr.bf16.mxu0 0
    %3756 = vmatpush1.bf16.msra.mxu0 0
    %3757 = vmatprep.subr.bf16.mxu0 0
    %3758 = vmatpush1.bf16.msra.mxu0 0
    %3759 = vmatprep.subr.bf16.mxu0 0
    %3760 = vmatpush1.bf16.msra.mxu0 0
    %3761 = vmatprep.subr.bf16.mxu0 0
    %3762 = vmatpush1.bf16.msra.mxu0 0
    %3763 = vmatprep.subr.bf16.mxu0 0
    %3764 = vmatpush1.bf16.msra.mxu0 0
    %3765 = vmatprep.subr.bf16.mxu0 0
    %3766 = vmatpush1.bf16.msra.mxu0 0
    %3767 = vmatprep.subr.bf16.mxu0 0
    %3768 = vmatpush1.bf16.msra.mxu0 0
    %3769 = vmatprep.subr.bf16.mxu0 0
    %3770 = vmatpush1.bf16.msra.mxu0 0
    %3771 = vmatprep.subr.bf16.mxu0 0
    %3772 = vmatpush1.bf16.msra.mxu0 0
    %3773 = vmatprep.subr.bf16.mxu0 0
    %3774 = vmatpush1.bf16.msra.mxu0 0
    %3775 = vmatprep.mubr.bf16.mxu0 0
    %3776 = vmatmul.mubr.bf16.gmra.mrb[0].mxu0 %v3741
    %v3777 = vpop.f32.mrb[0].mxu0
    %v3778 = vadd.f32 0.0, %v3777
    %v3779 = vpop.f32.mrb[0].mxu0
    %v3780 = vadd.f32 0.0, %v3779
    %v3781 = vpop.f32.mrb[0].mxu0
    %v3782 = vpop.f32.mrb[0].mxu0
    %3783 = vdwg.mxu0
    %v3784 = vadd.f32 %v3737, %v3778
    %v3785 = vadd.f32 %v3738, %v3780
    %v3786 = vxor.u32 %v3784, 2147483648
    %v3787 = vxor.u32 %v3785, 2147483648
    %v3788 = vmul.f32 %v3786, 1.442695
    %v3789 = vpow.pop %v3788
    %v3790 = vmul.f32 %v3787, 1.442695
    %v3791 = vpow.pop %v3790
    %v3792 = vadd.f32 %v3789, 1.0
    %v3793 = vadd.f32 %v3791, 1.0
    %v3794 = vrcp.pop %v3792
    %v3795 = vmul.f32 1.0, %v3794
    %v3796 = vrcp.pop %v3793
    %v3797 = vmul.f32 1.0, %v3796
    %v3798 = vtanh.pop %v3785
    %v3799 = vmul.f32 %v3795, %v3730
    %3801 = vrot.lane.b32.xlu0 %v3798, 64
    %v3802 = vpop.permute.xlu0 %3801
    %v3804 = vmul.f32 %v3795, %v3802
    %3806 = vrot.lane.b32.xlu0 %v3804, 64
    %v3807 = vpop.permute.xlu0 %3806
    %v3809 = vadd.f32 %v3799, %v3807
    %v3810 = vtanh.pop %v3809
    %3812 = vrot.lane.b32.xlu0 %v3810, 64
    %v3813 = vpop.permute.xlu0 %3812
    %v3815 = vmul.f32 %v3797, %v3813
    %v3816 = vld [vmem:[%s615] sm:$0xff]
    %v3817 = vld [vmem:[%s615 + $0x8] sm:$0xff]
    %v3818 = vpack.c.bf16 %v3815, %v3815
    %v3820 = vsel %vm367, %v3818, 0
    %3822 = vmatprep.subr.bf16.mxu0 %v3570
    %3823 = vmatpush1.bf16.msra.mxu0 %v3569
    %3824 = vmatprep.subr.bf16.mxu0 %v3572
    %3825 = vmatpush1.bf16.msra.mxu0 %v3571
    %3826 = vmatprep.subr.bf16.mxu0 %v3574
    %3827 = vmatpush1.bf16.msra.mxu0 %v3573
    %3828 = vmatprep.subr.bf16.mxu0 %v3576
    %3829 = vmatpush1.bf16.msra.mxu0 %v3575
    %3830 = vmatprep.subr.bf16.mxu0 0
    %3831 = vmatpush1.bf16.msra.mxu0 0
    %3832 = vmatprep.subr.bf16.mxu0 0
    %3833 = vmatpush1.bf16.msra.mxu0 0
    %3834 = vmatprep.subr.bf16.mxu0 0
    %3835 = vmatpush1.bf16.msra.mxu0 0
    %3836 = vmatprep.subr.bf16.mxu0 0
    %3837 = vmatpush1.bf16.msra.mxu0 0
    %3838 = vmatprep.subr.bf16.mxu0 0
    %3839 = vmatpush1.bf16.msra.mxu0 0
    %3840 = vmatprep.subr.bf16.mxu0 0
    %3841 = vmatpush1.bf16.msra.mxu0 0
    %3842 = vmatprep.subr.bf16.mxu0 0
    %3843 = vmatpush1.bf16.msra.mxu0 0
    %3844 = vmatprep.subr.bf16.mxu0 0
    %3845 = vmatpush1.bf16.msra.mxu0 0
    %3846 = vmatprep.subr.bf16.mxu0 0
    %3847 = vmatpush1.bf16.msra.mxu0 0
    %3848 = vmatprep.subr.bf16.mxu0 0
    %3849 = vmatpush1.bf16.msra.mxu0 0
    %3850 = vmatprep.subr.bf16.mxu0 0
    %3851 = vmatpush1.bf16.msra.mxu0 0
    %3852 = vmatprep.subr.bf16.mxu0 0
    %3853 = vmatpush1.bf16.msra.mxu0 0
    %3854 = vmatprep.mubr.bf16.mxu0 0
    %3855 = vmatmul.mubr.bf16.gmra.mrb[0].mxu0 %v3820
    %v3856 = vpop.f32.mrb[0].mxu0
    %v3857 = vadd.f32 0.0, %v3856
    %v3858 = vpop.f32.mrb[0].mxu0
    %v3859 = vadd.f32 0.0, %v3858
    %v3860 = vpop.f32.mrb[0].mxu0
    %v3861 = vpop.f32.mrb[0].mxu0
    %3862 = vdwg.mxu0
    %v3863 = vadd.f32 %v3816, %v3857
    %v3864 = vadd.f32 %v3817, %v3859
    %v3865 = vxor.u32 %v3863, 2147483648
    %v3866 = vxor.u32 %v3864, 2147483648
    %v3867 = vmul.f32 %v3865, 1.442695
    %v3868 = vpow.pop %v3867
    %v3869 = vmul.f32 %v3866, 1.442695
    %v3870 = vpow.pop %v3869
    %v3871 = vadd.f32 %v3868, 1.0
    %v3872 = vadd.f32 %v3870, 1.0
    %v3873 = vrcp.pop %v3871
    %v3874 = vmul.f32 1.0, %v3873
    %v3875 = vrcp.pop %v3872
    %v3876 = vmul.f32 1.0, %v3875
    %v3877 = vtanh.pop %v3864
    %v3878 = vmul.f32 %v3874, %v3809
    %3880 = vrot.lane.b32.xlu0 %v3877, 64
    %v3881 = vpop.permute.xlu0 %3880
    %v3883 = vmul.f32 %v3874, %v3881
    %3885 = vrot.lane.b32.xlu0 %v3883, 64
    %v3886 = vpop.permute.xlu0 %3885
    %v3888 = vadd.f32 %v3878, %v3886
    %v3889 = vtanh.pop %v3888
    %3891 = vrot.lane.b32.xlu0 %v3889, 64
    %v3892 = vpop.permute.xlu0 %3891
    %v3894 = vmul.f32 %v3876, %v3892
    %v3895 = vld [vmem:[%s699] sm:$0xff]
    %v3896 = vld [vmem:[%s699 + $0x8] sm:$0xff]
    %v3897 = vpack.c.bf16 %v3894, %v3894
    %v3899 = vsel %vm367, %v3897, 0
    %3901 = vmatprep.subr.bf16.mxu0 %v3570
    %3902 = vmatpush1.bf16.msra.mxu0 %v3569
    %3903 = vmatprep.subr.bf16.mxu0 %v3572
    %3904 = vmatpush1.bf16.msra.mxu0 %v3571
    %3905 = vmatprep.subr.bf16.mxu0 %v3574
    %3906 = vmatpush1.bf16.msra.mxu0 %v3573
    %3907 = vmatprep.subr.bf16.mxu0 %v3576
    %3908 = vmatpush1.bf16.msra.mxu0 %v3575
    %3909 = vmatprep.subr.bf16.mxu0 0
    %3910 = vmatpush1.bf16.msra.mxu0 0
    %3911 = vmatprep.subr.bf16.mxu0 0
    %3912 = vmatpush1.bf16.msra.mxu0 0
    %3913 = vmatprep.subr.bf16.mxu0 0
    %3914 = vmatpush1.bf16.msra.mxu0 0
    %3915 = vmatprep.subr.bf16.mxu0 0
    %3916 = vmatpush1.bf16.msra.mxu0 0
    %3917 = vmatprep.subr.bf16.mxu0 0
    %3918 = vmatpush1.bf16.msra.mxu0 0
    %3919 = vmatprep.subr.bf16.mxu0 0
    %3920 = vmatpush1.bf16.msra.mxu0 0
    %3921 = vmatprep.subr.bf16.mxu0 0
    %3922 = vmatpush1.bf16.msra.mxu0 0
    %3923 = vmatprep.subr.bf16.mxu0 0
    %3924 = vmatpush1.bf16.msra.mxu0 0
    %3925 = vmatprep.subr.bf16.mxu0 0
    %3926 = vmatpush1.bf16.msra.mxu0 0
    %3927 = vmatprep.subr.bf16.mxu0 0
    %3928 = vmatpush1.bf16.msra.mxu0 0
    %3929 = vmatprep.subr.bf16.mxu0 0
    %3930 = vmatpush1.bf16.msra.mxu0 0
    %3931 = vmatprep.subr.bf16.mxu0 0
    %3932 = vmatpush1.bf16.msra.mxu0 0
    %3933 = vmatprep.mubr.bf16.mxu0 0
    %3934 = vmatmul.mubr.bf16.gmra.mrb[0].mxu0 %v3899
    %v3935 = vpop.f32.mrb[0].mxu0
    %v3936 = vadd.f32 0.0, %v3935
    %v3937 = vpop.f32.mrb[0].mxu0
    %v3938 = vadd.f32 0.0, %v3937
    %v3939 = vpop.f32.mrb[0].mxu0
    %v3940 = vpop.f32.mrb[0].mxu0
    %3941 = vdwg.mxu0
    %v3942 = vadd.f32 %v3895, %v3936
    %v3943 = vadd.f32 %v3896, %v3938
    %v3944 = vxor.u32 %v3942, 2147483648
    %v3945 = vxor.u32 %v3943, 2147483648
    %v3946 = vmul.f32 %v3944, 1.442695
    %v3947 = vpow.pop %v3946
    %v3948 = vmul.f32 %v3945, 1.442695
    %v3949 = vpow.pop %v3948
    %v3950 = vadd.f32 %v3947, 1.0
    %v3951 = vadd.f32 %v3949, 1.0
    %v3952 = vrcp.pop %v3950
    %v3953 = vmul.f32 1.0, %v3952
    %v3954 = vrcp.pop %v3951
    %v3955 = vmul.f32 1.0, %v3954
    %v3956 = vtanh.pop %v3943
    %v3957 = vmul.f32 %v3953, %v3888
    %3959 = vrot.lane.b32.xlu0 %v3956, 64
    %v3960 = vpop.permute.xlu0 %3959
    %v3962 = vmul.f32 %v3953, %v3960
    %3964 = vrot.lane.b32.xlu0 %v3962, 64
    %v3965 = vpop.permute.xlu0 %3964
    %v3967 = vadd.f32 %v3957, %v3965
    %v3968 = vtanh.pop %v3967
    %3970 = vrot.lane.b32.xlu0 %v3968, 64
    %v3971 = vpop.permute.xlu0 %3970
    %v3973 = vmul.f32 %v3955, %v3971
    %v3974 = vld [vmem:[%s783] sm:$0xff]
    %v3975 = vld [vmem:[%s783 + $0x8] sm:$0xff]
    %v3976 = vpack.c.bf16 %v3973, %v3973
    %v3978 = vsel %vm367, %v3976, 0
    %3980 = vmatprep.subr.bf16.mxu0 %v3570
    %3981 = vmatpush1.bf16.msra.mxu0 %v3569
    %3982 = vmatprep.subr.bf16.mxu0 %v3572
    %3983 = vmatpush1.bf16.msra.mxu0 %v3571
    %3984 = vmatprep.subr.bf16.mxu0 %v3574
    %3985 = vmatpush1.bf16.msra.mxu0 %v3573
    %3986 = vmatprep.subr.bf16.mxu0 %v3576
    %3987 = vmatpush1.bf16.msra.mxu0 %v3575
    %3988 = vmatprep.subr.bf16.mxu0 0
    %3989 = vmatpush1.bf16.msra.mxu0 0
    %3990 = vmatprep.subr.bf16.mxu0 0
    %3991 = vmatpush1.bf16.msra.mxu0 0
    %3992 = vmatprep.subr.bf16.mxu0 0
    %3993 = vmatpush1.bf16.msra.mxu0 0
    %3994 = vmatprep.subr.bf16.mxu0 0
    %3995 = vmatpush1.bf16.msra.mxu0 0
    %3996 = vmatprep.subr.bf16.mxu0 0
    %3997 = vmatpush1.bf16.msra.mxu0 0
    %3998 = vmatprep.subr.bf16.mxu0 0
    %3999 = vmatpush1.bf16.msra.mxu0 0
    %4000 = vmatprep.subr.bf16.mxu0 0
    %4001 = vmatpush1.bf16.msra.mxu0 0
    %4002 = vmatprep.subr.bf16.mxu0 0
    %4003 = vmatpush1.bf16.msra.mxu0 0
    %4004 = vmatprep.subr.bf16.mxu0 0
    %4005 = vmatpush1.bf16.msra.mxu0 0
    %4006 = vmatprep.subr.bf16.mxu0 0
    %4007 = vmatpush1.bf16.msra.mxu0 0
    %4008 = vmatprep.subr.bf16.mxu0 0
    %4009 = vmatpush1.bf16.msra.mxu0 0
    %4010 = vmatprep.subr.bf16.mxu0 0
    %4011 = vmatpush1.bf16.msra.mxu0 0
    %4012 = vmatprep.mubr.bf16.mxu0 0
    %4013 = vmatmul.mubr.bf16.gmra.mrb[0].mxu0 %v3978
    %v4014 = vpop.f32.mrb[0].mxu0
    %v4015 = vadd.f32 0.0, %v4014
    %v4016 = vpop.f32.mrb[0].mxu0
    %v4017 = vadd.f32 0.0, %v4016
    %v4018 = vpop.f32.mrb[0].mxu0
    %v4019 = vpop.f32.mrb[0].mxu0
    %4020 = vdwg.mxu0
    %v4021 = vadd.f32 %v3974, %v4015
    %v4022 = vadd.f32 %v3975, %v4017
    %v4023 = vxor.u32 %v4021, 2147483648
    %v4024 = vxor.u32 %v4022, 2147483648
    %v4025 = vmul.f32 %v4023, 1.442695
    %v4026 = vpow.pop %v4025
    %v4027 = vmul.f32 %v4024, 1.442695
    %v4028 = vpow.pop %v4027
    %v4029 = vadd.f32 %v4026, 1.0
    %v4030 = vadd.f32 %v4028, 1.0
    %v4031 = vrcp.pop %v4029
    %v4032 = vmul.f32 1.0, %v4031
    %v4033 = vrcp.pop %v4030
    %v4034 = vmul.f32 1.0, %v4033
    %v4035 = vtanh.pop %v4022
    %v4036 = vmul.f32 %v4032, %v3967
    %4038 = vrot.lane.b32.xlu0 %v4035, 64
    %v4039 = vpop.permute.xlu0 %4038
    %v4041 = vmul.f32 %v4032, %v4039
    %4043 = vrot.lane.b32.xlu0 %v4041, 64
    %v4044 = vpop.permute.xlu0 %4043
    %v4046 = vadd.f32 %v4036, %v4044
    %v4047 = vtanh.pop %v4046
    %4049 = vrot.lane.b32.xlu0 %v4047, 64
    %v4050 = vpop.permute.xlu0 %4049
    %v4052 = vmul.f32 %v4034, %v4050
    %v4053 = vld [vmem:[%s867] sm:$0xff]
    %v4054 = vld [vmem:[%s867 + $0x8] sm:$0xff]
    %v4055 = vpack.c.bf16 %v4052, %v4052
    %v4057 = vsel %vm367, %v4055, 0
    %4059 = vmatprep.subr.bf16.mxu0 %v3570
    %4060 = vmatpush1.bf16.msra.mxu0 %v3569
    %4061 = vmatprep.subr.bf16.mxu0 %v3572
    %4062 = vmatpush1.bf16.msra.mxu0 %v3571
    %4063 = vmatprep.subr.bf16.mxu0 %v3574
    %4064 = vmatpush1.bf16.msra.mxu0 %v3573
    %4065 = vmatprep.subr.bf16.mxu0 %v3576
    %4066 = vmatpush1.bf16.msra.mxu0 %v3575
    %4067 = vmatprep.subr.bf16.mxu0 0
    %4068 = vmatpush1.bf16.msra.mxu0 0
    %4069 = vmatprep.subr.bf16.mxu0 0
    %4070 = vmatpush1.bf16.msra.mxu0 0
    %4071 = vmatprep.subr.bf16.mxu0 0
    %4072 = vmatpush1.bf16.msra.mxu0 0
    %4073 = vmatprep.subr.bf16.mxu0 0
    %4074 = vmatpush1.bf16.msra.mxu0 0
    %4075 = vmatprep.subr.bf16.mxu0 0
    %4076 = vmatpush1.bf16.msra.mxu0 0
    %4077 = vmatprep.subr.bf16.mxu0 0
    %4078 = vmatpush1.bf16.msra.mxu0 0
    %4079 = vmatprep.subr.bf16.mxu0 0
    %4080 = vmatpush1.bf16.msra.mxu0 0
    %4081 = vmatprep.subr.bf16.mxu0 0
    %4082 = vmatpush1.bf16.msra.mxu0 0
    %4083 = vmatprep.subr.bf16.mxu0 0
    %4084 = vmatpush1.bf16.msra.mxu0 0
    %4085 = vmatprep.subr.bf16.mxu0 0
    %4086 = vmatpush1.bf16.msra.mxu0 0
    %4087 = vmatprep.subr.bf16.mxu0 0
    %4088 = vmatpush1.bf16.msra.mxu0 0
    %4089 = vmatprep.subr.bf16.mxu0 0
    %4090 = vmatpush1.bf16.msra.mxu0 0
    %4091 = vmatprep.mubr.bf16.mxu0 0
    %4092 = vmatmul.mubr.bf16.gmra.mrb[0].mxu0 %v4057
    %v4093 = vpop.f32.mrb[0].mxu0
    %v4094 = vadd.f32 0.0, %v4093
    %v4095 = vpop.f32.mrb[0].mxu0
    %v4096 = vadd.f32 0.0, %v4095
    %v4097 = vpop.f32.mrb[0].mxu0
    %v4098 = vpop.f32.mrb[0].mxu0
    %4099 = vdwg.mxu0
    %v4100 = vadd.f32 %v4053, %v4094
    %v4101 = vadd.f32 %v4054, %v4096
    %v4102 = vxor.u32 %v4100, 2147483648
    %v4103 = vxor.u32 %v4101, 2147483648
    %v4104 = vmul.f32 %v4102, 1.442695
    %v4105 = vpow.pop %v4104
    %v4106 = vmul.f32 %v4103, 1.442695
    %v4107 = vpow.pop %v4106
    %v4108 = vadd.f32 %v4105, 1.0
    %v4109 = vadd.f32 %v4107, 1.0
    %v4110 = vrcp.pop %v4108
    %v4111 = vmul.f32 1.0, %v4110
    %v4112 = vrcp.pop %v4109
    %v4113 = vmul.f32 1.0, %v4112
    %v4114 = vtanh.pop %v4101
    %v4115 = vmul.f32 %v4111, %v4046
    %4117 = vrot.lane.b32.xlu0 %v4114, 64
    %v4118 = vpop.permute.xlu0 %4117
    %v4120 = vmul.f32 %v4111, %v4118
    %4122 = vrot.lane.b32.xlu0 %v4120, 64
    %v4123 = vpop.permute.xlu0 %4122
    %v4125 = vadd.f32 %v4115, %v4123
    %v4126 = vtanh.pop %v4125
    %4128 = vrot.lane.b32.xlu0 %v4126, 64
    %v4129 = vpop.permute.xlu0 %4128
    %v4131 = vmul.f32 %v4113, %v4129
    %v4132 = vld [vmem:[%s951] sm:$0xff]
    %v4133 = vld [vmem:[%s951 + $0x8] sm:$0xff]
    %v4134 = vpack.c.bf16 %v4131, %v4131
    %v4136 = vsel %vm367, %v4134, 0
    %4138 = vmatprep.subr.bf16.mxu0 %v3570
    %4139 = vmatpush1.bf16.msra.mxu0 %v3569
    %4140 = vmatprep.subr.bf16.mxu0 %v3572
    %4141 = vmatpush1.bf16.msra.mxu0 %v3571
    %4142 = vmatprep.subr.bf16.mxu0 %v3574
    %4143 = vmatpush1.bf16.msra.mxu0 %v3573
    %4144 = vmatprep.subr.bf16.mxu0 %v3576
    %4145 = vmatpush1.bf16.msra.mxu0 %v3575
    %4146 = vmatprep.subr.bf16.mxu0 0
    %4147 = vmatpush1.bf16.msra.mxu0 0
    %4148 = vmatprep.subr.bf16.mxu0 0
    %4149 = vmatpush1.bf16.msra.mxu0 0
    %4150 = vmatprep.subr.bf16.mxu0 0
    %4151 = vmatpush1.bf16.msra.mxu0 0
    %4152 = vmatprep.subr.bf16.mxu0 0
    %4153 = vmatpush1.bf16.msra.mxu0 0
    %4154 = vmatprep.subr.bf16.mxu0 0
    %4155 = vmatpush1.bf16.msra.mxu0 0
    %4156 = vmatprep.subr.bf16.mxu0 0
    %4157 = vmatpush1.bf16.msra.mxu0 0
    %4158 = vmatprep.subr.bf16.mxu0 0
    %4159 = vmatpush1.bf16.msra.mxu0 0
    %4160 = vmatprep.subr.bf16.mxu0 0
    %4161 = vmatpush1.bf16.msra.mxu0 0
    %4162 = vmatprep.subr.bf16.mxu0 0
    %4163 = vmatpush1.bf16.msra.mxu0 0
    %4164 = vmatprep.subr.bf16.mxu0 0
    %4165 = vmatpush1.bf16.msra.mxu0 0
    %4166 = vmatprep.subr.bf16.mxu0 0
    %4167 = vmatpush1.bf16.msra.mxu0 0
    %4168 = vmatprep.subr.bf16.mxu0 0
    %4169 = vmatpush1.bf16.msra.mxu0 0
    %4170 = vmatprep.mubr.bf16.mxu0 0
    %4171 = vmatmul.mubr.bf16.gmra.mrb[0].mxu0 %v4136
    %v4172 = vpop.f32.mrb[0].mxu0
    %v4173 = vadd.f32 0.0, %v4172
    %v4174 = vpop.f32.mrb[0].mxu0
    %v4175 = vadd.f32 0.0, %v4174
    %v4176 = vpop.f32.mrb[0].mxu0
    %v4177 = vpop.f32.mrb[0].mxu0
    %4178 = vdwg.mxu0
    %v4179 = vadd.f32 %v4132, %v4173
    %v4180 = vadd.f32 %v4133, %v4175
    %v4181 = vxor.u32 %v4179, 2147483648
    %v4182 = vxor.u32 %v4180, 2147483648
    %v4183 = vmul.f32 %v4181, 1.442695
    %v4184 = vpow.pop %v4183
    %v4185 = vmul.f32 %v4182, 1.442695
    %v4186 = vpow.pop %v4185
    %v4187 = vadd.f32 %v4184, 1.0
    %v4188 = vadd.f32 %v4186, 1.0
    %v4189 = vrcp.pop %v4187
    %v4190 = vmul.f32 1.0, %v4189
    %v4191 = vrcp.pop %v4188
    %v4192 = vmul.f32 1.0, %v4191
    %v4193 = vtanh.pop %v4180
    %v4194 = vmul.f32 %v4190, %v4125
    %4196 = vrot.lane.b32.xlu0 %v4193, 64
    %v4197 = vpop.permute.xlu0 %4196
    %v4199 = vmul.f32 %v4190, %v4197
    %4201 = vrot.lane.b32.xlu0 %v4199, 64
    %v4202 = vpop.permute.xlu0 %4201
    %v4204 = vadd.f32 %v4194, %v4202
    %v4205 = vtanh.pop %v4204
    %4207 = vrot.lane.b32.xlu0 %v4205, 64
    %v4208 = vpop.permute.xlu0 %4207
    %v4210 = vmul.f32 %v4192, %v4208
    %v4211 = vld [vmem:[%s1035] sm:$0xff]
    %v4212 = vld [vmem:[%s1035 + $0x8] sm:$0xff]
    %v4213 = vpack.c.bf16 %v4210, %v4210
    %v4215 = vsel %vm367, %v4213, 0
    %4217 = vmatprep.subr.bf16.mxu0 %v3570
    %4218 = vmatpush1.bf16.msra.mxu0 %v3569
    %4219 = vmatprep.subr.bf16.mxu0 %v3572
    %4220 = vmatpush1.bf16.msra.mxu0 %v3571
    %4221 = vmatprep.subr.bf16.mxu0 %v3574
    %4222 = vmatpush1.bf16.msra.mxu0 %v3573
    %4223 = vmatprep.subr.bf16.mxu0 %v3576
    %4224 = vmatpush1.bf16.msra.mxu0 %v3575
    %4225 = vmatprep.subr.bf16.mxu0 0
    %4226 = vmatpush1.bf16.msra.mxu0 0
    %4227 = vmatprep.subr.bf16.mxu0 0
    %4228 = vmatpush1.bf16.msra.mxu0 0
    %4229 = vmatprep.subr.bf16.mxu0 0
    %4230 = vmatpush1.bf16.msra.mxu0 0
    %4231 = vmatprep.subr.bf16.mxu0 0
    %4232 = vmatpush1.bf16.msra.mxu0 0
    %4233 = vmatprep.subr.bf16.mxu0 0
    %4234 = vmatpush1.bf16.msra.mxu0 0
    %4235 = vmatprep.subr.bf16.mxu0 0
    %4236 = vmatpush1.bf16.msra.mxu0 0
    %4237 = vmatprep.subr.bf16.mxu0 0
    %4238 = vmatpush1.bf16.msra.mxu0 0
    %4239 = vmatprep.subr.bf16.mxu0 0
    %4240 = vmatpush1.bf16.msra.mxu0 0
    %4241 = vmatprep.subr.bf16.mxu0 0
    %4242 = vmatpush1.bf16.msra.mxu0 0
    %4243 = vmatprep.subr.bf16.mxu0 0
    %4244 = vmatpush1.bf16.msra.mxu0 0
    %4245 = vmatprep.subr.bf16.mxu0 0
    %4246 = vmatpush1.bf16.msra.mxu0 0
    %4247 = vmatprep.subr.bf16.mxu0 0
    %4248 = vmatpush1.bf16.msra.mxu0 0
    %4249 = vmatprep.mubr.bf16.mxu0 0
    %4250 = vmatmul.mubr.bf16.gmra.mrb[0].mxu0 %v4215
    %v4251 = vpop.f32.mrb[0].mxu0
    %v4252 = vadd.f32 0.0, %v4251
    %v4253 = vpop.f32.mrb[0].mxu0
    %v4254 = vadd.f32 0.0, %v4253
    %v4255 = vpop.f32.mrb[0].mxu0
    %v4256 = vpop.f32.mrb[0].mxu0
    %4257 = vdwg.mxu0
    %v4258 = vadd.f32 %v4211, %v4252
    %v4259 = vadd.f32 %v4212, %v4254
    %v4260 = vxor.u32 %v4258, 2147483648
    %v4261 = vxor.u32 %v4259, 2147483648
    %v4262 = vmul.f32 %v4260, 1.442695
    %v4263 = vpow.pop %v4262
    %v4264 = vmul.f32 %v4261, 1.442695
    %v4265 = vpow.pop %v4264
    %v4266 = vadd.f32 %v4263, 1.0
    %v4267 = vadd.f32 %v4265, 1.0
    %v4268 = vrcp.pop %v4266
    %v4269 = vmul.f32 1.0, %v4268
    %v4270 = vrcp.pop %v4267
    %v4271 = vmul.f32 1.0, %v4270
    %v4272 = vtanh.pop %v4259
    %v4273 = vmul.f32 %v4269, %v4204
    %4275 = vrot.lane.b32.xlu0 %v4272, 64
    %v4276 = vpop.permute.xlu0 %4275
    %v4278 = vmul.f32 %v4269, %v4276
    %4280 = vrot.lane.b32.xlu0 %v4278, 64
    %v4281 = vpop.permute.xlu0 %4280
    %v4283 = vadd.f32 %v4273, %v4281
    %v4284 = vtanh.pop %v4283
    %4286 = vrot.lane.b32.xlu0 %v4284, 64
    %v4287 = vpop.permute.xlu0 %4286
    %v4289 = vmul.f32 %v4271, %v4287
    %v4290 = vld [vmem:[%s1119] sm:$0xff]
    %v4291 = vld [vmem:[%s1119 + $0x8] sm:$0xff]
    %v4292 = vpack.c.bf16 %v4289, %v4289
    %v4294 = vsel %vm367, %v4292, 0
    %4296 = vmatprep.subr.bf16.mxu0 %v3570
    %4297 = vmatpush1.bf16.msra.mxu0 %v3569
    %4298 = vmatprep.subr.bf16.mxu0 %v3572
    %4299 = vmatpush1.bf16.msra.mxu0 %v3571
    %4300 = vmatprep.subr.bf16.mxu0 %v3574
    %4301 = vmatpush1.bf16.msra.mxu0 %v3573
    %4302 = vmatprep.subr.bf16.mxu0 %v3576
    %4303 = vmatpush1.bf16.msra.mxu0 %v3575
    %4304 = vmatprep.subr.bf16.mxu0 0
    %4305 = vmatpush1.bf16.msra.mxu0 0
    %4306 = vmatprep.subr.bf16.mxu0 0
    %4307 = vmatpush1.bf16.msra.mxu0 0
    %4308 = vmatprep.subr.bf16.mxu0 0
    %4309 = vmatpush1.bf16.msra.mxu0 0
    %4310 = vmatprep.subr.bf16.mxu0 0
    %4311 = vmatpush1.bf16.msra.mxu0 0
    %4312 = vmatprep.subr.bf16.mxu0 0
    %4313 = vmatpush1.bf16.msra.mxu0 0
    %4314 = vmatprep.subr.bf16.mxu0 0
    %4315 = vmatpush1.bf16.msra.mxu0 0
    %4316 = vmatprep.subr.bf16.mxu0 0
    %4317 = vmatpush1.bf16.msra.mxu0 0
    %4318 = vmatprep.subr.bf16.mxu0 0
    %4319 = vmatpush1.bf16.msra.mxu0 0
    %4320 = vmatprep.subr.bf16.mxu0 0
    %4321 = vmatpush1.bf16.msra.mxu0 0
    %4322 = vmatprep.subr.bf16.mxu0 0
    %4323 = vmatpush1.bf16.msra.mxu0 0
    %4324 = vmatprep.subr.bf16.mxu0 0
    %4325 = vmatpush1.bf16.msra.mxu0 0
    %4326 = vmatprep.subr.bf16.mxu0 0
    %4327 = vmatpush1.bf16.msra.mxu0 0
    %4328 = vmatprep.mubr.bf16.mxu0 0
    %4329 = vmatmul.mubr.bf16.gmra.mrb[0].mxu0 %v4294
    %v4330 = vpop.f32.mrb[0].mxu0
    %v4331 = vadd.f32 0.0, %v4330
    %v4332 = vpop.f32.mrb[0].mxu0
    %v4333 = vadd.f32 0.0, %v4332
    %v4334 = vpop.f32.mrb[0].mxu0
    %v4335 = vpop.f32.mrb[0].mxu0
    %4336 = vdwg.mxu0
    %v4337 = vadd.f32 %v4290, %v4331
    %v4338 = vadd.f32 %v4291, %v4333
    %v4339 = vxor.u32 %v4337, 2147483648
    %v4340 = vxor.u32 %v4338, 2147483648
    %v4341 = vmul.f32 %v4339, 1.442695
    %v4342 = vpow.pop %v4341
    %v4343 = vmul.f32 %v4340, 1.442695
    %v4344 = vpow.pop %v4343
    %v4345 = vadd.f32 %v4342, 1.0
    %v4346 = vadd.f32 %v4344, 1.0
    %v4347 = vrcp.pop %v4345
    %v4348 = vmul.f32 1.0, %v4347
    %v4349 = vrcp.pop %v4346
    %v4350 = vmul.f32 1.0, %v4349
    %v4351 = vtanh.pop %v4338
    %v4352 = vmul.f32 %v4348, %v4283
    %4354 = vrot.lane.b32.xlu0 %v4351, 64
    %v4355 = vpop.permute.xlu0 %4354
    %v4357 = vmul.f32 %v4348, %v4355
    %4359 = vrot.lane.b32.xlu0 %v4357, 64
    %v4360 = vpop.permute.xlu0 %4359
    %v4362 = vadd.f32 %v4352, %v4360
    %v4363 = vtanh.pop %v4362
    %4365 = vrot.lane.b32.xlu0 %v4363, 64
    %v4366 = vpop.permute.xlu0 %4365
    %v4368 = vmul.f32 %v4350, %v4366
    %v4369 = vld [vmem:[%s1203] sm:$0xff]
    %v4370 = vld [vmem:[%s1203 + $0x8] sm:$0xff]
    %v4371 = vpack.c.bf16 %v4368, %v4368
    %v4373 = vsel %vm367, %v4371, 0
    %4375 = vmatprep.subr.bf16.mxu0 %v3570
    %4376 = vmatpush1.bf16.msra.mxu0 %v3569
    %4377 = vmatprep.subr.bf16.mxu0 %v3572
    %4378 = vmatpush1.bf16.msra.mxu0 %v3571
    %4379 = vmatprep.subr.bf16.mxu0 %v3574
    %4380 = vmatpush1.bf16.msra.mxu0 %v3573
    %4381 = vmatprep.subr.bf16.mxu0 %v3576
    %4382 = vmatpush1.bf16.msra.mxu0 %v3575
    %4383 = vmatprep.subr.bf16.mxu0 0
    %4384 = vmatpush1.bf16.msra.mxu0 0
    %4385 = vmatprep.subr.bf16.mxu0 0
    %4386 = vmatpush1.bf16.msra.mxu0 0
    %4387 = vmatprep.subr.bf16.mxu0 0
    %4388 = vmatpush1.bf16.msra.mxu0 0
    %4389 = vmatprep.subr.bf16.mxu0 0
    %4390 = vmatpush1.bf16.msra.mxu0 0
    %4391 = vmatprep.subr.bf16.mxu0 0
    %4392 = vmatpush1.bf16.msra.mxu0 0
    %4393 = vmatprep.subr.bf16.mxu0 0
    %4394 = vmatpush1.bf16.msra.mxu0 0
    %4395 = vmatprep.subr.bf16.mxu0 0
    %4396 = vmatpush1.bf16.msra.mxu0 0
    %4397 = vmatprep.subr.bf16.mxu0 0
    %4398 = vmatpush1.bf16.msra.mxu0 0
    %4399 = vmatprep.subr.bf16.mxu0 0
    %4400 = vmatpush1.bf16.msra.mxu0 0
    %4401 = vmatprep.subr.bf16.mxu0 0
    %4402 = vmatpush1.bf16.msra.mxu0 0
    %4403 = vmatprep.subr.bf16.mxu0 0
    %4404 = vmatpush1.bf16.msra.mxu0 0
    %4405 = vmatprep.subr.bf16.mxu0 0
    %4406 = vmatpush1.bf16.msra.mxu0 0
    %4407 = vmatprep.mubr.bf16.mxu0 0
    %4408 = vmatmul.mubr.bf16.gmra.mrb[0].mxu0 %v4373
    %v4409 = vpop.f32.mrb[0].mxu0
    %v4410 = vadd.f32 0.0, %v4409
    %v4411 = vpop.f32.mrb[0].mxu0
    %v4412 = vadd.f32 0.0, %v4411
    %v4413 = vpop.f32.mrb[0].mxu0
    %v4414 = vpop.f32.mrb[0].mxu0
    %4415 = vdwg.mxu0
    %v4416 = vadd.f32 %v4369, %v4410
    %v4417 = vadd.f32 %v4370, %v4412
    %v4418 = vxor.u32 %v4416, 2147483648
    %v4419 = vxor.u32 %v4417, 2147483648
    %v4420 = vmul.f32 %v4418, 1.442695
    %v4421 = vpow.pop %v4420
    %v4422 = vmul.f32 %v4419, 1.442695
    %v4423 = vpow.pop %v4422
    %v4424 = vadd.f32 %v4421, 1.0
    %v4425 = vadd.f32 %v4423, 1.0
    %v4426 = vrcp.pop %v4424
    %v4427 = vmul.f32 1.0, %v4426
    %v4428 = vrcp.pop %v4425
    %v4429 = vmul.f32 1.0, %v4428
    %v4430 = vtanh.pop %v4417
    %v4431 = vmul.f32 %v4427, %v4362
    %4433 = vrot.lane.b32.xlu0 %v4430, 64
    %v4434 = vpop.permute.xlu0 %4433
    %v4436 = vmul.f32 %v4427, %v4434
    %4438 = vrot.lane.b32.xlu0 %v4436, 64
    %v4439 = vpop.permute.xlu0 %4438
    %v4441 = vadd.f32 %v4431, %v4439
    %v4442 = vtanh.pop %v4441
    %4444 = vrot.lane.b32.xlu0 %v4442, 64
    %v4445 = vpop.permute.xlu0 %4444
    %v4447 = vmul.f32 %v4429, %v4445
    %v4448 = vld [vmem:[%s1287] sm:$0xff]
    %v4449 = vld [vmem:[%s1287 + $0x8] sm:$0xff]
    %v4450 = vpack.c.bf16 %v4447, %v4447
    %v4452 = vsel %vm367, %v4450, 0
    %4454 = vmatprep.subr.bf16.mxu0 %v3570
    %4455 = vmatpush1.bf16.msra.mxu0 %v3569
    %4456 = vmatprep.subr.bf16.mxu0 %v3572
    %4457 = vmatpush1.bf16.msra.mxu0 %v3571
    %4458 = vmatprep.subr.bf16.mxu0 %v3574
    %4459 = vmatpush1.bf16.msra.mxu0 %v3573
    %4460 = vmatprep.subr.bf16.mxu0 %v3576
    %4461 = vmatpush1.bf16.msra.mxu0 %v3575
    %4462 = vmatprep.subr.bf16.mxu0 0
    %4463 = vmatpush1.bf16.msra.mxu0 0
    %4464 = vmatprep.subr.bf16.mxu0 0
    %4465 = vmatpush1.bf16.msra.mxu0 0
    %4466 = vmatprep.subr.bf16.mxu0 0
    %4467 = vmatpush1.bf16.msra.mxu0 0
    %4468 = vmatprep.subr.bf16.mxu0 0
    %4469 = vmatpush1.bf16.msra.mxu0 0
    %4470 = vmatprep.subr.bf16.mxu0 0
    %4471 = vmatpush1.bf16.msra.mxu0 0
    %4472 = vmatprep.subr.bf16.mxu0 0
    %4473 = vmatpush1.bf16.msra.mxu0 0
    %4474 = vmatprep.subr.bf16.mxu0 0
    %4475 = vmatpush1.bf16.msra.mxu0 0
    %4476 = vmatprep.subr.bf16.mxu0 0
    %4477 = vmatpush1.bf16.msra.mxu0 0
    %4478 = vmatprep.subr.bf16.mxu0 0
    %4479 = vmatpush1.bf16.msra.mxu0 0
    %4480 = vmatprep.subr.bf16.mxu0 0
    %4481 = vmatpush1.bf16.msra.mxu0 0
    %4482 = vmatprep.subr.bf16.mxu0 0
    %4483 = vmatpush1.bf16.msra.mxu0 0
    %4484 = vmatprep.subr.bf16.mxu0 0
    %4485 = vmatpush1.bf16.msra.mxu0 0
    %4486 = vmatprep.mubr.bf16.mxu0 0
    %4487 = vmatmul.mubr.bf16.gmra.mrb[0].mxu0 %v4452
    %v4488 = vpop.f32.mrb[0].mxu0
    %v4489 = vadd.f32 0.0, %v4488
    %v4490 = vpop.f32.mrb[0].mxu0
    %v4491 = vadd.f32 0.0, %v4490
    %v4492 = vpop.f32.mrb[0].mxu0
    %v4493 = vpop.f32.mrb[0].mxu0
    %4494 = vdwg.mxu0
    %v4495 = vadd.f32 %v4448, %v4489
    %v4496 = vadd.f32 %v4449, %v4491
    %v4497 = vxor.u32 %v4495, 2147483648
    %v4498 = vxor.u32 %v4496, 2147483648
    %v4499 = vmul.f32 %v4497, 1.442695
    %v4500 = vpow.pop %v4499
    %v4501 = vmul.f32 %v4498, 1.442695
    %v4502 = vpow.pop %v4501
    %v4503 = vadd.f32 %v4500, 1.0
    %v4504 = vadd.f32 %v4502, 1.0
    %v4505 = vrcp.pop %v4503
    %v4506 = vmul.f32 1.0, %v4505
    %v4507 = vrcp.pop %v4504
    %v4508 = vmul.f32 1.0, %v4507
    %v4509 = vtanh.pop %v4496
    %v4510 = vmul.f32 %v4506, %v4441
    %4512 = vrot.lane.b32.xlu0 %v4509, 64
    %v4513 = vpop.permute.xlu0 %4512
    %v4515 = vmul.f32 %v4506, %v4513
    %4517 = vrot.lane.b32.xlu0 %v4515, 64
    %v4518 = vpop.permute.xlu0 %4517
    %v4520 = vadd.f32 %v4510, %v4518
    %v4521 = vtanh.pop %v4520
    %4523 = vrot.lane.b32.xlu0 %v4521, 64
    %v4524 = vpop.permute.xlu0 %4523
    %v4526 = vmul.f32 %v4508, %v4524
    %v4527 = vld [vmem:[%s1371] sm:$0xff]
    %v4528 = vld [vmem:[%s1371 + $0x8] sm:$0xff]
    %v4529 = vpack.c.bf16 %v4526, %v4526
    %v4531 = vsel %vm367, %v4529, 0
    %4533 = vmatprep.subr.bf16.mxu0 %v3570
    %4534 = vmatpush1.bf16.msra.mxu0 %v3569
    %4535 = vmatprep.subr.bf16.mxu0 %v3572
    %4536 = vmatpush1.bf16.msra.mxu0 %v3571
    %4537 = vmatprep.subr.bf16.mxu0 %v3574
    %4538 = vmatpush1.bf16.msra.mxu0 %v3573
    %4539 = vmatprep.subr.bf16.mxu0 %v3576
    %4540 = vmatpush1.bf16.msra.mxu0 %v3575
    %4541 = vmatprep.subr.bf16.mxu0 0
    %4542 = vmatpush1.bf16.msra.mxu0 0
    %4543 = vmatprep.subr.bf16.mxu0 0
    %4544 = vmatpush1.bf16.msra.mxu0 0
    %4545 = vmatprep.subr.bf16.mxu0 0
    %4546 = vmatpush1.bf16.msra.mxu0 0
    %4547 = vmatprep.subr.bf16.mxu0 0
    %4548 = vmatpush1.bf16.msra.mxu0 0
    %4549 = vmatprep.subr.bf16.mxu0 0
    %4550 = vmatpush1.bf16.msra.mxu0 0
    %4551 = vmatprep.subr.bf16.mxu0 0
    %4552 = vmatpush1.bf16.msra.mxu0 0
    %4553 = vmatprep.subr.bf16.mxu0 0
    %4554 = vmatpush1.bf16.msra.mxu0 0
    %4555 = vmatprep.subr.bf16.mxu0 0
    %4556 = vmatpush1.bf16.msra.mxu0 0
    %4557 = vmatprep.subr.bf16.mxu0 0
    %4558 = vmatpush1.bf16.msra.mxu0 0
    %4559 = vmatprep.subr.bf16.mxu0 0
    %4560 = vmatpush1.bf16.msra.mxu0 0
    %4561 = vmatprep.subr.bf16.mxu0 0
    %4562 = vmatpush1.bf16.msra.mxu0 0
    %4563 = vmatprep.subr.bf16.mxu0 0
    %4564 = vmatpush1.bf16.msra.mxu0 0
    %4565 = vmatprep.mubr.bf16.mxu0 0
    %4566 = vmatmul.mubr.bf16.gmra.mrb[0].mxu0 %v4531
    %v4567 = vpop.f32.mrb[0].mxu0
    %v4568 = vadd.f32 0.0, %v4567
    %v4569 = vpop.f32.mrb[0].mxu0
    %v4570 = vadd.f32 0.0, %v4569
    %v4571 = vpop.f32.mrb[0].mxu0
    %v4572 = vpop.f32.mrb[0].mxu0
    %4573 = vdwg.mxu0
    %v4574 = vadd.f32 %v4527, %v4568
    %v4575 = vadd.f32 %v4528, %v4570
    %v4576 = vxor.u32 %v4574, 2147483648
    %v4577 = vxor.u32 %v4575, 2147483648
    %v4578 = vmul.f32 %v4576, 1.442695
    %v4579 = vpow.pop %v4578
    %v4580 = vmul.f32 %v4577, 1.442695
    %v4581 = vpow.pop %v4580
    %v4582 = vadd.f32 %v4579, 1.0
    %v4583 = vadd.f32 %v4581, 1.0
    %v4584 = vrcp.pop %v4582
    %v4585 = vmul.f32 1.0, %v4584
    %v4586 = vrcp.pop %v4583
    %v4587 = vmul.f32 1.0, %v4586
    %v4588 = vtanh.pop %v4575
    %v4589 = vmul.f32 %v4585, %v4520
    %4591 = vrot.lane.b32.xlu0 %v4588, 64
    %v4592 = vpop.permute.xlu0 %4591
    %v4594 = vmul.f32 %v4585, %v4592
    %4596 = vrot.lane.b32.xlu0 %v4594, 64
    %v4597 = vpop.permute.xlu0 %4596
    %v4599 = vadd.f32 %v4589, %v4597
    %v4600 = vtanh.pop %v4599
    %4602 = vrot.lane.b32.xlu0 %v4600, 64
    %v4603 = vpop.permute.xlu0 %4602
    %v4605 = vmul.f32 %v4587, %v4603
    %v4606 = vld [vmem:[%s1455] sm:$0xff]
    %v4607 = vld [vmem:[%s1455 + $0x8] sm:$0xff]
    %v4608 = vpack.c.bf16 %v4605, %v4605
    %v4610 = vsel %vm367, %v4608, 0
    %4612 = vmatprep.subr.bf16.mxu0 %v3570
    %4613 = vmatpush1.bf16.msra.mxu0 %v3569
    %4614 = vmatprep.subr.bf16.mxu0 %v3572
    %4615 = vmatpush1.bf16.msra.mxu0 %v3571
    %4616 = vmatprep.subr.bf16.mxu0 %v3574
    %4617 = vmatpush1.bf16.msra.mxu0 %v3573
    %4618 = vmatprep.subr.bf16.mxu0 %v3576
    %4619 = vmatpush1.bf16.msra.mxu0 %v3575
    %4620 = vmatprep.subr.bf16.mxu0 0
    %4621 = vmatpush1.bf16.msra.mxu0 0
    %4622 = vmatprep.subr.bf16.mxu0 0
    %4623 = vmatpush1.bf16.msra.mxu0 0
    %4624 = vmatprep.subr.bf16.mxu0 0
    %4625 = vmatpush1.bf16.msra.mxu0 0
    %4626 = vmatprep.subr.bf16.mxu0 0
    %4627 = vmatpush1.bf16.msra.mxu0 0
    %4628 = vmatprep.subr.bf16.mxu0 0
    %4629 = vmatpush1.bf16.msra.mxu0 0
    %4630 = vmatprep.subr.bf16.mxu0 0
    %4631 = vmatpush1.bf16.msra.mxu0 0
    %4632 = vmatprep.subr.bf16.mxu0 0
    %4633 = vmatpush1.bf16.msra.mxu0 0
    %4634 = vmatprep.subr.bf16.mxu0 0
    %4635 = vmatpush1.bf16.msra.mxu0 0
    %4636 = vmatprep.subr.bf16.mxu0 0
    %4637 = vmatpush1.bf16.msra.mxu0 0
    %4638 = vmatprep.subr.bf16.mxu0 0
    %4639 = vmatpush1.bf16.msra.mxu0 0
    %4640 = vmatprep.subr.bf16.mxu0 0
    %4641 = vmatpush1.bf16.msra.mxu0 0
    %4642 = vmatprep.subr.bf16.mxu0 0
    %4643 = vmatpush1.bf16.msra.mxu0 0
    %4644 = vmatprep.mubr.bf16.mxu0 0
    %4645 = vmatmul.mubr.bf16.gmra.mrb[0].mxu0 %v4610
    %v4646 = vpop.f32.mrb[0].mxu0
    %v4647 = vadd.f32 0.0, %v4646
    %v4648 = vpop.f32.mrb[0].mxu0
    %v4649 = vadd.f32 0.0, %v4648
    %v4650 = vpop.f32.mrb[0].mxu0
    %v4651 = vpop.f32.mrb[0].mxu0
    %4652 = vdwg.mxu0
    %v4653 = vadd.f32 %v4606, %v4647
    %v4654 = vadd.f32 %v4607, %v4649
    %v4655 = vxor.u32 %v4653, 2147483648
    %v4656 = vxor.u32 %v4654, 2147483648
    %v4657 = vmul.f32 %v4655, 1.442695
    %v4658 = vpow.pop %v4657
    %v4659 = vmul.f32 %v4656, 1.442695
    %v4660 = vpow.pop %v4659
    %v4661 = vadd.f32 %v4658, 1.0
    %v4662 = vadd.f32 %v4660, 1.0
    %v4663 = vrcp.pop %v4661
    %v4664 = vmul.f32 1.0, %v4663
    %v4665 = vrcp.pop %v4662
    %v4666 = vmul.f32 1.0, %v4665
    %v4667 = vtanh.pop %v4654
    %v4668 = vmul.f32 %v4664, %v4599
    %4670 = vrot.lane.b32.xlu0 %v4667, 64
    %v4671 = vpop.permute.xlu0 %4670
    %v4673 = vmul.f32 %v4664, %v4671
    %4675 = vrot.lane.b32.xlu0 %v4673, 64
    %v4676 = vpop.permute.xlu0 %4675
    %v4678 = vadd.f32 %v4668, %v4676
    %v4679 = vtanh.pop %v4678
    %4681 = vrot.lane.b32.xlu0 %v4679, 64
    %v4682 = vpop.permute.xlu0 %4681
    %v4684 = vmul.f32 %v4666, %v4682
    %v4685 = vld [vmem:[%s1539] sm:$0xff]
    %v4686 = vld [vmem:[%s1539 + $0x8] sm:$0xff]
    %v4687 = vpack.c.bf16 %v4684, %v4684
    %v4689 = vsel %vm367, %v4687, 0
    %4691 = vmatprep.subr.bf16.mxu0 %v3570
    %4692 = vmatpush1.bf16.msra.mxu0 %v3569
    %4693 = vmatprep.subr.bf16.mxu0 %v3572
    %4694 = vmatpush1.bf16.msra.mxu0 %v3571
    %4695 = vmatprep.subr.bf16.mxu0 %v3574
    %4696 = vmatpush1.bf16.msra.mxu0 %v3573
    %4697 = vmatprep.subr.bf16.mxu0 %v3576
    %4698 = vmatpush1.bf16.msra.mxu0 %v3575
    %4699 = vmatprep.subr.bf16.mxu0 0
    %4700 = vmatpush1.bf16.msra.mxu0 0
    %4701 = vmatprep.subr.bf16.mxu0 0
    %4702 = vmatpush1.bf16.msra.mxu0 0
    %4703 = vmatprep.subr.bf16.mxu0 0
    %4704 = vmatpush1.bf16.msra.mxu0 0
    %4705 = vmatprep.subr.bf16.mxu0 0
    %4706 = vmatpush1.bf16.msra.mxu0 0
    %4707 = vmatprep.subr.bf16.mxu0 0
    %4708 = vmatpush1.bf16.msra.mxu0 0
    %4709 = vmatprep.subr.bf16.mxu0 0
    %4710 = vmatpush1.bf16.msra.mxu0 0
    %4711 = vmatprep.subr.bf16.mxu0 0
    %4712 = vmatpush1.bf16.msra.mxu0 0
    %4713 = vmatprep.subr.bf16.mxu0 0
    %4714 = vmatpush1.bf16.msra.mxu0 0
    %4715 = vmatprep.subr.bf16.mxu0 0
    %4716 = vmatpush1.bf16.msra.mxu0 0
    %4717 = vmatprep.subr.bf16.mxu0 0
    %4718 = vmatpush1.bf16.msra.mxu0 0
    %4719 = vmatprep.subr.bf16.mxu0 0
    %4720 = vmatpush1.bf16.msra.mxu0 0
    %4721 = vmatprep.subr.bf16.mxu0 0
    %4722 = vmatpush1.bf16.msra.mxu0 0
    %4723 = vmatprep.mubr.bf16.mxu0 0
    %4724 = vmatmul.mubr.bf16.gmra.mrb[0].mxu0 %v4689
    %v4725 = vpop.f32.mrb[0].mxu0
    %v4726 = vadd.f32 0.0, %v4725
    %v4727 = vpop.f32.mrb[0].mxu0
    %v4728 = vadd.f32 0.0, %v4727
    %v4729 = vpop.f32.mrb[0].mxu0
    %v4730 = vpop.f32.mrb[0].mxu0
    %4731 = vdwg.mxu0
    %v4732 = vadd.f32 %v4685, %v4726
    %v4733 = vadd.f32 %v4686, %v4728
    %v4734 = vxor.u32 %v4732, 2147483648
    %v4735 = vxor.u32 %v4733, 2147483648
    %v4736 = vmul.f32 %v4734, 1.442695
    %v4737 = vpow.pop %v4736
    %v4738 = vmul.f32 %v4735, 1.442695
    %v4739 = vpow.pop %v4738
    %v4740 = vadd.f32 %v4737, 1.0
    %v4741 = vadd.f32 %v4739, 1.0
    %v4742 = vrcp.pop %v4740
    %v4743 = vmul.f32 1.0, %v4742
    %v4744 = vrcp.pop %v4741
    %v4745 = vmul.f32 1.0, %v4744
    %v4746 = vtanh.pop %v4733
    %v4747 = vmul.f32 %v4743, %v4678
    %4749 = vrot.lane.b32.xlu0 %v4746, 64
    %v4750 = vpop.permute.xlu0 %4749
    %v4752 = vmul.f32 %v4743, %v4750
    %4754 = vrot.lane.b32.xlu0 %v4752, 64
    %v4755 = vpop.permute.xlu0 %4754
    %v4757 = vadd.f32 %v4747, %v4755
    %v4758 = vtanh.pop %v4757
    %4760 = vrot.lane.b32.xlu0 %v4758, 64
    %v4761 = vpop.permute.xlu0 %4760
    %v4763 = vmul.f32 %v4745, %v4761
    %v4764 = vld [vmem:[%s1623] sm:$0xff]
    %v4765 = vld [vmem:[%s1623 + $0x8] sm:$0xff]
    %v4766 = vpack.c.bf16 %v4763, %v4763
    %v4768 = vsel %vm367, %v4766, 0
    %4770 = vmatprep.subr.bf16.mxu0 %v3570
    %4771 = vmatpush1.bf16.msra.mxu0 %v3569
    %4772 = vmatprep.subr.bf16.mxu0 %v3572
    %4773 = vmatpush1.bf16.msra.mxu0 %v3571
    %4774 = vmatprep.subr.bf16.mxu0 %v3574
    %4775 = vmatpush1.bf16.msra.mxu0 %v3573
    %4776 = vmatprep.subr.bf16.mxu0 %v3576
    %4777 = vmatpush1.bf16.msra.mxu0 %v3575
    %4778 = vmatprep.subr.bf16.mxu0 0
    %4779 = vmatpush1.bf16.msra.mxu0 0
    %4780 = vmatprep.subr.bf16.mxu0 0
    %4781 = vmatpush1.bf16.msra.mxu0 0
    %4782 = vmatprep.subr.bf16.mxu0 0
    %4783 = vmatpush1.bf16.msra.mxu0 0
    %4784 = vmatprep.subr.bf16.mxu0 0
    %4785 = vmatpush1.bf16.msra.mxu0 0
    %4786 = vmatprep.subr.bf16.mxu0 0
    %4787 = vmatpush1.bf16.msra.mxu0 0
    %4788 = vmatprep.subr.bf16.mxu0 0
    %4789 = vmatpush1.bf16.msra.mxu0 0
    %4790 = vmatprep.subr.bf16.mxu0 0
    %4791 = vmatpush1.bf16.msra.mxu0 0
    %4792 = vmatprep.subr.bf16.mxu0 0
    %4793 = vmatpush1.bf16.msra.mxu0 0
    %4794 = vmatprep.subr.bf16.mxu0 0
    %4795 = vmatpush1.bf16.msra.mxu0 0
    %4796 = vmatprep.subr.bf16.mxu0 0
    %4797 = vmatpush1.bf16.msra.mxu0 0
    %4798 = vmatprep.subr.bf16.mxu0 0
    %4799 = vmatpush1.bf16.msra.mxu0 0
    %4800 = vmatprep.subr.bf16.mxu0 0
    %4801 = vmatpush1.bf16.msra.mxu0 0
    %4802 = vmatprep.mubr.bf16.mxu0 0
    %4803 = vmatmul.mubr.bf16.gmra.mrb[0].mxu0 %v4768
    %v4804 = vpop.f32.mrb[0].mxu0
    %v4805 = vadd.f32 0.0, %v4804
    %v4806 = vpop.f32.mrb[0].mxu0
    %v4807 = vadd.f32 0.0, %v4806
    %v4808 = vpop.f32.mrb[0].mxu0
    %v4809 = vpop.f32.mrb[0].mxu0
    %4810 = vdwg.mxu0
    %v4811 = vadd.f32 %v4764, %v4805
    %v4812 = vadd.f32 %v4765, %v4807
    %v4813 = vxor.u32 %v4811, 2147483648
    %v4814 = vxor.u32 %v4812, 2147483648
    %v4815 = vmul.f32 %v4813, 1.442695
    %v4816 = vpow.pop %v4815
    %v4817 = vmul.f32 %v4814, 1.442695
    %v4818 = vpow.pop %v4817
    %v4819 = vadd.f32 %v4816, 1.0
    %v4820 = vadd.f32 %v4818, 1.0
    %v4821 = vrcp.pop %v4819
    %v4822 = vmul.f32 1.0, %v4821
    %v4823 = vrcp.pop %v4820
    %v4824 = vmul.f32 1.0, %v4823
    %v4825 = vtanh.pop %v4812
    %v4826 = vmul.f32 %v4822, %v4757
    %4828 = vrot.lane.b32.xlu0 %v4825, 64
    %v4829 = vpop.permute.xlu0 %4828
    %v4831 = vmul.f32 %v4822, %v4829
    %4833 = vrot.lane.b32.xlu0 %v4831, 64
    %v4834 = vpop.permute.xlu0 %4833
    %v4836 = vadd.f32 %v4826, %v4834
    %v4837 = vtanh.pop %v4836
    %4839 = vrot.lane.b32.xlu0 %v4837, 64
    %v4840 = vpop.permute.xlu0 %4839
    %v4842 = vmul.f32 %v4824, %v4840
    %v4843 = vpack.c.bf16 %v4842, %v4842
    %v4844 = vld [vmem:[%s10] sm:$0xf]
    %v4845 = vld [vmem:[%s10 + $0x4] sm:$0xf]
    %v4846 = vld [vmem:[%s10 + $0x8] sm:$0xf]
    %v4847 = vld [vmem:[%s10 + $0xc] sm:$0xf]
    %v4848 = vld [vmem:[%s10 + $0x10] sm:$0xf]
    %v4849 = vld [vmem:[%s10 + $0x14] sm:$0xf]
    %v4850 = vld [vmem:[%s10 + $0x18] sm:$0xf]
    %v4851 = vld [vmem:[%s10 + $0x1c] sm:$0xf]
    %v4852 = vld [vmem:[%s11] sm:$0x1]
    %v4854 = vlaneseq
    %v4855 = vshrl.u32 %v4854, 7
    %v4856 = vsub.s32 0, %v4855
    %v4857 = vrot.slane %v4852, %v4856
    %v4867 = vunpack.c.l.b16 %v4844
    %v4868 = vunpack.c.l.b16 %v4845
    %v4869 = vunpack.c.l.b16 %v4846
    %v4870 = vunpack.c.l.b16 %v4847
    %v4871 = vunpack.c.l.b16 %v4848
    %v4872 = vunpack.c.l.b16 %v4849
    %v4873 = vunpack.c.l.b16 %v4850
    %v4874 = vunpack.c.l.b16 %v4851
    %v4875 = vpack.c.b16 %v4868, %v4867
    %v4876 = vpack.c.b16 %v4870, %v4869
    %v4877 = vpack.c.b16 %v4872, %v4871
    %v4878 = vpack.c.b16 %v4874, %v4873
    %v4884 = vsel %vm367, %v4843, 0
    %4886 = vmatprep.subr.bf16.mxu0 0
    %4887 = vmatpush1.bf16.msra.mxu0 %v4875
    %4888 = vmatprep.subr.bf16.mxu0 0
    %4889 = vmatpush1.bf16.msra.mxu0 %v4876
    %4890 = vmatprep.subr.bf16.mxu0 0
    %4891 = vmatpush1.bf16.msra.mxu0 %v4877
    %4892 = vmatprep.subr.bf16.mxu0 0
    %4893 = vmatpush1.bf16.msra.mxu0 %v4878
    %4894 = vmatprep.subr.bf16.mxu0 0
    %4895 = vmatpush1.bf16.msra.mxu0 0
    %4896 = vmatprep.subr.bf16.mxu0 0
    %4897 = vmatpush1.bf16.msra.mxu0 0
    %4898 = vmatprep.subr.bf16.mxu0 0
    %4899 = vmatpush1.bf16.msra.mxu0 0
    %4900 = vmatprep.subr.bf16.mxu0 0
    %4901 = vmatpush1.bf16.msra.mxu0 0
    %4902 = vmatprep.subr.bf16.mxu0 0
    %4903 = vmatpush1.bf16.msra.mxu0 0
    %4904 = vmatprep.subr.bf16.mxu0 0
    %4905 = vmatpush1.bf16.msra.mxu0 0
    %4906 = vmatprep.subr.bf16.mxu0 0
    %4907 = vmatpush1.bf16.msra.mxu0 0
    %4908 = vmatprep.subr.bf16.mxu0 0
    %4909 = vmatpush1.bf16.msra.mxu0 0
    %4910 = vmatprep.subr.bf16.mxu0 0
    %4911 = vmatpush1.bf16.msra.mxu0 0
    %4912 = vmatprep.subr.bf16.mxu0 0
    %4913 = vmatpush1.bf16.msra.mxu0 0
    %4914 = vmatprep.subr.bf16.mxu0 0
    %4915 = vmatpush1.bf16.msra.mxu0 0
    %4916 = vmatprep.subr.bf16.mxu0 0
    %4917 = vmatpush1.bf16.msra.mxu0 0
    %4918 = vmatprep.mubr.bf16.mxu0 0
    %4919 = vmatmul.mubr.bf16.gmra.mrb[0].mxu0 %v4884
    %v4920 = vpop.f32.mrb[0].mxu0
    %v4921 = vadd.f32 %v4857, %v4920
    %v4922 = vpop.f32.mrb[0].mxu0
    %v4923 = vpop.f32.mrb[0].mxu0
    %v4924 = vpop.f32.mrb[0].mxu0
    %4925 = vdwg.mxu0
    %vm4926 = vcmask 72704
    %4927 = vst.msk [vmem:[#allocation10] sm:$0xff] %vm4926, %v4921
    // Predicated region
    $region62: #{tpu_custom_call.1} parent=1 // pred_check
      _
    $region63: #{tpu_custom_call.1} parent=1 // pred_check_branch
      %4929 = sbr.rel (0) target = $region65
    $region64: #{tpu_custom_call.1} parent=1 // pred_region
      %s4931 = ssub.s32 128, 128
      %4932 = vsyncadd [#allocation6], %s4931
      %s4934 = sshll.u32 [#allocation10], 4
      %s4935 = int_to_ptr.vmem [resolvable:$true] %s4934
      %4937 = dma.vmem_to_hbm [thread:$0]  %s4935, 128, %s12, [#allocation6]
    $region65: #{tpu_custom_call.1} parent=1 // pred_fallthru
      _
    // Predicated region
    $region66: #{tpu_custom_call.1} parent=1 // pred_check
      _
    $region67: #{tpu_custom_call.1} parent=1 // pred_check_branch
      %4939 = sbr.rel (0) target = $region69
    $region68: #{tpu_custom_call.1} parent=1 // pred_region
      %4940 = dma.done [#allocation6], 128
    $region69: #{tpu_custom_call.1} parent=1 // pred_fallthru
      _
    %4941 = vsyncpa [#allocation5], 1
    %4942 = vsyncpa [#allocation8], 1
    %4943 = vsyncpa [#allocation6], 1

</llo_original>
